<compile_context>
chip_gen: v5e
topology: v5e:2x2
jax: 0.10.0
libtpu: 0.0.40
codegen_flags: <defaults>
</compile_context>

<pallas_src>
import numpy as np

import jax
import jax.numpy as jnp
from jax import lax
from jax.experimental import pallas as pl
from jax.experimental.pallas import tpu as pltpu

C_IN = 4
HIDDEN = [32, 64]
C_OUT = 16
BN_EPS = 1e-5
NEG_SLOPE = 0.2


# ----------------------------- static helpers -------------------------------

def _ru(x, m):
    return (x + m - 1) // m * m


def _pick_image_block(n):
    """Images per grid step: as large as possible (<=8) while keeping >=2 steps."""
    best = 1
    for b in range(1, min(n, 8) + 1):
        if n % b == 0 and n // b >= 2:
            best = b
    return best


def _static_config(h, w):
    """Row-layout bookkeeping for the sparse 'oh*Wb+ow' activation layouts."""
    assert h % 4 == 0 and w % 4 == 0 and h >= 8 and w >= 8
    hb, wb = h // 4, w // 4
    h1, w1 = hb - 1, wb - 1                       # conv1 out (k8 s4 p0)
    assert h1 >= 4 and w1 >= 4
    h2, w2 = (h1 - 4) // 2 + 1, (w1 - 4) // 2 + 1  # conv2 out (k4 s2 p0)
    assert h2 >= 3 and w2 >= 3
    h3, w3 = (h2 - 3) // 2 + 1, (w2 - 3) // 2 + 1  # conv3 out (k3 s2 p0)
    m3 = h3 * w3
    mp3 = _ru(m3, 8)
    # conv3 taps read conv2 rows r3 + off3; conv2 taps read conv1 rows r2 + off2;
    # conv1 offsets read blocked-image rows r1 + off1.  Extents padded to 8.
    off3 = [2 * wb * dh + 2 * dw for dh in range(3) for dw in range(3)]
    L3 = _ru(4 * wb * (h3 - 1) + 4 * (w3 - 1) + 1, 8)
    off2 = [wb * dh + dw for dh in range(4) for dw in range(4)]
    L2 = _ru(max(2 * wb * (h2 - 1) + 2 * (w2 - 1) + 1, L3 + max(off3)), 8)
    off1 = [0, 1, wb, wb + 1]
    L1 = _ru(max((h1 - 1) * wb + (w1 - 1) + 1, L2 + max(off2)), 8)
    pr = _ru(max(L1 + max(off1), hb * wb), 8)
    return dict(hb=hb, wb=wb, h1=h1, w1=w1, h2=h2, w2=w2, h3=h3, w3=w3,
                m3=m3, mp3=mp3, L1=L1, L2=L2, L3=L3, PR=pr,
                off1=off1, off2=off2, off3=off3)


def _compact_matrix(cfg):
    """(mp3, L3) 0/1 matrix: sparse conv3 rows -> dense row-major h3*w3 grid."""
    g = np.zeros((cfg["mp3"], cfg["L3"]), np.float32)
    for q in range(cfg["m3"]):
        oh, ow = q // cfg["w3"], q % cfg["w3"]
        g[q, 4 * cfg["wb"] * oh + 4 * ow] = 1.0
    return g


def _res_gather_matrix(cfg):
    """(9*mp3, mp3) 0/1 matrix: 3x3/pad-1 im2col over the dense h3*w3 grid."""
    h3, w3, mp3, m3 = cfg["h3"], cfg["w3"], cfg["mp3"], cfg["m3"]
    g = np.zeros((9 * mp3, mp3), np.float32)
    for dh in range(3):
        for dw in range(3):
            t = dh * 3 + dw
            for q in range(m3):
                oh, ow = q // w3, q % w3
                ih, iw = oh + dh - 1, ow + dw - 1
                if 0 <= ih < h3 and 0 <= iw < w3:
                    g[t * mp3 + q, ih * w3 + iw] = 1.0
    return g


# ------------------------------ JAX glue (cheap) -----------------------------

def bn_fold(bn, eps=BN_EPS):
    scale = bn["gamma"] / jnp.sqrt(bn["var"] + eps)
    shift = bn["beta"] - bn["mean"] * scale
    return scale, shift


def _block_image(x, cfg):
    """(N, C, H, W) -> (N, PR, 16*C) bf16, row = Hb*Wb_blocks + Wb, col = (hi,wi,c)."""
    n, c, h, w = x.shape
    hb, wb = cfg["hb"], cfg["wb"]
    xb = jnp.transpose(x, (0, 2, 3, 1)).reshape(n, hb, 4, wb, 4, c)
    xb = jnp.transpose(xb, (0, 1, 3, 2, 4, 5)).reshape(n, hb * wb, 16 * c)
    xb = jnp.pad(xb, ((0, 0), (0, cfg["PR"] - hb * wb), (0, 0)))
    return xb.astype(jnp.bfloat16)


def _conv1_offset_weights(w1):
    """(Cout, C, 8, 8) -> (4, 16*C, Cout); d = bh*2+bw matches offsets [0,1,Wb,Wb+1]."""
    cout, c = w1.shape[0], w1.shape[1]
    wr = w1.reshape(cout, c, 2, 4, 2, 4)            # (cout, c, bh, hi, bw, wi)
    wr = jnp.transpose(wr, (2, 4, 3, 5, 1, 0))      # (bh, bw, hi, wi, c, cout)
    return wr.reshape(4, 16 * c, cout)


def _tap_cat_weight(w, scale):
    """(Cout, Cin, k, k) -> (k*k*Cin, Cout), K = (kh*k+kw)*Cin + cin; BN scale folded."""
    k = w.shape[2]
    wm = jnp.transpose(w, (2, 3, 1, 0)).reshape(k * k * w.shape[1], w.shape[0])
    return wm * scale[None, :]


# ------------------------------ fused kernel --------------------------------

def _make_kernel(B, cfg, c1, c2, c3):
    L1, L2, L3, mp3 = cfg["L1"], cfg["L2"], cfg["L3"], cfg["mp3"]
    off1, off2, off3 = cfg["off1"], cfg["off2"], cfg["off3"]

    def kernel(xblk_ref, w1_ref, b1_ref, w2_ref, s2_ref, w3_ref, s3_ref,
               gc_ref, g4_ref, w4_ref, s4_ref, w5_ref, s5_ref,
               out_ref, p2_s, p3_s, p4_s):
        f32, bf16 = jnp.float32, jnp.bfloat16

        def lrelu(v):
            return jnp.where(v >= 0, v, NEG_SLOPE * v)

        results = []
        for b in range(B):
            # --- ConvBlock 1: k8 s4, bias, LeakyReLU --------------------
            # k == 2*stride, so im2col = 4 shifted slabs of the blocked image.
            xb = xblk_ref[b].astype(f32)                    # (PR, 16*Cin)
            y1 = b1_ref[...]
            for d, off in enumerate(off1):
                y1 = y1 + jnp.dot(xb[off:off + L1, :].astype(bf16), w1_ref[d],
                                  preferred_element_type=f32)
            y1 = lrelu(y1)                                   # (L1, c1) f32

            # --- ConvBlock 2: k4 s2, BN folded, LeakyReLU ----------------
            # 16 taps are constant-offset slices of y1 -> pack lane-wise,
            # one merged matmul (L2, 16*c1) @ (16*c1, c2).
            for t, off in enumerate(off2):
                p2_s[:, t * c1:(t + 1) * c1] = y1[off:off + L2, :].astype(bf16)
            y2 = lrelu(jnp.dot(p2_s[...], w2_ref[...],
                               preferred_element_type=f32) + s2_ref[...])

            # --- ConvBlock 3: k3 s2, BN folded, LeakyReLU ----------------
            for t, off in enumerate(off3):
                p3_s[:, t * c2:(t + 1) * c2] = y2[off:off + L3, :].astype(bf16)
            y3s = lrelu(jnp.dot(p3_s[...], w3_ref[...],
                                preferred_element_type=f32) + s3_ref[...])

            # Compact sparse conv3 rows to the dense (mp3, c3) grid.
            y3 = jnp.dot(gc_ref[...], y3s.astype(bf16),
                         preferred_element_type=f32)         # (mp3, c3)

            # --- ResidualLayer: x + BN(conv1x1(ReLU(BN(conv3x3(x))))) ----
            p4raw = jnp.dot(g4_ref[...], y3.astype(bf16),
                            preferred_element_type=f32).astype(bf16)
            for t in range(9):
                p4_s[:, t * c3:(t + 1) * c3] = p4raw[t * mp3:(t + 1) * mp3, :]
            hmid = jnp.maximum(jnp.dot(p4_s[...], w4_ref[...],
                                       preferred_element_type=f32)
                               + s4_ref[...], 0.0)
            r = jnp.dot(hmid.astype(bf16), w5_ref[...],
                        preferred_element_type=f32) + s5_ref[...]
            results.append(jnp.maximum(y3 + r, 0.0))         # final ReLU

        res = results[0] if B == 1 else jnp.concatenate(results, axis=1)
        out_ref[0] = res.astype(out_ref.dtype)

    return kernel


@jax.jit
def encoder_forward(params, x):
    n, c_in, h, w = x.shape
    cfg = _static_config(h, w)
    c1 = params["conv2_w"].shape[1]
    c2 = params["conv3_w"].shape[1]
    c3 = params["conv3_w"].shape[0]
    B = _pick_image_block(n)
    g = n // B
    bf16 = jnp.bfloat16

    xblk = _block_image(x, cfg)

    w1o = _conv1_offset_weights(params["conv1_w"]).astype(bf16)
    b1 = params["conv1_b"].reshape(1, -1).astype(jnp.float32)

    s2, t2 = bn_fold(params["bn2"])
    w2c = _tap_cat_weight(params["conv2_w"], s2).astype(bf16)
    s3, t3 = bn_fold(params["bn3"])
    w3c = _tap_cat_weight(params["conv3_w"], s3).astype(bf16)
    sr1, tr1 = bn_fold(params["res_bn1"])
    w4c = _tap_cat_weight(params["res_w1"], sr1).astype(bf16)
    sr2, tr2 = bn_fold(params["res_bn2"])
    w5 = (params["res_w2"][:, :, 0, 0].T * sr2[None, :]).astype(bf16)

    gc = jnp.asarray(_compact_matrix(cfg), bf16)
    g4 = jnp.asarray(_res_gather_matrix(cfg), bf16)

    consts = [w1o, b1,
              w2c, t2.reshape(1, -1),
              w3c, t3.reshape(1, -1),
              gc, g4,
              w4c, tr1.reshape(1, -1),
              w5, tr2.reshape(1, -1)]
    const_specs = [pl.BlockSpec(a.shape, lambda i, nd=a.ndim: (0,) * nd)
                   for a in consts]

    kernel = _make_kernel(B, cfg, c1, c2, c3)

    out = pl.pallas_call(
        kernel,
        out_shape=jax.ShapeDtypeStruct((g, cfg["mp3"], B * c3), jnp.float32),
        grid=(g,),
        in_specs=[pl.BlockSpec((B, cfg["PR"], 16 * c_in), lambda i: (i, 0, 0))]
                 + const_specs,
        out_specs=pl.BlockSpec((1, cfg["mp3"], B * c3), lambda i: (i, 0, 0)),
        scratch_shapes=[pltpu.VMEM((cfg["L2"], 16 * c1), bf16),
                        pltpu.VMEM((cfg["L3"], 9 * c2), bf16),
                        pltpu.VMEM((cfg["mp3"], 9 * c3), bf16)],
        compiler_params=pltpu.CompilerParams(
            dimension_semantics=("parallel",),
            vmem_limit_bytes=32 * 1024 * 1024),
    )(xblk, *consts)

    # (g, mp3, B*c3) -> NCHW at the model boundary (tiny).
    out = out.reshape(g, cfg["mp3"], B, c3)[:, :cfg["m3"]]
    out = jnp.transpose(out, (0, 2, 3, 1))
    return out.reshape(n, c3, cfg["h3"], cfg["w3"])


# --------------------------- pure-JAX reference ------------------------------

@jax.jit
def encoder_reference(params, x):
    dn = ("NCHW", "OIHW", "NCHW")

    def conv(v, wgt, stride, pad):
        return lax.conv_general_dilated(v, wgt, (stride, stride),
                                        [(pad, pad), (pad, pad)],
                                        dimension_numbers=dn)

    def lrelu(v):
        return jnp.where(v >= 0, v, NEG_SLOPE * v)

    def bcast(v):
        return v[None, :, None, None]

    y = lrelu(conv(x, params["conv1_w"], 4, 0) + bcast(params["conv1_b"]))
    s, t = bn_fold(params["bn2"])
    y = lrelu(conv(y, params["conv2_w"], 2, 0) * bcast(s) + bcast(t))
    s, t = bn_fold(params["bn3"])
    y = lrelu(conv(y, params["conv3_w"], 2, 0) * bcast(s) + bcast(t))
    s, t = bn_fold(params["res_bn1"])
    hmid = jax.nn.relu(conv(y, params["res_w1"], 1, 1) * bcast(s) + bcast(t))
    s, t = bn_fold(params["res_bn2"])
    r = conv(hmid, params["res_w2"], 1, 0) * bcast(s) + bcast(t)
    return jax.nn.relu(y + r)


# ---------------------------- parameter init --------------------------------

def init_params(key):
    ks = jax.random.split(key, 16)

    def nrm(k, shape, s=0.05):
        return s * jax.random.normal(k, shape, jnp.float32)

    def bn(k, c):
        k1, k2, k3, k4 = jax.random.split(k, 4)
        return {
            "gamma": 1.0 + 0.1 * jax.random.normal(k1, (c,), jnp.float32),
            "beta": 0.1 * jax.random.normal(k2, (c,), jnp.float32),
            "mean": 0.1 * jax.random.normal(k3, (c,), jnp.float32),
            "var": 1.0 + 0.1 * jnp.abs(jax.random.normal(k4, (c,), jnp.float32)),
        }

    return {
        "conv1_w": nrm(ks[0], (HIDDEN[0], C_IN, 8, 8)),
        "conv1_b": nrm(ks[1], (HIDDEN[0],)),
        "conv2_w": nrm(ks[2], (HIDDEN[1], HIDDEN[0], 4, 4)),
        "bn2": bn(ks[3], HIDDEN[1]),
        "conv3_w": nrm(ks[4], (C_OUT, HIDDEN[1], 3, 3)),
        "bn3": bn(ks[5], C_OUT),
        "res_w1": nrm(ks[6], (C_OUT, C_OUT, 3, 3)),
        "res_bn1": bn(ks[7], C_OUT),
        "res_w2": nrm(ks[8], (C_OUT, C_OUT, 1, 1)),
        "res_bn2": bn(ks[9], C_OUT),
    }


# --------------------------------- main --------------------------------------

if __name__ == "__main__":
    key = jax.random.PRNGKey(0)
    kp, kx = jax.random.split(key)
    params = init_params(kp)
    # NCHW input; 64x64 -> 15x15 -> 6x6 -> 2x2 through the three convs.
    # Batch 4 -> 2 images per grid step, 2 grid steps (both v7x cores busy).
    x = jax.random.normal(kx, (4, C_IN, 64, 64), jnp.float32)

    out = encoder_forward(params, x)
    jax.block_until_ready(out)

    assert out.shape == (4, C_OUT, 2, 2), out.shape
    assert out.dtype == jnp.float32
    assert bool(jnp.all(jnp.isfinite(out)))
    assert bool(jnp.all(out >= 0))  # final op is ReLU

    ref = encoder_reference(params, x)
    err = float(jnp.max(jnp.abs(out - ref)))
    # bf16 matmul operands with f32 accumulation: small, bounded drift.
    assert err < 8e-2, f"max abs error vs reference: {err}"
    print("KERNEL_OK")
</pallas_src>

<mosaic_0001>
module attributes {stable_mosaic.version = 11 : i64} {
  func.func @kernel(%arg0: i32, %arg1: memref<2x264x64xbf16, #tpu.memory_space<vmem>>, %arg2: memref<4x64x32xbf16, #tpu.memory_space<vmem>>, %arg3: memref<1x32xf32, #tpu.memory_space<vmem>>, %arg4: memref<512x64xbf16, #tpu.memory_space<vmem>>, %arg5: memref<1x64xf32, #tpu.memory_space<vmem>>, %arg6: memref<576x16xbf16, #tpu.memory_space<vmem>>, %arg7: memref<1x16xf32, #tpu.memory_space<vmem>>, %arg8: memref<8x72xbf16, #tpu.memory_space<vmem>>, %arg9: memref<72x8xbf16, #tpu.memory_space<vmem>>, %arg10: memref<144x16xbf16, #tpu.memory_space<vmem>>, %arg11: memref<1x16xf32, #tpu.memory_space<vmem>>, %arg12: memref<16x16xbf16, #tpu.memory_space<vmem>>, %arg13: memref<1x16xf32, #tpu.memory_space<vmem>>, %arg14: memref<1x8x32xf32, #tpu.memory_space<vmem>>, %arg15: memref<176x512xbf16, #tpu.memory_space<vmem>>, %arg16: memref<72x576xbf16, #tpu.memory_space<vmem>>, %arg17: memref<8x144xbf16, #tpu.memory_space<vmem>>) attributes {dimension_semantics = [#tpu.dimension_semantics<parallel>], iteration_bounds = array<i64: 2>, scalar_prefetch = 0 : i64, scratch_operands = 3 : i64, tpu.core_type = #tpu.core_type<tc>, window_params = [{transform_indices = @transform_0, window_bounds = array<i64: 2, 264, 64>}, {pipeline_mode = #tpu.pipeline_mode<synchronous>, transform_indices = @transform_1, window_bounds = array<i64: 4, 64, 32>}, {pipeline_mode = #tpu.pipeline_mode<synchronous>, transform_indices = @transform_2, window_bounds = array<i64: 1, 32>}, {pipeline_mode = #tpu.pipeline_mode<synchronous>, transform_indices = @transform_3, window_bounds = array<i64: 512, 64>}, {pipeline_mode = #tpu.pipeline_mode<synchronous>, transform_indices = @transform_4, window_bounds = array<i64: 1, 64>}, {pipeline_mode = #tpu.pipeline_mode<synchronous>, transform_indices = @transform_5, window_bounds = array<i64: 576, 16>}, {pipeline_mode = #tpu.pipeline_mode<synchronous>, transform_indices = @transform_6, window_bounds = array<i64: 1, 16>}, {pipeline_mode = #tpu.pipeline_mode<synchronous>, transform_indices = @transform_7, window_bounds = array<i64: 8, 72>}, {pipeline_mode = #tpu.pipeline_mode<synchronous>, transform_indices = @transform_8, window_bounds = array<i64: 72, 8>}, {pipeline_mode = #tpu.pipeline_mode<synchronous>, transform_indices = @transform_9, window_bounds = array<i64: 144, 16>}, {pipeline_mode = #tpu.pipeline_mode<synchronous>, transform_indices = @transform_10, window_bounds = array<i64: 1, 16>}, {pipeline_mode = #tpu.pipeline_mode<synchronous>, transform_indices = @transform_11, window_bounds = array<i64: 16, 16>}, {pipeline_mode = #tpu.pipeline_mode<synchronous>, transform_indices = @transform_12, window_bounds = array<i64: 1, 16>}, {transform_indices = @transform_13, window_bounds = array<i64: 1, 8, 32>}]} {
    %c0 = arith.constant 0 : index
    %c0_0 = arith.constant 0 : index
    %c0_1 = arith.constant 0 : index
    %0 = vector.load %arg1[%c0, %c0_0, %c0_1] : memref<2x264x64xbf16, #tpu.memory_space<vmem>>, vector<1x264x64xbf16>
    %1 = vector.shape_cast %0 : vector<1x264x64xbf16> to vector<264x64xbf16>
    %2 = arith.extf %1 : vector<264x64xbf16> to vector<264x64xf32>
    %c0_2 = arith.constant 0 : index
    %c0_3 = arith.constant 0 : index
    %3 = vector.load %arg3[%c0_2, %c0_3] : memref<1x32xf32, #tpu.memory_space<vmem>>, vector<1x32xf32>
    %4 = vector.extract_strided_slice %2 {offsets = [0, 0], sizes = [240, 64], strides = [1, 1]} : vector<264x64xf32> to vector<240x64xf32>
    %5 = arith.truncf %4 : vector<240x64xf32> to vector<240x64xbf16>
    %c0_4 = arith.constant 0 : index
    %c0_5 = arith.constant 0 : index
    %c0_6 = arith.constant 0 : index
    %6 = vector.load %arg2[%c0_4, %c0_5, %c0_6] : memref<4x64x32xbf16, #tpu.memory_space<vmem>>, vector<1x64x32xbf16>
    %7 = vector.shape_cast %6 : vector<1x64x32xbf16> to vector<64x32xbf16>
    %cst = arith.constant dense<0.000000e+00> : vector<240x32xf32>
    %8 = tpu.matmul %5, %7, %cst {dimension_numbers = #tpu.dot_dimension_numbers<[1], [0], [0], [1], [0, 0, 1, 1], [], []>} : vector<240x64xbf16>, vector<64x32xbf16>, vector<240x32xf32> -> vector<240x32xf32>
    %9 = vector.broadcast %3 : vector<1x32xf32> to vector<240x32xf32>
    %10 = arith.addf %9, %8 : vector<240x32xf32>
    %11 = vector.extract_strided_slice %2 {offsets = [1, 0], sizes = [240, 64], strides = [1, 1]} : vector<264x64xf32> to vector<240x64xf32>
    %12 = arith.truncf %11 : vector<240x64xf32> to vector<240x64xbf16>
    %c1 = arith.constant 1 : index
    %c0_7 = arith.constant 0 : index
    %c0_8 = arith.constant 0 : index
    %13 = vector.load %arg2[%c1, %c0_7, %c0_8] : memref<4x64x32xbf16, #tpu.memory_space<vmem>>, vector<1x64x32xbf16>
    %14 = vector.shape_cast %13 : vector<1x64x32xbf16> to vector<64x32xbf16>
    %cst_9 = arith.constant dense<0.000000e+00> : vector<240x32xf32>
    %15 = tpu.matmul %12, %14, %cst_9 {dimension_numbers = #tpu.dot_dimension_numbers<[1], [0], [0], [1], [0, 0, 1, 1], [], []>} : vector<240x64xbf16>, vector<64x32xbf16>, vector<240x32xf32> -> vector<240x32xf32>
    %16 = arith.addf %10, %15 : vector<240x32xf32>
    %17 = vector.extract_strided_slice %2 {offsets = [16, 0], sizes = [240, 64], strides = [1, 1]} : vector<264x64xf32> to vector<240x64xf32>
    %18 = arith.truncf %17 : vector<240x64xf32> to vector<240x64xbf16>
    %c2 = arith.constant 2 : index
    %c0_10 = arith.constant 0 : index
    %c0_11 = arith.constant 0 : index
    %19 = vector.load %arg2[%c2, %c0_10, %c0_11] : memref<4x64x32xbf16, #tpu.memory_space<vmem>>, vector<1x64x32xbf16>
    %20 = vector.shape_cast %19 : vector<1x64x32xbf16> to vector<64x32xbf16>
    %cst_12 = arith.constant dense<0.000000e+00> : vector<240x32xf32>
    %21 = tpu.matmul %18, %20, %cst_12 {dimension_numbers = #tpu.dot_dimension_numbers<[1], [0], [0], [1], [0, 0, 1, 1], [], []>} : vector<240x64xbf16>, vector<64x32xbf16>, vector<240x32xf32> -> vector<240x32xf32>
    %22 = arith.addf %16, %21 : vector<240x32xf32>
    %23 = vector.extract_strided_slice %2 {offsets = [17, 0], sizes = [240, 64], strides = [1, 1]} : vector<264x64xf32> to vector<240x64xf32>
    %24 = arith.truncf %23 : vector<240x64xf32> to vector<240x64xbf16>
    %c3 = arith.constant 3 : index
    %c0_13 = arith.constant 0 : index
    %c0_14 = arith.constant 0 : index
    %25 = vector.load %arg2[%c3, %c0_13, %c0_14] : memref<4x64x32xbf16, #tpu.memory_space<vmem>>, vector<1x64x32xbf16>
    %26 = vector.shape_cast %25 : vector<1x64x32xbf16> to vector<64x32xbf16>
    %cst_15 = arith.constant dense<0.000000e+00> : vector<240x32xf32>
    %27 = tpu.matmul %24, %26, %cst_15 {dimension_numbers = #tpu.dot_dimension_numbers<[1], [0], [0], [1], [0, 0, 1, 1], [], []>} : vector<240x64xbf16>, vector<64x32xbf16>, vector<240x32xf32> -> vector<240x32xf32>
    %28 = arith.addf %22, %27 : vector<240x32xf32>
    %cst_16 = arith.constant 0.000000e+00 : f32
    %29 = vector.broadcast %cst_16 : f32 to vector<240x32xf32>
    %30 = arith.cmpf oge, %28, %29 : vector<240x32xf32>
    %cst_17 = arith.constant 2.000000e-01 : f32
    %31 = vector.broadcast %cst_17 : f32 to vector<240x32xf32>
    %32 = arith.mulf %31, %28 : vector<240x32xf32>
    %33 = arith.select %30, %28, %32 : vector<240x32xi1>, vector<240x32xf32>
    %34 = vector.extract_strided_slice %33 {offsets = [0, 0], sizes = [176, 32], strides = [1, 1]} : vector<240x32xf32> to vector<176x32xf32>
    %35 = arith.truncf %34 : vector<176x32xf32> to vector<176x32xbf16>
    %c0_18 = arith.constant 0 : index
    %c0_19 = arith.constant 0 : index
    %36 = vector.load %arg15[%c0_18, %c0_19] : memref<176x512xbf16, #tpu.memory_space<vmem>>, vector<176x32xbf16>
    tpu.vector_store %arg15[%c0_18, %c0_19], %35 {strides = array<i32>} : memref<176x512xbf16, #tpu.memory_space<vmem>>, vector<176x32xbf16>,
    %37 = vector.extract_strided_slice %33 {offsets = [1, 0], sizes = [176, 32], strides = [1, 1]} : vector<240x32xf32> to vector<176x32xf32>
    %38 = arith.truncf %37 : vector<176x32xf32> to vector<176x32xbf16>
    %c0_20 = arith.constant 0 : index
    %c32 = arith.constant 32 : index
    %39 = vector.load %arg15[%c0_20, %c32] : memref<176x512xbf16, #tpu.memory_space<vmem>>, vector<176x32xbf16>
    tpu.vector_store %arg15[%c0_20, %c32], %38 {strides = array<i32>} : memref<176x512xbf16, #tpu.memory_space<vmem>>, vector<176x32xbf16>,
    %40 = vector.extract_strided_slice %33 {offsets = [2, 0], sizes = [176, 32], strides = [1, 1]} : vector<240x32xf32> to vector<176x32xf32>
    %41 = arith.truncf %40 : vector<176x32xf32> to vector<176x32xbf16>
    %c0_21 = arith.constant 0 : index
    %c64 = arith.constant 64 : index
    %42 = vector.load %arg15[%c0_21, %c64] : memref<176x512xbf16, #tpu.memory_space<vmem>>, vector<176x32xbf16>
    tpu.vector_store %arg15[%c0_21, %c64], %41 {strides = array<i32>} : memref<176x512xbf16, #tpu.memory_space<vmem>>, vector<176x32xbf16>,
    %43 = vector.extract_strided_slice %33 {offsets = [3, 0], sizes = [176, 32], strides = [1, 1]} : vector<240x32xf32> to vector<176x32xf32>
    %44 = arith.truncf %43 : vector<176x32xf32> to vector<176x32xbf16>
    %c0_22 = arith.constant 0 : index
    %c96 = arith.constant 96 : index
    %45 = vector.load %arg15[%c0_22, %c96] : memref<176x512xbf16, #tpu.memory_space<vmem>>, vector<176x32xbf16>
    tpu.vector_store %arg15[%c0_22, %c96], %44 {strides = array<i32>} : memref<176x512xbf16, #tpu.memory_space<vmem>>, vector<176x32xbf16>,
    %46 = vector.extract_strided_slice %33 {offsets = [16, 0], sizes = [176, 32], strides = [1, 1]} : vector<240x32xf32> to vector<176x32xf32>
    %47 = arith.truncf %46 : vector<176x32xf32> to vector<176x32xbf16>
    %c0_23 = arith.constant 0 : index
    %c128 = arith.constant 128 : index
    %48 = vector.load %arg15[%c0_23, %c128] : memref<176x512xbf16, #tpu.memory_space<vmem>>, vector<176x32xbf16>
    tpu.vector_store %arg15[%c0_23, %c128], %47 {strides = array<i32>} : memref<176x512xbf16, #tpu.memory_space<vmem>>, vector<176x32xbf16>,
    %49 = vector.extract_strided_slice %33 {offsets = [17, 0], sizes = [176, 32], strides = [1, 1]} : vector<240x32xf32> to vector<176x32xf32>
    %50 = arith.truncf %49 : vector<176x32xf32> to vector<176x32xbf16>
    %c0_24 = arith.constant 0 : index
    %c160 = arith.constant 160 : index
    %51 = vector.load %arg15[%c0_24, %c160] : memref<176x512xbf16, #tpu.memory_space<vmem>>, vector<176x32xbf16>
    tpu.vector_store %arg15[%c0_24, %c160], %50 {strides = array<i32>} : memref<176x512xbf16, #tpu.memory_space<vmem>>, vector<176x32xbf16>,
    %52 = vector.extract_strided_slice %33 {offsets = [18, 0], sizes = [176, 32], strides = [1, 1]} : vector<240x32xf32> to vector<176x32xf32>
    %53 = arith.truncf %52 : vector<176x32xf32> to vector<176x32xbf16>
    %c0_25 = arith.constant 0 : index
    %c192 = arith.constant 192 : index
    %54 = vector.load %arg15[%c0_25, %c192] : memref<176x512xbf16, #tpu.memory_space<vmem>>, vector<176x32xbf16>
    tpu.vector_store %arg15[%c0_25, %c192], %53 {strides = array<i32>} : memref<176x512xbf16, #tpu.memory_space<vmem>>, vector<176x32xbf16>,
    %55 = vector.extract_strided_slice %33 {offsets = [19, 0], sizes = [176, 32], strides = [1, 1]} : vector<240x32xf32> to vector<176x32xf32>
    %56 = arith.truncf %55 : vector<176x32xf32> to vector<176x32xbf16>
    %c0_26 = arith.constant 0 : index
    %c224 = arith.constant 224 : index
    %57 = vector.load %arg15[%c0_26, %c224] : memref<176x512xbf16, #tpu.memory_space<vmem>>, vector<176x32xbf16>
    tpu.vector_store %arg15[%c0_26, %c224], %56 {strides = array<i32>} : memref<176x512xbf16, #tpu.memory_space<vmem>>, vector<176x32xbf16>,
    %58 = vector.extract_strided_slice %33 {offsets = [32, 0], sizes = [176, 32], strides = [1, 1]} : vector<240x32xf32> to vector<176x32xf32>
    %59 = arith.truncf %58 : vector<176x32xf32> to vector<176x32xbf16>
    %c0_27 = arith.constant 0 : index
    %c256 = arith.constant 256 : index
    %60 = vector.load %arg15[%c0_27, %c256] : memref<176x512xbf16, #tpu.memory_space<vmem>>, vector<176x32xbf16>
    tpu.vector_store %arg15[%c0_27, %c256], %59 {strides = array<i32>} : memref<176x512xbf16, #tpu.memory_space<vmem>>, vector<176x32xbf16>,
    %61 = vector.extract_strided_slice %33 {offsets = [33, 0], sizes = [176, 32], strides = [1, 1]} : vector<240x32xf32> to vector<176x32xf32>
    %62 = arith.truncf %61 : vector<176x32xf32> to vector<176x32xbf16>
    %c0_28 = arith.constant 0 : index
    %c288 = arith.constant 288 : index
    %63 = vector.load %arg15[%c0_28, %c288] : memref<176x512xbf16, #tpu.memory_space<vmem>>, vector<176x32xbf16>
    tpu.vector_store %arg15[%c0_28, %c288], %62 {strides = array<i32>} : memref<176x512xbf16, #tpu.memory_space<vmem>>, vector<176x32xbf16>,
    %64 = vector.extract_strided_slice %33 {offsets = [34, 0], sizes = [176, 32], strides = [1, 1]} : vector<240x32xf32> to vector<176x32xf32>
    %65 = arith.truncf %64 : vector<176x32xf32> to vector<176x32xbf16>
    %c0_29 = arith.constant 0 : index
    %c320 = arith.constant 320 : index
    %66 = vector.load %arg15[%c0_29, %c320] : memref<176x512xbf16, #tpu.memory_space<vmem>>, vector<176x32xbf16>
    tpu.vector_store %arg15[%c0_29, %c320], %65 {strides = array<i32>} : memref<176x512xbf16, #tpu.memory_space<vmem>>, vector<176x32xbf16>,
    %67 = vector.extract_strided_slice %33 {offsets = [35, 0], sizes = [176, 32], strides = [1, 1]} : vector<240x32xf32> to vector<176x32xf32>
    %68 = arith.truncf %67 : vector<176x32xf32> to vector<176x32xbf16>
    %c0_30 = arith.constant 0 : index
    %c352 = arith.constant 352 : index
    %69 = vector.load %arg15[%c0_30, %c352] : memref<176x512xbf16, #tpu.memory_space<vmem>>, vector<176x32xbf16>
    tpu.vector_store %arg15[%c0_30, %c352], %68 {strides = array<i32>} : memref<176x512xbf16, #tpu.memory_space<vmem>>, vector<176x32xbf16>,
    %70 = vector.extract_strided_slice %33 {offsets = [48, 0], sizes = [176, 32], strides = [1, 1]} : vector<240x32xf32> to vector<176x32xf32>
    %71 = arith.truncf %70 : vector<176x32xf32> to vector<176x32xbf16>
    %c0_31 = arith.constant 0 : index
    %c384 = arith.constant 384 : index
    %72 = vector.load %arg15[%c0_31, %c384] : memref<176x512xbf16, #tpu.memory_space<vmem>>, vector<176x32xbf16>
    tpu.vector_store %arg15[%c0_31, %c384], %71 {strides = array<i32>} : memref<176x512xbf16, #tpu.memory_space<vmem>>, vector<176x32xbf16>,
    %73 = vector.extract_strided_slice %33 {offsets = [49, 0], sizes = [176, 32], strides = [1, 1]} : vector<240x32xf32> to vector<176x32xf32>
    %74 = arith.truncf %73 : vector<176x32xf32> to vector<176x32xbf16>
    %c0_32 = arith.constant 0 : index
    %c416 = arith.constant 416 : index
    %75 = vector.load %arg15[%c0_32, %c416] : memref<176x512xbf16, #tpu.memory_space<vmem>>, vector<176x32xbf16>
    tpu.vector_store %arg15[%c0_32, %c416], %74 {strides = array<i32>} : memref<176x512xbf16, #tpu.memory_space<vmem>>, vector<176x32xbf16>,
    %76 = vector.extract_strided_slice %33 {offsets = [50, 0], sizes = [176, 32], strides = [1, 1]} : vector<240x32xf32> to vector<176x32xf32>
    %77 = arith.truncf %76 : vector<176x32xf32> to vector<176x32xbf16>
    %c0_33 = arith.constant 0 : index
    %c448 = arith.constant 448 : index
    %78 = vector.load %arg15[%c0_33, %c448] : memref<176x512xbf16, #tpu.memory_space<vmem>>, vector<176x32xbf16>
    tpu.vector_store %arg15[%c0_33, %c448], %77 {strides = array<i32>} : memref<176x512xbf16, #tpu.memory_space<vmem>>, vector<176x32xbf16>,
    %79 = vector.extract_strided_slice %33 {offsets = [51, 0], sizes = [176, 32], strides = [1, 1]} : vector<240x32xf32> to vector<176x32xf32>
    %80 = arith.truncf %79 : vector<176x32xf32> to vector<176x32xbf16>
    %c0_34 = arith.constant 0 : index
    %c480 = arith.constant 480 : index
    %81 = vector.load %arg15[%c0_34, %c480] : memref<176x512xbf16, #tpu.memory_space<vmem>>, vector<176x32xbf16>
    tpu.vector_store %arg15[%c0_34, %c480], %80 {strides = array<i32>} : memref<176x512xbf16, #tpu.memory_space<vmem>>, vector<176x32xbf16>,
    %c0_35 = arith.constant 0 : index
    %c0_36 = arith.constant 0 : index
    %82 = vector.load %arg15[%c0_35, %c0_36] : memref<176x512xbf16, #tpu.memory_space<vmem>>, vector<176x512xbf16>
    %c0_37 = arith.constant 0 : index
    %c0_38 = arith.constant 0 : index
    %83 = vector.load %arg4[%c0_37, %c0_38] : memref<512x64xbf16, #tpu.memory_space<vmem>>, vector<512x64xbf16>
    %cst_39 = arith.constant dense<0.000000e+00> : vector<176x64xf32>
    %84 = tpu.matmul %82, %83, %cst_39 {dimension_numbers = #tpu.dot_dimension_numbers<[1], [0], [0], [1], [0, 0, 1, 1], [], []>} : vector<176x512xbf16>, vector<512x64xbf16>, vector<176x64xf32> -> vector<176x64xf32>
    %c0_40 = arith.constant 0 : index
    %c0_41 = arith.constant 0 : index
    %85 = vector.load %arg5[%c0_40, %c0_41] : memref<1x64xf32, #tpu.memory_space<vmem>>, vector<1x64xf32>
    %86 = vector.broadcast %85 : vector<1x64xf32> to vector<176x64xf32>
    %87 = arith.addf %84, %86 : vector<176x64xf32>
    %cst_42 = arith.constant 0.000000e+00 : f32
    %88 = vector.broadcast %cst_42 : f32 to vector<176x64xf32>
    %89 = arith.cmpf oge, %87, %88 : vector<176x64xf32>
    %cst_43 = arith.constant 2.000000e-01 : f32
    %90 = vector.broadcast %cst_43 : f32 to vector<176x64xf32>
    %91 = arith.mulf %90, %87 : vector<176x64xf32>
    %92 = arith.select %89, %87, %91 : vector<176x64xi1>, vector<176x64xf32>
    %93 = vector.extract_strided_slice %92 {offsets = [0, 0], sizes = [72, 64], strides = [1, 1]} : vector<176x64xf32> to vector<72x64xf32>
    %94 = arith.truncf %93 : vector<72x64xf32> to vector<72x64xbf16>
    %c0_44 = arith.constant 0 : index
    %c0_45 = arith.constant 0 : index
    %95 = vector.load %arg16[%c0_44, %c0_45] : memref<72x576xbf16, #tpu.memory_space<vmem>>, vector<72x64xbf16>
    tpu.vector_store %arg16[%c0_44, %c0_45], %94 {strides = array<i32>} : memref<72x576xbf16, #tpu.memory_space<vmem>>, vector<72x64xbf16>,
    %96 = vector.extract_strided_slice %92 {offsets = [2, 0], sizes = [72, 64], strides = [1, 1]} : vector<176x64xf32> to vector<72x64xf32>
    %97 = arith.truncf %96 : vector<72x64xf32> to vector<72x64xbf16>
    %c0_46 = arith.constant 0 : index
    %c64_47 = arith.constant 64 : index
    %98 = vector.load %arg16[%c0_46, %c64_47] : memref<72x576xbf16, #tpu.memory_space<vmem>>, vector<72x64xbf16>
    tpu.vector_store %arg16[%c0_46, %c64_47], %97 {strides = array<i32>} : memref<72x576xbf16, #tpu.memory_space<vmem>>, vector<72x64xbf16>,
    %99 = vector.extract_strided_slice %92 {offsets = [4, 0], sizes = [72, 64], strides = [1, 1]} : vector<176x64xf32> to vector<72x64xf32>
    %100 = arith.truncf %99 : vector<72x64xf32> to vector<72x64xbf16>
    %c0_48 = arith.constant 0 : index
    %c128_49 = arith.constant 128 : index
    %101 = vector.load %arg16[%c0_48, %c128_49] : memref<72x576xbf16, #tpu.memory_space<vmem>>, vector<72x64xbf16>
    tpu.vector_store %arg16[%c0_48, %c128_49], %100 {strides = array<i32>} : memref<72x576xbf16, #tpu.memory_space<vmem>>, vector<72x64xbf16>,
    %102 = vector.extract_strided_slice %92 {offsets = [32, 0], sizes = [72, 64], strides = [1, 1]} : vector<176x64xf32> to vector<72x64xf32>
    %103 = arith.truncf %102 : vector<72x64xf32> to vector<72x64xbf16>
    %c0_50 = arith.constant 0 : index
    %c192_51 = arith.constant 192 : index
    %104 = vector.load %arg16[%c0_50, %c192_51] : memref<72x576xbf16, #tpu.memory_space<vmem>>, vector<72x64xbf16>
    tpu.vector_store %arg16[%c0_50, %c192_51], %103 {strides = array<i32>} : memref<72x576xbf16, #tpu.memory_space<vmem>>, vector<72x64xbf16>,
    %105 = vector.extract_strided_slice %92 {offsets = [34, 0], sizes = [72, 64], strides = [1, 1]} : vector<176x64xf32> to vector<72x64xf32>
    %106 = arith.truncf %105 : vector<72x64xf32> to vector<72x64xbf16>
    %c0_52 = arith.constant 0 : index
    %c256_53 = arith.constant 256 : index
    %107 = vector.load %arg16[%c0_52, %c256_53] : memref<72x576xbf16, #tpu.memory_space<vmem>>, vector<72x64xbf16>
    tpu.vector_store %arg16[%c0_52, %c256_53], %106 {strides = array<i32>} : memref<72x576xbf16, #tpu.memory_space<vmem>>, vector<72x64xbf16>,
    %108 = vector.extract_strided_slice %92 {offsets = [36, 0], sizes = [72, 64], strides = [1, 1]} : vector<176x64xf32> to vector<72x64xf32>
    %109 = arith.truncf %108 : vector<72x64xf32> to vector<72x64xbf16>
    %c0_54 = arith.constant 0 : index
    %c320_55 = arith.constant 320 : index
    %110 = vector.load %arg16[%c0_54, %c320_55] : memref<72x576xbf16, #tpu.memory_space<vmem>>, vector<72x64xbf16>
    tpu.vector_store %arg16[%c0_54, %c320_55], %109 {strides = array<i32>} : memref<72x576xbf16, #tpu.memory_space<vmem>>, vector<72x64xbf16>,
    %111 = vector.extract_strided_slice %92 {offsets = [64, 0], sizes = [72, 64], strides = [1, 1]} : vector<176x64xf32> to vector<72x64xf32>
    %112 = arith.truncf %111 : vector<72x64xf32> to vector<72x64xbf16>
    %c0_56 = arith.constant 0 : index
    %c384_57 = arith.constant 384 : index
    %113 = vector.load %arg16[%c0_56, %c384_57] : memref<72x576xbf16, #tpu.memory_space<vmem>>, vector<72x64xbf16>
    tpu.vector_store %arg16[%c0_56, %c384_57], %112 {strides = array<i32>} : memref<72x576xbf16, #tpu.memory_space<vmem>>, vector<72x64xbf16>,
    %114 = vector.extract_strided_slice %92 {offsets = [66, 0], sizes = [72, 64], strides = [1, 1]} : vector<176x64xf32> to vector<72x64xf32>
    %115 = arith.truncf %114 : vector<72x64xf32> to vector<72x64xbf16>
    %c0_58 = arith.constant 0 : index
    %c448_59 = arith.constant 448 : index
    %116 = vector.load %arg16[%c0_58, %c448_59] : memref<72x576xbf16, #tpu.memory_space<vmem>>, vector<72x64xbf16>
    tpu.vector_store %arg16[%c0_58, %c448_59], %115 {strides = array<i32>} : memref<72x576xbf16, #tpu.memory_space<vmem>>, vector<72x64xbf16>,
    %117 = vector.extract_strided_slice %92 {offsets = [68, 0], sizes = [72, 64], strides = [1, 1]} : vector<176x64xf32> to vector<72x64xf32>
    %118 = arith.truncf %117 : vector<72x64xf32> to vector<72x64xbf16>
    %c0_60 = arith.constant 0 : index
    %c512 = arith.constant 512 : index
    %119 = vector.load %arg16[%c0_60, %c512] : memref<72x576xbf16, #tpu.memory_space<vmem>>, vector<72x64xbf16>
    tpu.vector_store %arg16[%c0_60, %c512], %118 {strides = array<i32>} : memref<72x576xbf16, #tpu.memory_space<vmem>>, vector<72x64xbf16>,
    %c0_61 = arith.constant 0 : index
    %c0_62 = arith.constant 0 : index
    %120 = vector.load %arg16[%c0_61, %c0_62] : memref<72x576xbf16, #tpu.memory_space<vmem>>, vector<72x576xbf16>
    %c0_63 = arith.constant 0 : index
    %c0_64 = arith.constant 0 : index
    %121 = vector.load %arg6[%c0_63, %c0_64] : memref<576x16xbf16, #tpu.memory_space<vmem>>, vector<576x16xbf16>
    %cst_65 = arith.constant dense<0.000000e+00> : vector<72x16xf32>
    %122 = tpu.matmul %120, %121, %cst_65 {dimension_numbers = #tpu.dot_dimension_numbers<[1], [0], [0], [1], [0, 0, 1, 1], [], []>} : vector<72x576xbf16>, vector<576x16xbf16>, vector<72x16xf32> -> vector<72x16xf32>
    %c0_66 = arith.constant 0 : index
    %c0_67 = arith.constant 0 : index
    %123 = vector.load %arg7[%c0_66, %c0_67] : memref<1x16xf32, #tpu.memory_space<vmem>>, vector<1x16xf32>
    %124 = vector.broadcast %123 : vector<1x16xf32> to vector<72x16xf32>
    %125 = arith.addf %122, %124 : vector<72x16xf32>
    %cst_68 = arith.constant 0.000000e+00 : f32
    %126 = vector.broadcast %cst_68 : f32 to vector<72x16xf32>
    %127 = arith.cmpf oge, %125, %126 : vector<72x16xf32>
    %cst_69 = arith.constant 2.000000e-01 : f32
    %128 = vector.broadcast %cst_69 : f32 to vector<72x16xf32>
    %129 = arith.mulf %128, %125 : vector<72x16xf32>
    %130 = arith.select %127, %125, %129 : vector<72x16xi1>, vector<72x16xf32>
    %c0_70 = arith.constant 0 : index
    %c0_71 = arith.constant 0 : index
    %131 = vector.load %arg8[%c0_70, %c0_71] : memref<8x72xbf16, #tpu.memory_space<vmem>>, vector<8x72xbf16>
    %132 = arith.truncf %130 : vector<72x16xf32> to vector<72x16xbf16>
    %cst_72 = arith.constant dense<0.000000e+00> : vector<8x16xf32>
    %133 = tpu.matmul %131, %132, %cst_72 {dimension_numbers = #tpu.dot_dimension_numbers<[1], [0], [0], [1], [0, 0, 1, 1], [], []>} : vector<8x72xbf16>, vector<72x16xbf16>, vector<8x16xf32> -> vector<8x16xf32>
    %c0_73 = arith.constant 0 : index
    %c0_74 = arith.constant 0 : index
    %134 = vector.load %arg9[%c0_73, %c0_74] : memref<72x8xbf16, #tpu.memory_space<vmem>>, vector<72x8xbf16>
    %135 = arith.truncf %133 : vector<8x16xf32> to vector<8x16xbf16>
    %cst_75 = arith.constant dense<0.000000e+00> : vector<72x16xf32>
    %136 = tpu.matmul %134, %135, %cst_75 {dimension_numbers = #tpu.dot_dimension_numbers<[1], [0], [0], [1], [0, 0, 1, 1], [], []>} : vector<72x8xbf16>, vector<8x16xbf16>, vector<72x16xf32> -> vector<72x16xf32>
    %137 = arith.truncf %136 : vector<72x16xf32> to vector<72x16xbf16>
    %138 = vector.extract_strided_slice %137 {offsets = [0, 0], sizes = [8, 16], strides = [1, 1]} : vector<72x16xbf16> to vector<8x16xbf16>
    %c0_76 = arith.constant 0 : index
    %c0_77 = arith.constant 0 : index
    %139 = vector.load %arg17[%c0_76, %c0_77] : memref<8x144xbf16, #tpu.memory_space<vmem>>, vector<8x16xbf16>
    tpu.vector_store %arg17[%c0_76, %c0_77], %138 {strides = array<i32>} : memref<8x144xbf16, #tpu.memory_space<vmem>>, vector<8x16xbf16>,
    %140 = vector.extract_strided_slice %137 {offsets = [8, 0], sizes = [8, 16], strides = [1, 1]} : vector<72x16xbf16> to vector<8x16xbf16>
    %c0_78 = arith.constant 0 : index
    %c16 = arith.constant 16 : index
    %141 = vector.load %arg17[%c0_78, %c16] : memref<8x144xbf16, #tpu.memory_space<vmem>>, vector<8x16xbf16>
    tpu.vector_store %arg17[%c0_78, %c16], %140 {strides = array<i32>} : memref<8x144xbf16, #tpu.memory_space<vmem>>, vector<8x16xbf16>,
    %142 = vector.extract_strided_slice %137 {offsets = [16, 0], sizes = [8, 16], strides = [1, 1]} : vector<72x16xbf16> to vector<8x16xbf16>
    %c0_79 = arith.constant 0 : index
    %c32_80 = arith.constant 32 : index
    %143 = vector.load %arg17[%c0_79, %c32_80] : memref<8x144xbf16, #tpu.memory_space<vmem>>, vector<8x16xbf16>
    tpu.vector_store %arg17[%c0_79, %c32_80], %142 {strides = array<i32>} : memref<8x144xbf16, #tpu.memory_space<vmem>>, vector<8x16xbf16>,
    %144 = vector.extract_strided_slice %137 {offsets = [24, 0], sizes = [8, 16], strides = [1, 1]} : vector<72x16xbf16> to vector<8x16xbf16>
    %c0_81 = arith.constant 0 : index
    %c48 = arith.constant 48 : index
    %145 = vector.load %arg17[%c0_81, %c48] : memref<8x144xbf16, #tpu.memory_space<vmem>>, vector<8x16xbf16>
    tpu.vector_store %arg17[%c0_81, %c48], %144 {strides = array<i32>} : memref<8x144xbf16, #tpu.memory_space<vmem>>, vector<8x16xbf16>,
    %146 = vector.extract_strided_slice %137 {offsets = [32, 0], sizes = [8, 16], strides = [1, 1]} : vector<72x16xbf16> to vector<8x16xbf16>
    %c0_82 = arith.constant 0 : index
    %c64_83 = arith.constant 64 : index
    %147 = vector.load %arg17[%c0_82, %c64_83] : memref<8x144xbf16, #tpu.memory_space<vmem>>, vector<8x16xbf16>
    tpu.vector_store %arg17[%c0_82, %c64_83], %146 {strides = array<i32>} : memref<8x144xbf16, #tpu.memory_space<vmem>>, vector<8x16xbf16>,
    %148 = vector.extract_strided_slice %137 {offsets = [40, 0], sizes = [8, 16], strides = [1, 1]} : vector<72x16xbf16> to vector<8x16xbf16>
    %c0_84 = arith.constant 0 : index
    %c80 = arith.constant 80 : index
    %149 = vector.load %arg17[%c0_84, %c80] : memref<8x144xbf16, #tpu.memory_space<vmem>>, vector<8x16xbf16>
    tpu.vector_store %arg17[%c0_84, %c80], %148 {strides = array<i32>} : memref<8x144xbf16, #tpu.memory_space<vmem>>, vector<8x16xbf16>,
    %150 = vector.extract_strided_slice %137 {offsets = [48, 0], sizes = [8, 16], strides = [1, 1]} : vector<72x16xbf16> to vector<8x16xbf16>
    %c0_85 = arith.constant 0 : index
    %c96_86 = arith.constant 96 : index
    %151 = vector.load %arg17[%c0_85, %c96_86] : memref<8x144xbf16, #tpu.memory_space<vmem>>, vector<8x16xbf16>
    tpu.vector_store %arg17[%c0_85, %c96_86], %150 {strides = array<i32>} : memref<8x144xbf16, #tpu.memory_space<vmem>>, vector<8x16xbf16>,
    %152 = vector.extract_strided_slice %137 {offsets = [56, 0], sizes = [8, 16], strides = [1, 1]} : vector<72x16xbf16> to vector<8x16xbf16>
    %c0_87 = arith.constant 0 : index
    %c112 = arith.constant 112 : index
    %153 = vector.load %arg17[%c0_87, %c112] : memref<8x144xbf16, #tpu.memory_space<vmem>>, vector<8x16xbf16>
    tpu.vector_store %arg17[%c0_87, %c112], %152 {strides = array<i32>} : memref<8x144xbf16, #tpu.memory_space<vmem>>, vector<8x16xbf16>,
    %154 = vector.extract_strided_slice %137 {offsets = [64, 0], sizes = [8, 16], strides = [1, 1]} : vector<72x16xbf16> to vector<8x16xbf16>
    %c0_88 = arith.constant 0 : index
    %c128_89 = arith.constant 128 : index
    %155 = vector.load %arg17[%c0_88, %c128_89] : memref<8x144xbf16, #tpu.memory_space<vmem>>, vector<8x16xbf16>
    tpu.vector_store %arg17[%c0_88, %c128_89], %154 {strides = array<i32>} : memref<8x144xbf16, #tpu.memory_space<vmem>>, vector<8x16xbf16>,
    %c0_90 = arith.constant 0 : index
    %c0_91 = arith.constant 0 : index
    %156 = vector.load %arg17[%c0_90, %c0_91] : memref<8x144xbf16, #tpu.memory_space<vmem>>, vector<8x144xbf16>
    %c0_92 = arith.constant 0 : index
    %c0_93 = arith.constant 0 : index
    %157 = vector.load %arg10[%c0_92, %c0_93] : memref<144x16xbf16, #tpu.memory_space<vmem>>, vector<144x16xbf16>
    %cst_94 = arith.constant dense<0.000000e+00> : vector<8x16xf32>
    %158 = tpu.matmul %156, %157, %cst_94 {dimension_numbers = #tpu.dot_dimension_numbers<[1], [0], [0], [1], [0, 0, 1, 1], [], []>} : vector<8x144xbf16>, vector<144x16xbf16>, vector<8x16xf32> -> vector<8x16xf32>
    %c0_95 = arith.constant 0 : index
    %c0_96 = arith.constant 0 : index
    %159 = vector.load %arg11[%c0_95, %c0_96] : memref<1x16xf32, #tpu.memory_space<vmem>>, vector<1x16xf32>
    %160 = vector.broadcast %159 : vector<1x16xf32> to vector<8x16xf32>
    %161 = arith.addf %158, %160 : vector<8x16xf32>
    %cst_97 = arith.constant 0.000000e+00 : f32
    %162 = vector.broadcast %cst_97 : f32 to vector<8x16xf32>
    %163 = arith.maximumf %161, %162 : vector<8x16xf32>
    %164 = arith.truncf %163 : vector<8x16xf32> to vector<8x16xbf16>
    %c0_98 = arith.constant 0 : index
    %c0_99 = arith.constant 0 : index
    %165 = vector.load %arg12[%c0_98, %c0_99] : memref<16x16xbf16, #tpu.memory_space<vmem>>, vector<16x16xbf16>
    %cst_100 = arith.constant dense<0.000000e+00> : vector<8x16xf32>
    %166 = tpu.matmul %164, %165, %cst_100 {dimension_numbers = #tpu.dot_dimension_numbers<[1], [0], [0], [1], [0, 0, 1, 1], [], []>} : vector<8x16xbf16>, vector<16x16xbf16>, vector<8x16xf32> -> vector<8x16xf32>
    %c0_101 = arith.constant 0 : index
    %c0_102 = arith.constant 0 : index
    %167 = vector.load %arg13[%c0_101, %c0_102] : memref<1x16xf32, #tpu.memory_space<vmem>>, vector<1x16xf32>
    %168 = vector.broadcast %167 : vector<1x16xf32> to vector<8x16xf32>
    %169 = arith.addf %166, %168 : vector<8x16xf32>
    %170 = arith.addf %133, %169 : vector<8x16xf32>
    %cst_103 = arith.constant 0.000000e+00 : f32
    %171 = vector.broadcast %cst_103 : f32 to vector<8x16xf32>
    %172 = arith.maximumf %170, %171 : vector<8x16xf32>
    %c1_104 = arith.constant 1 : index
    %c0_105 = arith.constant 0 : index
    %c0_106 = arith.constant 0 : index
    %173 = vector.load %arg1[%c1_104, %c0_105, %c0_106] : memref<2x264x64xbf16, #tpu.memory_space<vmem>>, vector<1x264x64xbf16>
    %174 = vector.shape_cast %173 : vector<1x264x64xbf16> to vector<264x64xbf16>
    %175 = arith.extf %174 : vector<264x64xbf16> to vector<264x64xf32>
    %c0_107 = arith.constant 0 : index
    %c0_108 = arith.constant 0 : index
    %176 = vector.load %arg3[%c0_107, %c0_108] : memref<1x32xf32, #tpu.memory_space<vmem>>, vector<1x32xf32>
    %177 = vector.extract_strided_slice %175 {offsets = [0, 0], sizes = [240, 64], strides = [1, 1]} : vector<264x64xf32> to vector<240x64xf32>
    %178 = arith.truncf %177 : vector<240x64xf32> to vector<240x64xbf16>
    %c0_109 = arith.constant 0 : index
    %c0_110 = arith.constant 0 : index
    %c0_111 = arith.constant 0 : index
    %179 = vector.load %arg2[%c0_109, %c0_110, %c0_111] : memref<4x64x32xbf16, #tpu.memory_space<vmem>>, vector<1x64x32xbf16>
    %180 = vector.shape_cast %179 : vector<1x64x32xbf16> to vector<64x32xbf16>
    %cst_112 = arith.constant dense<0.000000e+00> : vector<240x32xf32>
    %181 = tpu.matmul %178, %180, %cst_112 {dimension_numbers = #tpu.dot_dimension_numbers<[1], [0], [0], [1], [0, 0, 1, 1], [], []>} : vector<240x64xbf16>, vector<64x32xbf16>, vector<240x32xf32> -> vector<240x32xf32>
    %182 = vector.broadcast %176 : vector<1x32xf32> to vector<240x32xf32>
    %183 = arith.addf %182, %181 : vector<240x32xf32>
    %184 = vector.extract_strided_slice %175 {offsets = [1, 0], sizes = [240, 64], strides = [1, 1]} : vector<264x64xf32> to vector<240x64xf32>
    %185 = arith.truncf %184 : vector<240x64xf32> to vector<240x64xbf16>
    %c1_113 = arith.constant 1 : index
    %c0_114 = arith.constant 0 : index
    %c0_115 = arith.constant 0 : index
    %186 = vector.load %arg2[%c1_113, %c0_114, %c0_115] : memref<4x64x32xbf16, #tpu.memory_space<vmem>>, vector<1x64x32xbf16>
    %187 = vector.shape_cast %186 : vector<1x64x32xbf16> to vector<64x32xbf16>
    %cst_116 = arith.constant dense<0.000000e+00> : vector<240x32xf32>
    %188 = tpu.matmul %185, %187, %cst_116 {dimension_numbers = #tpu.dot_dimension_numbers<[1], [0], [0], [1], [0, 0, 1, 1], [], []>} : vector<240x64xbf16>, vector<64x32xbf16>, vector<240x32xf32> -> vector<240x32xf32>
    %189 = arith.addf %183, %188 : vector<240x32xf32>
    %190 = vector.extract_strided_slice %175 {offsets = [16, 0], sizes = [240, 64], strides = [1, 1]} : vector<264x64xf32> to vector<240x64xf32>
    %191 = arith.truncf %190 : vector<240x64xf32> to vector<240x64xbf16>
    %c2_117 = arith.constant 2 : index
    %c0_118 = arith.constant 0 : index
    %c0_119 = arith.constant 0 : index
    %192 = vector.load %arg2[%c2_117, %c0_118, %c0_119] : memref<4x64x32xbf16, #tpu.memory_space<vmem>>, vector<1x64x32xbf16>
    %193 = vector.shape_cast %192 : vector<1x64x32xbf16> to vector<64x32xbf16>
    %cst_120 = arith.constant dense<0.000000e+00> : vector<240x32xf32>
    %194 = tpu.matmul %191, %193, %cst_120 {dimension_numbers = #tpu.dot_dimension_numbers<[1], [0], [0], [1], [0, 0, 1, 1], [], []>} : vector<240x64xbf16>, vector<64x32xbf16>, vector<240x32xf32> -> vector<240x32xf32>
    %195 = arith.addf %189, %194 : vector<240x32xf32>
    %196 = vector.extract_strided_slice %175 {offsets = [17, 0], sizes = [240, 64], strides = [1, 1]} : vector<264x64xf32> to vector<240x64xf32>
    %197 = arith.truncf %196 : vector<240x64xf32> to vector<240x64xbf16>
    %c3_121 = arith.constant 3 : index
    %c0_122 = arith.constant 0 : index
    %c0_123 = arith.constant 0 : index
    %198 = vector.load %arg2[%c3_121, %c0_122, %c0_123] : memref<4x64x32xbf16, #tpu.memory_space<vmem>>, vector<1x64x32xbf16>
    %199 = vector.shape_cast %198 : vector<1x64x32xbf16> to vector<64x32xbf16>
    %cst_124 = arith.constant dense<0.000000e+00> : vector<240x32xf32>
    %200 = tpu.matmul %197, %199, %cst_124 {dimension_numbers = #tpu.dot_dimension_numbers<[1], [0], [0], [1], [0, 0, 1, 1], [], []>} : vector<240x64xbf16>, vector<64x32xbf16>, vector<240x32xf32> -> vector<240x32xf32>
    %201 = arith.addf %195, %200 : vector<240x32xf32>
    %cst_125 = arith.constant 0.000000e+00 : f32
    %202 = vector.broadcast %cst_125 : f32 to vector<240x32xf32>
    %203 = arith.cmpf oge, %201, %202 : vector<240x32xf32>
    %cst_126 = arith.constant 2.000000e-01 : f32
    %204 = vector.broadcast %cst_126 : f32 to vector<240x32xf32>
    %205 = arith.mulf %204, %201 : vector<240x32xf32>
    %206 = arith.select %203, %201, %205 : vector<240x32xi1>, vector<240x32xf32>
    %207 = vector.extract_strided_slice %206 {offsets = [0, 0], sizes = [176, 32], strides = [1, 1]} : vector<240x32xf32> to vector<176x32xf32>
    %208 = arith.truncf %207 : vector<176x32xf32> to vector<176x32xbf16>
    %c0_127 = arith.constant 0 : index
    %c0_128 = arith.constant 0 : index
    %209 = vector.load %arg15[%c0_127, %c0_128] : memref<176x512xbf16, #tpu.memory_space<vmem>>, vector<176x32xbf16>
    tpu.vector_store %arg15[%c0_127, %c0_128], %208 {strides = array<i32>} : memref<176x512xbf16, #tpu.memory_space<vmem>>, vector<176x32xbf16>,
    %210 = vector.extract_strided_slice %206 {offsets = [1, 0], sizes = [176, 32], strides = [1, 1]} : vector<240x32xf32> to vector<176x32xf32>
    %211 = arith.truncf %210 : vector<176x32xf32> to vector<176x32xbf16>
    %c0_129 = arith.constant 0 : index
    %c32_130 = arith.constant 32 : index
    %212 = vector.load %arg15[%c0_129, %c32_130] : memref<176x512xbf16, #tpu.memory_space<vmem>>, vector<176x32xbf16>
    tpu.vector_store %arg15[%c0_129, %c32_130], %211 {strides = array<i32>} : memref<176x512xbf16, #tpu.memory_space<vmem>>, vector<176x32xbf16>,
    %213 = vector.extract_strided_slice %206 {offsets = [2, 0], sizes = [176, 32], strides = [1, 1]} : vector<240x32xf32> to vector<176x32xf32>
    %214 = arith.truncf %213 : vector<176x32xf32> to vector<176x32xbf16>
    %c0_131 = arith.constant 0 : index
    %c64_132 = arith.constant 64 : index
    %215 = vector.load %arg15[%c0_131, %c64_132] : memref<176x512xbf16, #tpu.memory_space<vmem>>, vector<176x32xbf16>
    tpu.vector_store %arg15[%c0_131, %c64_132], %214 {strides = array<i32>} : memref<176x512xbf16, #tpu.memory_space<vmem>>, vector<176x32xbf16>,
    %216 = vector.extract_strided_slice %206 {offsets = [3, 0], sizes = [176, 32], strides = [1, 1]} : vector<240x32xf32> to vector<176x32xf32>
    %217 = arith.truncf %216 : vector<176x32xf32> to vector<176x32xbf16>
    %c0_133 = arith.constant 0 : index
    %c96_134 = arith.constant 96 : index
    %218 = vector.load %arg15[%c0_133, %c96_134] : memref<176x512xbf16, #tpu.memory_space<vmem>>, vector<176x32xbf16>
    tpu.vector_store %arg15[%c0_133, %c96_134], %217 {strides = array<i32>} : memref<176x512xbf16, #tpu.memory_space<vmem>>, vector<176x32xbf16>,
    %219 = vector.extract_strided_slice %206 {offsets = [16, 0], sizes = [176, 32], strides = [1, 1]} : vector<240x32xf32> to vector<176x32xf32>
    %220 = arith.truncf %219 : vector<176x32xf32> to vector<176x32xbf16>
    %c0_135 = arith.constant 0 : index
    %c128_136 = arith.constant 128 : index
    %221 = vector.load %arg15[%c0_135, %c128_136] : memref<176x512xbf16, #tpu.memory_space<vmem>>, vector<176x32xbf16>
    tpu.vector_store %arg15[%c0_135, %c128_136], %220 {strides = array<i32>} : memref<176x512xbf16, #tpu.memory_space<vmem>>, vector<176x32xbf16>,
    %222 = vector.extract_strided_slice %206 {offsets = [17, 0], sizes = [176, 32], strides = [1, 1]} : vector<240x32xf32> to vector<176x32xf32>
    %223 = arith.truncf %222 : vector<176x32xf32> to vector<176x32xbf16>
    %c0_137 = arith.constant 0 : index
    %c160_138 = arith.constant 160 : index
    %224 = vector.load %arg15[%c0_137, %c160_138] : memref<176x512xbf16, #tpu.memory_space<vmem>>, vector<176x32xbf16>
    tpu.vector_store %arg15[%c0_137, %c160_138], %223 {strides = array<i32>} : memref<176x512xbf16, #tpu.memory_space<vmem>>, vector<176x32xbf16>,
    %225 = vector.extract_strided_slice %206 {offsets = [18, 0], sizes = [176, 32], strides = [1, 1]} : vector<240x32xf32> to vector<176x32xf32>
    %226 = arith.truncf %225 : vector<176x32xf32> to vector<176x32xbf16>
    %c0_139 = arith.constant 0 : index
    %c192_140 = arith.constant 192 : index
    %227 = vector.load %arg15[%c0_139, %c192_140] : memref<176x512xbf16, #tpu.memory_space<vmem>>, vector<176x32xbf16>
    tpu.vector_store %arg15[%c0_139, %c192_140], %226 {strides = array<i32>} : memref<176x512xbf16, #tpu.memory_space<vmem>>, vector<176x32xbf16>,
    %228 = vector.extract_strided_slice %206 {offsets = [19, 0], sizes = [176, 32], strides = [1, 1]} : vector<240x32xf32> to vector<176x32xf32>
    %229 = arith.truncf %228 : vector<176x32xf32> to vector<176x32xbf16>
    %c0_141 = arith.constant 0 : index
    %c224_142 = arith.constant 224 : index
    %230 = vector.load %arg15[%c0_141, %c224_142] : memref<176x512xbf16, #tpu.memory_space<vmem>>, vector<176x32xbf16>
    tpu.vector_store %arg15[%c0_141, %c224_142], %229 {strides = array<i32>} : memref<176x512xbf16, #tpu.memory_space<vmem>>, vector<176x32xbf16>,
    %231 = vector.extract_strided_slice %206 {offsets = [32, 0], sizes = [176, 32], strides = [1, 1]} : vector<240x32xf32> to vector<176x32xf32>
    %232 = arith.truncf %231 : vector<176x32xf32> to vector<176x32xbf16>
    %c0_143 = arith.constant 0 : index
    %c256_144 = arith.constant 256 : index
    %233 = vector.load %arg15[%c0_143, %c256_144] : memref<176x512xbf16, #tpu.memory_space<vmem>>, vector<176x32xbf16>
    tpu.vector_store %arg15[%c0_143, %c256_144], %232 {strides = array<i32>} : memref<176x512xbf16, #tpu.memory_space<vmem>>, vector<176x32xbf16>,
    %234 = vector.extract_strided_slice %206 {offsets = [33, 0], sizes = [176, 32], strides = [1, 1]} : vector<240x32xf32> to vector<176x32xf32>
    %235 = arith.truncf %234 : vector<176x32xf32> to vector<176x32xbf16>
    %c0_145 = arith.constant 0 : index
    %c288_146 = arith.constant 288 : index
    %236 = vector.load %arg15[%c0_145, %c288_146] : memref<176x512xbf16, #tpu.memory_space<vmem>>, vector<176x32xbf16>
    tpu.vector_store %arg15[%c0_145, %c288_146], %235 {strides = array<i32>} : memref<176x512xbf16, #tpu.memory_space<vmem>>, vector<176x32xbf16>,
    %237 = vector.extract_strided_slice %206 {offsets = [34, 0], sizes = [176, 32], strides = [1, 1]} : vector<240x32xf32> to vector<176x32xf32>
    %238 = arith.truncf %237 : vector<176x32xf32> to vector<176x32xbf16>
    %c0_147 = arith.constant 0 : index
    %c320_148 = arith.constant 320 : index
    %239 = vector.load %arg15[%c0_147, %c320_148] : memref<176x512xbf16, #tpu.memory_space<vmem>>, vector<176x32xbf16>
    tpu.vector_store %arg15[%c0_147, %c320_148], %238 {strides = array<i32>} : memref<176x512xbf16, #tpu.memory_space<vmem>>, vector<176x32xbf16>,
    %240 = vector.extract_strided_slice %206 {offsets = [35, 0], sizes = [176, 32], strides = [1, 1]} : vector<240x32xf32> to vector<176x32xf32>
    %241 = arith.truncf %240 : vector<176x32xf32> to vector<176x32xbf16>
    %c0_149 = arith.constant 0 : index
    %c352_150 = arith.constant 352 : index
    %242 = vector.load %arg15[%c0_149, %c352_150] : memref<176x512xbf16, #tpu.memory_space<vmem>>, vector<176x32xbf16>
    tpu.vector_store %arg15[%c0_149, %c352_150], %241 {strides = array<i32>} : memref<176x512xbf16, #tpu.memory_space<vmem>>, vector<176x32xbf16>,
    %243 = vector.extract_strided_slice %206 {offsets = [48, 0], sizes = [176, 32], strides = [1, 1]} : vector<240x32xf32> to vector<176x32xf32>
    %244 = arith.truncf %243 : vector<176x32xf32> to vector<176x32xbf16>
    %c0_151 = arith.constant 0 : index
    %c384_152 = arith.constant 384 : index
    %245 = vector.load %arg15[%c0_151, %c384_152] : memref<176x512xbf16, #tpu.memory_space<vmem>>, vector<176x32xbf16>
    tpu.vector_store %arg15[%c0_151, %c384_152], %244 {strides = array<i32>} : memref<176x512xbf16, #tpu.memory_space<vmem>>, vector<176x32xbf16>,
    %246 = vector.extract_strided_slice %206 {offsets = [49, 0], sizes = [176, 32], strides = [1, 1]} : vector<240x32xf32> to vector<176x32xf32>
    %247 = arith.truncf %246 : vector<176x32xf32> to vector<176x32xbf16>
    %c0_153 = arith.constant 0 : index
    %c416_154 = arith.constant 416 : index
    %248 = vector.load %arg15[%c0_153, %c416_154] : memref<176x512xbf16, #tpu.memory_space<vmem>>, vector<176x32xbf16>
    tpu.vector_store %arg15[%c0_153, %c416_154], %247 {strides = array<i32>} : memref<176x512xbf16, #tpu.memory_space<vmem>>, vector<176x32xbf16>,
    %249 = vector.extract_strided_slice %206 {offsets = [50, 0], sizes = [176, 32], strides = [1, 1]} : vector<240x32xf32> to vector<176x32xf32>
    %250 = arith.truncf %249 : vector<176x32xf32> to vector<176x32xbf16>
    %c0_155 = arith.constant 0 : index
    %c448_156 = arith.constant 448 : index
    %251 = vector.load %arg15[%c0_155, %c448_156] : memref<176x512xbf16, #tpu.memory_space<vmem>>, vector<176x32xbf16>
    tpu.vector_store %arg15[%c0_155, %c448_156], %250 {strides = array<i32>} : memref<176x512xbf16, #tpu.memory_space<vmem>>, vector<176x32xbf16>,
    %252 = vector.extract_strided_slice %206 {offsets = [51, 0], sizes = [176, 32], strides = [1, 1]} : vector<240x32xf32> to vector<176x32xf32>
    %253 = arith.truncf %252 : vector<176x32xf32> to vector<176x32xbf16>
    %c0_157 = arith.constant 0 : index
    %c480_158 = arith.constant 480 : index
    %254 = vector.load %arg15[%c0_157, %c480_158] : memref<176x512xbf16, #tpu.memory_space<vmem>>, vector<176x32xbf16>
    tpu.vector_store %arg15[%c0_157, %c480_158], %253 {strides = array<i32>} : memref<176x512xbf16, #tpu.memory_space<vmem>>, vector<176x32xbf16>,
    %c0_159 = arith.constant 0 : index
    %c0_160 = arith.constant 0 : index
    %255 = vector.load %arg15[%c0_159, %c0_160] : memref<176x512xbf16, #tpu.memory_space<vmem>>, vector<176x512xbf16>
    %c0_161 = arith.constant 0 : index
    %c0_162 = arith.constant 0 : index
    %256 = vector.load %arg4[%c0_161, %c0_162] : memref<512x64xbf16, #tpu.memory_space<vmem>>, vector<512x64xbf16>
    %cst_163 = arith.constant dense<0.000000e+00> : vector<176x64xf32>
    %257 = tpu.matmul %255, %256, %cst_163 {dimension_numbers = #tpu.dot_dimension_numbers<[1], [0], [0], [1], [0, 0, 1, 1], [], []>} : vector<176x512xbf16>, vector<512x64xbf16>, vector<176x64xf32> -> vector<176x64xf32>
    %c0_164 = arith.constant 0 : index
    %c0_165 = arith.constant 0 : index
    %258 = vector.load %arg5[%c0_164, %c0_165] : memref<1x64xf32, #tpu.memory_space<vmem>>, vector<1x64xf32>
    %259 = vector.broadcast %258 : vector<1x64xf32> to vector<176x64xf32>
    %260 = arith.addf %257, %259 : vector<176x64xf32>
    %cst_166 = arith.constant 0.000000e+00 : f32
    %261 = vector.broadcast %cst_166 : f32 to vector<176x64xf32>
    %262 = arith.cmpf oge, %260, %261 : vector<176x64xf32>
    %cst_167 = arith.constant 2.000000e-01 : f32
    %263 = vector.broadcast %cst_167 : f32 to vector<176x64xf32>
    %264 = arith.mulf %263, %260 : vector<176x64xf32>
    %265 = arith.select %262, %260, %264 : vector<176x64xi1>, vector<176x64xf32>
    %266 = vector.extract_strided_slice %265 {offsets = [0, 0], sizes = [72, 64], strides = [1, 1]} : vector<176x64xf32> to vector<72x64xf32>
    %267 = arith.truncf %266 : vector<72x64xf32> to vector<72x64xbf16>
    %c0_168 = arith.constant 0 : index
    %c0_169 = arith.constant 0 : index
    %268 = vector.load %arg16[%c0_168, %c0_169] : memref<72x576xbf16, #tpu.memory_space<vmem>>, vector<72x64xbf16>
    tpu.vector_store %arg16[%c0_168, %c0_169], %267 {strides = array<i32>} : memref<72x576xbf16, #tpu.memory_space<vmem>>, vector<72x64xbf16>,
    %269 = vector.extract_strided_slice %265 {offsets = [2, 0], sizes = [72, 64], strides = [1, 1]} : vector<176x64xf32> to vector<72x64xf32>
    %270 = arith.truncf %269 : vector<72x64xf32> to vector<72x64xbf16>
    %c0_170 = arith.constant 0 : index
    %c64_171 = arith.constant 64 : index
    %271 = vector.load %arg16[%c0_170, %c64_171] : memref<72x576xbf16, #tpu.memory_space<vmem>>, vector<72x64xbf16>
    tpu.vector_store %arg16[%c0_170, %c64_171], %270 {strides = array<i32>} : memref<72x576xbf16, #tpu.memory_space<vmem>>, vector<72x64xbf16>,
    %272 = vector.extract_strided_slice %265 {offsets = [4, 0], sizes = [72, 64], strides = [1, 1]} : vector<176x64xf32> to vector<72x64xf32>
    %273 = arith.truncf %272 : vector<72x64xf32> to vector<72x64xbf16>
    %c0_172 = arith.constant 0 : index
    %c128_173 = arith.constant 128 : index
    %274 = vector.load %arg16[%c0_172, %c128_173] : memref<72x576xbf16, #tpu.memory_space<vmem>>, vector<72x64xbf16>
    tpu.vector_store %arg16[%c0_172, %c128_173], %273 {strides = array<i32>} : memref<72x576xbf16, #tpu.memory_space<vmem>>, vector<72x64xbf16>,
    %275 = vector.extract_strided_slice %265 {offsets = [32, 0], sizes = [72, 64], strides = [1, 1]} : vector<176x64xf32> to vector<72x64xf32>
    %276 = arith.truncf %275 : vector<72x64xf32> to vector<72x64xbf16>
    %c0_174 = arith.constant 0 : index
    %c192_175 = arith.constant 192 : index
    %277 = vector.load %arg16[%c0_174, %c192_175] : memref<72x576xbf16, #tpu.memory_space<vmem>>, vector<72x64xbf16>
    tpu.vector_store %arg16[%c0_174, %c192_175], %276 {strides = array<i32>} : memref<72x576xbf16, #tpu.memory_space<vmem>>, vector<72x64xbf16>,
    %278 = vector.extract_strided_slice %265 {offsets = [34, 0], sizes = [72, 64], strides = [1, 1]} : vector<176x64xf32> to vector<72x64xf32>
    %279 = arith.truncf %278 : vector<72x64xf32> to vector<72x64xbf16>
    %c0_176 = arith.constant 0 : index
    %c256_177 = arith.constant 256 : index
    %280 = vector.load %arg16[%c0_176, %c256_177] : memref<72x576xbf16, #tpu.memory_space<vmem>>, vector<72x64xbf16>
    tpu.vector_store %arg16[%c0_176, %c256_177], %279 {strides = array<i32>} : memref<72x576xbf16, #tpu.memory_space<vmem>>, vector<72x64xbf16>,
    %281 = vector.extract_strided_slice %265 {offsets = [36, 0], sizes = [72, 64], strides = [1, 1]} : vector<176x64xf32> to vector<72x64xf32>
    %282 = arith.truncf %281 : vector<72x64xf32> to vector<72x64xbf16>
    %c0_178 = arith.constant 0 : index
    %c320_179 = arith.constant 320 : index
    %283 = vector.load %arg16[%c0_178, %c320_179] : memref<72x576xbf16, #tpu.memory_space<vmem>>, vector<72x64xbf16>
    tpu.vector_store %arg16[%c0_178, %c320_179], %282 {strides = array<i32>} : memref<72x576xbf16, #tpu.memory_space<vmem>>, vector<72x64xbf16>,
    %284 = vector.extract_strided_slice %265 {offsets = [64, 0], sizes = [72, 64], strides = [1, 1]} : vector<176x64xf32> to vector<72x64xf32>
    %285 = arith.truncf %284 : vector<72x64xf32> to vector<72x64xbf16>
    %c0_180 = arith.constant 0 : index
    %c384_181 = arith.constant 384 : index
    %286 = vector.load %arg16[%c0_180, %c384_181] : memref<72x576xbf16, #tpu.memory_space<vmem>>, vector<72x64xbf16>
    tpu.vector_store %arg16[%c0_180, %c384_181], %285 {strides = array<i32>} : memref<72x576xbf16, #tpu.memory_space<vmem>>, vector<72x64xbf16>,
    %287 = vector.extract_strided_slice %265 {offsets = [66, 0], sizes = [72, 64], strides = [1, 1]} : vector<176x64xf32> to vector<72x64xf32>
    %288 = arith.truncf %287 : vector<72x64xf32> to vector<72x64xbf16>
    %c0_182 = arith.constant 0 : index
    %c448_183 = arith.constant 448 : index
    %289 = vector.load %arg16[%c0_182, %c448_183] : memref<72x576xbf16, #tpu.memory_space<vmem>>, vector<72x64xbf16>
    tpu.vector_store %arg16[%c0_182, %c448_183], %288 {strides = array<i32>} : memref<72x576xbf16, #tpu.memory_space<vmem>>, vector<72x64xbf16>,
    %290 = vector.extract_strided_slice %265 {offsets = [68, 0], sizes = [72, 64], strides = [1, 1]} : vector<176x64xf32> to vector<72x64xf32>
    %291 = arith.truncf %290 : vector<72x64xf32> to vector<72x64xbf16>
    %c0_184 = arith.constant 0 : index
    %c512_185 = arith.constant 512 : index
    %292 = vector.load %arg16[%c0_184, %c512_185] : memref<72x576xbf16, #tpu.memory_space<vmem>>, vector<72x64xbf16>
    tpu.vector_store %arg16[%c0_184, %c512_185], %291 {strides = array<i32>} : memref<72x576xbf16, #tpu.memory_space<vmem>>, vector<72x64xbf16>,
    %c0_186 = arith.constant 0 : index
    %c0_187 = arith.constant 0 : index
    %293 = vector.load %arg16[%c0_186, %c0_187] : memref<72x576xbf16, #tpu.memory_space<vmem>>, vector<72x576xbf16>
    %c0_188 = arith.constant 0 : index
    %c0_189 = arith.constant 0 : index
    %294 = vector.load %arg6[%c0_188, %c0_189] : memref<576x16xbf16, #tpu.memory_space<vmem>>, vector<576x16xbf16>
    %cst_190 = arith.constant dense<0.000000e+00> : vector<72x16xf32>
    %295 = tpu.matmul %293, %294, %cst_190 {dimension_numbers = #tpu.dot_dimension_numbers<[1], [0], [0], [1], [0, 0, 1, 1], [], []>} : vector<72x576xbf16>, vector<576x16xbf16>, vector<72x16xf32> -> vector<72x16xf32>
    %c0_191 = arith.constant 0 : index
    %c0_192 = arith.constant 0 : index
    %296 = vector.load %arg7[%c0_191, %c0_192] : memref<1x16xf32, #tpu.memory_space<vmem>>, vector<1x16xf32>
    %297 = vector.broadcast %296 : vector<1x16xf32> to vector<72x16xf32>
    %298 = arith.addf %295, %297 : vector<72x16xf32>
    %cst_193 = arith.constant 0.000000e+00 : f32
    %299 = vector.broadcast %cst_193 : f32 to vector<72x16xf32>
    %300 = arith.cmpf oge, %298, %299 : vector<72x16xf32>
    %cst_194 = arith.constant 2.000000e-01 : f32
    %301 = vector.broadcast %cst_194 : f32 to vector<72x16xf32>
    %302 = arith.mulf %301, %298 : vector<72x16xf32>
    %303 = arith.select %300, %298, %302 : vector<72x16xi1>, vector<72x16xf32>
    %c0_195 = arith.constant 0 : index
    %c0_196 = arith.constant 0 : index
    %304 = vector.load %arg8[%c0_195, %c0_196] : memref<8x72xbf16, #tpu.memory_space<vmem>>, vector<8x72xbf16>
    %305 = arith.truncf %303 : vector<72x16xf32> to vector<72x16xbf16>
    %cst_197 = arith.constant dense<0.000000e+00> : vector<8x16xf32>
    %306 = tpu.matmul %304, %305, %cst_197 {dimension_numbers = #tpu.dot_dimension_numbers<[1], [0], [0], [1], [0, 0, 1, 1], [], []>} : vector<8x72xbf16>, vector<72x16xbf16>, vector<8x16xf32> -> vector<8x16xf32>
    %c0_198 = arith.constant 0 : index
    %c0_199 = arith.constant 0 : index
    %307 = vector.load %arg9[%c0_198, %c0_199] : memref<72x8xbf16, #tpu.memory_space<vmem>>, vector<72x8xbf16>
    %308 = arith.truncf %306 : vector<8x16xf32> to vector<8x16xbf16>
    %cst_200 = arith.constant dense<0.000000e+00> : vector<72x16xf32>
    %309 = tpu.matmul %307, %308, %cst_200 {dimension_numbers = #tpu.dot_dimension_numbers<[1], [0], [0], [1], [0, 0, 1, 1], [], []>} : vector<72x8xbf16>, vector<8x16xbf16>, vector<72x16xf32> -> vector<72x16xf32>
    %310 = arith.truncf %309 : vector<72x16xf32> to vector<72x16xbf16>
    %311 = vector.extract_strided_slice %310 {offsets = [0, 0], sizes = [8, 16], strides = [1, 1]} : vector<72x16xbf16> to vector<8x16xbf16>
    %c0_201 = arith.constant 0 : index
    %c0_202 = arith.constant 0 : index
    %312 = vector.load %arg17[%c0_201, %c0_202] : memref<8x144xbf16, #tpu.memory_space<vmem>>, vector<8x16xbf16>
    tpu.vector_store %arg17[%c0_201, %c0_202], %311 {strides = array<i32>} : memref<8x144xbf16, #tpu.memory_space<vmem>>, vector<8x16xbf16>,
    %313 = vector.extract_strided_slice %310 {offsets = [8, 0], sizes = [8, 16], strides = [1, 1]} : vector<72x16xbf16> to vector<8x16xbf16>
    %c0_203 = arith.constant 0 : index
    %c16_204 = arith.constant 16 : index
    %314 = vector.load %arg17[%c0_203, %c16_204] : memref<8x144xbf16, #tpu.memory_space<vmem>>, vector<8x16xbf16>
    tpu.vector_store %arg17[%c0_203, %c16_204], %313 {strides = array<i32>} : memref<8x144xbf16, #tpu.memory_space<vmem>>, vector<8x16xbf16>,
    %315 = vector.extract_strided_slice %310 {offsets = [16, 0], sizes = [8, 16], strides = [1, 1]} : vector<72x16xbf16> to vector<8x16xbf16>
    %c0_205 = arith.constant 0 : index
    %c32_206 = arith.constant 32 : index
    %316 = vector.load %arg17[%c0_205, %c32_206] : memref<8x144xbf16, #tpu.memory_space<vmem>>, vector<8x16xbf16>
    tpu.vector_store %arg17[%c0_205, %c32_206], %315 {strides = array<i32>} : memref<8x144xbf16, #tpu.memory_space<vmem>>, vector<8x16xbf16>,
    %317 = vector.extract_strided_slice %310 {offsets = [24, 0], sizes = [8, 16], strides = [1, 1]} : vector<72x16xbf16> to vector<8x16xbf16>
    %c0_207 = arith.constant 0 : index
    %c48_208 = arith.constant 48 : index
    %318 = vector.load %arg17[%c0_207, %c48_208] : memref<8x144xbf16, #tpu.memory_space<vmem>>, vector<8x16xbf16>
    tpu.vector_store %arg17[%c0_207, %c48_208], %317 {strides = array<i32>} : memref<8x144xbf16, #tpu.memory_space<vmem>>, vector<8x16xbf16>,
    %319 = vector.extract_strided_slice %310 {offsets = [32, 0], sizes = [8, 16], strides = [1, 1]} : vector<72x16xbf16> to vector<8x16xbf16>
    %c0_209 = arith.constant 0 : index
    %c64_210 = arith.constant 64 : index
    %320 = vector.load %arg17[%c0_209, %c64_210] : memref<8x144xbf16, #tpu.memory_space<vmem>>, vector<8x16xbf16>
    tpu.vector_store %arg17[%c0_209, %c64_210], %319 {strides = array<i32>} : memref<8x144xbf16, #tpu.memory_space<vmem>>, vector<8x16xbf16>,
    %321 = vector.extract_strided_slice %310 {offsets = [40, 0], sizes = [8, 16], strides = [1, 1]} : vector<72x16xbf16> to vector<8x16xbf16>
    %c0_211 = arith.constant 0 : index
    %c80_212 = arith.constant 80 : index
    %322 = vector.load %arg17[%c0_211, %c80_212] : memref<8x144xbf16, #tpu.memory_space<vmem>>, vector<8x16xbf16>
    tpu.vector_store %arg17[%c0_211, %c80_212], %321 {strides = array<i32>} : memref<8x144xbf16, #tpu.memory_space<vmem>>, vector<8x16xbf16>,
    %323 = vector.extract_strided_slice %310 {offsets = [48, 0], sizes = [8, 16], strides = [1, 1]} : vector<72x16xbf16> to vector<8x16xbf16>
    %c0_213 = arith.constant 0 : index
    %c96_214 = arith.constant 96 : index
    %324 = vector.load %arg17[%c0_213, %c96_214] : memref<8x144xbf16, #tpu.memory_space<vmem>>, vector<8x16xbf16>
    tpu.vector_store %arg17[%c0_213, %c96_214], %323 {strides = array<i32>} : memref<8x144xbf16, #tpu.memory_space<vmem>>, vector<8x16xbf16>,
    %325 = vector.extract_strided_slice %310 {offsets = [56, 0], sizes = [8, 16], strides = [1, 1]} : vector<72x16xbf16> to vector<8x16xbf16>
    %c0_215 = arith.constant 0 : index
    %c112_216 = arith.constant 112 : index
    %326 = vector.load %arg17[%c0_215, %c112_216] : memref<8x144xbf16, #tpu.memory_space<vmem>>, vector<8x16xbf16>
    tpu.vector_store %arg17[%c0_215, %c112_216], %325 {strides = array<i32>} : memref<8x144xbf16, #tpu.memory_space<vmem>>, vector<8x16xbf16>,
    %327 = vector.extract_strided_slice %310 {offsets = [64, 0], sizes = [8, 16], strides = [1, 1]} : vector<72x16xbf16> to vector<8x16xbf16>
    %c0_217 = arith.constant 0 : index
    %c128_218 = arith.constant 128 : index
    %328 = vector.load %arg17[%c0_217, %c128_218] : memref<8x144xbf16, #tpu.memory_space<vmem>>, vector<8x16xbf16>
    tpu.vector_store %arg17[%c0_217, %c128_218], %327 {strides = array<i32>} : memref<8x144xbf16, #tpu.memory_space<vmem>>, vector<8x16xbf16>,
    %c0_219 = arith.constant 0 : index
    %c0_220 = arith.constant 0 : index
    %329 = vector.load %arg17[%c0_219, %c0_220] : memref<8x144xbf16, #tpu.memory_space<vmem>>, vector<8x144xbf16>
    %c0_221 = arith.constant 0 : index
    %c0_222 = arith.constant 0 : index
    %330 = vector.load %arg10[%c0_221, %c0_222] : memref<144x16xbf16, #tpu.memory_space<vmem>>, vector<144x16xbf16>
    %cst_223 = arith.constant dense<0.000000e+00> : vector<8x16xf32>
    %331 = tpu.matmul %329, %330, %cst_223 {dimension_numbers = #tpu.dot_dimension_numbers<[1], [0], [0], [1], [0, 0, 1, 1], [], []>} : vector<8x144xbf16>, vector<144x16xbf16>, vector<8x16xf32> -> vector<8x16xf32>
    %c0_224 = arith.constant 0 : index
    %c0_225 = arith.constant 0 : index
    %332 = vector.load %arg11[%c0_224, %c0_225] : memref<1x16xf32, #tpu.memory_space<vmem>>, vector<1x16xf32>
    %333 = vector.broadcast %332 : vector<1x16xf32> to vector<8x16xf32>
    %334 = arith.addf %331, %333 : vector<8x16xf32>
    %cst_226 = arith.constant 0.000000e+00 : f32
    %335 = vector.broadcast %cst_226 : f32 to vector<8x16xf32>
    %336 = arith.maximumf %334, %335 : vector<8x16xf32>
    %337 = arith.truncf %336 : vector<8x16xf32> to vector<8x16xbf16>
    %c0_227 = arith.constant 0 : index
    %c0_228 = arith.constant 0 : index
    %338 = vector.load %arg12[%c0_227, %c0_228] : memref<16x16xbf16, #tpu.memory_space<vmem>>, vector<16x16xbf16>
    %cst_229 = arith.constant dense<0.000000e+00> : vector<8x16xf32>
    %339 = tpu.matmul %337, %338, %cst_229 {dimension_numbers = #tpu.dot_dimension_numbers<[1], [0], [0], [1], [0, 0, 1, 1], [], []>} : vector<8x16xbf16>, vector<16x16xbf16>, vector<8x16xf32> -> vector<8x16xf32>
    %c0_230 = arith.constant 0 : index
    %c0_231 = arith.constant 0 : index
    %340 = vector.load %arg13[%c0_230, %c0_231] : memref<1x16xf32, #tpu.memory_space<vmem>>, vector<1x16xf32>
    %341 = vector.broadcast %340 : vector<1x16xf32> to vector<8x16xf32>
    %342 = arith.addf %339, %341 : vector<8x16xf32>
    %343 = arith.addf %306, %342 : vector<8x16xf32>
    %cst_232 = arith.constant 0.000000e+00 : f32
    %344 = vector.broadcast %cst_232 : f32 to vector<8x16xf32>
    %345 = arith.maximumf %343, %344 : vector<8x16xf32>
    %346 = tpu.concatenate %172, %345 in 1 : vector<8x16xf32>, vector<8x16xf32> -> vector<8x32xf32>
    %c0_233 = arith.constant 0 : index
    %c0_234 = arith.constant 0 : index
    %c0_235 = arith.constant 0 : index
    %347 = vector.load %arg14[%c0_233, %c0_234, %c0_235] : memref<1x8x32xf32, #tpu.memory_space<vmem>>, vector<1x8x32xf32>
    %348 = vector.shape_cast %347 : vector<1x8x32xf32> to vector<8x32xf32>
    %349 = vector.shape_cast %346 : vector<8x32xf32> to vector<1x8x32xf32>
    tpu.vector_store %arg14[%c0_233, %c0_234, %c0_235], %349 {strides = array<i32>} : memref<1x8x32xf32, #tpu.memory_space<vmem>>, vector<1x8x32xf32>,
    return
  }
  func.func @transform_0(%arg0: i32) -> (i32, i32, i32) {
    %c0_i32 = arith.constant 0 : i32
    %c0_i32_0 = arith.constant 0 : i32
    %c0_i32_1 = arith.constant 0 : i32
    return %arg0, %c0_i32, %c0_i32_0 : i32, i32, i32
  }
  func.func @transform_1(%arg0: i32) -> (i32, i32, i32) {
    %c0_i32 = arith.constant 0 : i32
    %c0_i32_0 = arith.constant 0 : i32
    %c0_i32_1 = arith.constant 0 : i32
    %c0_i32_2 = arith.constant 0 : i32
    return %c0_i32, %c0_i32_0, %c0_i32_1 : i32, i32, i32
  }
  func.func @transform_2(%arg0: i32) -> (i32, i32) {
    %c0_i32 = arith.constant 0 : i32
    %c0_i32_0 = arith.constant 0 : i32
    %c0_i32_1 = arith.constant 0 : i32
    return %c0_i32, %c0_i32_0 : i32, i32
  }
  func.func @transform_3(%arg0: i32) -> (i32, i32) {
    %c0_i32 = arith.constant 0 : i32
    %c0_i32_0 = arith.constant 0 : i32
    %c0_i32_1 = arith.constant 0 : i32
    return %c0_i32, %c0_i32_0 : i32, i32
  }
  func.func @transform_4(%arg0: i32) -> (i32, i32) {
    %c0_i32 = arith.constant 0 : i32
    %c0_i32_0 = arith.constant 0 : i32
    %c0_i32_1 = arith.constant 0 : i32
    return %c0_i32, %c0_i32_0 : i32, i32
  }
  func.func @transform_5(%arg0: i32) -> (i32, i32) {
    %c0_i32 = arith.constant 0 : i32
    %c0_i32_0 = arith.constant 0 : i32
    %c0_i32_1 = arith.constant 0 : i32
    return %c0_i32, %c0_i32_0 : i32, i32
  }
  func.func @transform_6(%arg0: i32) -> (i32, i32) {
    %c0_i32 = arith.constant 0 : i32
    %c0_i32_0 = arith.constant 0 : i32
    %c0_i32_1 = arith.constant 0 : i32
    return %c0_i32, %c0_i32_0 : i32, i32
  }
  func.func @transform_7(%arg0: i32) -> (i32, i32) {
    %c0_i32 = arith.constant 0 : i32
    %c0_i32_0 = arith.constant 0 : i32
    %c0_i32_1 = arith.constant 0 : i32
    return %c0_i32, %c0_i32_0 : i32, i32
  }
  func.func @transform_8(%arg0: i32) -> (i32, i32) {
    %c0_i32 = arith.constant 0 : i32
    %c0_i32_0 = arith.constant 0 : i32
    %c0_i32_1 = arith.constant 0 : i32
    return %c0_i32, %c0_i32_0 : i32, i32
  }
  func.func @transform_9(%arg0: i32) -> (i32, i32) {
    %c0_i32 = arith.constant 0 : i32
    %c0_i32_0 = arith.constant 0 : i32
    %c0_i32_1 = arith.constant 0 : i32
    return %c0_i32, %c0_i32_0 : i32, i32
  }
  func.func @transform_10(%arg0: i32) -> (i32, i32) {
    %c0_i32 = arith.constant 0 : i32
    %c0_i32_0 = arith.constant 0 : i32
    %c0_i32_1 = arith.constant 0 : i32
    return %c0_i32, %c0_i32_0 : i32, i32
  }
  func.func @transform_11(%arg0: i32) -> (i32, i32) {
    %c0_i32 = arith.constant 0 : i32
    %c0_i32_0 = arith.constant 0 : i32
    %c0_i32_1 = arith.constant 0 : i32
    return %c0_i32, %c0_i32_0 : i32, i32
  }
  func.func @transform_12(%arg0: i32) -> (i32, i32) {
    %c0_i32 = arith.constant 0 : i32
    %c0_i32_0 = arith.constant 0 : i32
    %c0_i32_1 = arith.constant 0 : i32
    return %c0_i32, %c0_i32_0 : i32, i32
  }
  func.func @transform_13(%arg0: i32) -> (i32, i32, i32) {
    %c0_i32 = arith.constant 0 : i32
    %c0_i32_0 = arith.constant 0 : i32
    %c0_i32_1 = arith.constant 0 : i32
    return %arg0, %c0_i32, %c0_i32_0 : i32, i32, i32
  }
}

</mosaic_0001>

<llo_original>
// kernel: encoder_forward.1
$region0: #{encoder_forward.1}
  #allocation0 [shape = 'u32[]', space=smem, size = 0x4, offset = 0x4, fixed_abs, tag = 'smem constant byte address 0x4 - core index']
  #allocation1 [shape = 'u32[72,128]{1,0:T(1,128)}', space=vmem, size = 0x9000, scoped, tag = 'internal scratch']
  #allocation2 [shape = 'bf16[176,512]{1,0:T(8,128)(2,1)}', space=vmem, size = 0x2c000, scoped, tag = 'scratch operand']
  #allocation3 [shape = 'bf16[72,576]{1,0:T(8,128)(2,1)}', space=vmem, size = 0x16800, scoped, tag = 'scratch operand']
  #allocation4 [shape = 'bf16[8,144]{1,0:T(8,128)(2,1)}', space=vmem, size = 0x1000, scoped, tag = 'scratch operand']
  %s0 = inlined_call_operand.vmem [shape: bf16[4,264,64], index: 0, kind: input, shape index: {}]
  %s1 = inlined_call_operand.vmem [shape: bf16[4,64,32], index: 1, kind: input, shape index: {}]
  %s2 = inlined_call_operand.vmem [shape: f32[1,32], index: 2, kind: input, shape index: {}]
  %s3 = inlined_call_operand.vmem [shape: bf16[512,64], index: 3, kind: input, shape index: {}]
  %s4 = inlined_call_operand.vmem [shape: f32[1,64], index: 4, kind: input, shape index: {}]
  %s5 = inlined_call_operand.vmem [shape: bf16[576,16], index: 5, kind: input, shape index: {}]
  %s6 = inlined_call_operand.vmem [shape: f32[1,16], index: 6, kind: input, shape index: {}]
  %s7 = inlined_call_operand.vmem [shape: bf16[8,72], index: 7, kind: input, shape index: {}]
  %s8 = inlined_call_operand.vmem [shape: bf16[72,8], index: 8, kind: input, shape index: {}]
  %s9 = inlined_call_operand.vmem [shape: bf16[144,16], index: 9, kind: input, shape index: {}]
  %s10 = inlined_call_operand.vmem [shape: f32[1,16], index: 10, kind: input, shape index: {}]
  %s11 = inlined_call_operand.vmem [shape: bf16[16,16], index: 11, kind: input, shape index: {}]
  %s12 = inlined_call_operand.vmem [shape: f32[1,16], index: 12, kind: input, shape index: {}]
  %s13 = inlined_call_operand.vmem [shape: f32[2,8,32], index: 13, kind: output, shape index: {}]
  %s14 = sld [smem:[#allocation0]]
  $region85: #{encoder_forward.1} parent=0
    _
  %s16 = ssub.s32 1, %s14
  %s17 = scalar_select 0, %s16, %s14
  loop: start=0, step=1, limit=4
  $region2: #{encoder_forward.1} parent=0 // loop_pre_header
    _
  $region3: #{encoder_forward.1} parent=0 // loop_header
    %s19 = sphi 0, %s23
    %p20 = scmp.ge.s32.totalorder %s19, 4
    %s29 = sphi 0, %s31
    %s32 = sphi 0, %s29
    %s33 = sphi 0, %s32
    %s49 = sphi 0, %s33
    %s53 = sphi 0, %s53
    %s55 = sphi 0, %s53
    %s56 = sphi 0, %s55
    %s70 = sphi 0, %s56
    %s74 = sphi 0, %s74
    %s76 = sphi 0, %s74
    %s77 = sphi 0, %s76
    %s91 = sphi 0, %s77
    %s95 = sphi 0, %s95
    %s97 = sphi 0, %s95
    %s98 = sphi 0, %s97
    %s112 = sphi 0, %s98
    %s116 = sphi 0, %s116
    %s118 = sphi 0, %s116
    %s119 = sphi 0, %s118
    %s133 = sphi 0, %s119
    %s137 = sphi 0, %s137
    %s139 = sphi 0, %s137
    %s140 = sphi 0, %s139
    %s154 = sphi 0, %s140
    %s158 = sphi 0, %s158
    %s160 = sphi 0, %s158
    %s161 = sphi 0, %s160
    %s175 = sphi 0, %s161
    %s179 = sphi 0, %s179
    %s181 = sphi 0, %s179
    %s182 = sphi 0, %s181
    %s196 = sphi 0, %s182
    %s200 = sphi 0, %s200
    %s202 = sphi 0, %s200
    %s203 = sphi 0, %s202
    %s217 = sphi 0, %s203
    %s221 = sphi 0, %s221
    %s223 = sphi 0, %s221
    %s224 = sphi 0, %s223
    %s238 = sphi 0, %s224
    %s242 = sphi 0, %s242
    %s244 = sphi 0, %s242
    %s245 = sphi 0, %s244
    %s259 = sphi 0, %s245
    %s263 = sphi 0, %s263
    %s265 = sphi 0, %s263
    %s266 = sphi 0, %s265
    %s280 = sphi 0, %s266
    %s284 = sphi 0, %s284
    %s286 = sphi 0, %s284
    %s287 = sphi 0, %s286
    %s301 = sphi 0, %s287
    %s307 = sphi 0, %s309
    %s310 = sphi 0, %s307
    %s311 = sphi 0, %s310
    %s327 = sphi 0, %s311
  $region4: #{encoder_forward.1} parent=0 // loop_header_branch
    %22 = sbr.rel (%p20) target = $region8
  $region5: #{encoder_forward.1} parent=0 // loop_body
    %s24 = ssub.s32 %s19, 1
    %s25 = ssub.s32 %s19, 2
    %s26 = sadd.s32 %s19, 1
    %s27 = ssub.s32 %s19, %s26
    %p28 = scmp.eq.s32.totalorder %s27, 0
    %s30 = sadd.s32 %s29, 1
    %s31 = scalar_select %p28, %s29, %s30
    %p34 = pneg %p28
    %p35 = scmp.eq.s32.totalorder %s19, 1
    %p36 = por %p34, %p35
    %p37 = scmp.ne.s32.totalorder %s29, %s32
    %p38 = scmp.eq.s32.totalorder %s19, 0
    %p39 = por %p37, %p38
    %p40 = scmp.ne.s32.totalorder %s29, %s32
    %p41 = scmp.eq.s32.totalorder %s24, 1
    %p42 = por %p40, %p41
    %p43 = scmp.ne.s32.totalorder %s32, %s33
    %p44 = scmp.eq.s32.totalorder %s24, 0
    %p45 = por %p43, %p44
    %p46 = scmp.ne.s32.totalorder %s32, %s33
    %p47 = scmp.eq.s32.totalorder %s25, 1
    %p48 = por %p46, %p47
    %p50 = scmp.ne.s32.totalorder %s33, %s49
    %p51 = scmp.eq.s32.totalorder %s25, 0
    %p52 = por %p50, %p51
    %s54 = sadd.s32 %s53, 1
    %p57 = scmp.eq.s32.totalorder %s19, 1
    %p58 = scmp.ne.s32.totalorder %s53, %s55
    %p59 = scmp.eq.s32.totalorder %s19, 0
    %p60 = por %p58, %p59
    %p61 = scmp.ne.s32.totalorder %s53, %s55
    %p62 = scmp.eq.s32.totalorder %s24, 1
    %p63 = por %p61, %p62
    %p64 = scmp.ne.s32.totalorder %s55, %s56
    %p65 = scmp.eq.s32.totalorder %s24, 0
    %p66 = por %p64, %p65
    %p67 = scmp.ne.s32.totalorder %s55, %s56
    %p68 = scmp.eq.s32.totalorder %s25, 1
    %p69 = por %p67, %p68
    %p71 = scmp.ne.s32.totalorder %s56, %s70
    %p72 = scmp.eq.s32.totalorder %s25, 0
    %p73 = por %p71, %p72
    %s75 = sadd.s32 %s74, 1
    %p78 = scmp.eq.s32.totalorder %s19, 1
    %p79 = scmp.ne.s32.totalorder %s74, %s76
    %p80 = scmp.eq.s32.totalorder %s19, 0
    %p81 = por %p79, %p80
    %p82 = scmp.ne.s32.totalorder %s74, %s76
    %p83 = scmp.eq.s32.totalorder %s24, 1
    %p84 = por %p82, %p83
    %p85 = scmp.ne.s32.totalorder %s76, %s77
    %p86 = scmp.eq.s32.totalorder %s24, 0
    %p87 = por %p85, %p86
    %p88 = scmp.ne.s32.totalorder %s76, %s77
    %p89 = scmp.eq.s32.totalorder %s25, 1
    %p90 = por %p88, %p89
    %p92 = scmp.ne.s32.totalorder %s77, %s91
    %p93 = scmp.eq.s32.totalorder %s25, 0
    %p94 = por %p92, %p93
    %s96 = sadd.s32 %s95, 1
    %p99 = scmp.eq.s32.totalorder %s19, 1
    %p100 = scmp.ne.s32.totalorder %s95, %s97
    %p101 = scmp.eq.s32.totalorder %s19, 0
    %p102 = por %p100, %p101
    %p103 = scmp.ne.s32.totalorder %s95, %s97
    %p104 = scmp.eq.s32.totalorder %s24, 1
    %p105 = por %p103, %p104
    %p106 = scmp.ne.s32.totalorder %s97, %s98
    %p107 = scmp.eq.s32.totalorder %s24, 0
    %p108 = por %p106, %p107
    %p109 = scmp.ne.s32.totalorder %s97, %s98
    %p110 = scmp.eq.s32.totalorder %s25, 1
    %p111 = por %p109, %p110
    %p113 = scmp.ne.s32.totalorder %s98, %s112
    %p114 = scmp.eq.s32.totalorder %s25, 0
    %p115 = por %p113, %p114
    %s117 = sadd.s32 %s116, 1
    %p120 = scmp.eq.s32.totalorder %s19, 1
    %p121 = scmp.ne.s32.totalorder %s116, %s118
    %p122 = scmp.eq.s32.totalorder %s19, 0
    %p123 = por %p121, %p122
    %p124 = scmp.ne.s32.totalorder %s116, %s118
    %p125 = scmp.eq.s32.totalorder %s24, 1
    %p126 = por %p124, %p125
    %p127 = scmp.ne.s32.totalorder %s118, %s119
    %p128 = scmp.eq.s32.totalorder %s24, 0
    %p129 = por %p127, %p128
    %p130 = scmp.ne.s32.totalorder %s118, %s119
    %p131 = scmp.eq.s32.totalorder %s25, 1
    %p132 = por %p130, %p131
    %p134 = scmp.ne.s32.totalorder %s119, %s133
    %p135 = scmp.eq.s32.totalorder %s25, 0
    %p136 = por %p134, %p135
    %s138 = sadd.s32 %s137, 1
    %p141 = scmp.eq.s32.totalorder %s19, 1
    %p142 = scmp.ne.s32.totalorder %s137, %s139
    %p143 = scmp.eq.s32.totalorder %s19, 0
    %p144 = por %p142, %p143
    %p145 = scmp.ne.s32.totalorder %s137, %s139
    %p146 = scmp.eq.s32.totalorder %s24, 1
    %p147 = por %p145, %p146
    %p148 = scmp.ne.s32.totalorder %s139, %s140
    %p149 = scmp.eq.s32.totalorder %s24, 0
    %p150 = por %p148, %p149
    %p151 = scmp.ne.s32.totalorder %s139, %s140
    %p152 = scmp.eq.s32.totalorder %s25, 1
    %p153 = por %p151, %p152
    %p155 = scmp.ne.s32.totalorder %s140, %s154
    %p156 = scmp.eq.s32.totalorder %s25, 0
    %p157 = por %p155, %p156
    %s159 = sadd.s32 %s158, 1
    %p162 = scmp.eq.s32.totalorder %s19, 1
    %p163 = scmp.ne.s32.totalorder %s158, %s160
    %p164 = scmp.eq.s32.totalorder %s19, 0
    %p165 = por %p163, %p164
    %p166 = scmp.ne.s32.totalorder %s158, %s160
    %p167 = scmp.eq.s32.totalorder %s24, 1
    %p168 = por %p166, %p167
    %p169 = scmp.ne.s32.totalorder %s160, %s161
    %p170 = scmp.eq.s32.totalorder %s24, 0
    %p171 = por %p169, %p170
    %p172 = scmp.ne.s32.totalorder %s160, %s161
    %p173 = scmp.eq.s32.totalorder %s25, 1
    %p174 = por %p172, %p173
    %p176 = scmp.ne.s32.totalorder %s161, %s175
    %p177 = scmp.eq.s32.totalorder %s25, 0
    %p178 = por %p176, %p177
    %s180 = sadd.s32 %s179, 1
    %p183 = scmp.eq.s32.totalorder %s19, 1
    %p184 = scmp.ne.s32.totalorder %s179, %s181
    %p185 = scmp.eq.s32.totalorder %s19, 0
    %p186 = por %p184, %p185
    %p187 = scmp.ne.s32.totalorder %s179, %s181
    %p188 = scmp.eq.s32.totalorder %s24, 1
    %p189 = por %p187, %p188
    %p190 = scmp.ne.s32.totalorder %s181, %s182
    %p191 = scmp.eq.s32.totalorder %s24, 0
    %p192 = por %p190, %p191
    %p193 = scmp.ne.s32.totalorder %s181, %s182
    %p194 = scmp.eq.s32.totalorder %s25, 1
    %p195 = por %p193, %p194
    %p197 = scmp.ne.s32.totalorder %s182, %s196
    %p198 = scmp.eq.s32.totalorder %s25, 0
    %p199 = por %p197, %p198
    %s201 = sadd.s32 %s200, 1
    %p204 = scmp.eq.s32.totalorder %s19, 1
    %p205 = scmp.ne.s32.totalorder %s200, %s202
    %p206 = scmp.eq.s32.totalorder %s19, 0
    %p207 = por %p205, %p206
    %p208 = scmp.ne.s32.totalorder %s200, %s202
    %p209 = scmp.eq.s32.totalorder %s24, 1
    %p210 = por %p208, %p209
    %p211 = scmp.ne.s32.totalorder %s202, %s203
    %p212 = scmp.eq.s32.totalorder %s24, 0
    %p213 = por %p211, %p212
    %p214 = scmp.ne.s32.totalorder %s202, %s203
    %p215 = scmp.eq.s32.totalorder %s25, 1
    %p216 = por %p214, %p215
    %p218 = scmp.ne.s32.totalorder %s203, %s217
    %p219 = scmp.eq.s32.totalorder %s25, 0
    %p220 = por %p218, %p219
    %s222 = sadd.s32 %s221, 1
    %p225 = scmp.eq.s32.totalorder %s19, 1
    %p226 = scmp.ne.s32.totalorder %s221, %s223
    %p227 = scmp.eq.s32.totalorder %s19, 0
    %p228 = por %p226, %p227
    %p229 = scmp.ne.s32.totalorder %s221, %s223
    %p230 = scmp.eq.s32.totalorder %s24, 1
    %p231 = por %p229, %p230
    %p232 = scmp.ne.s32.totalorder %s223, %s224
    %p233 = scmp.eq.s32.totalorder %s24, 0
    %p234 = por %p232, %p233
    %p235 = scmp.ne.s32.totalorder %s223, %s224
    %p236 = scmp.eq.s32.totalorder %s25, 1
    %p237 = por %p235, %p236
    %p239 = scmp.ne.s32.totalorder %s224, %s238
    %p240 = scmp.eq.s32.totalorder %s25, 0
    %p241 = por %p239, %p240
    %s243 = sadd.s32 %s242, 1
    %p246 = scmp.eq.s32.totalorder %s19, 1
    %p247 = scmp.ne.s32.totalorder %s242, %s244
    %p248 = scmp.eq.s32.totalorder %s19, 0
    %p249 = por %p247, %p248
    %p250 = scmp.ne.s32.totalorder %s242, %s244
    %p251 = scmp.eq.s32.totalorder %s24, 1
    %p252 = por %p250, %p251
    %p253 = scmp.ne.s32.totalorder %s244, %s245
    %p254 = scmp.eq.s32.totalorder %s24, 0
    %p255 = por %p253, %p254
    %p256 = scmp.ne.s32.totalorder %s244, %s245
    %p257 = scmp.eq.s32.totalorder %s25, 1
    %p258 = por %p256, %p257
    %p260 = scmp.ne.s32.totalorder %s245, %s259
    %p261 = scmp.eq.s32.totalorder %s25, 0
    %p262 = por %p260, %p261
    %s264 = sadd.s32 %s263, 1
    %p267 = scmp.eq.s32.totalorder %s19, 1
    %p268 = scmp.ne.s32.totalorder %s263, %s265
    %p269 = scmp.eq.s32.totalorder %s19, 0
    %p270 = por %p268, %p269
    %p271 = scmp.ne.s32.totalorder %s263, %s265
    %p272 = scmp.eq.s32.totalorder %s24, 1
    %p273 = por %p271, %p272
    %p274 = scmp.ne.s32.totalorder %s265, %s266
    %p275 = scmp.eq.s32.totalorder %s24, 0
    %p276 = por %p274, %p275
    %p277 = scmp.ne.s32.totalorder %s265, %s266
    %p278 = scmp.eq.s32.totalorder %s25, 1
    %p279 = por %p277, %p278
    %p281 = scmp.ne.s32.totalorder %s266, %s280
    %p282 = scmp.eq.s32.totalorder %s25, 0
    %p283 = por %p281, %p282
    %s285 = sadd.s32 %s284, 1
    %p288 = scmp.eq.s32.totalorder %s19, 1
    %p289 = scmp.ne.s32.totalorder %s284, %s286
    %p290 = scmp.eq.s32.totalorder %s19, 0
    %p291 = por %p289, %p290
    %p292 = scmp.ne.s32.totalorder %s284, %s286
    %p293 = scmp.eq.s32.totalorder %s24, 1
    %p294 = por %p292, %p293
    %p295 = scmp.ne.s32.totalorder %s286, %s287
    %p296 = scmp.eq.s32.totalorder %s24, 0
    %p297 = por %p295, %p296
    %p298 = scmp.ne.s32.totalorder %s286, %s287
    %p299 = scmp.eq.s32.totalorder %s25, 1
    %p300 = por %p298, %p299
    %p302 = scmp.ne.s32.totalorder %s287, %s301
    %p303 = scmp.eq.s32.totalorder %s25, 0
    %p304 = por %p302, %p303
    %s305 = ssub.s32 %s19, %s26
    %p306 = scmp.eq.s32.totalorder %s305, 0
    %s308 = sadd.s32 %s307, 1
    %s309 = scalar_select %p306, %s307, %s308
    %p312 = pneg %p306
    %p313 = scmp.eq.s32.totalorder %s19, 1
    %p314 = por %p312, %p313
    %p315 = scmp.ne.s32.totalorder %s307, %s310
    %p316 = scmp.eq.s32.totalorder %s19, 0
    %p317 = por %p315, %p316
    %p318 = scmp.ne.s32.totalorder %s307, %s310
    %p319 = scmp.eq.s32.totalorder %s24, 1
    %p320 = por %p318, %p319
    %p321 = scmp.ne.s32.totalorder %s310, %s311
    %p322 = scmp.eq.s32.totalorder %s24, 0
    %p323 = por %p321, %p322
    %p324 = scmp.ne.s32.totalorder %s310, %s311
    %p325 = scmp.eq.s32.totalorder %s25, 1
    %p326 = por %p324, %p325
    %p328 = scmp.ne.s32.totalorder %s311, %s327
    %p329 = scmp.eq.s32.totalorder %s25, 0
    %p330 = por %p328, %p329
    %p331 = scmp.le.s32.totalorder 1, %s19
    %p332 = scmp.lt.s32.totalorder %s19, 3
    %p333 = pnand %p331, %p332
    %p334 = pneg %p333
    // Predicated region
    $region9: #{encoder_forward.1} parent=5 // pred_check
      _
    $region10: #{encoder_forward.1} parent=5 // pred_check_branch
      %336 = sbr.rel (%p333) target = $region12
    $region11: #{encoder_forward.1} parent=5 // pred_region
      %s337 = ssub.s32 %s19, 1
      // Predicated region
      $region13: #{encoder_forward.1} parent=11 // pred_check
        %p338 = pneg %p66
      $region14: #{encoder_forward.1} parent=11 // pred_check_branch
        %340 = sbr.rel (%p338) target = $region16
      $region15: #{encoder_forward.1} parent=11 // pred_region
        _
      $region16: #{encoder_forward.1} parent=11 // pred_fallthru
        _
      // Predicated region
      $region17: #{encoder_forward.1} parent=11 // pred_check
        %p341 = pneg %p87
      $region18: #{encoder_forward.1} parent=11 // pred_check_branch
        %343 = sbr.rel (%p341) target = $region20
      $region19: #{encoder_forward.1} parent=11 // pred_region
        _
      $region20: #{encoder_forward.1} parent=11 // pred_fallthru
        _
      // Predicated region
      $region21: #{encoder_forward.1} parent=11 // pred_check
        %p344 = pneg %p108
      $region22: #{encoder_forward.1} parent=11 // pred_check_branch
        %346 = sbr.rel (%p344) target = $region24
      $region23: #{encoder_forward.1} parent=11 // pred_region
        _
      $region24: #{encoder_forward.1} parent=11 // pred_fallthru
        _
      // Predicated region
      $region25: #{encoder_forward.1} parent=11 // pred_check
        %p347 = pneg %p129
      $region26: #{encoder_forward.1} parent=11 // pred_check_branch
        %349 = sbr.rel (%p347) target = $region28
      $region27: #{encoder_forward.1} parent=11 // pred_region
        _
      $region28: #{encoder_forward.1} parent=11 // pred_fallthru
        _
      // Predicated region
      $region29: #{encoder_forward.1} parent=11 // pred_check
        %p350 = pneg %p150
      $region30: #{encoder_forward.1} parent=11 // pred_check_branch
        %352 = sbr.rel (%p350) target = $region32
      $region31: #{encoder_forward.1} parent=11 // pred_region
        _
      $region32: #{encoder_forward.1} parent=11 // pred_fallthru
        _
      // Predicated region
      $region33: #{encoder_forward.1} parent=11 // pred_check
        %p353 = pneg %p171
      $region34: #{encoder_forward.1} parent=11 // pred_check_branch
        %355 = sbr.rel (%p353) target = $region36
      $region35: #{encoder_forward.1} parent=11 // pred_region
        _
      $region36: #{encoder_forward.1} parent=11 // pred_fallthru
        _
      // Predicated region
      $region37: #{encoder_forward.1} parent=11 // pred_check
        %p356 = pneg %p192
      $region38: #{encoder_forward.1} parent=11 // pred_check_branch
        %358 = sbr.rel (%p356) target = $region40
      $region39: #{encoder_forward.1} parent=11 // pred_region
        _
      $region40: #{encoder_forward.1} parent=11 // pred_fallthru
        _
      // Predicated region
      $region41: #{encoder_forward.1} parent=11 // pred_check
        %p359 = pneg %p213
      $region42: #{encoder_forward.1} parent=11 // pred_check_branch
        %361 = sbr.rel (%p359) target = $region44
      $region43: #{encoder_forward.1} parent=11 // pred_region
        _
      $region44: #{encoder_forward.1} parent=11 // pred_fallthru
        _
      // Predicated region
      $region45: #{encoder_forward.1} parent=11 // pred_check
        %p362 = pneg %p234
      $region46: #{encoder_forward.1} parent=11 // pred_check_branch
        %364 = sbr.rel (%p362) target = $region48
      $region47: #{encoder_forward.1} parent=11 // pred_region
        _
      $region48: #{encoder_forward.1} parent=11 // pred_fallthru
        _
      // Predicated region
      $region49: #{encoder_forward.1} parent=11 // pred_check
        %p365 = pneg %p255
      $region50: #{encoder_forward.1} parent=11 // pred_check_branch
        %367 = sbr.rel (%p365) target = $region52
      $region51: #{encoder_forward.1} parent=11 // pred_region
        _
      $region52: #{encoder_forward.1} parent=11 // pred_fallthru
        _
      // Predicated region
      $region53: #{encoder_forward.1} parent=11 // pred_check
        %p368 = pneg %p276
      $region54: #{encoder_forward.1} parent=11 // pred_check_branch
        %370 = sbr.rel (%p368) target = $region56
      $region55: #{encoder_forward.1} parent=11 // pred_region
        _
      $region56: #{encoder_forward.1} parent=11 // pred_fallthru
        _
      // Predicated region
      $region57: #{encoder_forward.1} parent=11 // pred_check
        %p371 = pneg %p297
      $region58: #{encoder_forward.1} parent=11 // pred_check_branch
        %373 = sbr.rel (%p371) target = $region60
      $region59: #{encoder_forward.1} parent=11 // pred_region
        _
      $region60: #{encoder_forward.1} parent=11 // pred_fallthru
        _
    $region12: #{encoder_forward.1} parent=5 // pred_fallthru
      _
    %p374 = scmp.lt.s32.totalorder %s19, 2
    // Predicated region
    $region61: #{encoder_forward.1} parent=5 // pred_check
      %p375 = pneg %p374
    $region62: #{encoder_forward.1} parent=5 // pred_check_branch
      %377 = sbr.rel (%p375) target = $region64
    $region63: #{encoder_forward.1} parent=5 // pred_region
      // Predicated region
      $region65: #{encoder_forward.1} parent=63 // pred_check
        %p378 = pneg %p39
      $region66: #{encoder_forward.1} parent=63 // pred_check_branch
        %380 = sbr.rel (%p378) target = $region68
      $region67: #{encoder_forward.1} parent=63 // pred_region
        %s381 = smul.u32 2, %s19
        %p382 = scmp.lt.s32.totalorder %s381, 3
        %s383 = scalar_select %p382, %s381, 3
        %s384 = smul.addr %s383, 33
        %s385 = smul.addr %s384, 4
        %s386 = scalar_lea.vmem %s0, %s385
        %s387 = smul.u32 2, %s19
      $region68: #{encoder_forward.1} parent=63 // pred_fallthru
        _
    $region64: #{encoder_forward.1} parent=5 // pred_fallthru
      _
    %p388 = scmp.le.s32.totalorder 1, %s19
    %p389 = scmp.lt.s32.totalorder %s19, 3
    %p390 = pnand %p388, %p389
    %p391 = pneg %p390
    // Predicated region
    $region69: #{encoder_forward.1} parent=5 // pred_check
      _
    $region70: #{encoder_forward.1} parent=5 // pred_check_branch
      %393 = sbr.rel (%p390) target = $region72
    $region71: #{encoder_forward.1} parent=5 // pred_region
      %s394 = ssub.s32 %s19, 1
      %s395 = smul.u32 2, %s24
      %p396 = scmp.lt.s32.totalorder %s395, 3
      %s397 = scalar_select %p396, %s395, 3
      %s398 = smul.addr %s397, 33
      %s399 = smul.addr %s398, 4
      %s400 = scalar_lea.vmem %s0, %s399
      %p401 = pneg %p45
      %p402 = pneg %p42
      %p403 = pneg %p66
      %p404 = pneg %p63
      %p405 = pneg %p87
      %p406 = pneg %p84
      %p407 = pneg %p108
      %p408 = pneg %p105
      %p409 = pneg %p129
      %p410 = pneg %p126
      %p411 = pneg %p150
      %p412 = pneg %p147
      %p413 = pneg %p171
      %p414 = pneg %p168
      %p415 = pneg %p192
      %p416 = pneg %p189
      %p417 = pneg %p213
      %p418 = pneg %p210
      %p419 = pneg %p234
      %p420 = pneg %p231
      %p421 = pneg %p255
      %p422 = pneg %p252
      %p423 = pneg %p276
      %p424 = pneg %p273
      %p425 = pneg %p297
      %p426 = pneg %p294
      %p427 = pneg %p323
      %p428 = pneg %p320
      %p429 = scmp.lt.s32.totalorder %s24, 1
      %s430 = scalar_select %p429, %s24, 1
      %s431 = smul.addr %s430, 8
      %s432 = scalar_lea.vmem %s13, %s431
      %s433 = smul.u32 2, %s24
      %p434 = scmp.lt.s32.totalorder %s433, 3
      %s435 = scalar_select %p434, %s433, 3
      %s436 = smul.addr %s435, 33
      %s437 = smul.addr %s436, 4
      %s438 = scalar_lea.vmem %s0, %s437
      %s439 = smul.u32 2, %s24
      %p440 = scmp.lt.s32.totalorder %s24, 1
      %s441 = scalar_select %p440, %s24, 1
      %s442 = smul.addr %s441, 8
      %s443 = scalar_lea.vmem %s13, %s442
      %v445 = vld [vmem:[%s438] sm:$0xf]
      %v446 = vld [vmem:[%s438 + $0x4] sm:$0xf]
      %v447 = vld [vmem:[%s438 + $0x8] sm:$0xf]
      %v448 = vld [vmem:[%s438 + $0xc] sm:$0xf]
      %v449 = vld [vmem:[%s438 + $0x10] sm:$0xf]
      %v450 = vld [vmem:[%s438 + $0x14] sm:$0xf]
      %v451 = vld [vmem:[%s438 + $0x18] sm:$0xf]
      %v452 = vld [vmem:[%s438 + $0x1c] sm:$0xf]
      %v453 = vld [vmem:[%s438 + $0x20] sm:$0xf]
      %v454 = vld [vmem:[%s438 + $0x24] sm:$0xf]
      %v455 = vld [vmem:[%s438 + $0x28] sm:$0xf]
      %v456 = vld [vmem:[%s438 + $0x2c] sm:$0xf]
      %v457 = vld [vmem:[%s438 + $0x30] sm:$0xf]
      %v458 = vld [vmem:[%s438 + $0x34] sm:$0xf]
      %v459 = vld [vmem:[%s438 + $0x38] sm:$0xf]
      %v460 = vld [vmem:[%s438 + $0x3c] sm:$0xf]
      %v461 = vld [vmem:[%s438 + $0x40] sm:$0xf]
      %v462 = vld [vmem:[%s438 + $0x44] sm:$0xf]
      %v463 = vld [vmem:[%s438 + $0x48] sm:$0xf]
      %v464 = vld [vmem:[%s438 + $0x4c] sm:$0xf]
      %v465 = vld [vmem:[%s438 + $0x50] sm:$0xf]
      %v466 = vld [vmem:[%s438 + $0x54] sm:$0xf]
      %v467 = vld [vmem:[%s438 + $0x58] sm:$0xf]
      %v468 = vld [vmem:[%s438 + $0x5c] sm:$0xf]
      %v469 = vld [vmem:[%s438 + $0x60] sm:$0xf]
      %v470 = vld [vmem:[%s438 + $0x64] sm:$0xf]
      %v471 = vld [vmem:[%s438 + $0x68] sm:$0xf]
      %v472 = vld [vmem:[%s438 + $0x6c] sm:$0xf]
      %v473 = vld [vmem:[%s438 + $0x70] sm:$0xf]
      %v474 = vld [vmem:[%s438 + $0x74] sm:$0xf]
      %v475 = vld [vmem:[%s438 + $0x78] sm:$0xf]
      %v476 = vld [vmem:[%s438 + $0x7c] sm:$0xf]
      %v477 = vld [vmem:[%s438 + $0x80] sm:$0xf]
      %v478 = vunpack.c.l.bf16 %v445
      %v479 = vunpack.c.l.bf16 %v446
      %v480 = vunpack.c.l.bf16 %v447
      %v481 = vunpack.c.l.bf16 %v448
      %v482 = vunpack.c.l.bf16 %v449
      %v483 = vunpack.c.l.bf16 %v450
      %v484 = vunpack.c.l.bf16 %v451
      %v485 = vunpack.c.l.bf16 %v452
      %v486 = vunpack.c.l.bf16 %v453
      %v487 = vunpack.c.l.bf16 %v454
      %v488 = vunpack.c.l.bf16 %v455
      %v489 = vunpack.c.l.bf16 %v456
      %v490 = vunpack.c.l.bf16 %v457
      %v491 = vunpack.c.l.bf16 %v458
      %v492 = vunpack.c.l.bf16 %v459
      %v493 = vunpack.c.l.bf16 %v460
      %v494 = vunpack.c.l.bf16 %v461
      %v495 = vunpack.c.l.bf16 %v462
      %v496 = vunpack.c.l.bf16 %v463
      %v497 = vunpack.c.l.bf16 %v464
      %v498 = vunpack.c.l.bf16 %v465
      %v499 = vunpack.c.l.bf16 %v466
      %v500 = vunpack.c.l.bf16 %v467
      %v501 = vunpack.c.l.bf16 %v468
      %v502 = vunpack.c.l.bf16 %v469
      %v503 = vunpack.c.l.bf16 %v470
      %v504 = vunpack.c.l.bf16 %v471
      %v505 = vunpack.c.l.bf16 %v472
      %v506 = vunpack.c.l.bf16 %v473
      %v507 = vunpack.c.l.bf16 %v474
      %v508 = vunpack.c.l.bf16 %v475
      %v509 = vunpack.c.l.bf16 %v476
      %v510 = vunpack.c.l.bf16 %v477
      %v511 = vld [vmem:[%s2] sm:$0x1]
      %v512 = vpack.c.bf16 %v479, %v478
      %v513 = vpack.c.bf16 %v481, %v480
      %v514 = vpack.c.bf16 %v483, %v482
      %v515 = vpack.c.bf16 %v485, %v484
      %v516 = vpack.c.bf16 %v487, %v486
      %v517 = vpack.c.bf16 %v489, %v488
      %v518 = vpack.c.bf16 %v491, %v490
      %v519 = vpack.c.bf16 %v493, %v492
      %v520 = vpack.c.bf16 %v495, %v494
      %v521 = vpack.c.bf16 %v497, %v496
      %v522 = vpack.c.bf16 %v499, %v498
      %v523 = vpack.c.bf16 %v501, %v500
      %v524 = vpack.c.bf16 %v503, %v502
      %v525 = vpack.c.bf16 %v505, %v504
      %v526 = vpack.c.bf16 %v507, %v506
      %v527 = vld [vmem:[%s1] sm:$0xf]
      %v528 = vld [vmem:[%s1 + $0x4] sm:$0xf]
      %v529 = vld [vmem:[%s1 + $0x8] sm:$0xf]
      %v530 = vld [vmem:[%s1 + $0xc] sm:$0xf]
      %v531 = vld [vmem:[%s1 + $0x10] sm:$0xf]
      %v532 = vld [vmem:[%s1 + $0x14] sm:$0xf]
      %v533 = vld [vmem:[%s1 + $0x18] sm:$0xf]
      %v534 = vld [vmem:[%s1 + $0x1c] sm:$0xf]
      %v543 = vunpack.c.l.b16 %v527
      %v544 = vunpack.c.l.b16 %v528
      %v545 = vunpack.c.l.b16 %v529
      %v546 = vunpack.c.l.b16 %v530
      %v547 = vunpack.c.l.b16 %v531
      %v548 = vunpack.c.l.b16 %v532
      %v549 = vunpack.c.l.b16 %v533
      %v550 = vunpack.c.l.b16 %v534
      %v551 = vpack.c.b16 %v544, %v543
      %v552 = vpack.c.b16 %v546, %v545
      %v553 = vpack.c.b16 %v548, %v547
      %v554 = vpack.c.b16 %v550, %v549
      %vm559 = vcmask 523264
      %v561 = vsel %vm559, %v512, 0
      %v564 = vsel %vm559, %v513, 0
      %v567 = vsel %vm559, %v514, 0
      %v570 = vsel %vm559, %v515, 0
      %v573 = vsel %vm559, %v516, 0
      %v576 = vsel %vm559, %v517, 0
      %v579 = vsel %vm559, %v518, 0
      %v582 = vsel %vm559, %v519, 0
      %v585 = vsel %vm559, %v520, 0
      %v588 = vsel %vm559, %v521, 0
      %v591 = vsel %vm559, %v522, 0
      %v594 = vsel %vm559, %v523, 0
      %v597 = vsel %vm559, %v524, 0
      %v600 = vsel %vm559, %v525, 0
      %v603 = vsel %vm559, %v526, 0
      %605 = vmatpush.bf16.msra.mxu0 0
      %606 = vmatpush.bf16.msra.mxu0 0
      %607 = vmatpush.bf16.msra.mxu0 0
      %608 = vmatpush.bf16.msra.mxu0 0
      %609 = vmatpush.bf16.msra.mxu0 %v554
      %610 = vmatpush.bf16.msra.mxu0 %v553
      %611 = vmatpush.bf16.msra.mxu0 %v552
      %612 = vmatpush.bf16.msra.mxu0 %v551
      %613 = vmatmul.bf16.gmra.mxu0 %v561
      %v614 = vpop.f32.mrf.mxu0
      %v615 = vadd.f32 0.0, %v614
      %v616 = vpop.f32.mrf.mxu0
      %v617 = vadd.f32 0.0, %v616
      %618 = vmatmul.bf16.gmra.mxu0 %v564
      %v619 = vpop.f32.mrf.mxu0
      %v620 = vadd.f32 0.0, %v619
      %v621 = vpop.f32.mrf.mxu0
      %v622 = vadd.f32 0.0, %v621
      %623 = vmatmul.bf16.gmra.mxu0 %v567
      %v624 = vpop.f32.mrf.mxu0
      %v625 = vadd.f32 0.0, %v624
      %v626 = vpop.f32.mrf.mxu0
      %v627 = vadd.f32 0.0, %v626
      %628 = vmatmul.bf16.gmra.mxu0 %v570
      %v629 = vpop.f32.mrf.mxu0
      %v630 = vadd.f32 0.0, %v629
      %v631 = vpop.f32.mrf.mxu0
      %v632 = vadd.f32 0.0, %v631
      %633 = vmatmul.bf16.gmra.mxu0 %v573
      %v634 = vpop.f32.mrf.mxu0
      %v635 = vadd.f32 0.0, %v634
      %v636 = vpop.f32.mrf.mxu0
      %v637 = vadd.f32 0.0, %v636
      %638 = vmatmul.bf16.gmra.mxu0 %v576
      %v639 = vpop.f32.mrf.mxu0
      %v640 = vadd.f32 0.0, %v639
      %v641 = vpop.f32.mrf.mxu0
      %v642 = vadd.f32 0.0, %v641
      %643 = vmatmul.bf16.gmra.mxu0 %v579
      %v644 = vpop.f32.mrf.mxu0
      %v645 = vadd.f32 0.0, %v644
      %v646 = vpop.f32.mrf.mxu0
      %v647 = vadd.f32 0.0, %v646
      %648 = vmatmul.bf16.gmra.mxu0 %v582
      %v649 = vpop.f32.mrf.mxu0
      %v650 = vadd.f32 0.0, %v649
      %v651 = vpop.f32.mrf.mxu0
      %v652 = vadd.f32 0.0, %v651
      %653 = vmatmul.bf16.gmra.mxu0 %v585
      %v654 = vpop.f32.mrf.mxu0
      %v655 = vadd.f32 0.0, %v654
      %v656 = vpop.f32.mrf.mxu0
      %v657 = vadd.f32 0.0, %v656
      %658 = vmatmul.bf16.gmra.mxu0 %v588
      %v659 = vpop.f32.mrf.mxu0
      %v660 = vadd.f32 0.0, %v659
      %v661 = vpop.f32.mrf.mxu0
      %v662 = vadd.f32 0.0, %v661
      %663 = vmatmul.bf16.gmra.mxu0 %v591
      %v664 = vpop.f32.mrf.mxu0
      %v665 = vadd.f32 0.0, %v664
      %v666 = vpop.f32.mrf.mxu0
      %v667 = vadd.f32 0.0, %v666
      %668 = vmatmul.bf16.gmra.mxu0 %v594
      %v669 = vpop.f32.mrf.mxu0
      %v670 = vadd.f32 0.0, %v669
      %v671 = vpop.f32.mrf.mxu0
      %v672 = vadd.f32 0.0, %v671
      %673 = vmatmul.bf16.gmra.mxu0 %v597
      %v674 = vpop.f32.mrf.mxu0
      %v675 = vadd.f32 0.0, %v674
      %v676 = vpop.f32.mrf.mxu0
      %v677 = vadd.f32 0.0, %v676
      %678 = vmatmul.bf16.gmra.mxu0 %v600
      %v679 = vpop.f32.mrf.mxu0
      %v680 = vadd.f32 0.0, %v679
      %v681 = vpop.f32.mrf.mxu0
      %v682 = vadd.f32 0.0, %v681
      %683 = vmatmul.bf16.gmra.mxu0 %v603
      %v684 = vpop.f32.mrf.mxu0
      %v685 = vadd.f32 0.0, %v684
      %v686 = vpop.f32.mrf.mxu0
      %687 = vdwg.mxu0
      %v689 = vperm.slane %v511, 0
      %v691 = vadd.f32 %v689, %v615
      %v692 = vadd.f32 %v689, %v617
      %v693 = vadd.f32 %v689, %v620
      %v694 = vadd.f32 %v689, %v622
      %v695 = vadd.f32 %v689, %v625
      %v696 = vadd.f32 %v689, %v627
      %v697 = vadd.f32 %v689, %v630
      %v698 = vadd.f32 %v689, %v632
      %v699 = vadd.f32 %v689, %v635
      %v700 = vadd.f32 %v689, %v637
      %v701 = vadd.f32 %v689, %v640
      %v702 = vadd.f32 %v689, %v642
      %v703 = vadd.f32 %v689, %v645
      %v704 = vadd.f32 %v689, %v647
      %v705 = vadd.f32 %v689, %v650
      %v706 = vadd.f32 %v689, %v652
      %v707 = vadd.f32 %v689, %v655
      %v708 = vadd.f32 %v689, %v657
      %v709 = vadd.f32 %v689, %v660
      %v710 = vadd.f32 %v689, %v662
      %v711 = vadd.f32 %v689, %v665
      %v712 = vadd.f32 %v689, %v667
      %v713 = vadd.f32 %v689, %v670
      %v714 = vadd.f32 %v689, %v672
      %v715 = vadd.f32 %v689, %v675
      %v716 = vadd.f32 %v689, %v677
      %v717 = vadd.f32 %v689, %v680
      %v718 = vadd.f32 %v689, %v682
      %v719 = vadd.f32 %v689, %v685
      %v720 = vpack.c.bf16 %v508, %v508
      %s721 = scalar_lea.vmem %s1, 32
      %v722 = vld [vmem:[%s721] sm:$0xf]
      %v723 = vld [vmem:[%s721 + $0x4] sm:$0xf]
      %v724 = vld [vmem:[%s721 + $0x8] sm:$0xf]
      %v725 = vld [vmem:[%s721 + $0xc] sm:$0xf]
      %v726 = vld [vmem:[%s721 + $0x10] sm:$0xf]
      %v727 = vld [vmem:[%s721 + $0x14] sm:$0xf]
      %v728 = vld [vmem:[%s721 + $0x18] sm:$0xf]
      %v729 = vld [vmem:[%s721 + $0x1c] sm:$0xf]
      %vm730 = vsmask.f32 7424
      %v731 = vshrl.u32 %v512, 16
      %v733 = vshll.u32 %v512, 16
      %v735 = vrot.slane %v733, 1
      %v736 = vor.u32 %v731, %v735
      %v737 = vshll.u32 %v513, 16
      %v739 = vrot.slane %v737, 1
      %v740 = vsel %vm730, %v736, %v739
      %v741 = vshrl.u32 %v513, 16
      %v743 = vor.u32 %v741, %v739
      %v744 = vshll.u32 %v514, 16
      %v746 = vrot.slane %v744, 1
      %v747 = vsel %vm730, %v743, %v746
      %v748 = vshrl.u32 %v514, 16
      %v750 = vor.u32 %v748, %v746
      %v751 = vshll.u32 %v515, 16
      %v753 = vrot.slane %v751, 1
      %v754 = vsel %vm730, %v750, %v753
      %v755 = vshrl.u32 %v515, 16
      %v757 = vor.u32 %v755, %v753
      %v758 = vshll.u32 %v516, 16
      %v760 = vrot.slane %v758, 1
      %v761 = vsel %vm730, %v757, %v760
      %v762 = vshrl.u32 %v516, 16
      %v764 = vor.u32 %v762, %v760
      %v765 = vshll.u32 %v517, 16
      %v767 = vrot.slane %v765, 1
      %v768 = vsel %vm730, %v764, %v767
      %v769 = vshrl.u32 %v517, 16
      %v771 = vor.u32 %v769, %v767
      %v772 = vshll.u32 %v518, 16
      %v774 = vrot.slane %v772, 1
      %v775 = vsel %vm730, %v771, %v774
      %v776 = vshrl.u32 %v518, 16
      %v778 = vor.u32 %v776, %v774
      %v779 = vshll.u32 %v519, 16
      %v781 = vrot.slane %v779, 1
      %v782 = vsel %vm730, %v778, %v781
      %v783 = vshrl.u32 %v519, 16
      %v785 = vor.u32 %v783, %v781
      %v786 = vshll.u32 %v520, 16
      %v788 = vrot.slane %v786, 1
      %v789 = vsel %vm730, %v785, %v788
      %v790 = vshrl.u32 %v520, 16
      %v792 = vor.u32 %v790, %v788
      %v793 = vshll.u32 %v521, 16
      %v795 = vrot.slane %v793, 1
      %v796 = vsel %vm730, %v792, %v795
      %v797 = vshrl.u32 %v521, 16
      %v799 = vor.u32 %v797, %v795
      %v800 = vshll.u32 %v522, 16
      %v802 = vrot.slane %v800, 1
      %v803 = vsel %vm730, %v799, %v802
      %v804 = vshrl.u32 %v522, 16
      %v806 = vor.u32 %v804, %v802
      %v807 = vshll.u32 %v523, 16
      %v809 = vrot.slane %v807, 1
      %v810 = vsel %vm730, %v806, %v809
      %v811 = vshrl.u32 %v523, 16
      %v813 = vor.u32 %v811, %v809
      %v814 = vshll.u32 %v524, 16
      %v816 = vrot.slane %v814, 1
      %v817 = vsel %vm730, %v813, %v816
      %v818 = vshrl.u32 %v524, 16
      %v820 = vor.u32 %v818, %v816
      %v821 = vshll.u32 %v525, 16
      %v823 = vrot.slane %v821, 1
      %v824 = vsel %vm730, %v820, %v823
      %v825 = vshrl.u32 %v525, 16
      %v827 = vor.u32 %v825, %v823
      %v828 = vshll.u32 %v526, 16
      %v830 = vrot.slane %v828, 1
      %v831 = vsel %vm730, %v827, %v830
      %v832 = vshrl.u32 %v526, 16
      %v834 = vor.u32 %v832, %v830
      %v836 = vshll.u32 %v720, 16
      %v838 = vrot.slane %v836, 1
      %v839 = vsel %vm730, %v834, %v838
      %v848 = vunpack.c.l.b16 %v722
      %v849 = vunpack.c.l.b16 %v723
      %v850 = vunpack.c.l.b16 %v724
      %v851 = vunpack.c.l.b16 %v725
      %v852 = vunpack.c.l.b16 %v726
      %v853 = vunpack.c.l.b16 %v727
      %v854 = vunpack.c.l.b16 %v728
      %v855 = vunpack.c.l.b16 %v729
      %v856 = vpack.c.b16 %v849, %v848
      %v857 = vpack.c.b16 %v851, %v850
      %v858 = vpack.c.b16 %v853, %v852
      %v859 = vpack.c.b16 %v855, %v854
      %v865 = vsel %vm559, %v740, 0
      %v868 = vsel %vm559, %v747, 0
      %v871 = vsel %vm559, %v754, 0
      %v874 = vsel %vm559, %v761, 0
      %v877 = vsel %vm559, %v768, 0
      %v880 = vsel %vm559, %v775, 0
      %v883 = vsel %vm559, %v782, 0
      %v886 = vsel %vm559, %v789, 0
      %v889 = vsel %vm559, %v796, 0
      %v892 = vsel %vm559, %v803, 0
      %v895 = vsel %vm559, %v810, 0
      %v898 = vsel %vm559, %v817, 0
      %v901 = vsel %vm559, %v824, 0
      %v904 = vsel %vm559, %v831, 0
      %v907 = vsel %vm559, %v839, 0
      %909 = vmatpush.bf16.msra.mxu0 0
      %910 = vmatpush.bf16.msra.mxu0 0
      %911 = vmatpush.bf16.msra.mxu0 0
      %912 = vmatpush.bf16.msra.mxu0 0
      %913 = vmatpush.bf16.msra.mxu0 %v859
      %914 = vmatpush.bf16.msra.mxu0 %v858
      %915 = vmatpush.bf16.msra.mxu0 %v857
      %916 = vmatpush.bf16.msra.mxu0 %v856
      %917 = vmatmul.bf16.gmra.mxu0 %v865
      %v918 = vpop.f32.mrf.mxu0
      %v919 = vadd.f32 0.0, %v918
      %v920 = vpop.f32.mrf.mxu0
      %v921 = vadd.f32 0.0, %v920
      %922 = vmatmul.bf16.gmra.mxu0 %v868
      %v923 = vpop.f32.mrf.mxu0
      %v924 = vadd.f32 0.0, %v923
      %v925 = vpop.f32.mrf.mxu0
      %v926 = vadd.f32 0.0, %v925
      %927 = vmatmul.bf16.gmra.mxu0 %v871
      %v928 = vpop.f32.mrf.mxu0
      %v929 = vadd.f32 0.0, %v928
      %v930 = vpop.f32.mrf.mxu0
      %v931 = vadd.f32 0.0, %v930
      %932 = vmatmul.bf16.gmra.mxu0 %v874
      %v933 = vpop.f32.mrf.mxu0
      %v934 = vadd.f32 0.0, %v933
      %v935 = vpop.f32.mrf.mxu0
      %v936 = vadd.f32 0.0, %v935
      %937 = vmatmul.bf16.gmra.mxu0 %v877
      %v938 = vpop.f32.mrf.mxu0
      %v939 = vadd.f32 0.0, %v938
      %v940 = vpop.f32.mrf.mxu0
      %v941 = vadd.f32 0.0, %v940
      %942 = vmatmul.bf16.gmra.mxu0 %v880
      %v943 = vpop.f32.mrf.mxu0
      %v944 = vadd.f32 0.0, %v943
      %v945 = vpop.f32.mrf.mxu0
      %v946 = vadd.f32 0.0, %v945
      %947 = vmatmul.bf16.gmra.mxu0 %v883
      %v948 = vpop.f32.mrf.mxu0
      %v949 = vadd.f32 0.0, %v948
      %v950 = vpop.f32.mrf.mxu0
      %v951 = vadd.f32 0.0, %v950
      %952 = vmatmul.bf16.gmra.mxu0 %v886
      %v953 = vpop.f32.mrf.mxu0
      %v954 = vadd.f32 0.0, %v953
      %v955 = vpop.f32.mrf.mxu0
      %v956 = vadd.f32 0.0, %v955
      %957 = vmatmul.bf16.gmra.mxu0 %v889
      %v958 = vpop.f32.mrf.mxu0
      %v959 = vadd.f32 0.0, %v958
      %v960 = vpop.f32.mrf.mxu0
      %v961 = vadd.f32 0.0, %v960
      %962 = vmatmul.bf16.gmra.mxu0 %v892
      %v963 = vpop.f32.mrf.mxu0
      %v964 = vadd.f32 0.0, %v963
      %v965 = vpop.f32.mrf.mxu0
      %v966 = vadd.f32 0.0, %v965
      %967 = vmatmul.bf16.gmra.mxu0 %v895
      %v968 = vpop.f32.mrf.mxu0
      %v969 = vadd.f32 0.0, %v968
      %v970 = vpop.f32.mrf.mxu0
      %v971 = vadd.f32 0.0, %v970
      %972 = vmatmul.bf16.gmra.mxu0 %v898
      %v973 = vpop.f32.mrf.mxu0
      %v974 = vadd.f32 0.0, %v973
      %v975 = vpop.f32.mrf.mxu0
      %v976 = vadd.f32 0.0, %v975
      %977 = vmatmul.bf16.gmra.mxu0 %v901
      %v978 = vpop.f32.mrf.mxu0
      %v979 = vadd.f32 0.0, %v978
      %v980 = vpop.f32.mrf.mxu0
      %v981 = vadd.f32 0.0, %v980
      %982 = vmatmul.bf16.gmra.mxu0 %v904
      %v983 = vpop.f32.mrf.mxu0
      %v984 = vadd.f32 0.0, %v983
      %v985 = vpop.f32.mrf.mxu0
      %v986 = vadd.f32 0.0, %v985
      %987 = vmatmul.bf16.gmra.mxu0 %v907
      %v988 = vpop.f32.mrf.mxu0
      %v989 = vadd.f32 0.0, %v988
      %v990 = vpop.f32.mrf.mxu0
      %991 = vdwg.mxu0
      %v992 = vadd.f32 %v691, %v919
      %v993 = vadd.f32 %v692, %v921
      %v994 = vadd.f32 %v693, %v924
      %v995 = vadd.f32 %v694, %v926
      %v996 = vadd.f32 %v695, %v929
      %v997 = vadd.f32 %v696, %v931
      %v998 = vadd.f32 %v697, %v934
      %v999 = vadd.f32 %v698, %v936
      %v1000 = vadd.f32 %v699, %v939
      %v1001 = vadd.f32 %v700, %v941
      %v1002 = vadd.f32 %v701, %v944
      %v1003 = vadd.f32 %v702, %v946
      %v1004 = vadd.f32 %v703, %v949
      %v1005 = vadd.f32 %v704, %v951
      %v1006 = vadd.f32 %v705, %v954
      %v1007 = vadd.f32 %v706, %v956
      %v1008 = vadd.f32 %v707, %v959
      %v1009 = vadd.f32 %v708, %v961
      %v1010 = vadd.f32 %v709, %v964
      %v1011 = vadd.f32 %v710, %v966
      %v1012 = vadd.f32 %v711, %v969
      %v1013 = vadd.f32 %v712, %v971
      %v1014 = vadd.f32 %v713, %v974
      %v1015 = vadd.f32 %v714, %v976
      %v1016 = vadd.f32 %v715, %v979
      %v1017 = vadd.f32 %v716, %v981
      %v1018 = vadd.f32 %v717, %v984
      %v1019 = vadd.f32 %v718, %v986
      %v1020 = vadd.f32 %v719, %v989
      %v1021 = vpack.c.bf16 %v509, %v508
      %s1022 = scalar_lea.vmem %s1, 64
      %v1023 = vld [vmem:[%s1022] sm:$0xf]
      %v1024 = vld [vmem:[%s1022 + $0x4] sm:$0xf]
      %v1025 = vld [vmem:[%s1022 + $0x8] sm:$0xf]
      %v1026 = vld [vmem:[%s1022 + $0xc] sm:$0xf]
      %v1027 = vld [vmem:[%s1022 + $0x10] sm:$0xf]
      %v1028 = vld [vmem:[%s1022 + $0x14] sm:$0xf]
      %v1029 = vld [vmem:[%s1022 + $0x18] sm:$0xf]
      %v1030 = vld [vmem:[%s1022 + $0x1c] sm:$0xf]
      %v1039 = vunpack.c.l.b16 %v1023
      %v1040 = vunpack.c.l.b16 %v1024
      %v1041 = vunpack.c.l.b16 %v1025
      %v1042 = vunpack.c.l.b16 %v1026
      %v1043 = vunpack.c.l.b16 %v1027
      %v1044 = vunpack.c.l.b16 %v1028
      %v1045 = vunpack.c.l.b16 %v1029
      %v1046 = vunpack.c.l.b16 %v1030
      %v1047 = vpack.c.b16 %v1040, %v1039
      %v1048 = vpack.c.b16 %v1042, %v1041
      %v1049 = vpack.c.b16 %v1044, %v1043
      %v1050 = vpack.c.b16 %v1046, %v1045
      %v1056 = vsel %vm559, %v1021, 0
      %1058 = vmatpush.bf16.msra.mxu0 0
      %1059 = vmatpush.bf16.msra.mxu0 0
      %1060 = vmatpush.bf16.msra.mxu0 0
      %1061 = vmatpush.bf16.msra.mxu0 0
      %1062 = vmatpush.bf16.msra.mxu0 %v1050
      %1063 = vmatpush.bf16.msra.mxu0 %v1049
      %1064 = vmatpush.bf16.msra.mxu0 %v1048
      %1065 = vmatpush.bf16.msra.mxu0 %v1047
      %1066 = vmatmul.bf16.gmra.mxu0 %v564
      %v1067 = vpop.f32.mrf.mxu0
      %v1068 = vadd.f32 0.0, %v1067
      %v1069 = vpop.f32.mrf.mxu0
      %v1070 = vadd.f32 0.0, %v1069
      %1071 = vmatmul.bf16.gmra.mxu0 %v567
      %v1072 = vpop.f32.mrf.mxu0
      %v1073 = vadd.f32 0.0, %v1072
      %v1074 = vpop.f32.mrf.mxu0
      %v1075 = vadd.f32 0.0, %v1074
      %1076 = vmatmul.bf16.gmra.mxu0 %v570
      %v1077 = vpop.f32.mrf.mxu0
      %v1078 = vadd.f32 0.0, %v1077
      %v1079 = vpop.f32.mrf.mxu0
      %v1080 = vadd.f32 0.0, %v1079
      %1081 = vmatmul.bf16.gmra.mxu0 %v573
      %v1082 = vpop.f32.mrf.mxu0
      %v1083 = vadd.f32 0.0, %v1082
      %v1084 = vpop.f32.mrf.mxu0
      %v1085 = vadd.f32 0.0, %v1084
      %1086 = vmatmul.bf16.gmra.mxu0 %v576
      %v1087 = vpop.f32.mrf.mxu0
      %v1088 = vadd.f32 0.0, %v1087
      %v1089 = vpop.f32.mrf.mxu0
      %v1090 = vadd.f32 0.0, %v1089
      %1091 = vmatmul.bf16.gmra.mxu0 %v579
      %v1092 = vpop.f32.mrf.mxu0
      %v1093 = vadd.f32 0.0, %v1092
      %v1094 = vpop.f32.mrf.mxu0
      %v1095 = vadd.f32 0.0, %v1094
      %1096 = vmatmul.bf16.gmra.mxu0 %v582
      %v1097 = vpop.f32.mrf.mxu0
      %v1098 = vadd.f32 0.0, %v1097
      %v1099 = vpop.f32.mrf.mxu0
      %v1100 = vadd.f32 0.0, %v1099
      %1101 = vmatmul.bf16.gmra.mxu0 %v585
      %v1102 = vpop.f32.mrf.mxu0
      %v1103 = vadd.f32 0.0, %v1102
      %v1104 = vpop.f32.mrf.mxu0
      %v1105 = vadd.f32 0.0, %v1104
      %1106 = vmatmul.bf16.gmra.mxu0 %v588
      %v1107 = vpop.f32.mrf.mxu0
      %v1108 = vadd.f32 0.0, %v1107
      %v1109 = vpop.f32.mrf.mxu0
      %v1110 = vadd.f32 0.0, %v1109
      %1111 = vmatmul.bf16.gmra.mxu0 %v591
      %v1112 = vpop.f32.mrf.mxu0
      %v1113 = vadd.f32 0.0, %v1112
      %v1114 = vpop.f32.mrf.mxu0
      %v1115 = vadd.f32 0.0, %v1114
      %1116 = vmatmul.bf16.gmra.mxu0 %v594
      %v1117 = vpop.f32.mrf.mxu0
      %v1118 = vadd.f32 0.0, %v1117
      %v1119 = vpop.f32.mrf.mxu0
      %v1120 = vadd.f32 0.0, %v1119
      %1121 = vmatmul.bf16.gmra.mxu0 %v597
      %v1122 = vpop.f32.mrf.mxu0
      %v1123 = vadd.f32 0.0, %v1122
      %v1124 = vpop.f32.mrf.mxu0
      %v1125 = vadd.f32 0.0, %v1124
      %1126 = vmatmul.bf16.gmra.mxu0 %v600
      %v1127 = vpop.f32.mrf.mxu0
      %v1128 = vadd.f32 0.0, %v1127
      %v1129 = vpop.f32.mrf.mxu0
      %v1130 = vadd.f32 0.0, %v1129
      %1131 = vmatmul.bf16.gmra.mxu0 %v603
      %v1132 = vpop.f32.mrf.mxu0
      %v1133 = vadd.f32 0.0, %v1132
      %v1134 = vpop.f32.mrf.mxu0
      %v1135 = vadd.f32 0.0, %v1134
      %1136 = vmatmul.bf16.gmra.mxu0 %v1056
      %v1137 = vpop.f32.mrf.mxu0
      %v1138 = vadd.f32 0.0, %v1137
      %v1139 = vpop.f32.mrf.mxu0
      %1140 = vdwg.mxu0
      %v1141 = vadd.f32 %v992, %v1068
      %v1142 = vadd.f32 %v993, %v1070
      %v1143 = vadd.f32 %v994, %v1073
      %v1144 = vadd.f32 %v995, %v1075
      %v1145 = vadd.f32 %v996, %v1078
      %v1146 = vadd.f32 %v997, %v1080
      %v1147 = vadd.f32 %v998, %v1083
      %v1148 = vadd.f32 %v999, %v1085
      %v1149 = vadd.f32 %v1000, %v1088
      %v1150 = vadd.f32 %v1001, %v1090
      %v1151 = vadd.f32 %v1002, %v1093
      %v1152 = vadd.f32 %v1003, %v1095
      %v1153 = vadd.f32 %v1004, %v1098
      %v1154 = vadd.f32 %v1005, %v1100
      %v1155 = vadd.f32 %v1006, %v1103
      %v1156 = vadd.f32 %v1007, %v1105
      %v1157 = vadd.f32 %v1008, %v1108
      %v1158 = vadd.f32 %v1009, %v1110
      %v1159 = vadd.f32 %v1010, %v1113
      %v1160 = vadd.f32 %v1011, %v1115
      %v1161 = vadd.f32 %v1012, %v1118
      %v1162 = vadd.f32 %v1013, %v1120
      %v1163 = vadd.f32 %v1014, %v1123
      %v1164 = vadd.f32 %v1015, %v1125
      %v1165 = vadd.f32 %v1016, %v1128
      %v1166 = vadd.f32 %v1017, %v1130
      %v1167 = vadd.f32 %v1018, %v1133
      %v1168 = vadd.f32 %v1019, %v1135
      %v1169 = vadd.f32 %v1020, %v1138
      %v1170 = vpack.c.bf16 %v510, %v510
      %s1171 = scalar_lea.vmem %s1, 96
      %v1172 = vld [vmem:[%s1171] sm:$0xf]
      %v1173 = vld [vmem:[%s1171 + $0x4] sm:$0xf]
      %v1174 = vld [vmem:[%s1171 + $0x8] sm:$0xf]
      %v1175 = vld [vmem:[%s1171 + $0xc] sm:$0xf]
      %v1176 = vld [vmem:[%s1171 + $0x10] sm:$0xf]
      %v1177 = vld [vmem:[%s1171 + $0x14] sm:$0xf]
      %v1178 = vld [vmem:[%s1171 + $0x18] sm:$0xf]
      %v1179 = vld [vmem:[%s1171 + $0x1c] sm:$0xf]
      %v1180 = vshll.u32 %v1021, 16
      %v1182 = vrot.slane %v1180, 1
      %v1183 = vsel %vm730, %v834, %v1182
      %v1184 = vshrl.u32 %v1021, 16
      %v1186 = vor.u32 %v1184, %v1182
      %v1188 = vshll.u32 %v1170, 16
      %v1190 = vrot.slane %v1188, 1
      %v1191 = vsel %vm730, %v1186, %v1190
      %v1200 = vunpack.c.l.b16 %v1172
      %v1201 = vunpack.c.l.b16 %v1173
      %v1202 = vunpack.c.l.b16 %v1174
      %v1203 = vunpack.c.l.b16 %v1175
      %v1204 = vunpack.c.l.b16 %v1176
      %v1205 = vunpack.c.l.b16 %v1177
      %v1206 = vunpack.c.l.b16 %v1178
      %v1207 = vunpack.c.l.b16 %v1179
      %v1208 = vpack.c.b16 %v1201, %v1200
      %v1209 = vpack.c.b16 %v1203, %v1202
      %v1210 = vpack.c.b16 %v1205, %v1204
      %v1211 = vpack.c.b16 %v1207, %v1206
      %v1217 = vsel %vm559, %v1183, 0
      %v1220 = vsel %vm559, %v1191, 0
      %1222 = vmatpush.bf16.msra.mxu0 0
      %1223 = vmatpush.bf16.msra.mxu0 0
      %1224 = vmatpush.bf16.msra.mxu0 0
      %1225 = vmatpush.bf16.msra.mxu0 0
      %1226 = vmatpush.bf16.msra.mxu0 %v1211
      %1227 = vmatpush.bf16.msra.mxu0 %v1210
      %1228 = vmatpush.bf16.msra.mxu0 %v1209
      %1229 = vmatpush.bf16.msra.mxu0 %v1208
      %1230 = vmatmul.bf16.gmra.mxu0 %v868
      %v1231 = vpop.f32.mrf.mxu0
      %v1232 = vadd.f32 0.0, %v1231
      %v1233 = vpop.f32.mrf.mxu0
      %v1234 = vadd.f32 0.0, %v1233
      %1235 = vmatmul.bf16.gmra.mxu0 %v871
      %v1236 = vpop.f32.mrf.mxu0
      %v1237 = vadd.f32 0.0, %v1236
      %v1238 = vpop.f32.mrf.mxu0
      %v1239 = vadd.f32 0.0, %v1238
      %1240 = vmatmul.bf16.gmra.mxu0 %v874
      %v1241 = vpop.f32.mrf.mxu0
      %v1242 = vadd.f32 0.0, %v1241
      %v1243 = vpop.f32.mrf.mxu0
      %v1244 = vadd.f32 0.0, %v1243
      %1245 = vmatmul.bf16.gmra.mxu0 %v877
      %v1246 = vpop.f32.mrf.mxu0
      %v1247 = vadd.f32 0.0, %v1246
      %v1248 = vpop.f32.mrf.mxu0
      %v1249 = vadd.f32 0.0, %v1248
      %1250 = vmatmul.bf16.gmra.mxu0 %v880
      %v1251 = vpop.f32.mrf.mxu0
      %v1252 = vadd.f32 0.0, %v1251
      %v1253 = vpop.f32.mrf.mxu0
      %v1254 = vadd.f32 0.0, %v1253
      %1255 = vmatmul.bf16.gmra.mxu0 %v883
      %v1256 = vpop.f32.mrf.mxu0
      %v1257 = vadd.f32 0.0, %v1256
      %v1258 = vpop.f32.mrf.mxu0
      %v1259 = vadd.f32 0.0, %v1258
      %1260 = vmatmul.bf16.gmra.mxu0 %v886
      %v1261 = vpop.f32.mrf.mxu0
      %v1262 = vadd.f32 0.0, %v1261
      %v1263 = vpop.f32.mrf.mxu0
      %v1264 = vadd.f32 0.0, %v1263
      %1265 = vmatmul.bf16.gmra.mxu0 %v889
      %v1266 = vpop.f32.mrf.mxu0
      %v1267 = vadd.f32 0.0, %v1266
      %v1268 = vpop.f32.mrf.mxu0
      %v1269 = vadd.f32 0.0, %v1268
      %1270 = vmatmul.bf16.gmra.mxu0 %v892
      %v1271 = vpop.f32.mrf.mxu0
      %v1272 = vadd.f32 0.0, %v1271
      %v1273 = vpop.f32.mrf.mxu0
      %v1274 = vadd.f32 0.0, %v1273
      %1275 = vmatmul.bf16.gmra.mxu0 %v895
      %v1276 = vpop.f32.mrf.mxu0
      %v1277 = vadd.f32 0.0, %v1276
      %v1278 = vpop.f32.mrf.mxu0
      %v1279 = vadd.f32 0.0, %v1278
      %1280 = vmatmul.bf16.gmra.mxu0 %v898
      %v1281 = vpop.f32.mrf.mxu0
      %v1282 = vadd.f32 0.0, %v1281
      %v1283 = vpop.f32.mrf.mxu0
      %v1284 = vadd.f32 0.0, %v1283
      %1285 = vmatmul.bf16.gmra.mxu0 %v901
      %v1286 = vpop.f32.mrf.mxu0
      %v1287 = vadd.f32 0.0, %v1286
      %v1288 = vpop.f32.mrf.mxu0
      %v1289 = vadd.f32 0.0, %v1288
      %1290 = vmatmul.bf16.gmra.mxu0 %v904
      %v1291 = vpop.f32.mrf.mxu0
      %v1292 = vadd.f32 0.0, %v1291
      %v1293 = vpop.f32.mrf.mxu0
      %v1294 = vadd.f32 0.0, %v1293
      %1295 = vmatmul.bf16.gmra.mxu0 %v1217
      %v1296 = vpop.f32.mrf.mxu0
      %v1297 = vadd.f32 0.0, %v1296
      %v1298 = vpop.f32.mrf.mxu0
      %v1299 = vadd.f32 0.0, %v1298
      %1300 = vmatmul.bf16.gmra.mxu0 %v1220
      %v1301 = vpop.f32.mrf.mxu0
      %v1302 = vadd.f32 0.0, %v1301
      %v1303 = vpop.f32.mrf.mxu0
      %1304 = vdwg.mxu0
      %v1305 = vadd.f32 %v1141, %v1232
      %v1306 = vadd.f32 %v1142, %v1234
      %v1307 = vadd.f32 %v1143, %v1237
      %v1308 = vadd.f32 %v1144, %v1239
      %v1309 = vadd.f32 %v1145, %v1242
      %v1310 = vadd.f32 %v1146, %v1244
      %v1311 = vadd.f32 %v1147, %v1247
      %v1312 = vadd.f32 %v1148, %v1249
      %v1313 = vadd.f32 %v1149, %v1252
      %v1314 = vadd.f32 %v1150, %v1254
      %v1315 = vadd.f32 %v1151, %v1257
      %v1316 = vadd.f32 %v1152, %v1259
      %v1317 = vadd.f32 %v1153, %v1262
      %v1318 = vadd.f32 %v1154, %v1264
      %v1319 = vadd.f32 %v1155, %v1267
      %v1320 = vadd.f32 %v1156, %v1269
      %v1321 = vadd.f32 %v1157, %v1272
      %v1322 = vadd.f32 %v1158, %v1274
      %v1323 = vadd.f32 %v1159, %v1277
      %v1324 = vadd.f32 %v1160, %v1279
      %v1325 = vadd.f32 %v1161, %v1282
      %v1326 = vadd.f32 %v1162, %v1284
      %v1327 = vadd.f32 %v1163, %v1287
      %v1328 = vadd.f32 %v1164, %v1289
      %v1329 = vadd.f32 %v1165, %v1292
      %v1330 = vadd.f32 %v1166, %v1294
      %v1331 = vadd.f32 %v1167, %v1297
      %v1332 = vadd.f32 %v1168, %v1299
      %v1333 = vadd.f32 %v1169, %v1302
      %vm1334 = vcmp.ge.f32.partialorder %v1305, 0.0
      %vm1335 = vcmp.ge.f32.partialorder %v1306, 0.0
      %vm1336 = vcmp.ge.f32.partialorder %v1307, 0.0
      %vm1337 = vcmp.ge.f32.partialorder %v1308, 0.0
      %vm1338 = vcmp.ge.f32.partialorder %v1309, 0.0
      %vm1339 = vcmp.ge.f32.partialorder %v1310, 0.0
      %vm1340 = vcmp.ge.f32.partialorder %v1311, 0.0
      %vm1341 = vcmp.ge.f32.partialorder %v1312, 0.0
      %vm1342 = vcmp.ge.f32.partialorder %v1313, 0.0
      %vm1343 = vcmp.ge.f32.partialorder %v1314, 0.0
      %vm1344 = vcmp.ge.f32.partialorder %v1315, 0.0
      %vm1345 = vcmp.ge.f32.partialorder %v1316, 0.0
      %vm1346 = vcmp.ge.f32.partialorder %v1317, 0.0
      %vm1347 = vcmp.ge.f32.partialorder %v1318, 0.0
      %vm1348 = vcmp.ge.f32.partialorder %v1319, 0.0
      %vm1349 = vcmp.ge.f32.partialorder %v1320, 0.0
      %vm1350 = vcmp.ge.f32.partialorder %v1321, 0.0
      %vm1351 = vcmp.ge.f32.partialorder %v1322, 0.0
      %vm1352 = vcmp.ge.f32.partialorder %v1323, 0.0
      %vm1353 = vcmp.ge.f32.partialorder %v1324, 0.0
      %vm1354 = vcmp.ge.f32.partialorder %v1325, 0.0
      %vm1355 = vcmp.ge.f32.partialorder %v1326, 0.0
      %vm1356 = vcmp.ge.f32.partialorder %v1327, 0.0
      %vm1357 = vcmp.ge.f32.partialorder %v1328, 0.0
      %vm1358 = vcmp.ge.f32.partialorder %v1329, 0.0
      %vm1359 = vcmp.ge.f32.partialorder %v1330, 0.0
      %vm1360 = vcmp.ge.f32.partialorder %v1331, 0.0
      %vm1361 = vcmp.ge.f32.partialorder %v1332, 0.0
      %vm1362 = vcmp.ge.f32.partialorder %v1333, 0.0
      %v1363 = vmul.f32 %v1305, 0.2
      %v1364 = vmul.f32 %v1306, 0.2
      %v1365 = vmul.f32 %v1307, 0.2
      %v1366 = vmul.f32 %v1308, 0.2
      %v1367 = vmul.f32 %v1309, 0.2
      %v1368 = vmul.f32 %v1310, 0.2
      %v1369 = vmul.f32 %v1311, 0.2
      %v1370 = vmul.f32 %v1312, 0.2
      %v1371 = vmul.f32 %v1313, 0.2
      %v1372 = vmul.f32 %v1314, 0.2
      %v1373 = vmul.f32 %v1315, 0.2
      %v1374 = vmul.f32 %v1316, 0.2
      %v1375 = vmul.f32 %v1317, 0.2
      %v1376 = vmul.f32 %v1318, 0.2
      %v1377 = vmul.f32 %v1319, 0.2
      %v1378 = vmul.f32 %v1320, 0.2
      %v1379 = vmul.f32 %v1321, 0.2
      %v1380 = vmul.f32 %v1322, 0.2
      %v1381 = vmul.f32 %v1323, 0.2
      %v1382 = vmul.f32 %v1324, 0.2
      %v1383 = vmul.f32 %v1325, 0.2
      %v1384 = vmul.f32 %v1326, 0.2
      %v1385 = vmul.f32 %v1327, 0.2
      %v1386 = vmul.f32 %v1328, 0.2
      %v1387 = vmul.f32 %v1329, 0.2
      %v1388 = vmul.f32 %v1330, 0.2
      %v1389 = vmul.f32 %v1331, 0.2
      %v1390 = vmul.f32 %v1332, 0.2
      %v1391 = vmul.f32 %v1333, 0.2
      %v1392 = vsel %vm1334, %v1305, %v1363
      %v1393 = vsel %vm1335, %v1306, %v1364
      %v1394 = vsel %vm1336, %v1307, %v1365
      %v1395 = vsel %vm1337, %v1308, %v1366
      %v1396 = vsel %vm1338, %v1309, %v1367
      %v1397 = vsel %vm1339, %v1310, %v1368
      %v1398 = vsel %vm1340, %v1311, %v1369
      %v1399 = vsel %vm1341, %v1312, %v1370
      %v1400 = vsel %vm1342, %v1313, %v1371
      %v1401 = vsel %vm1343, %v1314, %v1372
      %v1402 = vsel %vm1344, %v1315, %v1373
      %v1403 = vsel %vm1345, %v1316, %v1374
      %v1404 = vsel %vm1346, %v1317, %v1375
      %v1405 = vsel %vm1347, %v1318, %v1376
      %v1406 = vsel %vm1348, %v1319, %v1377
      %v1407 = vsel %vm1349, %v1320, %v1378
      %v1408 = vsel %vm1350, %v1321, %v1379
      %v1409 = vsel %vm1351, %v1322, %v1380
      %v1410 = vsel %vm1352, %v1323, %v1381
      %v1411 = vsel %vm1353, %v1324, %v1382
      %v1412 = vsel %vm1354, %v1325, %v1383
      %v1413 = vsel %vm1355, %v1326, %v1384
      %v1414 = vsel %vm1356, %v1327, %v1385
      %v1415 = vsel %vm1357, %v1328, %v1386
      %v1416 = vsel %vm1358, %v1329, %v1387
      %v1417 = vsel %vm1359, %v1330, %v1388
      %v1418 = vsel %vm1360, %v1331, %v1389
      %v1419 = vsel %vm1361, %v1332, %v1390
      %v1420 = vsel %vm1362, %v1333, %v1391
      %v1421 = vpack.c.bf16 %v1392, %v1392
      %v1422 = vpack.c.bf16 %v1393, %v1393
      %v1423 = vpack.c.bf16 %v1394, %v1394
      %v1424 = vpack.c.bf16 %v1395, %v1395
      %v1425 = vpack.c.bf16 %v1396, %v1396
      %v1426 = vpack.c.bf16 %v1397, %v1397
      %v1427 = vpack.c.bf16 %v1398, %v1398
      %v1428 = vpack.c.bf16 %v1399, %v1399
      %v1429 = vpack.c.bf16 %v1400, %v1400
      %v1430 = vpack.c.bf16 %v1401, %v1401
      %v1431 = vpack.c.bf16 %v1402, %v1402
      %v1432 = vpack.c.bf16 %v1403, %v1403
      %v1433 = vpack.c.bf16 %v1404, %v1404
      %v1434 = vpack.c.bf16 %v1405, %v1405
      %v1435 = vpack.c.bf16 %v1406, %v1406
      %v1436 = vpack.c.bf16 %v1407, %v1407
      %v1437 = vpack.c.bf16 %v1408, %v1408
      %v1438 = vpack.c.bf16 %v1409, %v1409
      %v1439 = vpack.c.bf16 %v1410, %v1410
      %v1440 = vpack.c.bf16 %v1411, %v1411
      %v1441 = vpack.c.bf16 %v1412, %v1412
      %v1442 = vpack.c.bf16 %v1413, %v1413
      %vm1443 = vcmask 257024
      %1444 = vst.msk [vmem:[#allocation2] sm:$0xf] %vm1443, %v1421
      %1445 = vst.msk [vmem:[#allocation2 + $0x10] sm:$0xf] %vm1443, %v1422
      %1446 = vst.msk [vmem:[#allocation2 + $0x20] sm:$0xf] %vm1443, %v1423
      %1447 = vst.msk [vmem:[#allocation2 + $0x30] sm:$0xf] %vm1443, %v1424
      %1448 = vst.msk [vmem:[#allocation2 + $0x40] sm:$0xf] %vm1443, %v1425
      %1449 = vst.msk [vmem:[#allocation2 + $0x50] sm:$0xf] %vm1443, %v1426
      %1450 = vst.msk [vmem:[#allocation2 + $0x60] sm:$0xf] %vm1443, %v1427
      %1451 = vst.msk [vmem:[#allocation2 + $0x70] sm:$0xf] %vm1443, %v1428
      %1452 = vst.msk [vmem:[#allocation2 + $0x80] sm:$0xf] %vm1443, %v1429
      %1453 = vst.msk [vmem:[#allocation2 + $0x90] sm:$0xf] %vm1443, %v1430
      %1454 = vst.msk [vmem:[#allocation2 + $0xa0] sm:$0xf] %vm1443, %v1431
      %1455 = vst.msk [vmem:[#allocation2 + $0xb0] sm:$0xf] %vm1443, %v1432
      %1456 = vst.msk [vmem:[#allocation2 + $0xc0] sm:$0xf] %vm1443, %v1433
      %1457 = vst.msk [vmem:[#allocation2 + $0xd0] sm:$0xf] %vm1443, %v1434
      %1458 = vst.msk [vmem:[#allocation2 + $0xe0] sm:$0xf] %vm1443, %v1435
      %1459 = vst.msk [vmem:[#allocation2 + $0xf0] sm:$0xf] %vm1443, %v1436
      %1460 = vst.msk [vmem:[#allocation2 + $0x100] sm:$0xf] %vm1443, %v1437
      %1461 = vst.msk [vmem:[#allocation2 + $0x110] sm:$0xf] %vm1443, %v1438
      %1462 = vst.msk [vmem:[#allocation2 + $0x120] sm:$0xf] %vm1443, %v1439
      %1463 = vst.msk [vmem:[#allocation2 + $0x130] sm:$0xf] %vm1443, %v1440
      %1464 = vst.msk [vmem:[#allocation2 + $0x140] sm:$0xf] %vm1443, %v1441
      %1465 = vst.msk [vmem:[#allocation2 + $0x150] sm:$0xf] %vm1443, %v1442
      %v1466 = vpack.c.bf16 %v1414, %v1414
      %vm1467 = vsmask.f32 3328
      %vm1468 = vsmask.f32 7440
      %vm1469 = vmor %vm1467, %vm1468
      %v1471 = vshrl.u32 %v1421, 16
      %v1473 = vrot.slane %v1471, 4
      %v1474 = vshll.u32 %v1421, 16
      %v1476 = vrot.slane %v1474, 5
      %v1477 = vor.u32 %v1473, %v1476
      %v1478 = vrot.slane %v1477, 4
      %v1480 = vshll.u32 %v1422, 16
      %v1482 = vrot.slane %v1480, 5
      %v1483 = vsel %vm1469, %v1478, %v1482
      %v1484 = vshrl.u32 %v1422, 16
      %v1486 = vrot.slane %v1484, 4
      %v1487 = vor.u32 %v1486, %v1482
      %v1488 = vrot.slane %v1487, 4
      %v1490 = vshll.u32 %v1423, 16
      %v1492 = vrot.slane %v1490, 5
      %v1493 = vsel %vm1469, %v1488, %v1492
      %v1494 = vshrl.u32 %v1423, 16
      %v1496 = vrot.slane %v1494, 4
      %v1497 = vor.u32 %v1496, %v1492
      %v1498 = vrot.slane %v1497, 4
      %v1500 = vshll.u32 %v1424, 16
      %v1502 = vrot.slane %v1500, 5
      %v1503 = vsel %vm1469, %v1498, %v1502
      %v1504 = vshrl.u32 %v1424, 16
      %v1506 = vrot.slane %v1504, 4
      %v1507 = vor.u32 %v1506, %v1502
      %v1508 = vrot.slane %v1507, 4
      %v1510 = vshll.u32 %v1425, 16
      %v1512 = vrot.slane %v1510, 5
      %v1513 = vsel %vm1469, %v1508, %v1512
      %v1514 = vshrl.u32 %v1425, 16
      %v1516 = vrot.slane %v1514, 4
      %v1517 = vor.u32 %v1516, %v1512
      %v1518 = vrot.slane %v1517, 4
      %v1520 = vshll.u32 %v1426, 16
      %v1522 = vrot.slane %v1520, 5
      %v1523 = vsel %vm1469, %v1518, %v1522
      %v1524 = vshrl.u32 %v1426, 16
      %v1526 = vrot.slane %v1524, 4
      %v1527 = vor.u32 %v1526, %v1522
      %v1528 = vrot.slane %v1527, 4
      %v1530 = vshll.u32 %v1427, 16
      %v1532 = vrot.slane %v1530, 5
      %v1533 = vsel %vm1469, %v1528, %v1532
      %v1534 = vshrl.u32 %v1427, 16
      %v1536 = vrot.slane %v1534, 4
      %v1537 = vor.u32 %v1536, %v1532
      %v1538 = vrot.slane %v1537, 4
      %v1540 = vshll.u32 %v1428, 16
      %v1542 = vrot.slane %v1540, 5
      %v1543 = vsel %vm1469, %v1538, %v1542
      %v1544 = vshrl.u32 %v1428, 16
      %v1546 = vrot.slane %v1544, 4
      %v1547 = vor.u32 %v1546, %v1542
      %v1548 = vrot.slane %v1547, 4
      %v1550 = vshll.u32 %v1429, 16
      %v1552 = vrot.slane %v1550, 5
      %v1553 = vsel %vm1469, %v1548, %v1552
      %v1554 = vshrl.u32 %v1429, 16
      %v1556 = vrot.slane %v1554, 4
      %v1557 = vor.u32 %v1556, %v1552
      %v1558 = vrot.slane %v1557, 4
      %v1560 = vshll.u32 %v1430, 16
      %v1562 = vrot.slane %v1560, 5
      %v1563 = vsel %vm1469, %v1558, %v1562
      %v1564 = vshrl.u32 %v1430, 16
      %v1566 = vrot.slane %v1564, 4
      %v1567 = vor.u32 %v1566, %v1562
      %v1568 = vrot.slane %v1567, 4
      %v1570 = vshll.u32 %v1431, 16
      %v1572 = vrot.slane %v1570, 5
      %v1573 = vsel %vm1469, %v1568, %v1572
      %v1574 = vshrl.u32 %v1431, 16
      %v1576 = vrot.slane %v1574, 4
      %v1577 = vor.u32 %v1576, %v1572
      %v1578 = vrot.slane %v1577, 4
      %v1580 = vshll.u32 %v1432, 16
      %v1582 = vrot.slane %v1580, 5
      %v1583 = vsel %vm1469, %v1578, %v1582
      %v1584 = vshrl.u32 %v1432, 16
      %v1586 = vrot.slane %v1584, 4
      %v1587 = vor.u32 %v1586, %v1582
      %v1588 = vrot.slane %v1587, 4
      %v1590 = vshll.u32 %v1433, 16
      %v1592 = vrot.slane %v1590, 5
      %v1593 = vsel %vm1469, %v1588, %v1592
      %v1594 = vshrl.u32 %v1433, 16
      %v1596 = vrot.slane %v1594, 4
      %v1597 = vor.u32 %v1596, %v1592
      %v1598 = vrot.slane %v1597, 4
      %v1600 = vshll.u32 %v1434, 16
      %v1602 = vrot.slane %v1600, 5
      %v1603 = vsel %vm1469, %v1598, %v1602
      %v1604 = vshrl.u32 %v1434, 16
      %v1606 = vrot.slane %v1604, 4
      %v1607 = vor.u32 %v1606, %v1602
      %v1608 = vrot.slane %v1607, 4
      %v1610 = vshll.u32 %v1435, 16
      %v1612 = vrot.slane %v1610, 5
      %v1613 = vsel %vm1469, %v1608, %v1612
      %v1614 = vshrl.u32 %v1435, 16
      %v1616 = vrot.slane %v1614, 4
      %v1617 = vor.u32 %v1616, %v1612
      %v1618 = vrot.slane %v1617, 4
      %v1620 = vshll.u32 %v1436, 16
      %v1622 = vrot.slane %v1620, 5
      %v1623 = vsel %vm1469, %v1618, %v1622
      %v1624 = vshrl.u32 %v1436, 16
      %v1626 = vrot.slane %v1624, 4
      %v1627 = vor.u32 %v1626, %v1622
      %v1628 = vrot.slane %v1627, 4
      %v1630 = vshll.u32 %v1437, 16
      %v1632 = vrot.slane %v1630, 5
      %v1633 = vsel %vm1469, %v1628, %v1632
      %v1634 = vshrl.u32 %v1437, 16
      %v1636 = vrot.slane %v1634, 4
      %v1637 = vor.u32 %v1636, %v1632
      %v1638 = vrot.slane %v1637, 4
      %v1640 = vshll.u32 %v1438, 16
      %v1642 = vrot.slane %v1640, 5
      %v1643 = vsel %vm1469, %v1638, %v1642
      %v1644 = vshrl.u32 %v1438, 16
      %v1646 = vrot.slane %v1644, 4
      %v1647 = vor.u32 %v1646, %v1642
      %v1648 = vrot.slane %v1647, 4
      %v1650 = vshll.u32 %v1439, 16
      %v1652 = vrot.slane %v1650, 5
      %v1653 = vsel %vm1469, %v1648, %v1652
      %v1654 = vshrl.u32 %v1439, 16
      %v1656 = vrot.slane %v1654, 4
      %v1657 = vor.u32 %v1656, %v1652
      %v1658 = vrot.slane %v1657, 4
      %v1660 = vshll.u32 %v1440, 16
      %v1662 = vrot.slane %v1660, 5
      %v1663 = vsel %vm1469, %v1658, %v1662
      %v1664 = vshrl.u32 %v1440, 16
      %v1666 = vrot.slane %v1664, 4
      %v1667 = vor.u32 %v1666, %v1662
      %v1668 = vrot.slane %v1667, 4
      %v1670 = vshll.u32 %v1441, 16
      %v1672 = vrot.slane %v1670, 5
      %v1673 = vsel %vm1469, %v1668, %v1672
      %v1674 = vshrl.u32 %v1441, 16
      %v1676 = vrot.slane %v1674, 4
      %v1677 = vor.u32 %v1676, %v1672
      %v1678 = vrot.slane %v1677, 4
      %v1680 = vshll.u32 %v1442, 16
      %v1682 = vrot.slane %v1680, 5
      %v1683 = vsel %vm1469, %v1678, %v1682
      %v1684 = vshrl.u32 %v1442, 16
      %v1686 = vrot.slane %v1684, 4
      %v1687 = vor.u32 %v1686, %v1682
      %v1688 = vrot.slane %v1687, 4
      %v1690 = vshll.u32 %v1466, 16
      %v1692 = vrot.slane %v1690, 5
      %v1693 = vsel %vm1469, %v1688, %v1692
      %1694 = vrot.lane.b32.xlu0 %v1483, 32
      %v1695 = vpop.permute.xlu0 %1694
      %1696 = vrot.lane.b32.xlu0 %v1493, 32
      %v1697 = vpop.permute.xlu0 %1696
      %1698 = vrot.lane.b32.xlu0 %v1503, 32
      %v1699 = vpop.permute.xlu0 %1698
      %1700 = vrot.lane.b32.xlu0 %v1513, 32
      %v1701 = vpop.permute.xlu0 %1700
      %1702 = vrot.lane.b32.xlu0 %v1523, 32
      %v1703 = vpop.permute.xlu0 %1702
      %1704 = vrot.lane.b32.xlu0 %v1533, 32
      %v1705 = vpop.permute.xlu0 %1704
      %1706 = vrot.lane.b32.xlu0 %v1543, 32
      %v1707 = vpop.permute.xlu0 %1706
      %1708 = vrot.lane.b32.xlu0 %v1553, 32
      %v1709 = vpop.permute.xlu0 %1708
      %1710 = vrot.lane.b32.xlu0 %v1563, 32
      %v1711 = vpop.permute.xlu0 %1710
      %1712 = vrot.lane.b32.xlu0 %v1573, 32
      %v1713 = vpop.permute.xlu0 %1712
      %1714 = vrot.lane.b32.xlu0 %v1583, 32
      %v1715 = vpop.permute.xlu0 %1714
      %1716 = vrot.lane.b32.xlu0 %v1593, 32
      %v1717 = vpop.permute.xlu0 %1716
      %1718 = vrot.lane.b32.xlu0 %v1603, 32
      %v1719 = vpop.permute.xlu0 %1718
      %1720 = vrot.lane.b32.xlu0 %v1613, 32
      %v1721 = vpop.permute.xlu0 %1720
      %1722 = vrot.lane.b32.xlu0 %v1623, 32
      %v1723 = vpop.permute.xlu0 %1722
      %1724 = vrot.lane.b32.xlu0 %v1633, 32
      %v1725 = vpop.permute.xlu0 %1724
      %1726 = vrot.lane.b32.xlu0 %v1643, 32
      %v1727 = vpop.permute.xlu0 %1726
      %1728 = vrot.lane.b32.xlu0 %v1653, 32
      %v1729 = vpop.permute.xlu0 %1728
      %1730 = vrot.lane.b32.xlu0 %v1663, 32
      %v1731 = vpop.permute.xlu0 %1730
      %1732 = vrot.lane.b32.xlu0 %v1673, 32
      %v1733 = vpop.permute.xlu0 %1732
      %1734 = vrot.lane.b32.xlu0 %v1683, 32
      %v1735 = vpop.permute.xlu0 %1734
      %1736 = vrot.lane.b32.xlu0 %v1693, 32
      %v1737 = vpop.permute.xlu0 %1736
      %vm1760 = vcmask 519424
      %1761 = vst.msk [vmem:[#allocation2] sm:$0xf] %vm1760, %v1695
      %1762 = vst.msk [vmem:[#allocation2 + $0x10] sm:$0xf] %vm1760, %v1697
      %1763 = vst.msk [vmem:[#allocation2 + $0x20] sm:$0xf] %vm1760, %v1699
      %1764 = vst.msk [vmem:[#allocation2 + $0x30] sm:$0xf] %vm1760, %v1701
      %1765 = vst.msk [vmem:[#allocation2 + $0x40] sm:$0xf] %vm1760, %v1703
      %1766 = vst.msk [vmem:[#allocation2 + $0x50] sm:$0xf] %vm1760, %v1705
      %1767 = vst.msk [vmem:[#allocation2 + $0x60] sm:$0xf] %vm1760, %v1707
      %1768 = vst.msk [vmem:[#allocation2 + $0x70] sm:$0xf] %vm1760, %v1709
      %1769 = vst.msk [vmem:[#allocation2 + $0x80] sm:$0xf] %vm1760, %v1711
      %1770 = vst.msk [vmem:[#allocation2 + $0x90] sm:$0xf] %vm1760, %v1713
      %1771 = vst.msk [vmem:[#allocation2 + $0xa0] sm:$0xf] %vm1760, %v1715
      %1772 = vst.msk [vmem:[#allocation2 + $0xb0] sm:$0xf] %vm1760, %v1717
      %1773 = vst.msk [vmem:[#allocation2 + $0xc0] sm:$0xf] %vm1760, %v1719
      %1774 = vst.msk [vmem:[#allocation2 + $0xd0] sm:$0xf] %vm1760, %v1721
      %1775 = vst.msk [vmem:[#allocation2 + $0xe0] sm:$0xf] %vm1760, %v1723
      %1776 = vst.msk [vmem:[#allocation2 + $0xf0] sm:$0xf] %vm1760, %v1725
      %1777 = vst.msk [vmem:[#allocation2 + $0x100] sm:$0xf] %vm1760, %v1727
      %1778 = vst.msk [vmem:[#allocation2 + $0x110] sm:$0xf] %vm1760, %v1729
      %1779 = vst.msk [vmem:[#allocation2 + $0x120] sm:$0xf] %vm1760, %v1731
      %1780 = vst.msk [vmem:[#allocation2 + $0x130] sm:$0xf] %vm1760, %v1733
      %1781 = vst.msk [vmem:[#allocation2 + $0x140] sm:$0xf] %vm1760, %v1735
      %1782 = vst.msk [vmem:[#allocation2 + $0x150] sm:$0xf] %vm1760, %v1737
      %vm1806 = vcmask 1042432
      %vm1807 = vcmask 1046532
      %vm1808 = vmor %vm1806, %vm1807
      %v1809 = vrot.slane %v1421, 5
      %v1810 = vrot.slane %v1809, 4
      %v1811 = vrot.slane %v1422, 5
      %v1812 = vsel %vm1808, %v1810, %v1811
      %v1813 = vrot.slane %v1811, 4
      %v1814 = vrot.slane %v1423, 5
      %v1815 = vsel %vm1808, %v1813, %v1814
      %v1816 = vrot.slane %v1814, 4
      %v1817 = vrot.slane %v1424, 5
      %v1818 = vsel %vm1808, %v1816, %v1817
      %v1819 = vrot.slane %v1817, 4
      %v1820 = vrot.slane %v1425, 5
      %v1821 = vsel %vm1808, %v1819, %v1820
      %v1822 = vrot.slane %v1820, 4
      %v1823 = vrot.slane %v1426, 5
      %v1824 = vsel %vm1808, %v1822, %v1823
      %v1825 = vrot.slane %v1823, 4
      %v1826 = vrot.slane %v1427, 5
      %v1827 = vsel %vm1808, %v1825, %v1826
      %v1828 = vrot.slane %v1826, 4
      %v1829 = vrot.slane %v1428, 5
      %v1830 = vsel %vm1808, %v1828, %v1829
      %v1831 = vrot.slane %v1829, 4
      %v1832 = vrot.slane %v1429, 5
      %v1833 = vsel %vm1808, %v1831, %v1832
      %v1834 = vrot.slane %v1832, 4
      %v1835 = vrot.slane %v1430, 5
      %v1836 = vsel %vm1808, %v1834, %v1835
      %v1837 = vrot.slane %v1835, 4
      %v1838 = vrot.slane %v1431, 5
      %v1839 = vsel %vm1808, %v1837, %v1838
      %v1840 = vrot.slane %v1838, 4
      %v1841 = vrot.slane %v1432, 5
      %v1842 = vsel %vm1808, %v1840, %v1841
      %v1843 = vrot.slane %v1841, 4
      %v1844 = vrot.slane %v1433, 5
      %v1845 = vsel %vm1808, %v1843, %v1844
      %v1846 = vrot.slane %v1844, 4
      %v1847 = vrot.slane %v1434, 5
      %v1848 = vsel %vm1808, %v1846, %v1847
      %v1849 = vrot.slane %v1847, 4
      %v1850 = vrot.slane %v1435, 5
      %v1851 = vsel %vm1808, %v1849, %v1850
      %v1852 = vrot.slane %v1850, 4
      %v1853 = vrot.slane %v1436, 5
      %v1854 = vsel %vm1808, %v1852, %v1853
      %v1855 = vrot.slane %v1853, 4
      %v1856 = vrot.slane %v1437, 5
      %v1857 = vsel %vm1808, %v1855, %v1856
      %v1858 = vrot.slane %v1856, 4
      %v1859 = vrot.slane %v1438, 5
      %v1860 = vsel %vm1808, %v1858, %v1859
      %v1861 = vrot.slane %v1859, 4
      %v1862 = vrot.slane %v1439, 5
      %v1863 = vsel %vm1808, %v1861, %v1862
      %v1864 = vrot.slane %v1862, 4
      %v1865 = vrot.slane %v1440, 5
      %v1866 = vsel %vm1808, %v1864, %v1865
      %v1867 = vrot.slane %v1865, 4
      %v1868 = vrot.slane %v1441, 5
      %v1869 = vsel %vm1808, %v1867, %v1868
      %v1870 = vrot.slane %v1868, 4
      %v1871 = vrot.slane %v1442, 5
      %v1872 = vsel %vm1808, %v1870, %v1871
      %v1873 = vrot.slane %v1871, 4
      %v1874 = vrot.slane %v1466, 5
      %v1875 = vsel %vm1808, %v1873, %v1874
      %1876 = vrot.lane.b32.xlu0 %v1812, 64
      %v1877 = vpop.permute.xlu0 %1876
      %1878 = vrot.lane.b32.xlu0 %v1815, 64
      %v1879 = vpop.permute.xlu0 %1878
      %1880 = vrot.lane.b32.xlu0 %v1818, 64
      %v1881 = vpop.permute.xlu0 %1880
      %1882 = vrot.lane.b32.xlu0 %v1821, 64
      %v1883 = vpop.permute.xlu0 %1882
      %1884 = vrot.lane.b32.xlu0 %v1824, 64
      %v1885 = vpop.permute.xlu0 %1884
      %1886 = vrot.lane.b32.xlu0 %v1827, 64
      %v1887 = vpop.permute.xlu0 %1886
      %1888 = vrot.lane.b32.xlu0 %v1830, 64
      %v1889 = vpop.permute.xlu0 %1888
      %1890 = vrot.lane.b32.xlu0 %v1833, 64
      %v1891 = vpop.permute.xlu0 %1890
      %1892 = vrot.lane.b32.xlu0 %v1836, 64
      %v1893 = vpop.permute.xlu0 %1892
      %1894 = vrot.lane.b32.xlu0 %v1839, 64
      %v1895 = vpop.permute.xlu0 %1894
      %1896 = vrot.lane.b32.xlu0 %v1842, 64
      %v1897 = vpop.permute.xlu0 %1896
      %1898 = vrot.lane.b32.xlu0 %v1845, 64
      %v1899 = vpop.permute.xlu0 %1898
      %1900 = vrot.lane.b32.xlu0 %v1848, 64
      %v1901 = vpop.permute.xlu0 %1900
      %1902 = vrot.lane.b32.xlu0 %v1851, 64
      %v1903 = vpop.permute.xlu0 %1902
      %1904 = vrot.lane.b32.xlu0 %v1854, 64
      %v1905 = vpop.permute.xlu0 %1904
      %1906 = vrot.lane.b32.xlu0 %v1857, 64
      %v1907 = vpop.permute.xlu0 %1906
      %1908 = vrot.lane.b32.xlu0 %v1860, 64
      %v1909 = vpop.permute.xlu0 %1908
      %1910 = vrot.lane.b32.xlu0 %v1863, 64
      %v1911 = vpop.permute.xlu0 %1910
      %1912 = vrot.lane.b32.xlu0 %v1866, 64
      %v1913 = vpop.permute.xlu0 %1912
      %1914 = vrot.lane.b32.xlu0 %v1869, 64
      %v1915 = vpop.permute.xlu0 %1914
      %1916 = vrot.lane.b32.xlu0 %v1872, 64
      %v1917 = vpop.permute.xlu0 %1916
      %1918 = vrot.lane.b32.xlu0 %v1875, 64
      %v1919 = vpop.permute.xlu0 %1918
      %vm1942 = vcmask 781824
      %1943 = vst.msk [vmem:[#allocation2] sm:$0xf] %vm1942, %v1877
      %1944 = vst.msk [vmem:[#allocation2 + $0x10] sm:$0xf] %vm1942, %v1879
      %1945 = vst.msk [vmem:[#allocation2 + $0x20] sm:$0xf] %vm1942, %v1881
      %1946 = vst.msk [vmem:[#allocation2 + $0x30] sm:$0xf] %vm1942, %v1883
      %1947 = vst.msk [vmem:[#allocation2 + $0x40] sm:$0xf] %vm1942, %v1885
      %1948 = vst.msk [vmem:[#allocation2 + $0x50] sm:$0xf] %vm1942, %v1887
      %1949 = vst.msk [vmem:[#allocation2 + $0x60] sm:$0xf] %vm1942, %v1889
      %1950 = vst.msk [vmem:[#allocation2 + $0x70] sm:$0xf] %vm1942, %v1891
      %1951 = vst.msk [vmem:[#allocation2 + $0x80] sm:$0xf] %vm1942, %v1893
      %1952 = vst.msk [vmem:[#allocation2 + $0x90] sm:$0xf] %vm1942, %v1895
      %1953 = vst.msk [vmem:[#allocation2 + $0xa0] sm:$0xf] %vm1942, %v1897
      %1954 = vst.msk [vmem:[#allocation2 + $0xb0] sm:$0xf] %vm1942, %v1899
      %1955 = vst.msk [vmem:[#allocation2 + $0xc0] sm:$0xf] %vm1942, %v1901
      %1956 = vst.msk [vmem:[#allocation2 + $0xd0] sm:$0xf] %vm1942, %v1903
      %1957 = vst.msk [vmem:[#allocation2 + $0xe0] sm:$0xf] %vm1942, %v1905
      %1958 = vst.msk [vmem:[#allocation2 + $0xf0] sm:$0xf] %vm1942, %v1907
      %1959 = vst.msk [vmem:[#allocation2 + $0x100] sm:$0xf] %vm1942, %v1909
      %1960 = vst.msk [vmem:[#allocation2 + $0x110] sm:$0xf] %vm1942, %v1911
      %1961 = vst.msk [vmem:[#allocation2 + $0x120] sm:$0xf] %vm1942, %v1913
      %1962 = vst.msk [vmem:[#allocation2 + $0x130] sm:$0xf] %vm1942, %v1915
      %1963 = vst.msk [vmem:[#allocation2 + $0x140] sm:$0xf] %vm1942, %v1917
      %1964 = vst.msk [vmem:[#allocation2 + $0x150] sm:$0xf] %vm1942, %v1919
      %vm1965 = vsmask.f32 2304
      %vm1966 = vsmask.f32 6416
      %vm1967 = vmor %vm1965, %vm1966
      %v1968 = vrot.slane %v1471, 5
      %v1969 = vrot.slane %v1474, 6
      %v1970 = vor.u32 %v1968, %v1969
      %v1971 = vrot.slane %v1970, 4
      %v1972 = vrot.slane %v1484, 5
      %v1973 = vrot.slane %v1480, 6
      %v1974 = vor.u32 %v1972, %v1973
      %v1975 = vsel %vm1967, %v1971, %v1974
      %v1976 = vrot.slane %v1974, 4
      %v1977 = vrot.slane %v1494, 5
      %v1978 = vrot.slane %v1490, 6
      %v1979 = vor.u32 %v1977, %v1978
      %v1980 = vsel %vm1967, %v1976, %v1979
      %v1981 = vrot.slane %v1979, 4
      %v1982 = vrot.slane %v1504, 5
      %v1983 = vrot.slane %v1500, 6
      %v1984 = vor.u32 %v1982, %v1983
      %v1985 = vsel %vm1967, %v1981, %v1984
      %v1986 = vrot.slane %v1984, 4
      %v1987 = vrot.slane %v1514, 5
      %v1988 = vrot.slane %v1510, 6
      %v1989 = vor.u32 %v1987, %v1988
      %v1990 = vsel %vm1967, %v1986, %v1989
      %v1991 = vrot.slane %v1989, 4
      %v1992 = vrot.slane %v1524, 5
      %v1993 = vrot.slane %v1520, 6
      %v1994 = vor.u32 %v1992, %v1993
      %v1995 = vsel %vm1967, %v1991, %v1994
      %v1996 = vrot.slane %v1994, 4
      %v1997 = vrot.slane %v1534, 5
      %v1998 = vrot.slane %v1530, 6
      %v1999 = vor.u32 %v1997, %v1998
      %v2000 = vsel %vm1967, %v1996, %v1999
      %v2001 = vrot.slane %v1999, 4
      %v2002 = vrot.slane %v1544, 5
      %v2003 = vrot.slane %v1540, 6
      %v2004 = vor.u32 %v2002, %v2003
      %v2005 = vsel %vm1967, %v2001, %v2004
      %v2006 = vrot.slane %v2004, 4
      %v2007 = vrot.slane %v1554, 5
      %v2008 = vrot.slane %v1550, 6
      %v2009 = vor.u32 %v2007, %v2008
      %v2010 = vsel %vm1967, %v2006, %v2009
      %v2011 = vrot.slane %v2009, 4
      %v2012 = vrot.slane %v1564, 5
      %v2013 = vrot.slane %v1560, 6
      %v2014 = vor.u32 %v2012, %v2013
      %v2015 = vsel %vm1967, %v2011, %v2014
      %v2016 = vrot.slane %v2014, 4
      %v2017 = vrot.slane %v1574, 5
      %v2018 = vrot.slane %v1570, 6
      %v2019 = vor.u32 %v2017, %v2018
      %v2020 = vsel %vm1967, %v2016, %v2019
      %v2021 = vrot.slane %v2019, 4
      %v2022 = vrot.slane %v1584, 5
      %v2023 = vrot.slane %v1580, 6
      %v2024 = vor.u32 %v2022, %v2023
      %v2025 = vsel %vm1967, %v2021, %v2024
      %v2026 = vrot.slane %v2024, 4
      %v2027 = vrot.slane %v1594, 5
      %v2028 = vrot.slane %v1590, 6
      %v2029 = vor.u32 %v2027, %v2028
      %v2030 = vsel %vm1967, %v2026, %v2029
      %v2031 = vrot.slane %v2029, 4
      %v2032 = vrot.slane %v1604, 5
      %v2033 = vrot.slane %v1600, 6
      %v2034 = vor.u32 %v2032, %v2033
      %v2035 = vsel %vm1967, %v2031, %v2034
      %v2036 = vrot.slane %v2034, 4
      %v2037 = vrot.slane %v1614, 5
      %v2038 = vrot.slane %v1610, 6
      %v2039 = vor.u32 %v2037, %v2038
      %v2040 = vsel %vm1967, %v2036, %v2039
      %v2041 = vrot.slane %v2039, 4
      %v2042 = vrot.slane %v1624, 5
      %v2043 = vrot.slane %v1620, 6
      %v2044 = vor.u32 %v2042, %v2043
      %v2045 = vsel %vm1967, %v2041, %v2044
      %v2046 = vrot.slane %v2044, 4
      %v2047 = vrot.slane %v1634, 5
      %v2048 = vrot.slane %v1630, 6
      %v2049 = vor.u32 %v2047, %v2048
      %v2050 = vsel %vm1967, %v2046, %v2049
      %v2051 = vrot.slane %v2049, 4
      %v2052 = vrot.slane %v1644, 5
      %v2053 = vrot.slane %v1640, 6
      %v2054 = vor.u32 %v2052, %v2053
      %v2055 = vsel %vm1967, %v2051, %v2054
      %v2056 = vrot.slane %v2054, 4
      %v2057 = vrot.slane %v1654, 5
      %v2058 = vrot.slane %v1650, 6
      %v2059 = vor.u32 %v2057, %v2058
      %v2060 = vsel %vm1967, %v2056, %v2059
      %v2061 = vrot.slane %v2059, 4
      %v2062 = vrot.slane %v1664, 5
      %v2063 = vrot.slane %v1660, 6
      %v2064 = vor.u32 %v2062, %v2063
      %v2065 = vsel %vm1967, %v2061, %v2064
      %v2066 = vrot.slane %v2064, 4
      %v2067 = vrot.slane %v1674, 5
      %v2068 = vrot.slane %v1670, 6
      %v2069 = vor.u32 %v2067, %v2068
      %v2070 = vsel %vm1967, %v2066, %v2069
      %v2071 = vrot.slane %v2069, 4
      %v2072 = vrot.slane %v1684, 5
      %v2073 = vrot.slane %v1680, 6
      %v2074 = vor.u32 %v2072, %v2073
      %v2075 = vsel %vm1967, %v2071, %v2074
      %v2076 = vrot.slane %v2074, 4
      %v2077 = vshrl.u32 %v1466, 16
      %v2079 = vrot.slane %v2077, 5
      %v2080 = vrot.slane %v1690, 6
      %v2081 = vor.u32 %v2079, %v2080
      %v2082 = vsel %vm1967, %v2076, %v2081
      %2083 = vrot.lane.b32.xlu0 %v1975, 96
      %v2084 = vpop.permute.xlu0 %2083
      %2085 = vrot.lane.b32.xlu0 %v1980, 96
      %v2086 = vpop.permute.xlu0 %2085
      %2087 = vrot.lane.b32.xlu0 %v1985, 96
      %v2088 = vpop.permute.xlu0 %2087
      %2089 = vrot.lane.b32.xlu0 %v1990, 96
      %v2090 = vpop.permute.xlu0 %2089
      %2091 = vrot.lane.b32.xlu0 %v1995, 96
      %v2092 = vpop.permute.xlu0 %2091
      %2093 = vrot.lane.b32.xlu0 %v2000, 96
      %v2094 = vpop.permute.xlu0 %2093
      %2095 = vrot.lane.b32.xlu0 %v2005, 96
      %v2096 = vpop.permute.xlu0 %2095
      %2097 = vrot.lane.b32.xlu0 %v2010, 96
      %v2098 = vpop.permute.xlu0 %2097
      %2099 = vrot.lane.b32.xlu0 %v2015, 96
      %v2100 = vpop.permute.xlu0 %2099
      %2101 = vrot.lane.b32.xlu0 %v2020, 96
      %v2102 = vpop.permute.xlu0 %2101
      %2103 = vrot.lane.b32.xlu0 %v2025, 96
      %v2104 = vpop.permute.xlu0 %2103
      %2105 = vrot.lane.b32.xlu0 %v2030, 96
      %v2106 = vpop.permute.xlu0 %2105
      %2107 = vrot.lane.b32.xlu0 %v2035, 96
      %v2108 = vpop.permute.xlu0 %2107
      %2109 = vrot.lane.b32.xlu0 %v2040, 96
      %v2110 = vpop.permute.xlu0 %2109
      %2111 = vrot.lane.b32.xlu0 %v2045, 96
      %v2112 = vpop.permute.xlu0 %2111
      %2113 = vrot.lane.b32.xlu0 %v2050, 96
      %v2114 = vpop.permute.xlu0 %2113
      %2115 = vrot.lane.b32.xlu0 %v2055, 96
      %v2116 = vpop.permute.xlu0 %2115
      %2117 = vrot.lane.b32.xlu0 %v2060, 96
      %v2118 = vpop.permute.xlu0 %2117
      %2119 = vrot.lane.b32.xlu0 %v2065, 96
      %v2120 = vpop.permute.xlu0 %2119
      %2121 = vrot.lane.b32.xlu0 %v2070, 96
      %v2122 = vpop.permute.xlu0 %2121
      %2123 = vrot.lane.b32.xlu0 %v2075, 96
      %v2124 = vpop.permute.xlu0 %2123
      %2125 = vrot.lane.b32.xlu0 %v2082, 96
      %v2126 = vpop.permute.xlu0 %2125
      %vm2149 = vcmask 1044224
      %2150 = vst.msk [vmem:[#allocation2] sm:$0xf] %vm2149, %v2084
      %2151 = vst.msk [vmem:[#allocation2 + $0x10] sm:$0xf] %vm2149, %v2086
      %2152 = vst.msk [vmem:[#allocation2 + $0x20] sm:$0xf] %vm2149, %v2088
      %2153 = vst.msk [vmem:[#allocation2 + $0x30] sm:$0xf] %vm2149, %v2090
      %2154 = vst.msk [vmem:[#allocation2 + $0x40] sm:$0xf] %vm2149, %v2092
      %2155 = vst.msk [vmem:[#allocation2 + $0x50] sm:$0xf] %vm2149, %v2094
      %2156 = vst.msk [vmem:[#allocation2 + $0x60] sm:$0xf] %vm2149, %v2096
      %2157 = vst.msk [vmem:[#allocation2 + $0x70] sm:$0xf] %vm2149, %v2098
      %2158 = vst.msk [vmem:[#allocation2 + $0x80] sm:$0xf] %vm2149, %v2100
      %2159 = vst.msk [vmem:[#allocation2 + $0x90] sm:$0xf] %vm2149, %v2102
      %2160 = vst.msk [vmem:[#allocation2 + $0xa0] sm:$0xf] %vm2149, %v2104
      %2161 = vst.msk [vmem:[#allocation2 + $0xb0] sm:$0xf] %vm2149, %v2106
      %2162 = vst.msk [vmem:[#allocation2 + $0xc0] sm:$0xf] %vm2149, %v2108
      %2163 = vst.msk [vmem:[#allocation2 + $0xd0] sm:$0xf] %vm2149, %v2110
      %2164 = vst.msk [vmem:[#allocation2 + $0xe0] sm:$0xf] %vm2149, %v2112
      %2165 = vst.msk [vmem:[#allocation2 + $0xf0] sm:$0xf] %vm2149, %v2114
      %2166 = vst.msk [vmem:[#allocation2 + $0x100] sm:$0xf] %vm2149, %v2116
      %2167 = vst.msk [vmem:[#allocation2 + $0x110] sm:$0xf] %vm2149, %v2118
      %2168 = vst.msk [vmem:[#allocation2 + $0x120] sm:$0xf] %vm2149, %v2120
      %2169 = vst.msk [vmem:[#allocation2 + $0x130] sm:$0xf] %vm2149, %v2122
      %2170 = vst.msk [vmem:[#allocation2 + $0x140] sm:$0xf] %vm2149, %v2124
      %2171 = vst.msk [vmem:[#allocation2 + $0x150] sm:$0xf] %vm2149, %v2126
      %v2172 = vpack.c.bf16 %v1415, %v1415
      %2173 = vst.msk [vmem:[#allocation2 + $0x4] sm:$0xf] %vm1443, %v1423
      %2174 = vst.msk [vmem:[#allocation2 + $0x14] sm:$0xf] %vm1443, %v1424
      %2175 = vst.msk [vmem:[#allocation2 + $0x24] sm:$0xf] %vm1443, %v1425
      %2176 = vst.msk [vmem:[#allocation2 + $0x34] sm:$0xf] %vm1443, %v1426
      %2177 = vst.msk [vmem:[#allocation2 + $0x44] sm:$0xf] %vm1443, %v1427
      %2178 = vst.msk [vmem:[#allocation2 + $0x54] sm:$0xf] %vm1443, %v1428
      %2179 = vst.msk [vmem:[#allocation2 + $0x64] sm:$0xf] %vm1443, %v1429
      %2180 = vst.msk [vmem:[#allocation2 + $0x74] sm:$0xf] %vm1443, %v1430
      %2181 = vst.msk [vmem:[#allocation2 + $0x84] sm:$0xf] %vm1443, %v1431
      %2182 = vst.msk [vmem:[#allocation2 + $0x94] sm:$0xf] %vm1443, %v1432
      %2183 = vst.msk [vmem:[#allocation2 + $0xa4] sm:$0xf] %vm1443, %v1433
      %2184 = vst.msk [vmem:[#allocation2 + $0xb4] sm:$0xf] %vm1443, %v1434
      %2185 = vst.msk [vmem:[#allocation2 + $0xc4] sm:$0xf] %vm1443, %v1435
      %2186 = vst.msk [vmem:[#allocation2 + $0xd4] sm:$0xf] %vm1443, %v1436
      %2187 = vst.msk [vmem:[#allocation2 + $0xe4] sm:$0xf] %vm1443, %v1437
      %2188 = vst.msk [vmem:[#allocation2 + $0xf4] sm:$0xf] %vm1443, %v1438
      %2189 = vst.msk [vmem:[#allocation2 + $0x104] sm:$0xf] %vm1443, %v1439
      %2190 = vst.msk [vmem:[#allocation2 + $0x114] sm:$0xf] %vm1443, %v1440
      %2191 = vst.msk [vmem:[#allocation2 + $0x124] sm:$0xf] %vm1443, %v1441
      %2192 = vst.msk [vmem:[#allocation2 + $0x134] sm:$0xf] %vm1443, %v1442
      %2193 = vst.msk [vmem:[#allocation2 + $0x144] sm:$0xf] %vm1443, %v1466
      %2194 = vst.msk [vmem:[#allocation2 + $0x154] sm:$0xf] %vm1443, %v2172
      %v2195 = vpack.c.bf16 %v1416, %v1416
      %v2196 = vrot.slane %v2077, 4
      %v2197 = vor.u32 %v2196, %v1692
      %v2198 = vrot.slane %v2197, 4
      %v2200 = vshll.u32 %v2172, 16
      %v2202 = vrot.slane %v2200, 5
      %v2203 = vsel %vm1469, %v2198, %v2202
      %v2204 = vshrl.u32 %v2172, 16
      %v2206 = vrot.slane %v2204, 4
      %v2207 = vor.u32 %v2206, %v2202
      %v2208 = vrot.slane %v2207, 4
      %v2210 = vshll.u32 %v2195, 16
      %v2212 = vrot.slane %v2210, 5
      %v2213 = vsel %vm1469, %v2208, %v2212
      %2214 = vrot.lane.b32.xlu0 %v2203, 32
      %v2215 = vpop.permute.xlu0 %2214
      %2216 = vrot.lane.b32.xlu0 %v2213, 32
      %v2217 = vpop.permute.xlu0 %2216
      %2220 = vst.msk [vmem:[#allocation2 + $0x4] sm:$0xf] %vm1760, %v1699
      %2221 = vst.msk [vmem:[#allocation2 + $0x14] sm:$0xf] %vm1760, %v1701
      %2222 = vst.msk [vmem:[#allocation2 + $0x24] sm:$0xf] %vm1760, %v1703
      %2223 = vst.msk [vmem:[#allocation2 + $0x34] sm:$0xf] %vm1760, %v1705
      %2224 = vst.msk [vmem:[#allocation2 + $0x44] sm:$0xf] %vm1760, %v1707
      %2225 = vst.msk [vmem:[#allocation2 + $0x54] sm:$0xf] %vm1760, %v1709
      %2226 = vst.msk [vmem:[#allocation2 + $0x64] sm:$0xf] %vm1760, %v1711
      %2227 = vst.msk [vmem:[#allocation2 + $0x74] sm:$0xf] %vm1760, %v1713
      %2228 = vst.msk [vmem:[#allocation2 + $0x84] sm:$0xf] %vm1760, %v1715
      %2229 = vst.msk [vmem:[#allocation2 + $0x94] sm:$0xf] %vm1760, %v1717
      %2230 = vst.msk [vmem:[#allocation2 + $0xa4] sm:$0xf] %vm1760, %v1719
      %2231 = vst.msk [vmem:[#allocation2 + $0xb4] sm:$0xf] %vm1760, %v1721
      %2232 = vst.msk [vmem:[#allocation2 + $0xc4] sm:$0xf] %vm1760, %v1723
      %2233 = vst.msk [vmem:[#allocation2 + $0xd4] sm:$0xf] %vm1760, %v1725
      %2234 = vst.msk [vmem:[#allocation2 + $0xe4] sm:$0xf] %vm1760, %v1727
      %2235 = vst.msk [vmem:[#allocation2 + $0xf4] sm:$0xf] %vm1760, %v1729
      %2236 = vst.msk [vmem:[#allocation2 + $0x104] sm:$0xf] %vm1760, %v1731
      %2237 = vst.msk [vmem:[#allocation2 + $0x114] sm:$0xf] %vm1760, %v1733
      %2238 = vst.msk [vmem:[#allocation2 + $0x124] sm:$0xf] %vm1760, %v1735
      %2239 = vst.msk [vmem:[#allocation2 + $0x134] sm:$0xf] %vm1760, %v1737
      %2240 = vst.msk [vmem:[#allocation2 + $0x144] sm:$0xf] %vm1760, %v2215
      %2241 = vst.msk [vmem:[#allocation2 + $0x154] sm:$0xf] %vm1760, %v2217
      %v2244 = vrot.slane %v1874, 4
      %v2245 = vrot.slane %v2172, 5
      %v2246 = vsel %vm1808, %v2244, %v2245
      %v2247 = vrot.slane %v2245, 4
      %v2248 = vrot.slane %v2195, 5
      %v2249 = vsel %vm1808, %v2247, %v2248
      %2250 = vrot.lane.b32.xlu0 %v2246, 64
      %v2251 = vpop.permute.xlu0 %2250
      %2252 = vrot.lane.b32.xlu0 %v2249, 64
      %v2253 = vpop.permute.xlu0 %2252
      %2256 = vst.msk [vmem:[#allocation2 + $0x4] sm:$0xf] %vm1942, %v1881
      %2257 = vst.msk [vmem:[#allocation2 + $0x14] sm:$0xf] %vm1942, %v1883
      %2258 = vst.msk [vmem:[#allocation2 + $0x24] sm:$0xf] %vm1942, %v1885
      %2259 = vst.msk [vmem:[#allocation2 + $0x34] sm:$0xf] %vm1942, %v1887
      %2260 = vst.msk [vmem:[#allocation2 + $0x44] sm:$0xf] %vm1942, %v1889
      %2261 = vst.msk [vmem:[#allocation2 + $0x54] sm:$0xf] %vm1942, %v1891
      %2262 = vst.msk [vmem:[#allocation2 + $0x64] sm:$0xf] %vm1942, %v1893
      %2263 = vst.msk [vmem:[#allocation2 + $0x74] sm:$0xf] %vm1942, %v1895
      %2264 = vst.msk [vmem:[#allocation2 + $0x84] sm:$0xf] %vm1942, %v1897
      %2265 = vst.msk [vmem:[#allocation2 + $0x94] sm:$0xf] %vm1942, %v1899
      %2266 = vst.msk [vmem:[#allocation2 + $0xa4] sm:$0xf] %vm1942, %v1901
      %2267 = vst.msk [vmem:[#allocation2 + $0xb4] sm:$0xf] %vm1942, %v1903
      %2268 = vst.msk [vmem:[#allocation2 + $0xc4] sm:$0xf] %vm1942, %v1905
      %2269 = vst.msk [vmem:[#allocation2 + $0xd4] sm:$0xf] %vm1942, %v1907
      %2270 = vst.msk [vmem:[#allocation2 + $0xe4] sm:$0xf] %vm1942, %v1909
      %2271 = vst.msk [vmem:[#allocation2 + $0xf4] sm:$0xf] %vm1942, %v1911
      %2272 = vst.msk [vmem:[#allocation2 + $0x104] sm:$0xf] %vm1942, %v1913
      %2273 = vst.msk [vmem:[#allocation2 + $0x114] sm:$0xf] %vm1942, %v1915
      %2274 = vst.msk [vmem:[#allocation2 + $0x124] sm:$0xf] %vm1942, %v1917
      %2275 = vst.msk [vmem:[#allocation2 + $0x134] sm:$0xf] %vm1942, %v1919
      %2276 = vst.msk [vmem:[#allocation2 + $0x144] sm:$0xf] %vm1942, %v2251
      %2277 = vst.msk [vmem:[#allocation2 + $0x154] sm:$0xf] %vm1942, %v2253
      %v2278 = vrot.slane %v2081, 4
      %v2279 = vrot.slane %v2204, 5
      %v2280 = vrot.slane %v2200, 6
      %v2281 = vor.u32 %v2279, %v2280
      %v2282 = vsel %vm1967, %v2278, %v2281
      %v2283 = vrot.slane %v2281, 4
      %v2284 = vshrl.u32 %v2195, 16
      %v2286 = vrot.slane %v2284, 5
      %v2287 = vrot.slane %v2210, 6
      %v2288 = vor.u32 %v2286, %v2287
      %v2289 = vsel %vm1967, %v2283, %v2288
      %2290 = vrot.lane.b32.xlu0 %v2282, 96
      %v2291 = vpop.permute.xlu0 %2290
      %2292 = vrot.lane.b32.xlu0 %v2289, 96
      %v2293 = vpop.permute.xlu0 %2292
      %2296 = vst.msk [vmem:[#allocation2 + $0x4] sm:$0xf] %vm2149, %v2088
      %2297 = vst.msk [vmem:[#allocation2 + $0x14] sm:$0xf] %vm2149, %v2090
      %2298 = vst.msk [vmem:[#allocation2 + $0x24] sm:$0xf] %vm2149, %v2092
      %2299 = vst.msk [vmem:[#allocation2 + $0x34] sm:$0xf] %vm2149, %v2094
      %2300 = vst.msk [vmem:[#allocation2 + $0x44] sm:$0xf] %vm2149, %v2096
      %2301 = vst.msk [vmem:[#allocation2 + $0x54] sm:$0xf] %vm2149, %v2098
      %2302 = vst.msk [vmem:[#allocation2 + $0x64] sm:$0xf] %vm2149, %v2100
      %2303 = vst.msk [vmem:[#allocation2 + $0x74] sm:$0xf] %vm2149, %v2102
      %2304 = vst.msk [vmem:[#allocation2 + $0x84] sm:$0xf] %vm2149, %v2104
      %2305 = vst.msk [vmem:[#allocation2 + $0x94] sm:$0xf] %vm2149, %v2106
      %2306 = vst.msk [vmem:[#allocation2 + $0xa4] sm:$0xf] %vm2149, %v2108
      %2307 = vst.msk [vmem:[#allocation2 + $0xb4] sm:$0xf] %vm2149, %v2110
      %2308 = vst.msk [vmem:[#allocation2 + $0xc4] sm:$0xf] %vm2149, %v2112
      %2309 = vst.msk [vmem:[#allocation2 + $0xd4] sm:$0xf] %vm2149, %v2114
      %2310 = vst.msk [vmem:[#allocation2 + $0xe4] sm:$0xf] %vm2149, %v2116
      %2311 = vst.msk [vmem:[#allocation2 + $0xf4] sm:$0xf] %vm2149, %v2118
      %2312 = vst.msk [vmem:[#allocation2 + $0x104] sm:$0xf] %vm2149, %v2120
      %2313 = vst.msk [vmem:[#allocation2 + $0x114] sm:$0xf] %vm2149, %v2122
      %2314 = vst.msk [vmem:[#allocation2 + $0x124] sm:$0xf] %vm2149, %v2124
      %2315 = vst.msk [vmem:[#allocation2 + $0x134] sm:$0xf] %vm2149, %v2126
      %2316 = vst.msk [vmem:[#allocation2 + $0x144] sm:$0xf] %vm2149, %v2291
      %2317 = vst.msk [vmem:[#allocation2 + $0x154] sm:$0xf] %vm2149, %v2293
      %v2318 = vpack.c.bf16 %v1417, %v1417
      %2319 = vst.msk [vmem:[#allocation2 + $0x8] sm:$0xf] %vm1443, %v1425
      %2320 = vst.msk [vmem:[#allocation2 + $0x18] sm:$0xf] %vm1443, %v1426
      %2321 = vst.msk [vmem:[#allocation2 + $0x28] sm:$0xf] %vm1443, %v1427
      %2322 = vst.msk [vmem:[#allocation2 + $0x38] sm:$0xf] %vm1443, %v1428
      %2323 = vst.msk [vmem:[#allocation2 + $0x48] sm:$0xf] %vm1443, %v1429
      %2324 = vst.msk [vmem:[#allocation2 + $0x58] sm:$0xf] %vm1443, %v1430
      %2325 = vst.msk [vmem:[#allocation2 + $0x68] sm:$0xf] %vm1443, %v1431
      %2326 = vst.msk [vmem:[#allocation2 + $0x78] sm:$0xf] %vm1443, %v1432
      %2327 = vst.msk [vmem:[#allocation2 + $0x88] sm:$0xf] %vm1443, %v1433
      %2328 = vst.msk [vmem:[#allocation2 + $0x98] sm:$0xf] %vm1443, %v1434
      %2329 = vst.msk [vmem:[#allocation2 + $0xa8] sm:$0xf] %vm1443, %v1435
      %2330 = vst.msk [vmem:[#allocation2 + $0xb8] sm:$0xf] %vm1443, %v1436
      %2331 = vst.msk [vmem:[#allocation2 + $0xc8] sm:$0xf] %vm1443, %v1437
      %2332 = vst.msk [vmem:[#allocation2 + $0xd8] sm:$0xf] %vm1443, %v1438
      %2333 = vst.msk [vmem:[#allocation2 + $0xe8] sm:$0xf] %vm1443, %v1439
      %2334 = vst.msk [vmem:[#allocation2 + $0xf8] sm:$0xf] %vm1443, %v1440
      %2335 = vst.msk [vmem:[#allocation2 + $0x108] sm:$0xf] %vm1443, %v1441
      %2336 = vst.msk [vmem:[#allocation2 + $0x118] sm:$0xf] %vm1443, %v1442
      %2337 = vst.msk [vmem:[#allocation2 + $0x128] sm:$0xf] %vm1443, %v1466
      %2338 = vst.msk [vmem:[#allocation2 + $0x138] sm:$0xf] %vm1443, %v2172
      %2339 = vst.msk [vmem:[#allocation2 + $0x148] sm:$0xf] %vm1443, %v2195
      %2340 = vst.msk [vmem:[#allocation2 + $0x158] sm:$0xf] %vm1443, %v2318
      %v2341 = vpack.c.bf16 %v1418, %v1418
      %v2342 = vrot.slane %v2284, 4
      %v2343 = vor.u32 %v2342, %v2212
      %v2344 = vrot.slane %v2343, 4
      %v2346 = vshll.u32 %v2318, 16
      %v2348 = vrot.slane %v2346, 5
      %v2349 = vsel %vm1469, %v2344, %v2348
      %v2350 = vshrl.u32 %v2318, 16
      %v2352 = vrot.slane %v2350, 4
      %v2353 = vor.u32 %v2352, %v2348
      %v2354 = vrot.slane %v2353, 4
      %v2356 = vshll.u32 %v2341, 16
      %v2358 = vrot.slane %v2356, 5
      %v2359 = vsel %vm1469, %v2354, %v2358
      %2360 = vrot.lane.b32.xlu0 %v2349, 32
      %v2361 = vpop.permute.xlu0 %2360
      %2362 = vrot.lane.b32.xlu0 %v2359, 32
      %v2363 = vpop.permute.xlu0 %2362
      %2366 = vst.msk [vmem:[#allocation2 + $0x8] sm:$0xf] %vm1760, %v1703
      %2367 = vst.msk [vmem:[#allocation2 + $0x18] sm:$0xf] %vm1760, %v1705
      %2368 = vst.msk [vmem:[#allocation2 + $0x28] sm:$0xf] %vm1760, %v1707
      %2369 = vst.msk [vmem:[#allocation2 + $0x38] sm:$0xf] %vm1760, %v1709
      %2370 = vst.msk [vmem:[#allocation2 + $0x48] sm:$0xf] %vm1760, %v1711
      %2371 = vst.msk [vmem:[#allocation2 + $0x58] sm:$0xf] %vm1760, %v1713
      %2372 = vst.msk [vmem:[#allocation2 + $0x68] sm:$0xf] %vm1760, %v1715
      %2373 = vst.msk [vmem:[#allocation2 + $0x78] sm:$0xf] %vm1760, %v1717
      %2374 = vst.msk [vmem:[#allocation2 + $0x88] sm:$0xf] %vm1760, %v1719
      %2375 = vst.msk [vmem:[#allocation2 + $0x98] sm:$0xf] %vm1760, %v1721
      %2376 = vst.msk [vmem:[#allocation2 + $0xa8] sm:$0xf] %vm1760, %v1723
      %2377 = vst.msk [vmem:[#allocation2 + $0xb8] sm:$0xf] %vm1760, %v1725
      %2378 = vst.msk [vmem:[#allocation2 + $0xc8] sm:$0xf] %vm1760, %v1727
      %2379 = vst.msk [vmem:[#allocation2 + $0xd8] sm:$0xf] %vm1760, %v1729
      %2380 = vst.msk [vmem:[#allocation2 + $0xe8] sm:$0xf] %vm1760, %v1731
      %2381 = vst.msk [vmem:[#allocation2 + $0xf8] sm:$0xf] %vm1760, %v1733
      %2382 = vst.msk [vmem:[#allocation2 + $0x108] sm:$0xf] %vm1760, %v1735
      %2383 = vst.msk [vmem:[#allocation2 + $0x118] sm:$0xf] %vm1760, %v1737
      %2384 = vst.msk [vmem:[#allocation2 + $0x128] sm:$0xf] %vm1760, %v2215
      %2385 = vst.msk [vmem:[#allocation2 + $0x138] sm:$0xf] %vm1760, %v2217
      %2386 = vst.msk [vmem:[#allocation2 + $0x148] sm:$0xf] %vm1760, %v2361
      %2387 = vst.msk [vmem:[#allocation2 + $0x158] sm:$0xf] %vm1760, %v2363
      %v2390 = vrot.slane %v2248, 4
      %v2391 = vrot.slane %v2318, 5
      %v2392 = vsel %vm1808, %v2390, %v2391
      %v2393 = vrot.slane %v2391, 4
      %v2394 = vrot.slane %v2341, 5
      %v2395 = vsel %vm1808, %v2393, %v2394
      %2396 = vrot.lane.b32.xlu0 %v2392, 64
      %v2397 = vpop.permute.xlu0 %2396
      %2398 = vrot.lane.b32.xlu0 %v2395, 64
      %v2399 = vpop.permute.xlu0 %2398
      %2402 = vst.msk [vmem:[#allocation2 + $0x8] sm:$0xf] %vm1942, %v1885
      %2403 = vst.msk [vmem:[#allocation2 + $0x18] sm:$0xf] %vm1942, %v1887
      %2404 = vst.msk [vmem:[#allocation2 + $0x28] sm:$0xf] %vm1942, %v1889
      %2405 = vst.msk [vmem:[#allocation2 + $0x38] sm:$0xf] %vm1942, %v1891
      %2406 = vst.msk [vmem:[#allocation2 + $0x48] sm:$0xf] %vm1942, %v1893
      %2407 = vst.msk [vmem:[#allocation2 + $0x58] sm:$0xf] %vm1942, %v1895
      %2408 = vst.msk [vmem:[#allocation2 + $0x68] sm:$0xf] %vm1942, %v1897
      %2409 = vst.msk [vmem:[#allocation2 + $0x78] sm:$0xf] %vm1942, %v1899
      %2410 = vst.msk [vmem:[#allocation2 + $0x88] sm:$0xf] %vm1942, %v1901
      %2411 = vst.msk [vmem:[#allocation2 + $0x98] sm:$0xf] %vm1942, %v1903
      %2412 = vst.msk [vmem:[#allocation2 + $0xa8] sm:$0xf] %vm1942, %v1905
      %2413 = vst.msk [vmem:[#allocation2 + $0xb8] sm:$0xf] %vm1942, %v1907
      %2414 = vst.msk [vmem:[#allocation2 + $0xc8] sm:$0xf] %vm1942, %v1909
      %2415 = vst.msk [vmem:[#allocation2 + $0xd8] sm:$0xf] %vm1942, %v1911
      %2416 = vst.msk [vmem:[#allocation2 + $0xe8] sm:$0xf] %vm1942, %v1913
      %2417 = vst.msk [vmem:[#allocation2 + $0xf8] sm:$0xf] %vm1942, %v1915
      %2418 = vst.msk [vmem:[#allocation2 + $0x108] sm:$0xf] %vm1942, %v1917
      %2419 = vst.msk [vmem:[#allocation2 + $0x118] sm:$0xf] %vm1942, %v1919
      %2420 = vst.msk [vmem:[#allocation2 + $0x128] sm:$0xf] %vm1942, %v2251
      %2421 = vst.msk [vmem:[#allocation2 + $0x138] sm:$0xf] %vm1942, %v2253
      %2422 = vst.msk [vmem:[#allocation2 + $0x148] sm:$0xf] %vm1942, %v2397
      %2423 = vst.msk [vmem:[#allocation2 + $0x158] sm:$0xf] %vm1942, %v2399
      %v2424 = vrot.slane %v2288, 4
      %v2425 = vrot.slane %v2350, 5
      %v2426 = vrot.slane %v2346, 6
      %v2427 = vor.u32 %v2425, %v2426
      %v2428 = vsel %vm1967, %v2424, %v2427
      %v2429 = vrot.slane %v2427, 4
      %v2430 = vshrl.u32 %v2341, 16
      %v2432 = vrot.slane %v2430, 5
      %v2433 = vrot.slane %v2356, 6
      %v2434 = vor.u32 %v2432, %v2433
      %v2435 = vsel %vm1967, %v2429, %v2434
      %2436 = vrot.lane.b32.xlu0 %v2428, 96
      %v2437 = vpop.permute.xlu0 %2436
      %2438 = vrot.lane.b32.xlu0 %v2435, 96
      %v2439 = vpop.permute.xlu0 %2438
      %2442 = vst.msk [vmem:[#allocation2 + $0x8] sm:$0xf] %vm2149, %v2092
      %2443 = vst.msk [vmem:[#allocation2 + $0x18] sm:$0xf] %vm2149, %v2094
      %2444 = vst.msk [vmem:[#allocation2 + $0x28] sm:$0xf] %vm2149, %v2096
      %2445 = vst.msk [vmem:[#allocation2 + $0x38] sm:$0xf] %vm2149, %v2098
      %2446 = vst.msk [vmem:[#allocation2 + $0x48] sm:$0xf] %vm2149, %v2100
      %2447 = vst.msk [vmem:[#allocation2 + $0x58] sm:$0xf] %vm2149, %v2102
      %2448 = vst.msk [vmem:[#allocation2 + $0x68] sm:$0xf] %vm2149, %v2104
      %2449 = vst.msk [vmem:[#allocation2 + $0x78] sm:$0xf] %vm2149, %v2106
      %2450 = vst.msk [vmem:[#allocation2 + $0x88] sm:$0xf] %vm2149, %v2108
      %2451 = vst.msk [vmem:[#allocation2 + $0x98] sm:$0xf] %vm2149, %v2110
      %2452 = vst.msk [vmem:[#allocation2 + $0xa8] sm:$0xf] %vm2149, %v2112
      %2453 = vst.msk [vmem:[#allocation2 + $0xb8] sm:$0xf] %vm2149, %v2114
      %2454 = vst.msk [vmem:[#allocation2 + $0xc8] sm:$0xf] %vm2149, %v2116
      %2455 = vst.msk [vmem:[#allocation2 + $0xd8] sm:$0xf] %vm2149, %v2118
      %2456 = vst.msk [vmem:[#allocation2 + $0xe8] sm:$0xf] %vm2149, %v2120
      %2457 = vst.msk [vmem:[#allocation2 + $0xf8] sm:$0xf] %vm2149, %v2122
      %2458 = vst.msk [vmem:[#allocation2 + $0x108] sm:$0xf] %vm2149, %v2124
      %2459 = vst.msk [vmem:[#allocation2 + $0x118] sm:$0xf] %vm2149, %v2126
      %2460 = vst.msk [vmem:[#allocation2 + $0x128] sm:$0xf] %vm2149, %v2291
      %2461 = vst.msk [vmem:[#allocation2 + $0x138] sm:$0xf] %vm2149, %v2293
      %2462 = vst.msk [vmem:[#allocation2 + $0x148] sm:$0xf] %vm2149, %v2437
      %2463 = vst.msk [vmem:[#allocation2 + $0x158] sm:$0xf] %vm2149, %v2439
      %v2464 = vpack.c.bf16 %v1419, %v1419
      %2465 = vst.msk [vmem:[#allocation2 + $0xc] sm:$0xf] %vm1443, %v1427
      %2466 = vst.msk [vmem:[#allocation2 + $0x1c] sm:$0xf] %vm1443, %v1428
      %2467 = vst.msk [vmem:[#allocation2 + $0x2c] sm:$0xf] %vm1443, %v1429
      %2468 = vst.msk [vmem:[#allocation2 + $0x3c] sm:$0xf] %vm1443, %v1430
      %2469 = vst.msk [vmem:[#allocation2 + $0x4c] sm:$0xf] %vm1443, %v1431
      %2470 = vst.msk [vmem:[#allocation2 + $0x5c] sm:$0xf] %vm1443, %v1432
      %2471 = vst.msk [vmem:[#allocation2 + $0x6c] sm:$0xf] %vm1443, %v1433
      %2472 = vst.msk [vmem:[#allocation2 + $0x7c] sm:$0xf] %vm1443, %v1434
      %2473 = vst.msk [vmem:[#allocation2 + $0x8c] sm:$0xf] %vm1443, %v1435
      %2474 = vst.msk [vmem:[#allocation2 + $0x9c] sm:$0xf] %vm1443, %v1436
      %2475 = vst.msk [vmem:[#allocation2 + $0xac] sm:$0xf] %vm1443, %v1437
      %2476 = vst.msk [vmem:[#allocation2 + $0xbc] sm:$0xf] %vm1443, %v1438
      %2477 = vst.msk [vmem:[#allocation2 + $0xcc] sm:$0xf] %vm1443, %v1439
      %2478 = vst.msk [vmem:[#allocation2 + $0xdc] sm:$0xf] %vm1443, %v1440
      %2479 = vst.msk [vmem:[#allocation2 + $0xec] sm:$0xf] %vm1443, %v1441
      %2480 = vst.msk [vmem:[#allocation2 + $0xfc] sm:$0xf] %vm1443, %v1442
      %2481 = vst.msk [vmem:[#allocation2 + $0x10c] sm:$0xf] %vm1443, %v1466
      %2482 = vst.msk [vmem:[#allocation2 + $0x11c] sm:$0xf] %vm1443, %v2172
      %2483 = vst.msk [vmem:[#allocation2 + $0x12c] sm:$0xf] %vm1443, %v2195
      %2484 = vst.msk [vmem:[#allocation2 + $0x13c] sm:$0xf] %vm1443, %v2318
      %2485 = vst.msk [vmem:[#allocation2 + $0x14c] sm:$0xf] %vm1443, %v2341
      %2486 = vst.msk [vmem:[#allocation2 + $0x15c] sm:$0xf] %vm1443, %v2464
      %v2487 = vpack.c.bf16 %v1420, %v1420
      %v2488 = vrot.slane %v2430, 4
      %v2489 = vor.u32 %v2488, %v2358
      %v2490 = vrot.slane %v2489, 4
      %v2492 = vshll.u32 %v2464, 16
      %v2494 = vrot.slane %v2492, 5
      %v2495 = vsel %vm1469, %v2490, %v2494
      %v2496 = vshrl.u32 %v2464, 16
      %v2498 = vrot.slane %v2496, 4
      %v2499 = vor.u32 %v2498, %v2494
      %v2500 = vrot.slane %v2499, 4
      %v2502 = vshll.u32 %v2487, 16
      %v2504 = vrot.slane %v2502, 5
      %v2505 = vsel %vm1469, %v2500, %v2504
      %2506 = vrot.lane.b32.xlu0 %v2495, 32
      %v2507 = vpop.permute.xlu0 %2506
      %2508 = vrot.lane.b32.xlu0 %v2505, 32
      %v2509 = vpop.permute.xlu0 %2508
      %2512 = vst.msk [vmem:[#allocation2 + $0xc] sm:$0xf] %vm1760, %v1707
      %2513 = vst.msk [vmem:[#allocation2 + $0x1c] sm:$0xf] %vm1760, %v1709
      %2514 = vst.msk [vmem:[#allocation2 + $0x2c] sm:$0xf] %vm1760, %v1711
      %2515 = vst.msk [vmem:[#allocation2 + $0x3c] sm:$0xf] %vm1760, %v1713
      %2516 = vst.msk [vmem:[#allocation2 + $0x4c] sm:$0xf] %vm1760, %v1715
      %2517 = vst.msk [vmem:[#allocation2 + $0x5c] sm:$0xf] %vm1760, %v1717
      %2518 = vst.msk [vmem:[#allocation2 + $0x6c] sm:$0xf] %vm1760, %v1719
      %2519 = vst.msk [vmem:[#allocation2 + $0x7c] sm:$0xf] %vm1760, %v1721
      %2520 = vst.msk [vmem:[#allocation2 + $0x8c] sm:$0xf] %vm1760, %v1723
      %2521 = vst.msk [vmem:[#allocation2 + $0x9c] sm:$0xf] %vm1760, %v1725
      %2522 = vst.msk [vmem:[#allocation2 + $0xac] sm:$0xf] %vm1760, %v1727
      %2523 = vst.msk [vmem:[#allocation2 + $0xbc] sm:$0xf] %vm1760, %v1729
      %2524 = vst.msk [vmem:[#allocation2 + $0xcc] sm:$0xf] %vm1760, %v1731
      %2525 = vst.msk [vmem:[#allocation2 + $0xdc] sm:$0xf] %vm1760, %v1733
      %2526 = vst.msk [vmem:[#allocation2 + $0xec] sm:$0xf] %vm1760, %v1735
      %2527 = vst.msk [vmem:[#allocation2 + $0xfc] sm:$0xf] %vm1760, %v1737
      %2528 = vst.msk [vmem:[#allocation2 + $0x10c] sm:$0xf] %vm1760, %v2215
      %2529 = vst.msk [vmem:[#allocation2 + $0x11c] sm:$0xf] %vm1760, %v2217
      %2530 = vst.msk [vmem:[#allocation2 + $0x12c] sm:$0xf] %vm1760, %v2361
      %2531 = vst.msk [vmem:[#allocation2 + $0x13c] sm:$0xf] %vm1760, %v2363
      %2532 = vst.msk [vmem:[#allocation2 + $0x14c] sm:$0xf] %vm1760, %v2507
      %2533 = vst.msk [vmem:[#allocation2 + $0x15c] sm:$0xf] %vm1760, %v2509
      %v2536 = vrot.slane %v2394, 4
      %v2537 = vrot.slane %v2464, 5
      %v2538 = vsel %vm1808, %v2536, %v2537
      %v2539 = vrot.slane %v2537, 4
      %v2540 = vrot.slane %v2487, 5
      %v2541 = vsel %vm1808, %v2539, %v2540
      %2542 = vrot.lane.b32.xlu0 %v2538, 64
      %v2543 = vpop.permute.xlu0 %2542
      %2544 = vrot.lane.b32.xlu0 %v2541, 64
      %v2545 = vpop.permute.xlu0 %2544
      %2548 = vst.msk [vmem:[#allocation2 + $0xc] sm:$0xf] %vm1942, %v1889
      %2549 = vst.msk [vmem:[#allocation2 + $0x1c] sm:$0xf] %vm1942, %v1891
      %2550 = vst.msk [vmem:[#allocation2 + $0x2c] sm:$0xf] %vm1942, %v1893
      %2551 = vst.msk [vmem:[#allocation2 + $0x3c] sm:$0xf] %vm1942, %v1895
      %2552 = vst.msk [vmem:[#allocation2 + $0x4c] sm:$0xf] %vm1942, %v1897
      %2553 = vst.msk [vmem:[#allocation2 + $0x5c] sm:$0xf] %vm1942, %v1899
      %2554 = vst.msk [vmem:[#allocation2 + $0x6c] sm:$0xf] %vm1942, %v1901
      %2555 = vst.msk [vmem:[#allocation2 + $0x7c] sm:$0xf] %vm1942, %v1903
      %2556 = vst.msk [vmem:[#allocation2 + $0x8c] sm:$0xf] %vm1942, %v1905
      %2557 = vst.msk [vmem:[#allocation2 + $0x9c] sm:$0xf] %vm1942, %v1907
      %2558 = vst.msk [vmem:[#allocation2 + $0xac] sm:$0xf] %vm1942, %v1909
      %2559 = vst.msk [vmem:[#allocation2 + $0xbc] sm:$0xf] %vm1942, %v1911
      %2560 = vst.msk [vmem:[#allocation2 + $0xcc] sm:$0xf] %vm1942, %v1913
      %2561 = vst.msk [vmem:[#allocation2 + $0xdc] sm:$0xf] %vm1942, %v1915
      %2562 = vst.msk [vmem:[#allocation2 + $0xec] sm:$0xf] %vm1942, %v1917
      %2563 = vst.msk [vmem:[#allocation2 + $0xfc] sm:$0xf] %vm1942, %v1919
      %2564 = vst.msk [vmem:[#allocation2 + $0x10c] sm:$0xf] %vm1942, %v2251
      %2565 = vst.msk [vmem:[#allocation2 + $0x11c] sm:$0xf] %vm1942, %v2253
      %2566 = vst.msk [vmem:[#allocation2 + $0x12c] sm:$0xf] %vm1942, %v2397
      %2567 = vst.msk [vmem:[#allocation2 + $0x13c] sm:$0xf] %vm1942, %v2399
      %2568 = vst.msk [vmem:[#allocation2 + $0x14c] sm:$0xf] %vm1942, %v2543
      %2569 = vst.msk [vmem:[#allocation2 + $0x15c] sm:$0xf] %vm1942, %v2545
      %v2570 = vrot.slane %v2434, 4
      %v2571 = vrot.slane %v2496, 5
      %v2572 = vrot.slane %v2492, 6
      %v2573 = vor.u32 %v2571, %v2572
      %v2574 = vsel %vm1967, %v2570, %v2573
      %v2575 = vrot.slane %v2573, 4
      %v2576 = vshrl.u32 %v2487, 16
      %v2578 = vrot.slane %v2576, 5
      %v2579 = vrot.slane %v2502, 6
      %v2580 = vor.u32 %v2578, %v2579
      %v2581 = vsel %vm1967, %v2575, %v2580
      %2582 = vrot.lane.b32.xlu0 %v2574, 96
      %v2583 = vpop.permute.xlu0 %2582
      %2584 = vrot.lane.b32.xlu0 %v2581, 96
      %v2585 = vpop.permute.xlu0 %2584
      %2588 = vst.msk [vmem:[#allocation2 + $0xc] sm:$0xf] %vm2149, %v2096
      %2589 = vst.msk [vmem:[#allocation2 + $0x1c] sm:$0xf] %vm2149, %v2098
      %2590 = vst.msk [vmem:[#allocation2 + $0x2c] sm:$0xf] %vm2149, %v2100
      %2591 = vst.msk [vmem:[#allocation2 + $0x3c] sm:$0xf] %vm2149, %v2102
      %2592 = vst.msk [vmem:[#allocation2 + $0x4c] sm:$0xf] %vm2149, %v2104
      %2593 = vst.msk [vmem:[#allocation2 + $0x5c] sm:$0xf] %vm2149, %v2106
      %2594 = vst.msk [vmem:[#allocation2 + $0x6c] sm:$0xf] %vm2149, %v2108
      %2595 = vst.msk [vmem:[#allocation2 + $0x7c] sm:$0xf] %vm2149, %v2110
      %2596 = vst.msk [vmem:[#allocation2 + $0x8c] sm:$0xf] %vm2149, %v2112
      %2597 = vst.msk [vmem:[#allocation2 + $0x9c] sm:$0xf] %vm2149, %v2114
      %2598 = vst.msk [vmem:[#allocation2 + $0xac] sm:$0xf] %vm2149, %v2116
      %2599 = vst.msk [vmem:[#allocation2 + $0xbc] sm:$0xf] %vm2149, %v2118
      %2600 = vst.msk [vmem:[#allocation2 + $0xcc] sm:$0xf] %vm2149, %v2120
      %2601 = vst.msk [vmem:[#allocation2 + $0xdc] sm:$0xf] %vm2149, %v2122
      %2602 = vst.msk [vmem:[#allocation2 + $0xec] sm:$0xf] %vm2149, %v2124
      %2603 = vst.msk [vmem:[#allocation2 + $0xfc] sm:$0xf] %vm2149, %v2126
      %2604 = vst.msk [vmem:[#allocation2 + $0x10c] sm:$0xf] %vm2149, %v2291
      %2605 = vst.msk [vmem:[#allocation2 + $0x11c] sm:$0xf] %vm2149, %v2293
      %2606 = vst.msk [vmem:[#allocation2 + $0x12c] sm:$0xf] %vm2149, %v2437
      %2607 = vst.msk [vmem:[#allocation2 + $0x13c] sm:$0xf] %vm2149, %v2439
      %2608 = vst.msk [vmem:[#allocation2 + $0x14c] sm:$0xf] %vm2149, %v2583
      %2609 = vst.msk [vmem:[#allocation2 + $0x15c] sm:$0xf] %vm2149, %v2585
      %v2610 = vld [vmem:[#allocation2] sm:$0xff]
      %v2611 = vld [vmem:[#allocation2 + $0x8] sm:$0xff]
      %v2612 = vld [vmem:[#allocation2 + $0x10] sm:$0xff]
      %v2613 = vld [vmem:[#allocation2 + $0x18] sm:$0xff]
      %v2614 = vld [vmem:[#allocation2 + $0x20] sm:$0xff]
      %v2615 = vld [vmem:[#allocation2 + $0x28] sm:$0xff]
      %v2616 = vld [vmem:[#allocation2 + $0x30] sm:$0xff]
      %v2617 = vld [vmem:[#allocation2 + $0x38] sm:$0xff]
      %v2618 = vld [vmem:[#allocation2 + $0x40] sm:$0xff]
      %v2619 = vld [vmem:[#allocation2 + $0x48] sm:$0xff]
      %v2620 = vld [vmem:[#allocation2 + $0x50] sm:$0xff]
      %v2621 = vld [vmem:[#allocation2 + $0x58] sm:$0xff]
      %v2622 = vld [vmem:[#allocation2 + $0x60] sm:$0xff]
      %v2623 = vld [vmem:[#allocation2 + $0x68] sm:$0xff]
      %v2624 = vld [vmem:[#allocation2 + $0x70] sm:$0xff]
      %v2625 = vld [vmem:[#allocation2 + $0x78] sm:$0xff]
      %v2626 = vld [vmem:[#allocation2 + $0x80] sm:$0xff]
      %v2627 = vld [vmem:[#allocation2 + $0x88] sm:$0xff]
      %v2628 = vld [vmem:[#allocation2 + $0x90] sm:$0xff]
      %v2629 = vld [vmem:[#allocation2 + $0x98] sm:$0xff]
      %v2630 = vld [vmem:[#allocation2 + $0xa0] sm:$0xff]
      %v2631 = vld [vmem:[#allocation2 + $0xa8] sm:$0xff]
      %v2632 = vld [vmem:[#allocation2 + $0xb0] sm:$0xff]
      %v2633 = vld [vmem:[#allocation2 + $0xb8] sm:$0xff]
      %v2634 = vld [vmem:[#allocation2 + $0xc0] sm:$0xff]
      %v2635 = vld [vmem:[#allocation2 + $0xc8] sm:$0xff]
      %v2636 = vld [vmem:[#allocation2 + $0xd0] sm:$0xff]
      %v2637 = vld [vmem:[#allocation2 + $0xd8] sm:$0xff]
      %v2638 = vld [vmem:[#allocation2 + $0xe0] sm:$0xff]
      %v2639 = vld [vmem:[#allocation2 + $0xe8] sm:$0xff]
      %v2640 = vld [vmem:[#allocation2 + $0xf0] sm:$0xff]
      %v2641 = vld [vmem:[#allocation2 + $0xf8] sm:$0xff]
      %v2642 = vld [vmem:[#allocation2 + $0x100] sm:$0xff]
      %v2643 = vld [vmem:[#allocation2 + $0x108] sm:$0xff]
      %v2644 = vld [vmem:[#allocation2 + $0x110] sm:$0xff]
      %v2645 = vld [vmem:[#allocation2 + $0x118] sm:$0xff]
      %v2646 = vld [vmem:[#allocation2 + $0x120] sm:$0xff]
      %v2647 = vld [vmem:[#allocation2 + $0x128] sm:$0xff]
      %v2648 = vld [vmem:[#allocation2 + $0x130] sm:$0xff]
      %v2649 = vld [vmem:[#allocation2 + $0x138] sm:$0xff]
      %v2650 = vld [vmem:[#allocation2 + $0x140] sm:$0xff]
      %v2651 = vld [vmem:[#allocation2 + $0x148] sm:$0xff]
      %v2652 = vld [vmem:[#allocation2 + $0x150] sm:$0xff]
      %v2653 = vld [vmem:[#allocation2 + $0x158] sm:$0xff]
      %v2654 = vld [vmem:[%s3] sm:$0xf]
      %v2655 = vld [vmem:[%s3 + $0x4] sm:$0xf]
      %v2656 = vld [vmem:[%s3 + $0x8] sm:$0xf]
      %v2657 = vld [vmem:[%s3 + $0xc] sm:$0xf]
      %v2658 = vld [vmem:[%s3 + $0x10] sm:$0xf]
      %v2659 = vld [vmem:[%s3 + $0x14] sm:$0xf]
      %v2660 = vld [vmem:[%s3 + $0x18] sm:$0xf]
      %v2661 = vld [vmem:[%s3 + $0x1c] sm:$0xf]
      %v2662 = vld [vmem:[%s3 + $0x20] sm:$0xf]
      %v2663 = vld [vmem:[%s3 + $0x24] sm:$0xf]
      %v2664 = vld [vmem:[%s3 + $0x28] sm:$0xf]
      %v2665 = vld [vmem:[%s3 + $0x2c] sm:$0xf]
      %v2666 = vld [vmem:[%s3 + $0x30] sm:$0xf]
      %v2667 = vld [vmem:[%s3 + $0x34] sm:$0xf]
      %v2668 = vld [vmem:[%s3 + $0x38] sm:$0xf]
      %v2669 = vld [vmem:[%s3 + $0x3c] sm:$0xf]
      %v2670 = vld [vmem:[%s3 + $0x40] sm:$0xf]
      %v2671 = vld [vmem:[%s3 + $0x44] sm:$0xf]
      %v2672 = vld [vmem:[%s3 + $0x48] sm:$0xf]
      %v2673 = vld [vmem:[%s3 + $0x4c] sm:$0xf]
      %v2674 = vld [vmem:[%s3 + $0x50] sm:$0xf]
      %v2675 = vld [vmem:[%s3 + $0x54] sm:$0xf]
      %v2676 = vld [vmem:[%s3 + $0x58] sm:$0xf]
      %v2677 = vld [vmem:[%s3 + $0x5c] sm:$0xf]
      %v2678 = vld [vmem:[%s3 + $0x60] sm:$0xf]
      %v2679 = vld [vmem:[%s3 + $0x64] sm:$0xf]
      %v2680 = vld [vmem:[%s3 + $0x68] sm:$0xf]
      %v2681 = vld [vmem:[%s3 + $0x6c] sm:$0xf]
      %v2682 = vld [vmem:[%s3 + $0x70] sm:$0xf]
      %v2683 = vld [vmem:[%s3 + $0x74] sm:$0xf]
      %v2684 = vld [vmem:[%s3 + $0x78] sm:$0xf]
      %v2685 = vld [vmem:[%s3 + $0x7c] sm:$0xf]
      %v2686 = vld [vmem:[%s3 + $0x80] sm:$0xf]
      %v2687 = vld [vmem:[%s3 + $0x84] sm:$0xf]
      %v2688 = vld [vmem:[%s3 + $0x88] sm:$0xf]
      %v2689 = vld [vmem:[%s3 + $0x8c] sm:$0xf]
      %v2690 = vld [vmem:[%s3 + $0x90] sm:$0xf]
      %v2691 = vld [vmem:[%s3 + $0x94] sm:$0xf]
      %v2692 = vld [vmem:[%s3 + $0x98] sm:$0xf]
      %v2693 = vld [vmem:[%s3 + $0x9c] sm:$0xf]
      %v2694 = vld [vmem:[%s3 + $0xa0] sm:$0xf]
      %v2695 = vld [vmem:[%s3 + $0xa4] sm:$0xf]
      %v2696 = vld [vmem:[%s3 + $0xa8] sm:$0xf]
      %v2697 = vld [vmem:[%s3 + $0xac] sm:$0xf]
      %v2698 = vld [vmem:[%s3 + $0xb0] sm:$0xf]
      %v2699 = vld [vmem:[%s3 + $0xb4] sm:$0xf]
      %v2700 = vld [vmem:[%s3 + $0xb8] sm:$0xf]
      %v2701 = vld [vmem:[%s3 + $0xbc] sm:$0xf]
      %v2702 = vld [vmem:[%s3 + $0xc0] sm:$0xf]
      %v2703 = vld [vmem:[%s3 + $0xc4] sm:$0xf]
      %v2704 = vld [vmem:[%s3 + $0xc8] sm:$0xf]
      %v2705 = vld [vmem:[%s3 + $0xcc] sm:$0xf]
      %v2706 = vld [vmem:[%s3 + $0xd0] sm:$0xf]
      %v2707 = vld [vmem:[%s3 + $0xd4] sm:$0xf]
      %v2708 = vld [vmem:[%s3 + $0xd8] sm:$0xf]
      %v2709 = vld [vmem:[%s3 + $0xdc] sm:$0xf]
      %v2710 = vld [vmem:[%s3 + $0xe0] sm:$0xf]
      %v2711 = vld [vmem:[%s3 + $0xe4] sm:$0xf]
      %v2712 = vld [vmem:[%s3 + $0xe8] sm:$0xf]
      %v2713 = vld [vmem:[%s3 + $0xec] sm:$0xf]
      %v2714 = vld [vmem:[%s3 + $0xf0] sm:$0xf]
      %v2715 = vld [vmem:[%s3 + $0xf4] sm:$0xf]
      %v2716 = vld [vmem:[%s3 + $0xf8] sm:$0xf]
      %v2717 = vld [vmem:[%s3 + $0xfc] sm:$0xf]
      %v2718 = vld [vmem:[%s4] sm:$0x1]
      %v2720 = vperm.slane %v2718, 0
      %v2766 = vunpack.c.l.b16 %v2610
      %v2767 = vunpack.c.h.b16 %v2610
      %v2768 = vunpack.c.l.b16 %v2611
      %v2769 = vunpack.c.h.b16 %v2611
      %v2770 = vunpack.c.l.b16 %v2612
      %v2771 = vunpack.c.h.b16 %v2612
      %v2772 = vunpack.c.l.b16 %v2613
      %v2773 = vunpack.c.h.b16 %v2613
      %v2774 = vunpack.c.l.b16 %v2614
      %v2775 = vunpack.c.h.b16 %v2614
      %v2776 = vunpack.c.l.b16 %v2615
      %v2777 = vunpack.c.h.b16 %v2615
      %v2778 = vunpack.c.l.b16 %v2616
      %v2779 = vunpack.c.h.b16 %v2616
      %v2780 = vunpack.c.l.b16 %v2617
      %v2781 = vunpack.c.h.b16 %v2617
      %v2782 = vunpack.c.l.b16 %v2618
      %v2783 = vunpack.c.h.b16 %v2618
      %v2784 = vunpack.c.l.b16 %v2619
      %v2785 = vunpack.c.h.b16 %v2619
      %v2786 = vunpack.c.l.b16 %v2620
      %v2787 = vunpack.c.h.b16 %v2620
      %v2788 = vunpack.c.l.b16 %v2621
      %v2789 = vunpack.c.h.b16 %v2621
      %v2790 = vunpack.c.l.b16 %v2622
      %v2791 = vunpack.c.h.b16 %v2622
      %v2792 = vunpack.c.l.b16 %v2623
      %v2793 = vunpack.c.h.b16 %v2623
      %v2794 = vunpack.c.l.b16 %v2624
      %v2795 = vunpack.c.h.b16 %v2624
      %v2796 = vunpack.c.l.b16 %v2625
      %v2797 = vunpack.c.h.b16 %v2625
      %v2798 = vunpack.c.l.b16 %v2626
      %v2799 = vunpack.c.h.b16 %v2626
      %v2800 = vunpack.c.l.b16 %v2627
      %v2801 = vunpack.c.h.b16 %v2627
      %v2802 = vunpack.c.l.b16 %v2628
      %v2803 = vunpack.c.h.b16 %v2628
      %v2804 = vunpack.c.l.b16 %v2629
      %v2805 = vunpack.c.h.b16 %v2629
      %v2806 = vunpack.c.l.b16 %v2630
      %v2807 = vunpack.c.h.b16 %v2630
      %v2808 = vunpack.c.l.b16 %v2631
      %v2809 = vunpack.c.h.b16 %v2631
      %v2810 = vunpack.c.l.b16 %v2632
      %v2811 = vunpack.c.h.b16 %v2632
      %v2812 = vunpack.c.l.b16 %v2633
      %v2813 = vunpack.c.h.b16 %v2633
      %v2814 = vunpack.c.l.b16 %v2634
      %v2815 = vunpack.c.h.b16 %v2634
      %v2816 = vunpack.c.l.b16 %v2635
      %v2817 = vunpack.c.h.b16 %v2635
      %v2818 = vunpack.c.l.b16 %v2636
      %v2819 = vunpack.c.h.b16 %v2636
      %v2820 = vunpack.c.l.b16 %v2637
      %v2821 = vunpack.c.h.b16 %v2637
      %v2822 = vunpack.c.l.b16 %v2638
      %v2823 = vunpack.c.h.b16 %v2638
      %v2824 = vunpack.c.l.b16 %v2639
      %v2825 = vunpack.c.h.b16 %v2639
      %v2826 = vunpack.c.l.b16 %v2640
      %v2827 = vunpack.c.h.b16 %v2640
      %v2828 = vunpack.c.l.b16 %v2641
      %v2829 = vunpack.c.h.b16 %v2641
      %v2830 = vunpack.c.l.b16 %v2642
      %v2831 = vunpack.c.h.b16 %v2642
      %v2832 = vunpack.c.l.b16 %v2643
      %v2833 = vunpack.c.h.b16 %v2643
      %v2834 = vunpack.c.l.b16 %v2644
      %v2835 = vunpack.c.h.b16 %v2644
      %v2836 = vunpack.c.l.b16 %v2645
      %v2837 = vunpack.c.h.b16 %v2645
      %v2838 = vunpack.c.l.b16 %v2646
      %v2839 = vunpack.c.h.b16 %v2646
      %v2840 = vunpack.c.l.b16 %v2647
      %v2841 = vunpack.c.h.b16 %v2647
      %v2842 = vunpack.c.l.b16 %v2648
      %v2843 = vunpack.c.h.b16 %v2648
      %v2844 = vunpack.c.l.b16 %v2649
      %v2845 = vunpack.c.h.b16 %v2649
      %v2846 = vunpack.c.l.b16 %v2650
      %v2847 = vunpack.c.h.b16 %v2650
      %v2848 = vunpack.c.l.b16 %v2651
      %v2849 = vunpack.c.h.b16 %v2651
      %v2850 = vunpack.c.l.b16 %v2652
      %v2851 = vunpack.c.h.b16 %v2652
      %v2852 = vunpack.c.l.b16 %v2653
      %v2853 = vunpack.c.h.b16 %v2653
      %v2854 = vpack.c.b16 %v2770, %v2766
      %v2855 = vpack.c.b16 %v2771, %v2767
      %v2856 = vpack.c.b16 %v2772, %v2768
      %v2857 = vpack.c.b16 %v2773, %v2769
      %v2858 = vpack.c.b16 %v2778, %v2774
      %v2859 = vpack.c.b16 %v2779, %v2775
      %v2860 = vpack.c.b16 %v2780, %v2776
      %v2861 = vpack.c.b16 %v2781, %v2777
      %v2862 = vpack.c.b16 %v2786, %v2782
      %v2863 = vpack.c.b16 %v2787, %v2783
      %v2864 = vpack.c.b16 %v2788, %v2784
      %v2865 = vpack.c.b16 %v2789, %v2785
      %v2866 = vpack.c.b16 %v2794, %v2790
      %v2867 = vpack.c.b16 %v2795, %v2791
      %v2868 = vpack.c.b16 %v2796, %v2792
      %v2869 = vpack.c.b16 %v2797, %v2793
      %v2870 = vpack.c.b16 %v2802, %v2798
      %v2871 = vpack.c.b16 %v2803, %v2799
      %v2872 = vpack.c.b16 %v2804, %v2800
      %v2873 = vpack.c.b16 %v2805, %v2801
      %v2874 = vpack.c.b16 %v2810, %v2806
      %v2875 = vpack.c.b16 %v2811, %v2807
      %v2876 = vpack.c.b16 %v2812, %v2808
      %v2877 = vpack.c.b16 %v2813, %v2809
      %v2878 = vpack.c.b16 %v2818, %v2814
      %v2879 = vpack.c.b16 %v2819, %v2815
      %v2880 = vpack.c.b16 %v2820, %v2816
      %v2881 = vpack.c.b16 %v2821, %v2817
      %v2882 = vpack.c.b16 %v2826, %v2822
      %v2883 = vpack.c.b16 %v2827, %v2823
      %v2884 = vpack.c.b16 %v2828, %v2824
      %v2885 = vpack.c.b16 %v2829, %v2825
      %v2886 = vpack.c.b16 %v2834, %v2830
      %v2887 = vpack.c.b16 %v2835, %v2831
      %v2888 = vpack.c.b16 %v2836, %v2832
      %v2889 = vpack.c.b16 %v2837, %v2833
      %v2890 = vpack.c.b16 %v2842, %v2838
      %v2891 = vpack.c.b16 %v2843, %v2839
      %v2892 = vpack.c.b16 %v2844, %v2840
      %v2893 = vpack.c.b16 %v2845, %v2841
      %v2894 = vpack.c.b16 %v2850, %v2846
      %v2895 = vpack.c.b16 %v2851, %v2847
      %v2896 = vpack.c.b16 %v2852, %v2848
      %v2897 = vpack.c.b16 %v2853, %v2849
      %v3006 = vunpack.c.l.b16 %v2654
      %v3007 = vunpack.c.l.b16 %v2655
      %v3008 = vunpack.c.l.b16 %v2656
      %v3009 = vunpack.c.l.b16 %v2657
      %v3010 = vunpack.c.l.b16 %v2658
      %v3011 = vunpack.c.l.b16 %v2659
      %v3012 = vunpack.c.l.b16 %v2660
      %v3013 = vunpack.c.l.b16 %v2661
      %v3014 = vunpack.c.l.b16 %v2662
      %v3015 = vunpack.c.l.b16 %v2663
      %v3016 = vunpack.c.l.b16 %v2664
      %v3017 = vunpack.c.l.b16 %v2665
      %v3018 = vunpack.c.l.b16 %v2666
      %v3019 = vunpack.c.l.b16 %v2667
      %v3020 = vunpack.c.l.b16 %v2668
      %v3021 = vunpack.c.l.b16 %v2669
      %v3022 = vunpack.c.l.b16 %v2670
      %v3023 = vunpack.c.l.b16 %v2671
      %v3024 = vunpack.c.l.b16 %v2672
      %v3025 = vunpack.c.l.b16 %v2673
      %v3026 = vunpack.c.l.b16 %v2674
      %v3027 = vunpack.c.l.b16 %v2675
      %v3028 = vunpack.c.l.b16 %v2676
      %v3029 = vunpack.c.l.b16 %v2677
      %v3030 = vunpack.c.l.b16 %v2678
      %v3031 = vunpack.c.l.b16 %v2679
      %v3032 = vunpack.c.l.b16 %v2680
      %v3033 = vunpack.c.l.b16 %v2681
      %v3034 = vunpack.c.l.b16 %v2682
      %v3035 = vunpack.c.l.b16 %v2683
      %v3036 = vunpack.c.l.b16 %v2684
      %v3037 = vunpack.c.l.b16 %v2685
      %v3038 = vunpack.c.l.b16 %v2686
      %v3039 = vunpack.c.l.b16 %v2687
      %v3040 = vunpack.c.l.b16 %v2688
      %v3041 = vunpack.c.l.b16 %v2689
      %v3042 = vunpack.c.l.b16 %v2690
      %v3043 = vunpack.c.l.b16 %v2691
      %v3044 = vunpack.c.l.b16 %v2692
      %v3045 = vunpack.c.l.b16 %v2693
      %v3046 = vunpack.c.l.b16 %v2694
      %v3047 = vunpack.c.l.b16 %v2695
      %v3048 = vunpack.c.l.b16 %v2696
      %v3049 = vunpack.c.l.b16 %v2697
      %v3050 = vunpack.c.l.b16 %v2698
      %v3051 = vunpack.c.l.b16 %v2699
      %v3052 = vunpack.c.l.b16 %v2700
      %v3053 = vunpack.c.l.b16 %v2701
      %v3054 = vunpack.c.l.b16 %v2702
      %v3055 = vunpack.c.l.b16 %v2703
      %v3056 = vunpack.c.l.b16 %v2704
      %v3057 = vunpack.c.l.b16 %v2705
      %v3058 = vunpack.c.l.b16 %v2706
      %v3059 = vunpack.c.l.b16 %v2707
      %v3060 = vunpack.c.l.b16 %v2708
      %v3061 = vunpack.c.l.b16 %v2709
      %v3062 = vunpack.c.l.b16 %v2710
      %v3063 = vunpack.c.l.b16 %v2711
      %v3064 = vunpack.c.l.b16 %v2712
      %v3065 = vunpack.c.l.b16 %v2713
      %v3066 = vunpack.c.l.b16 %v2714
      %v3067 = vunpack.c.l.b16 %v2715
      %v3068 = vunpack.c.l.b16 %v2716
      %v3069 = vunpack.c.l.b16 %v2717
      %v3070 = vpack.c.b16 %v3007, %v3006
      %v3071 = vpack.c.b16 %v3009, %v3008
      %v3072 = vpack.c.b16 %v3011, %v3010
      %v3073 = vpack.c.b16 %v3013, %v3012
      %v3074 = vpack.c.b16 %v3015, %v3014
      %v3075 = vpack.c.b16 %v3017, %v3016
      %v3076 = vpack.c.b16 %v3019, %v3018
      %v3077 = vpack.c.b16 %v3021, %v3020
      %v3078 = vpack.c.b16 %v3023, %v3022
      %v3079 = vpack.c.b16 %v3025, %v3024
      %v3080 = vpack.c.b16 %v3027, %v3026
      %v3081 = vpack.c.b16 %v3029, %v3028
      %v3082 = vpack.c.b16 %v3031, %v3030
      %v3083 = vpack.c.b16 %v3033, %v3032
      %v3084 = vpack.c.b16 %v3035, %v3034
      %v3085 = vpack.c.b16 %v3037, %v3036
      %v3086 = vpack.c.b16 %v3039, %v3038
      %v3087 = vpack.c.b16 %v3041, %v3040
      %v3088 = vpack.c.b16 %v3043, %v3042
      %v3089 = vpack.c.b16 %v3045, %v3044
      %v3090 = vpack.c.b16 %v3047, %v3046
      %v3091 = vpack.c.b16 %v3049, %v3048
      %v3092 = vpack.c.b16 %v3051, %v3050
      %v3093 = vpack.c.b16 %v3053, %v3052
      %v3094 = vpack.c.b16 %v3055, %v3054
      %v3095 = vpack.c.b16 %v3057, %v3056
      %v3096 = vpack.c.b16 %v3059, %v3058
      %v3097 = vpack.c.b16 %v3061, %v3060
      %v3098 = vpack.c.b16 %v3063, %v3062
      %v3099 = vpack.c.b16 %v3065, %v3064
      %v3100 = vpack.c.b16 %v3067, %v3066
      %v3101 = vpack.c.b16 %v3069, %v3068
      %3134 = vmatpush.bf16.msra.mxu0 %v3077
      %3135 = vmatpush.bf16.msra.mxu0 %v3076
      %3136 = vmatpush.bf16.msra.mxu0 %v3075
      %3137 = vmatpush.bf16.msra.mxu0 %v3074
      %3138 = vmatpush.bf16.msra.mxu0 %v3073
      %3139 = vmatpush.bf16.msra.mxu0 %v3072
      %3140 = vmatpush.bf16.msra.mxu0 %v3071
      %3141 = vmatpush.bf16.msra.mxu0 %v3070
      %3142 = vmatmul.bf16.gmra.mxu0 %v2854
      %v3143 = vpop.f32.mrf.mxu0
      %v3144 = vadd.f32 %v2720, %v3143
      %v3145 = vpop.f32.mrf.mxu0
      %v3146 = vadd.f32 %v2720, %v3145
      %3147 = vmatmul.bf16.gmra.mxu0 %v2858
      %v3148 = vpop.f32.mrf.mxu0
      %v3149 = vadd.f32 %v2720, %v3148
      %v3150 = vpop.f32.mrf.mxu0
      %v3151 = vadd.f32 %v2720, %v3150
      %3152 = vmatmul.bf16.gmra.mxu0 %v2862
      %v3153 = vpop.f32.mrf.mxu0
      %v3154 = vadd.f32 %v2720, %v3153
      %v3155 = vpop.f32.mrf.mxu0
      %v3156 = vadd.f32 %v2720, %v3155
      %3157 = vmatmul.bf16.gmra.mxu0 %v2866
      %v3158 = vpop.f32.mrf.mxu0
      %v3159 = vadd.f32 %v2720, %v3158
      %v3160 = vpop.f32.mrf.mxu0
      %v3161 = vadd.f32 %v2720, %v3160
      %3162 = vmatmul.bf16.gmra.mxu0 %v2870
      %v3163 = vpop.f32.mrf.mxu0
      %v3164 = vadd.f32 %v2720, %v3163
      %v3165 = vpop.f32.mrf.mxu0
      %v3166 = vadd.f32 %v2720, %v3165
      %3167 = vmatmul.bf16.gmra.mxu0 %v2874
      %v3168 = vpop.f32.mrf.mxu0
      %v3169 = vadd.f32 %v2720, %v3168
      %v3170 = vpop.f32.mrf.mxu0
      %v3171 = vadd.f32 %v2720, %v3170
      %3172 = vmatmul.bf16.gmra.mxu0 %v2878
      %v3173 = vpop.f32.mrf.mxu0
      %v3174 = vadd.f32 %v2720, %v3173
      %v3175 = vpop.f32.mrf.mxu0
      %v3176 = vadd.f32 %v2720, %v3175
      %3177 = vmatmul.bf16.gmra.mxu0 %v2882
      %v3178 = vpop.f32.mrf.mxu0
      %v3179 = vadd.f32 %v2720, %v3178
      %v3180 = vpop.f32.mrf.mxu0
      %v3181 = vadd.f32 %v2720, %v3180
      %3182 = vmatmul.bf16.gmra.mxu0 %v2886
      %v3183 = vpop.f32.mrf.mxu0
      %v3184 = vadd.f32 %v2720, %v3183
      %v3185 = vpop.f32.mrf.mxu0
      %v3186 = vadd.f32 %v2720, %v3185
      %3187 = vmatmul.bf16.gmra.mxu0 %v2890
      %v3188 = vpop.f32.mrf.mxu0
      %v3189 = vpop.f32.mrf.mxu0
      %3190 = vmatmul.bf16.gmra.mxu0 %v2894
      %v3191 = vpop.f32.mrf.mxu0
      %v3192 = vpop.f32.mrf.mxu0
      %3193 = vdwg.mxu0
      %3194 = vmatpush.bf16.msra.mxu0 %v3085
      %3195 = vmatpush.bf16.msra.mxu0 %v3084
      %3196 = vmatpush.bf16.msra.mxu0 %v3083
      %3197 = vmatpush.bf16.msra.mxu0 %v3082
      %3198 = vmatpush.bf16.msra.mxu0 %v3081
      %3199 = vmatpush.bf16.msra.mxu0 %v3080
      %3200 = vmatpush.bf16.msra.mxu0 %v3079
      %3201 = vmatpush.bf16.msra.mxu0 %v3078
      %3202 = vmatmul.bf16.gmra.mxu0 %v2855
      %v3203 = vpop.f32.mrf.mxu0
      %v3204 = vadd.f32 %v3144, %v3203
      %v3205 = vpop.f32.mrf.mxu0
      %v3206 = vadd.f32 %v3146, %v3205
      %3207 = vmatmul.bf16.gmra.mxu0 %v2859
      %v3208 = vpop.f32.mrf.mxu0
      %v3209 = vadd.f32 %v3149, %v3208
      %v3210 = vpop.f32.mrf.mxu0
      %v3211 = vadd.f32 %v3151, %v3210
      %3212 = vmatmul.bf16.gmra.mxu0 %v2863
      %v3213 = vpop.f32.mrf.mxu0
      %v3214 = vadd.f32 %v3154, %v3213
      %v3215 = vpop.f32.mrf.mxu0
      %v3216 = vadd.f32 %v3156, %v3215
      %3217 = vmatmul.bf16.gmra.mxu0 %v2867
      %v3218 = vpop.f32.mrf.mxu0
      %v3219 = vadd.f32 %v3159, %v3218
      %v3220 = vpop.f32.mrf.mxu0
      %v3221 = vadd.f32 %v3161, %v3220
      %3222 = vmatmul.bf16.gmra.mxu0 %v2871
      %v3223 = vpop.f32.mrf.mxu0
      %v3224 = vadd.f32 %v3164, %v3223
      %v3225 = vpop.f32.mrf.mxu0
      %v3226 = vadd.f32 %v3166, %v3225
      %3227 = vmatmul.bf16.gmra.mxu0 %v2875
      %v3228 = vpop.f32.mrf.mxu0
      %v3229 = vadd.f32 %v3169, %v3228
      %v3230 = vpop.f32.mrf.mxu0
      %v3231 = vadd.f32 %v3171, %v3230
      %3232 = vmatmul.bf16.gmra.mxu0 %v2879
      %v3233 = vpop.f32.mrf.mxu0
      %v3234 = vadd.f32 %v3174, %v3233
      %v3235 = vpop.f32.mrf.mxu0
      %v3236 = vadd.f32 %v3176, %v3235
      %3237 = vmatmul.bf16.gmra.mxu0 %v2883
      %v3238 = vpop.f32.mrf.mxu0
      %v3239 = vadd.f32 %v3179, %v3238
      %v3240 = vpop.f32.mrf.mxu0
      %v3241 = vadd.f32 %v3181, %v3240
      %3242 = vmatmul.bf16.gmra.mxu0 %v2887
      %v3243 = vpop.f32.mrf.mxu0
      %v3244 = vadd.f32 %v3184, %v3243
      %v3245 = vpop.f32.mrf.mxu0
      %v3246 = vadd.f32 %v3186, %v3245
      %3247 = vmatmul.bf16.gmra.mxu0 %v2891
      %v3248 = vpop.f32.mrf.mxu0
      %v3249 = vpop.f32.mrf.mxu0
      %3250 = vmatmul.bf16.gmra.mxu0 %v2895
      %v3251 = vpop.f32.mrf.mxu0
      %v3252 = vpop.f32.mrf.mxu0
      %3253 = vdwg.mxu0
      %3254 = vmatpush.bf16.msra.mxu0 %v3093
      %3255 = vmatpush.bf16.msra.mxu0 %v3092
      %3256 = vmatpush.bf16.msra.mxu0 %v3091
      %3257 = vmatpush.bf16.msra.mxu0 %v3090
      %3258 = vmatpush.bf16.msra.mxu0 %v3089
      %3259 = vmatpush.bf16.msra.mxu0 %v3088
      %3260 = vmatpush.bf16.msra.mxu0 %v3087
      %3261 = vmatpush.bf16.msra.mxu0 %v3086
      %3262 = vmatmul.bf16.gmra.mxu0 %v2856
      %v3263 = vpop.f32.mrf.mxu0
      %v3264 = vadd.f32 %v3204, %v3263
      %v3265 = vpop.f32.mrf.mxu0
      %v3266 = vadd.f32 %v3206, %v3265
      %3267 = vmatmul.bf16.gmra.mxu0 %v2860
      %v3268 = vpop.f32.mrf.mxu0
      %v3269 = vadd.f32 %v3209, %v3268
      %v3270 = vpop.f32.mrf.mxu0
      %v3271 = vadd.f32 %v3211, %v3270
      %3272 = vmatmul.bf16.gmra.mxu0 %v2864
      %v3273 = vpop.f32.mrf.mxu0
      %v3274 = vadd.f32 %v3214, %v3273
      %v3275 = vpop.f32.mrf.mxu0
      %v3276 = vadd.f32 %v3216, %v3275
      %3277 = vmatmul.bf16.gmra.mxu0 %v2868
      %v3278 = vpop.f32.mrf.mxu0
      %v3279 = vadd.f32 %v3219, %v3278
      %v3280 = vpop.f32.mrf.mxu0
      %v3281 = vadd.f32 %v3221, %v3280
      %3282 = vmatmul.bf16.gmra.mxu0 %v2872
      %v3283 = vpop.f32.mrf.mxu0
      %v3284 = vadd.f32 %v3224, %v3283
      %v3285 = vpop.f32.mrf.mxu0
      %v3286 = vadd.f32 %v3226, %v3285
      %3287 = vmatmul.bf16.gmra.mxu0 %v2876
      %v3288 = vpop.f32.mrf.mxu0
      %v3289 = vadd.f32 %v3229, %v3288
      %v3290 = vpop.f32.mrf.mxu0
      %v3291 = vadd.f32 %v3231, %v3290
      %3292 = vmatmul.bf16.gmra.mxu0 %v2880
      %v3293 = vpop.f32.mrf.mxu0
      %v3294 = vadd.f32 %v3234, %v3293
      %v3295 = vpop.f32.mrf.mxu0
      %v3296 = vadd.f32 %v3236, %v3295
      %3297 = vmatmul.bf16.gmra.mxu0 %v2884
      %v3298 = vpop.f32.mrf.mxu0
      %v3299 = vadd.f32 %v3239, %v3298
      %v3300 = vpop.f32.mrf.mxu0
      %v3301 = vadd.f32 %v3241, %v3300
      %3302 = vmatmul.bf16.gmra.mxu0 %v2888
      %v3303 = vpop.f32.mrf.mxu0
      %v3304 = vadd.f32 %v3244, %v3303
      %v3305 = vpop.f32.mrf.mxu0
      %v3306 = vadd.f32 %v3246, %v3305
      %3307 = vmatmul.bf16.gmra.mxu0 %v2892
      %v3308 = vpop.f32.mrf.mxu0
      %v3309 = vpop.f32.mrf.mxu0
      %3310 = vmatmul.bf16.gmra.mxu0 %v2896
      %v3311 = vpop.f32.mrf.mxu0
      %v3312 = vpop.f32.mrf.mxu0
      %3313 = vdwg.mxu0
      %3314 = vmatpush.bf16.msra.mxu0 %v3101
      %3315 = vmatpush.bf16.msra.mxu0 %v3100
      %3316 = vmatpush.bf16.msra.mxu0 %v3099
      %3317 = vmatpush.bf16.msra.mxu0 %v3098
      %3318 = vmatpush.bf16.msra.mxu0 %v3097
      %3319 = vmatpush.bf16.msra.mxu0 %v3096
      %3320 = vmatpush.bf16.msra.mxu0 %v3095
      %3321 = vmatpush.bf16.msra.mxu0 %v3094
      %3322 = vmatmul.bf16.gmra.mxu0 %v2857
      %v3323 = vpop.f32.mrf.mxu0
      %v3324 = vadd.f32 %v3264, %v3323
      %v3325 = vpop.f32.mrf.mxu0
      %v3326 = vadd.f32 %v3266, %v3325
      %3327 = vmatmul.bf16.gmra.mxu0 %v2861
      %v3328 = vpop.f32.mrf.mxu0
      %v3329 = vadd.f32 %v3269, %v3328
      %v3330 = vpop.f32.mrf.mxu0
      %v3331 = vadd.f32 %v3271, %v3330
      %3332 = vmatmul.bf16.gmra.mxu0 %v2865
      %v3333 = vpop.f32.mrf.mxu0
      %v3334 = vadd.f32 %v3274, %v3333
      %v3335 = vpop.f32.mrf.mxu0
      %v3336 = vadd.f32 %v3276, %v3335
      %3337 = vmatmul.bf16.gmra.mxu0 %v2869
      %v3338 = vpop.f32.mrf.mxu0
      %v3339 = vadd.f32 %v3279, %v3338
      %v3340 = vpop.f32.mrf.mxu0
      %v3341 = vadd.f32 %v3281, %v3340
      %3342 = vmatmul.bf16.gmra.mxu0 %v2873
      %v3343 = vpop.f32.mrf.mxu0
      %v3344 = vadd.f32 %v3284, %v3343
      %v3345 = vpop.f32.mrf.mxu0
      %v3346 = vadd.f32 %v3286, %v3345
      %3347 = vmatmul.bf16.gmra.mxu0 %v2877
      %v3348 = vpop.f32.mrf.mxu0
      %v3349 = vadd.f32 %v3289, %v3348
      %v3350 = vpop.f32.mrf.mxu0
      %v3351 = vadd.f32 %v3291, %v3350
      %3352 = vmatmul.bf16.gmra.mxu0 %v2881
      %v3353 = vpop.f32.mrf.mxu0
      %v3354 = vadd.f32 %v3294, %v3353
      %v3355 = vpop.f32.mrf.mxu0
      %v3356 = vadd.f32 %v3296, %v3355
      %3357 = vmatmul.bf16.gmra.mxu0 %v2885
      %v3358 = vpop.f32.mrf.mxu0
      %v3359 = vadd.f32 %v3299, %v3358
      %v3360 = vpop.f32.mrf.mxu0
      %v3361 = vadd.f32 %v3301, %v3360
      %3362 = vmatmul.bf16.gmra.mxu0 %v2889
      %v3363 = vpop.f32.mrf.mxu0
      %v3364 = vadd.f32 %v3304, %v3363
      %v3365 = vpop.f32.mrf.mxu0
      %v3366 = vadd.f32 %v3306, %v3365
      %3367 = vmatmul.bf16.gmra.mxu0 %v2893
      %v3368 = vpop.f32.mrf.mxu0
      %v3369 = vpop.f32.mrf.mxu0
      %3370 = vmatmul.bf16.gmra.mxu0 %v2897
      %v3371 = vpop.f32.mrf.mxu0
      %v3372 = vpop.f32.mrf.mxu0
      %3373 = vdwg.mxu0
      %vm3374 = vcmp.ge.f32.partialorder %v3324, 0.0
      %vm3375 = vcmp.ge.f32.partialorder %v3326, 0.0
      %vm3376 = vcmp.ge.f32.partialorder %v3329, 0.0
      %vm3377 = vcmp.ge.f32.partialorder %v3331, 0.0
      %vm3378 = vcmp.ge.f32.partialorder %v3334, 0.0
      %vm3379 = vcmp.ge.f32.partialorder %v3336, 0.0
      %vm3380 = vcmp.ge.f32.partialorder %v3339, 0.0
      %vm3381 = vcmp.ge.f32.partialorder %v3341, 0.0
      %vm3382 = vcmp.ge.f32.partialorder %v3344, 0.0
      %vm3383 = vcmp.ge.f32.partialorder %v3346, 0.0
      %vm3384 = vcmp.ge.f32.partialorder %v3349, 0.0
      %vm3385 = vcmp.ge.f32.partialorder %v3351, 0.0
      %vm3386 = vcmp.ge.f32.partialorder %v3354, 0.0
      %vm3387 = vcmp.ge.f32.partialorder %v3356, 0.0
      %vm3388 = vcmp.ge.f32.partialorder %v3359, 0.0
      %vm3389 = vcmp.ge.f32.partialorder %v3361, 0.0
      %vm3390 = vcmp.ge.f32.partialorder %v3364, 0.0
      %vm3391 = vcmp.ge.f32.partialorder %v3366, 0.0
      %v3392 = vmul.f32 %v3324, 0.2
      %v3393 = vmul.f32 %v3326, 0.2
      %v3394 = vmul.f32 %v3329, 0.2
      %v3395 = vmul.f32 %v3331, 0.2
      %v3396 = vmul.f32 %v3334, 0.2
      %v3397 = vmul.f32 %v3336, 0.2
      %v3398 = vmul.f32 %v3339, 0.2
      %v3399 = vmul.f32 %v3341, 0.2
      %v3400 = vmul.f32 %v3344, 0.2
      %v3401 = vmul.f32 %v3346, 0.2
      %v3402 = vmul.f32 %v3349, 0.2
      %v3403 = vmul.f32 %v3351, 0.2
      %v3404 = vmul.f32 %v3354, 0.2
      %v3405 = vmul.f32 %v3356, 0.2
      %v3406 = vmul.f32 %v3359, 0.2
      %v3407 = vmul.f32 %v3361, 0.2
      %v3408 = vmul.f32 %v3364, 0.2
      %v3409 = vmul.f32 %v3366, 0.2
      %v3410 = vsel %vm3374, %v3324, %v3392
      %v3411 = vsel %vm3375, %v3326, %v3393
      %v3412 = vsel %vm3376, %v3329, %v3394
      %v3413 = vsel %vm3377, %v3331, %v3395
      %v3414 = vsel %vm3378, %v3334, %v3396
      %v3415 = vsel %vm3379, %v3336, %v3397
      %v3416 = vsel %vm3380, %v3339, %v3398
      %v3417 = vsel %vm3381, %v3341, %v3399
      %v3418 = vsel %vm3382, %v3344, %v3400
      %v3419 = vsel %vm3383, %v3346, %v3401
      %v3420 = vsel %vm3384, %v3349, %v3402
      %v3421 = vsel %vm3385, %v3351, %v3403
      %v3422 = vsel %vm3386, %v3354, %v3404
      %v3423 = vsel %vm3387, %v3356, %v3405
      %v3424 = vsel %vm3388, %v3359, %v3406
      %v3425 = vsel %vm3389, %v3361, %v3407
      %v3426 = vsel %vm3390, %v3364, %v3408
      %v3427 = vsel %vm3391, %v3366, %v3409
      %v3428 = vpack.c.bf16 %v3410, %v3410
      %v3429 = vpack.c.bf16 %v3411, %v3411
      %v3430 = vpack.c.bf16 %v3412, %v3412
      %v3431 = vpack.c.bf16 %v3413, %v3413
      %v3432 = vpack.c.bf16 %v3414, %v3414
      %v3433 = vpack.c.bf16 %v3415, %v3415
      %v3434 = vpack.c.bf16 %v3416, %v3416
      %v3435 = vpack.c.bf16 %v3417, %v3417
      %v3436 = vpack.c.bf16 %v3418, %v3418
      %vm3437 = vcmask 519168
      %3438 = vst.msk [vmem:[#allocation3] sm:$0xf] %vm3437, %v3428
      %3439 = vst.msk [vmem:[#allocation3 + $0x14] sm:$0xf] %vm3437, %v3429
      %3440 = vst.msk [vmem:[#allocation3 + $0x28] sm:$0xf] %vm3437, %v3430
      %3441 = vst.msk [vmem:[#allocation3 + $0x3c] sm:$0xf] %vm3437, %v3431
      %3442 = vst.msk [vmem:[#allocation3 + $0x50] sm:$0xf] %vm3437, %v3432
      %3443 = vst.msk [vmem:[#allocation3 + $0x64] sm:$0xf] %vm3437, %v3433
      %3444 = vst.msk [vmem:[#allocation3 + $0x78] sm:$0xf] %vm3437, %v3434
      %3445 = vst.msk [vmem:[#allocation3 + $0x8c] sm:$0xf] %vm3437, %v3435
      %3446 = vst.msk [vmem:[#allocation3 + $0xa0] sm:$0xf] %vm3437, %v3436
      %v3447 = vpack.c.bf16 %v3419, %v3419
      %v3458 = vrot.slane %v3428, 5
      %v3459 = vrot.slane %v3458, 4
      %v3460 = vrot.slane %v3429, 5
      %v3461 = vsel %vm1808, %v3459, %v3460
      %v3462 = vrot.slane %v3460, 4
      %v3463 = vrot.slane %v3430, 5
      %v3464 = vsel %vm1808, %v3462, %v3463
      %v3465 = vrot.slane %v3463, 4
      %v3466 = vrot.slane %v3431, 5
      %v3467 = vsel %vm1808, %v3465, %v3466
      %v3468 = vrot.slane %v3466, 4
      %v3469 = vrot.slane %v3432, 5
      %v3470 = vsel %vm1808, %v3468, %v3469
      %v3471 = vrot.slane %v3469, 4
      %v3472 = vrot.slane %v3433, 5
      %v3473 = vsel %vm1808, %v3471, %v3472
      %v3474 = vrot.slane %v3472, 4
      %v3475 = vrot.slane %v3434, 5
      %v3476 = vsel %vm1808, %v3474, %v3475
      %v3477 = vrot.slane %v3475, 4
      %v3478 = vrot.slane %v3435, 5
      %v3479 = vsel %vm1808, %v3477, %v3478
      %v3480 = vrot.slane %v3478, 4
      %v3481 = vrot.slane %v3436, 5
      %v3482 = vsel %vm1808, %v3480, %v3481
      %v3483 = vrot.slane %v3481, 4
      %v3484 = vrot.slane %v3447, 5
      %v3485 = vsel %vm1808, %v3483, %v3484
      %3486 = vrot.lane.b32.xlu0 %v3461, 64
      %v3487 = vpop.permute.xlu0 %3486
      %3488 = vrot.lane.b32.xlu0 %v3464, 64
      %v3489 = vpop.permute.xlu0 %3488
      %3490 = vrot.lane.b32.xlu0 %v3467, 64
      %v3491 = vpop.permute.xlu0 %3490
      %3492 = vrot.lane.b32.xlu0 %v3470, 64
      %v3493 = vpop.permute.xlu0 %3492
      %3494 = vrot.lane.b32.xlu0 %v3473, 64
      %v3495 = vpop.permute.xlu0 %3494
      %3496 = vrot.lane.b32.xlu0 %v3476, 64
      %v3497 = vpop.permute.xlu0 %3496
      %3498 = vrot.lane.b32.xlu0 %v3479, 64
      %v3499 = vpop.permute.xlu0 %3498
      %3500 = vrot.lane.b32.xlu0 %v3482, 64
      %v3501 = vpop.permute.xlu0 %3500
      %3502 = vrot.lane.b32.xlu0 %v3485, 64
      %v3503 = vpop.permute.xlu0 %3502
      %vm3513 = vcmask 1043968
      %3514 = vst.msk [vmem:[#allocation3] sm:$0xf] %vm3513, %v3487
      %3515 = vst.msk [vmem:[#allocation3 + $0x14] sm:$0xf] %vm3513, %v3489
      %3516 = vst.msk [vmem:[#allocation3 + $0x28] sm:$0xf] %vm3513, %v3491
      %3517 = vst.msk [vmem:[#allocation3 + $0x3c] sm:$0xf] %vm3513, %v3493
      %3518 = vst.msk [vmem:[#allocation3 + $0x50] sm:$0xf] %vm3513, %v3495
      %3519 = vst.msk [vmem:[#allocation3 + $0x64] sm:$0xf] %vm3513, %v3497
      %3520 = vst.msk [vmem:[#allocation3 + $0x78] sm:$0xf] %vm3513, %v3499
      %3521 = vst.msk [vmem:[#allocation3 + $0x8c] sm:$0xf] %vm3513, %v3501
      %3522 = vst.msk [vmem:[#allocation3 + $0xa0] sm:$0xf] %vm3513, %v3503
      %vm3523 = vcmask 1041408
      %vm3524 = vcmask 1045508
      %vm3525 = vmor %vm3523, %vm3524
      %v3526 = vrot.slane %v3428, 6
      %v3527 = vrot.slane %v3526, 4
      %v3528 = vrot.slane %v3429, 6
      %v3529 = vsel %vm3525, %v3527, %v3528
      %v3530 = vrot.slane %v3528, 4
      %v3531 = vrot.slane %v3430, 6
      %v3532 = vsel %vm3525, %v3530, %v3531
      %v3533 = vrot.slane %v3531, 4
      %v3534 = vrot.slane %v3431, 6
      %v3535 = vsel %vm3525, %v3533, %v3534
      %v3536 = vrot.slane %v3534, 4
      %v3537 = vrot.slane %v3432, 6
      %v3538 = vsel %vm3525, %v3536, %v3537
      %v3539 = vrot.slane %v3537, 4
      %v3540 = vrot.slane %v3433, 6
      %v3541 = vsel %vm3525, %v3539, %v3540
      %v3542 = vrot.slane %v3540, 4
      %v3543 = vrot.slane %v3434, 6
      %v3544 = vsel %vm3525, %v3542, %v3543
      %v3545 = vrot.slane %v3543, 4
      %v3546 = vrot.slane %v3435, 6
      %v3547 = vsel %vm3525, %v3545, %v3546
      %v3548 = vrot.slane %v3546, 4
      %v3549 = vrot.slane %v3436, 6
      %v3550 = vsel %vm3525, %v3548, %v3549
      %v3551 = vrot.slane %v3549, 4
      %v3552 = vrot.slane %v3447, 6
      %v3553 = vsel %vm3525, %v3551, %v3552
      %3563 = vst.msk [vmem:[#allocation3 + $0x4] sm:$0xf] %vm3437, %v3529
      %3564 = vst.msk [vmem:[#allocation3 + $0x18] sm:$0xf] %vm3437, %v3532
      %3565 = vst.msk [vmem:[#allocation3 + $0x2c] sm:$0xf] %vm3437, %v3535
      %3566 = vst.msk [vmem:[#allocation3 + $0x40] sm:$0xf] %vm3437, %v3538
      %3567 = vst.msk [vmem:[#allocation3 + $0x54] sm:$0xf] %vm3437, %v3541
      %3568 = vst.msk [vmem:[#allocation3 + $0x68] sm:$0xf] %vm3437, %v3544
      %3569 = vst.msk [vmem:[#allocation3 + $0x7c] sm:$0xf] %vm3437, %v3547
      %3570 = vst.msk [vmem:[#allocation3 + $0x90] sm:$0xf] %vm3437, %v3550
      %3571 = vst.msk [vmem:[#allocation3 + $0xa4] sm:$0xf] %vm3437, %v3553
      %v3572 = vpack.c.bf16 %v3420, %v3420
      %v3573 = vpack.c.bf16 %v3421, %v3421
      %v3574 = vpack.c.bf16 %v3422, %v3422
      %3578 = vrot.lane.b32.xlu0 %v3432, 64
      %v3579 = vpop.permute.xlu0 %3578
      %3580 = vrot.lane.b32.xlu0 %v3433, 64
      %v3581 = vpop.permute.xlu0 %3580
      %3582 = vrot.lane.b32.xlu0 %v3434, 64
      %v3583 = vpop.permute.xlu0 %3582
      %3584 = vrot.lane.b32.xlu0 %v3435, 64
      %v3585 = vpop.permute.xlu0 %3584
      %3586 = vrot.lane.b32.xlu0 %v3436, 64
      %v3587 = vpop.permute.xlu0 %3586
      %3588 = vrot.lane.b32.xlu0 %v3447, 64
      %v3589 = vpop.permute.xlu0 %3588
      %3590 = vrot.lane.b32.xlu0 %v3572, 64
      %v3591 = vpop.permute.xlu0 %3590
      %3592 = vrot.lane.b32.xlu0 %v3573, 64
      %v3593 = vpop.permute.xlu0 %3592
      %3594 = vrot.lane.b32.xlu0 %v3574, 64
      %v3595 = vpop.permute.xlu0 %3594
      %3605 = vst.msk [vmem:[#allocation3 + $0x4] sm:$0xf] %vm3513, %v3579
      %3606 = vst.msk [vmem:[#allocation3 + $0x18] sm:$0xf] %vm3513, %v3581
      %3607 = vst.msk [vmem:[#allocation3 + $0x2c] sm:$0xf] %vm3513, %v3583
      %3608 = vst.msk [vmem:[#allocation3 + $0x40] sm:$0xf] %vm3513, %v3585
      %3609 = vst.msk [vmem:[#allocation3 + $0x54] sm:$0xf] %vm3513, %v3587
      %3610 = vst.msk [vmem:[#allocation3 + $0x68] sm:$0xf] %vm3513, %v3589
      %3611 = vst.msk [vmem:[#allocation3 + $0x7c] sm:$0xf] %vm3513, %v3591
      %3612 = vst.msk [vmem:[#allocation3 + $0x90] sm:$0xf] %vm3513, %v3593
      %3613 = vst.msk [vmem:[#allocation3 + $0xa4] sm:$0xf] %vm3513, %v3595
      %v3614 = vpack.c.bf16 %v3423, %v3423
      %v3616 = vrot.slane %v3484, 4
      %v3617 = vrot.slane %v3572, 5
      %v3618 = vsel %vm1808, %v3616, %v3617
      %v3619 = vrot.slane %v3617, 4
      %v3620 = vrot.slane %v3573, 5
      %v3621 = vsel %vm1808, %v3619, %v3620
      %v3622 = vrot.slane %v3620, 4
      %v3623 = vrot.slane %v3574, 5
      %v3624 = vsel %vm1808, %v3622, %v3623
      %v3625 = vrot.slane %v3623, 4
      %v3626 = vrot.slane %v3614, 5
      %v3627 = vsel %vm1808, %v3625, %v3626
      %3637 = vst.msk [vmem:[#allocation3 + $0x8] sm:$0xf] %vm3437, %v3473
      %3638 = vst.msk [vmem:[#allocation3 + $0x1c] sm:$0xf] %vm3437, %v3476
      %3639 = vst.msk [vmem:[#allocation3 + $0x30] sm:$0xf] %vm3437, %v3479
      %3640 = vst.msk [vmem:[#allocation3 + $0x44] sm:$0xf] %vm3437, %v3482
      %3641 = vst.msk [vmem:[#allocation3 + $0x58] sm:$0xf] %vm3437, %v3485
      %3642 = vst.msk [vmem:[#allocation3 + $0x6c] sm:$0xf] %vm3437, %v3618
      %3643 = vst.msk [vmem:[#allocation3 + $0x80] sm:$0xf] %vm3437, %v3621
      %3644 = vst.msk [vmem:[#allocation3 + $0x94] sm:$0xf] %vm3437, %v3624
      %3645 = vst.msk [vmem:[#allocation3 + $0xa8] sm:$0xf] %vm3437, %v3627
      %v3646 = vrot.slane %v3552, 4
      %v3647 = vrot.slane %v3572, 6
      %v3648 = vsel %vm3525, %v3646, %v3647
      %v3649 = vrot.slane %v3647, 4
      %v3650 = vrot.slane %v3573, 6
      %v3651 = vsel %vm3525, %v3649, %v3650
      %v3652 = vrot.slane %v3650, 4
      %v3653 = vrot.slane %v3574, 6
      %v3654 = vsel %vm3525, %v3652, %v3653
      %v3655 = vrot.slane %v3653, 4
      %v3656 = vrot.slane %v3614, 6
      %v3657 = vsel %vm3525, %v3655, %v3656
      %3658 = vrot.lane.b32.xlu0 %v3541, 64
      %v3659 = vpop.permute.xlu0 %3658
      %3660 = vrot.lane.b32.xlu0 %v3544, 64
      %v3661 = vpop.permute.xlu0 %3660
      %3662 = vrot.lane.b32.xlu0 %v3547, 64
      %v3663 = vpop.permute.xlu0 %3662
      %3664 = vrot.lane.b32.xlu0 %v3550, 64
      %v3665 = vpop.permute.xlu0 %3664
      %3666 = vrot.lane.b32.xlu0 %v3553, 64
      %v3667 = vpop.permute.xlu0 %3666
      %3668 = vrot.lane.b32.xlu0 %v3648, 64
      %v3669 = vpop.permute.xlu0 %3668
      %3670 = vrot.lane.b32.xlu0 %v3651, 64
      %v3671 = vpop.permute.xlu0 %3670
      %3672 = vrot.lane.b32.xlu0 %v3654, 64
      %v3673 = vpop.permute.xlu0 %3672
      %3674 = vrot.lane.b32.xlu0 %v3657, 64
      %v3675 = vpop.permute.xlu0 %3674
      %3685 = vst.msk [vmem:[#allocation3 + $0x8] sm:$0xf] %vm3513, %v3659
      %3686 = vst.msk [vmem:[#allocation3 + $0x1c] sm:$0xf] %vm3513, %v3661
      %3687 = vst.msk [vmem:[#allocation3 + $0x30] sm:$0xf] %vm3513, %v3663
      %3688 = vst.msk [vmem:[#allocation3 + $0x44] sm:$0xf] %vm3513, %v3665
      %3689 = vst.msk [vmem:[#allocation3 + $0x58] sm:$0xf] %vm3513, %v3667
      %3690 = vst.msk [vmem:[#allocation3 + $0x6c] sm:$0xf] %vm3513, %v3669
      %3691 = vst.msk [vmem:[#allocation3 + $0x80] sm:$0xf] %vm3513, %v3671
      %3692 = vst.msk [vmem:[#allocation3 + $0x94] sm:$0xf] %vm3513, %v3673
      %3693 = vst.msk [vmem:[#allocation3 + $0xa8] sm:$0xf] %vm3513, %v3675
      %v3694 = vpack.c.bf16 %v3424, %v3424
      %v3695 = vpack.c.bf16 %v3425, %v3425
      %v3696 = vpack.c.bf16 %v3426, %v3426
      %3697 = vst.msk [vmem:[#allocation3 + $0xc] sm:$0xf] %vm3437, %v3436
      %3698 = vst.msk [vmem:[#allocation3 + $0x20] sm:$0xf] %vm3437, %v3447
      %3699 = vst.msk [vmem:[#allocation3 + $0x34] sm:$0xf] %vm3437, %v3572
      %3700 = vst.msk [vmem:[#allocation3 + $0x48] sm:$0xf] %vm3437, %v3573
      %3701 = vst.msk [vmem:[#allocation3 + $0x5c] sm:$0xf] %vm3437, %v3574
      %3702 = vst.msk [vmem:[#allocation3 + $0x70] sm:$0xf] %vm3437, %v3614
      %3703 = vst.msk [vmem:[#allocation3 + $0x84] sm:$0xf] %vm3437, %v3694
      %3704 = vst.msk [vmem:[#allocation3 + $0x98] sm:$0xf] %vm3437, %v3695
      %3705 = vst.msk [vmem:[#allocation3 + $0xac] sm:$0xf] %vm3437, %v3696
      %v3706 = vpack.c.bf16 %v3427, %v3427
      %v3711 = vrot.slane %v3626, 4
      %v3712 = vrot.slane %v3694, 5
      %v3713 = vsel %vm1808, %v3711, %v3712
      %v3714 = vrot.slane %v3712, 4
      %v3715 = vrot.slane %v3695, 5
      %v3716 = vsel %vm1808, %v3714, %v3715
      %v3717 = vrot.slane %v3715, 4
      %v3718 = vrot.slane %v3696, 5
      %v3719 = vsel %vm1808, %v3717, %v3718
      %v3720 = vrot.slane %v3718, 4
      %v3721 = vrot.slane %v3706, 5
      %v3722 = vsel %vm1808, %v3720, %v3721
      %3723 = vrot.lane.b32.xlu0 %v3618, 64
      %v3724 = vpop.permute.xlu0 %3723
      %3725 = vrot.lane.b32.xlu0 %v3621, 64
      %v3726 = vpop.permute.xlu0 %3725
      %3727 = vrot.lane.b32.xlu0 %v3624, 64
      %v3728 = vpop.permute.xlu0 %3727
      %3729 = vrot.lane.b32.xlu0 %v3627, 64
      %v3730 = vpop.permute.xlu0 %3729
      %3731 = vrot.lane.b32.xlu0 %v3713, 64
      %v3732 = vpop.permute.xlu0 %3731
      %3733 = vrot.lane.b32.xlu0 %v3716, 64
      %v3734 = vpop.permute.xlu0 %3733
      %3735 = vrot.lane.b32.xlu0 %v3719, 64
      %v3736 = vpop.permute.xlu0 %3735
      %3737 = vrot.lane.b32.xlu0 %v3722, 64
      %v3738 = vpop.permute.xlu0 %3737
      %3747 = vst.msk [vmem:[#allocation3 + $0xc] sm:$0xf] %vm3513, %v3503
      %3748 = vst.msk [vmem:[#allocation3 + $0x20] sm:$0xf] %vm3513, %v3724
      %3749 = vst.msk [vmem:[#allocation3 + $0x34] sm:$0xf] %vm3513, %v3726
      %3750 = vst.msk [vmem:[#allocation3 + $0x48] sm:$0xf] %vm3513, %v3728
      %3751 = vst.msk [vmem:[#allocation3 + $0x5c] sm:$0xf] %vm3513, %v3730
      %3752 = vst.msk [vmem:[#allocation3 + $0x70] sm:$0xf] %vm3513, %v3732
      %3753 = vst.msk [vmem:[#allocation3 + $0x84] sm:$0xf] %vm3513, %v3734
      %3754 = vst.msk [vmem:[#allocation3 + $0x98] sm:$0xf] %vm3513, %v3736
      %3755 = vst.msk [vmem:[#allocation3 + $0xac] sm:$0xf] %vm3513, %v3738
      %v3756 = vrot.slane %v3656, 4
      %v3757 = vrot.slane %v3694, 6
      %v3758 = vsel %vm3525, %v3756, %v3757
      %v3759 = vrot.slane %v3757, 4
      %v3760 = vrot.slane %v3695, 6
      %v3761 = vsel %vm3525, %v3759, %v3760
      %v3762 = vrot.slane %v3760, 4
      %v3763 = vrot.slane %v3696, 6
      %v3764 = vsel %vm3525, %v3762, %v3763
      %v3765 = vrot.slane %v3763, 4
      %v3766 = vrot.slane %v3706, 6
      %v3767 = vsel %vm3525, %v3765, %v3766
      %3776 = vst.msk [vmem:[#allocation3 + $0x10] sm:$0xf] %vm3437, %v3553
      %3777 = vst.msk [vmem:[#allocation3 + $0x24] sm:$0xf] %vm3437, %v3648
      %3778 = vst.msk [vmem:[#allocation3 + $0x38] sm:$0xf] %vm3437, %v3651
      %3779 = vst.msk [vmem:[#allocation3 + $0x4c] sm:$0xf] %vm3437, %v3654
      %3780 = vst.msk [vmem:[#allocation3 + $0x60] sm:$0xf] %vm3437, %v3657
      %3781 = vst.msk [vmem:[#allocation3 + $0x74] sm:$0xf] %vm3437, %v3758
      %3782 = vst.msk [vmem:[#allocation3 + $0x88] sm:$0xf] %vm3437, %v3761
      %3783 = vst.msk [vmem:[#allocation3 + $0x9c] sm:$0xf] %vm3437, %v3764
      %3784 = vst.msk [vmem:[#allocation3 + $0xb0] sm:$0xf] %vm3437, %v3767
      %v3785 = vld [vmem:[#allocation3] sm:$0xff]
      %v3786 = vld [vmem:[#allocation3 + $0x8] sm:$0xff]
      %v3787 = vld [vmem:[#allocation3 + $0x10] sm:$0xf]
      %v3788 = vld [vmem:[#allocation3 + $0x14] sm:$0xff]
      %v3789 = vld [vmem:[#allocation3 + $0x1c] sm:$0xff]
      %v3790 = vld [vmem:[#allocation3 + $0x24] sm:$0xf]
      %v3791 = vld [vmem:[#allocation3 + $0x28] sm:$0xff]
      %v3792 = vld [vmem:[#allocation3 + $0x30] sm:$0xff]
      %v3793 = vld [vmem:[#allocation3 + $0x38] sm:$0xf]
      %v3794 = vld [vmem:[#allocation3 + $0x3c] sm:$0xff]
      %v3795 = vld [vmem:[#allocation3 + $0x44] sm:$0xff]
      %v3796 = vld [vmem:[#allocation3 + $0x4c] sm:$0xf]
      %v3797 = vld [vmem:[#allocation3 + $0x50] sm:$0xff]
      %v3798 = vld [vmem:[#allocation3 + $0x58] sm:$0xff]
      %v3799 = vld [vmem:[#allocation3 + $0x60] sm:$0xf]
      %v3800 = vld [vmem:[#allocation3 + $0x64] sm:$0xff]
      %v3801 = vld [vmem:[#allocation3 + $0x6c] sm:$0xff]
      %v3802 = vld [vmem:[#allocation3 + $0x74] sm:$0xf]
      %v3803 = vld [vmem:[#allocation3 + $0x78] sm:$0xff]
      %v3804 = vld [vmem:[#allocation3 + $0x80] sm:$0xff]
      %v3805 = vld [vmem:[#allocation3 + $0x88] sm:$0xf]
      %v3806 = vld [vmem:[#allocation3 + $0x8c] sm:$0xff]
      %v3807 = vld [vmem:[#allocation3 + $0x94] sm:$0xff]
      %v3808 = vld [vmem:[#allocation3 + $0x9c] sm:$0xf]
      %v3809 = vld [vmem:[#allocation3 + $0xa0] sm:$0xff]
      %v3810 = vld [vmem:[#allocation3 + $0xa8] sm:$0xff]
      %v3811 = vld [vmem:[#allocation3 + $0xb0] sm:$0xf]
      %v3812 = vld [vmem:[%s5] sm:$0xf]
      %v3813 = vld [vmem:[%s5 + $0x4] sm:$0xf]
      %v3814 = vld [vmem:[%s5 + $0x8] sm:$0xf]
      %v3815 = vld [vmem:[%s5 + $0xc] sm:$0xf]
      %v3816 = vld [vmem:[%s5 + $0x10] sm:$0xf]
      %v3817 = vld [vmem:[%s5 + $0x14] sm:$0xf]
      %v3818 = vld [vmem:[%s5 + $0x18] sm:$0xf]
      %v3819 = vld [vmem:[%s5 + $0x1c] sm:$0xf]
      %v3820 = vld [vmem:[%s5 + $0x20] sm:$0xf]
      %v3821 = vld [vmem:[%s5 + $0x24] sm:$0xf]
      %v3822 = vld [vmem:[%s5 + $0x28] sm:$0xf]
      %v3823 = vld [vmem:[%s5 + $0x2c] sm:$0xf]
      %v3824 = vld [vmem:[%s5 + $0x30] sm:$0xf]
      %v3825 = vld [vmem:[%s5 + $0x34] sm:$0xf]
      %v3826 = vld [vmem:[%s5 + $0x38] sm:$0xf]
      %v3827 = vld [vmem:[%s5 + $0x3c] sm:$0xf]
      %v3828 = vld [vmem:[%s5 + $0x40] sm:$0xf]
      %v3829 = vld [vmem:[%s5 + $0x44] sm:$0xf]
      %v3830 = vld [vmem:[%s5 + $0x48] sm:$0xf]
      %v3831 = vld [vmem:[%s5 + $0x4c] sm:$0xf]
      %v3832 = vld [vmem:[%s5 + $0x50] sm:$0xf]
      %v3833 = vld [vmem:[%s5 + $0x54] sm:$0xf]
      %v3834 = vld [vmem:[%s5 + $0x58] sm:$0xf]
      %v3835 = vld [vmem:[%s5 + $0x5c] sm:$0xf]
      %v3836 = vld [vmem:[%s5 + $0x60] sm:$0xf]
      %v3837 = vld [vmem:[%s5 + $0x64] sm:$0xf]
      %v3838 = vld [vmem:[%s5 + $0x68] sm:$0xf]
      %v3839 = vld [vmem:[%s5 + $0x6c] sm:$0xf]
      %v3840 = vld [vmem:[%s5 + $0x70] sm:$0xf]
      %v3841 = vld [vmem:[%s5 + $0x74] sm:$0xf]
      %v3842 = vld [vmem:[%s5 + $0x78] sm:$0xf]
      %v3843 = vld [vmem:[%s5 + $0x7c] sm:$0xf]
      %v3844 = vld [vmem:[%s5 + $0x80] sm:$0xf]
      %v3845 = vld [vmem:[%s5 + $0x84] sm:$0xf]
      %v3846 = vld [vmem:[%s5 + $0x88] sm:$0xf]
      %v3847 = vld [vmem:[%s5 + $0x8c] sm:$0xf]
      %v3848 = vld [vmem:[%s5 + $0x90] sm:$0xf]
      %v3849 = vld [vmem:[%s5 + $0x94] sm:$0xf]
      %v3850 = vld [vmem:[%s5 + $0x98] sm:$0xf]
      %v3851 = vld [vmem:[%s5 + $0x9c] sm:$0xf]
      %v3852 = vld [vmem:[%s5 + $0xa0] sm:$0xf]
      %v3853 = vld [vmem:[%s5 + $0xa4] sm:$0xf]
      %v3854 = vld [vmem:[%s5 + $0xa8] sm:$0xf]
      %v3855 = vld [vmem:[%s5 + $0xac] sm:$0xf]
      %v3856 = vld [vmem:[%s5 + $0xb0] sm:$0xf]
      %v3857 = vld [vmem:[%s5 + $0xb4] sm:$0xf]
      %v3858 = vld [vmem:[%s5 + $0xb8] sm:$0xf]
      %v3859 = vld [vmem:[%s5 + $0xbc] sm:$0xf]
      %v3860 = vld [vmem:[%s5 + $0xc0] sm:$0xf]
      %v3861 = vld [vmem:[%s5 + $0xc4] sm:$0xf]
      %v3862 = vld [vmem:[%s5 + $0xc8] sm:$0xf]
      %v3863 = vld [vmem:[%s5 + $0xcc] sm:$0xf]
      %v3864 = vld [vmem:[%s5 + $0xd0] sm:$0xf]
      %v3865 = vld [vmem:[%s5 + $0xd4] sm:$0xf]
      %v3866 = vld [vmem:[%s5 + $0xd8] sm:$0xf]
      %v3867 = vld [vmem:[%s5 + $0xdc] sm:$0xf]
      %v3868 = vld [vmem:[%s5 + $0xe0] sm:$0xf]
      %v3869 = vld [vmem:[%s5 + $0xe4] sm:$0xf]
      %v3870 = vld [vmem:[%s5 + $0xe8] sm:$0xf]
      %v3871 = vld [vmem:[%s5 + $0xec] sm:$0xf]
      %v3872 = vld [vmem:[%s5 + $0xf0] sm:$0xf]
      %v3873 = vld [vmem:[%s5 + $0xf4] sm:$0xf]
      %v3874 = vld [vmem:[%s5 + $0xf8] sm:$0xf]
      %v3875 = vld [vmem:[%s5 + $0xfc] sm:$0xf]
      %v3876 = vld [vmem:[%s5 + $0x100] sm:$0xf]
      %v3877 = vld [vmem:[%s5 + $0x104] sm:$0xf]
      %v3878 = vld [vmem:[%s5 + $0x108] sm:$0xf]
      %v3879 = vld [vmem:[%s5 + $0x10c] sm:$0xf]
      %v3880 = vld [vmem:[%s5 + $0x110] sm:$0xf]
      %v3881 = vld [vmem:[%s5 + $0x114] sm:$0xf]
      %v3882 = vld [vmem:[%s5 + $0x118] sm:$0xf]
      %v3883 = vld [vmem:[%s5 + $0x11c] sm:$0xf]
      %v3884 = vld [vmem:[%s6] sm:$0x1]
      %v3886 = vperm.slane %v3884, 0
      %v3915 = vunpack.c.l.b16 %v3785
      %v3916 = vunpack.c.h.b16 %v3785
      %v3917 = vunpack.c.l.b16 %v3786
      %v3918 = vunpack.c.h.b16 %v3786
      %v3919 = vunpack.c.l.b16 %v3787
      %v3920 = vunpack.c.l.b16 %v3788
      %v3921 = vunpack.c.h.b16 %v3788
      %v3922 = vunpack.c.l.b16 %v3789
      %v3923 = vunpack.c.h.b16 %v3789
      %v3924 = vunpack.c.l.b16 %v3790
      %v3925 = vunpack.c.l.b16 %v3791
      %v3926 = vunpack.c.h.b16 %v3791
      %v3927 = vunpack.c.l.b16 %v3792
      %v3928 = vunpack.c.h.b16 %v3792
      %v3929 = vunpack.c.l.b16 %v3793
      %v3930 = vunpack.c.l.b16 %v3794
      %v3931 = vunpack.c.h.b16 %v3794
      %v3932 = vunpack.c.l.b16 %v3795
      %v3933 = vunpack.c.h.b16 %v3795
      %v3934 = vunpack.c.l.b16 %v3796
      %v3935 = vunpack.c.l.b16 %v3797
      %v3936 = vunpack.c.h.b16 %v3797
      %v3937 = vunpack.c.l.b16 %v3798
      %v3938 = vunpack.c.h.b16 %v3798
      %v3939 = vunpack.c.l.b16 %v3799
      %v3940 = vunpack.c.l.b16 %v3800
      %v3941 = vunpack.c.h.b16 %v3800
      %v3942 = vunpack.c.l.b16 %v3801
      %v3943 = vunpack.c.h.b16 %v3801
      %v3944 = vunpack.c.l.b16 %v3802
      %v3945 = vunpack.c.l.b16 %v3803
      %v3946 = vunpack.c.h.b16 %v3803
      %v3947 = vunpack.c.l.b16 %v3804
      %v3948 = vunpack.c.h.b16 %v3804
      %v3949 = vunpack.c.l.b16 %v3805
      %v3950 = vunpack.c.l.b16 %v3806
      %v3951 = vunpack.c.h.b16 %v3806
      %v3952 = vunpack.c.l.b16 %v3807
      %v3953 = vunpack.c.h.b16 %v3807
      %v3954 = vunpack.c.l.b16 %v3808
      %v3955 = vunpack.c.l.b16 %v3809
      %v3956 = vunpack.c.h.b16 %v3809
      %v3957 = vunpack.c.l.b16 %v3810
      %v3958 = vunpack.c.h.b16 %v3810
      %v3959 = vunpack.c.l.b16 %v3811
      %v3960 = vpack.c.b16 %v3920, %v3915
      %v3961 = vpack.c.b16 %v3921, %v3916
      %v3962 = vpack.c.b16 %v3922, %v3917
      %v3963 = vpack.c.b16 %v3923, %v3918
      %v3964 = vpack.c.b16 %v3924, %v3919
      %v3965 = vpack.c.b16 %v3930, %v3925
      %v3966 = vpack.c.b16 %v3931, %v3926
      %v3967 = vpack.c.b16 %v3932, %v3927
      %v3968 = vpack.c.b16 %v3933, %v3928
      %v3969 = vpack.c.b16 %v3934, %v3929
      %v3970 = vpack.c.b16 %v3940, %v3935
      %v3971 = vpack.c.b16 %v3941, %v3936
      %v3972 = vpack.c.b16 %v3942, %v3937
      %v3973 = vpack.c.b16 %v3943, %v3938
      %v3974 = vpack.c.b16 %v3944, %v3939
      %v3975 = vpack.c.b16 %v3950, %v3945
      %v3976 = vpack.c.b16 %v3951, %v3946
      %v3977 = vpack.c.b16 %v3952, %v3947
      %v3978 = vpack.c.b16 %v3953, %v3948
      %v3979 = vpack.c.b16 %v3954, %v3949
      %v3980 = vpack.c.b16 %v3955, %v3955
      %v3981 = vpack.c.b16 %v3956, %v3956
      %v3982 = vpack.c.b16 %v3957, %v3957
      %v3983 = vpack.c.b16 %v3958, %v3958
      %v3984 = vpack.c.b16 %v3959, %v3959
      %v4077 = vunpack.c.l.b16 %v3812
      %v4078 = vunpack.c.l.b16 %v3813
      %v4079 = vunpack.c.l.b16 %v3814
      %v4080 = vunpack.c.l.b16 %v3815
      %v4081 = vunpack.c.l.b16 %v3816
      %v4082 = vunpack.c.l.b16 %v3817
      %v4083 = vunpack.c.l.b16 %v3818
      %v4084 = vunpack.c.l.b16 %v3819
      %v4085 = vunpack.c.l.b16 %v3820
      %v4086 = vunpack.c.l.b16 %v3821
      %v4087 = vunpack.c.l.b16 %v3822
      %v4088 = vunpack.c.l.b16 %v3823
      %v4089 = vunpack.c.l.b16 %v3824
      %v4090 = vunpack.c.l.b16 %v3825
      %v4091 = vunpack.c.l.b16 %v3826
      %v4092 = vunpack.c.l.b16 %v3827
      %v4093 = vunpack.c.l.b16 %v3828
      %v4094 = vunpack.c.l.b16 %v3829
      %v4095 = vunpack.c.l.b16 %v3830
      %v4096 = vunpack.c.l.b16 %v3831
      %v4097 = vunpack.c.l.b16 %v3832
      %v4098 = vunpack.c.l.b16 %v3833
      %v4099 = vunpack.c.l.b16 %v3834
      %v4100 = vunpack.c.l.b16 %v3835
      %v4101 = vunpack.c.l.b16 %v3836
      %v4102 = vunpack.c.l.b16 %v3837
      %v4103 = vunpack.c.l.b16 %v3838
      %v4104 = vunpack.c.l.b16 %v3839
      %v4105 = vunpack.c.l.b16 %v3840
      %v4106 = vunpack.c.l.b16 %v3841
      %v4107 = vunpack.c.l.b16 %v3842
      %v4108 = vunpack.c.l.b16 %v3843
      %v4109 = vunpack.c.l.b16 %v3844
      %v4110 = vunpack.c.l.b16 %v3845
      %v4111 = vunpack.c.l.b16 %v3846
      %v4112 = vunpack.c.l.b16 %v3847
      %v4113 = vunpack.c.l.b16 %v3848
      %v4114 = vunpack.c.l.b16 %v3849
      %v4115 = vunpack.c.l.b16 %v3850
      %v4116 = vunpack.c.l.b16 %v3851
      %v4117 = vunpack.c.l.b16 %v3852
      %v4118 = vunpack.c.l.b16 %v3853
      %v4119 = vunpack.c.l.b16 %v3854
      %v4120 = vunpack.c.l.b16 %v3855
      %v4121 = vunpack.c.l.b16 %v3856
      %v4122 = vunpack.c.l.b16 %v3857
      %v4123 = vunpack.c.l.b16 %v3858
      %v4124 = vunpack.c.l.b16 %v3859
      %v4125 = vunpack.c.l.b16 %v3860
      %v4126 = vunpack.c.l.b16 %v3861
      %v4127 = vunpack.c.l.b16 %v3862
      %v4128 = vunpack.c.l.b16 %v3863
      %v4129 = vunpack.c.l.b16 %v3864
      %v4130 = vunpack.c.l.b16 %v3865
      %v4131 = vunpack.c.l.b16 %v3866
      %v4132 = vunpack.c.l.b16 %v3867
      %v4133 = vunpack.c.l.b16 %v3868
      %v4134 = vunpack.c.l.b16 %v3869
      %v4135 = vunpack.c.l.b16 %v3870
      %v4136 = vunpack.c.l.b16 %v3871
      %v4137 = vunpack.c.l.b16 %v3872
      %v4138 = vunpack.c.l.b16 %v3873
      %v4139 = vunpack.c.l.b16 %v3874
      %v4140 = vunpack.c.l.b16 %v3875
      %v4141 = vunpack.c.l.b16 %v3876
      %v4142 = vunpack.c.l.b16 %v3877
      %v4143 = vunpack.c.l.b16 %v3878
      %v4144 = vunpack.c.l.b16 %v3879
      %v4145 = vunpack.c.l.b16 %v3880
      %v4146 = vunpack.c.l.b16 %v3881
      %v4147 = vunpack.c.l.b16 %v3882
      %v4148 = vunpack.c.l.b16 %v3883
      %v4149 = vpack.c.b16 %v4078, %v4077
      %v4150 = vpack.c.b16 %v4080, %v4079
      %v4151 = vpack.c.b16 %v4082, %v4081
      %v4152 = vpack.c.b16 %v4084, %v4083
      %v4153 = vpack.c.b16 %v4086, %v4085
      %v4154 = vpack.c.b16 %v4088, %v4087
      %v4155 = vpack.c.b16 %v4090, %v4089
      %v4156 = vpack.c.b16 %v4092, %v4091
      %v4157 = vpack.c.b16 %v4094, %v4093
      %v4158 = vpack.c.b16 %v4096, %v4095
      %v4159 = vpack.c.b16 %v4098, %v4097
      %v4160 = vpack.c.b16 %v4100, %v4099
      %v4161 = vpack.c.b16 %v4102, %v4101
      %v4162 = vpack.c.b16 %v4104, %v4103
      %v4163 = vpack.c.b16 %v4106, %v4105
      %v4164 = vpack.c.b16 %v4108, %v4107
      %v4165 = vpack.c.b16 %v4110, %v4109
      %v4166 = vpack.c.b16 %v4112, %v4111
      %v4167 = vpack.c.b16 %v4114, %v4113
      %v4168 = vpack.c.b16 %v4116, %v4115
      %v4169 = vpack.c.b16 %v4118, %v4117
      %v4170 = vpack.c.b16 %v4120, %v4119
      %v4171 = vpack.c.b16 %v4122, %v4121
      %v4172 = vpack.c.b16 %v4124, %v4123
      %v4173 = vpack.c.b16 %v4126, %v4125
      %v4174 = vpack.c.b16 %v4128, %v4127
      %v4175 = vpack.c.b16 %v4130, %v4129
      %v4176 = vpack.c.b16 %v4132, %v4131
      %v4177 = vpack.c.b16 %v4134, %v4133
      %v4178 = vpack.c.b16 %v4136, %v4135
      %v4179 = vpack.c.b16 %v4138, %v4137
      %v4180 = vpack.c.b16 %v4140, %v4139
      %v4181 = vpack.c.b16 %v4142, %v4141
      %v4182 = vpack.c.b16 %v4144, %v4143
      %v4183 = vpack.c.b16 %v4146, %v4145
      %v4184 = vpack.c.b16 %v4148, %v4147
      %v4222 = vsel %vm559, %v3964, 0
      %v4225 = vsel %vm559, %v3969, 0
      %v4228 = vsel %vm559, %v3974, 0
      %v4231 = vsel %vm559, %v3979, 0
      %v4234 = vsel %vm559, %v3984, 0
      %4236 = vmatpush.bf16.msra.mxu0 %v4156
      %4237 = vmatpush.bf16.msra.mxu0 %v4155
      %4238 = vmatpush.bf16.msra.mxu0 %v4154
      %4239 = vmatpush.bf16.msra.mxu0 %v4153
      %4240 = vmatpush.bf16.msra.mxu0 %v4152
      %4241 = vmatpush.bf16.msra.mxu0 %v4151
      %4242 = vmatpush.bf16.msra.mxu0 %v4150
      %4243 = vmatpush.bf16.msra.mxu0 %v4149
      %4244 = vmatmul.bf16.gmra.mxu0 %v3960
      %v4245 = vpop.f32.mrf.mxu0
      %v4246 = vadd.f32 %v3886, %v4245
      %v4247 = vpop.f32.mrf.mxu0
      %v4248 = vadd.f32 %v3886, %v4247
      %4249 = vmatmul.bf16.gmra.mxu0 %v3965
      %v4250 = vpop.f32.mrf.mxu0
      %v4251 = vadd.f32 %v3886, %v4250
      %v4252 = vpop.f32.mrf.mxu0
      %v4253 = vadd.f32 %v3886, %v4252
      %4254 = vmatmul.bf16.gmra.mxu0 %v3970
      %v4255 = vpop.f32.mrf.mxu0
      %v4256 = vadd.f32 %v3886, %v4255
      %v4257 = vpop.f32.mrf.mxu0
      %v4258 = vadd.f32 %v3886, %v4257
      %4259 = vmatmul.bf16.gmra.mxu0 %v3975
      %v4260 = vpop.f32.mrf.mxu0
      %v4261 = vadd.f32 %v3886, %v4260
      %v4262 = vpop.f32.mrf.mxu0
      %v4263 = vadd.f32 %v3886, %v4262
      %4264 = vmatmul.bf16.gmra.mxu0 %v3980
      %v4265 = vpop.f32.mrf.mxu0
      %v4266 = vadd.f32 %v3886, %v4265
      %v4267 = vpop.f32.mrf.mxu0
      %4268 = vdwg.mxu0
      %4269 = vmatpush.bf16.msra.mxu0 %v4164
      %4270 = vmatpush.bf16.msra.mxu0 %v4163
      %4271 = vmatpush.bf16.msra.mxu0 %v4162
      %4272 = vmatpush.bf16.msra.mxu0 %v4161
      %4273 = vmatpush.bf16.msra.mxu0 %v4160
      %4274 = vmatpush.bf16.msra.mxu0 %v4159
      %4275 = vmatpush.bf16.msra.mxu0 %v4158
      %4276 = vmatpush.bf16.msra.mxu0 %v4157
      %4277 = vmatmul.bf16.gmra.mxu0 %v3961
      %v4278 = vpop.f32.mrf.mxu0
      %v4279 = vadd.f32 %v4246, %v4278
      %v4280 = vpop.f32.mrf.mxu0
      %v4281 = vadd.f32 %v4248, %v4280
      %4282 = vmatmul.bf16.gmra.mxu0 %v3966
      %v4283 = vpop.f32.mrf.mxu0
      %v4284 = vadd.f32 %v4251, %v4283
      %v4285 = vpop.f32.mrf.mxu0
      %v4286 = vadd.f32 %v4253, %v4285
      %4287 = vmatmul.bf16.gmra.mxu0 %v3971
      %v4288 = vpop.f32.mrf.mxu0
      %v4289 = vadd.f32 %v4256, %v4288
      %v4290 = vpop.f32.mrf.mxu0
      %v4291 = vadd.f32 %v4258, %v4290
      %4292 = vmatmul.bf16.gmra.mxu0 %v3976
      %v4293 = vpop.f32.mrf.mxu0
      %v4294 = vadd.f32 %v4261, %v4293
      %v4295 = vpop.f32.mrf.mxu0
      %v4296 = vadd.f32 %v4263, %v4295
      %4297 = vmatmul.bf16.gmra.mxu0 %v3981
      %v4298 = vpop.f32.mrf.mxu0
      %v4299 = vadd.f32 %v4266, %v4298
      %v4300 = vpop.f32.mrf.mxu0
      %4301 = vdwg.mxu0
      %4302 = vmatpush.bf16.msra.mxu0 %v4172
      %4303 = vmatpush.bf16.msra.mxu0 %v4171
      %4304 = vmatpush.bf16.msra.mxu0 %v4170
      %4305 = vmatpush.bf16.msra.mxu0 %v4169
      %4306 = vmatpush.bf16.msra.mxu0 %v4168
      %4307 = vmatpush.bf16.msra.mxu0 %v4167
      %4308 = vmatpush.bf16.msra.mxu0 %v4166
      %4309 = vmatpush.bf16.msra.mxu0 %v4165
      %4310 = vmatmul.bf16.gmra.mxu0 %v3962
      %v4311 = vpop.f32.mrf.mxu0
      %v4312 = vadd.f32 %v4279, %v4311
      %v4313 = vpop.f32.mrf.mxu0
      %v4314 = vadd.f32 %v4281, %v4313
      %4315 = vmatmul.bf16.gmra.mxu0 %v3967
      %v4316 = vpop.f32.mrf.mxu0
      %v4317 = vadd.f32 %v4284, %v4316
      %v4318 = vpop.f32.mrf.mxu0
      %v4319 = vadd.f32 %v4286, %v4318
      %4320 = vmatmul.bf16.gmra.mxu0 %v3972
      %v4321 = vpop.f32.mrf.mxu0
      %v4322 = vadd.f32 %v4289, %v4321
      %v4323 = vpop.f32.mrf.mxu0
      %v4324 = vadd.f32 %v4291, %v4323
      %4325 = vmatmul.bf16.gmra.mxu0 %v3977
      %v4326 = vpop.f32.mrf.mxu0
      %v4327 = vadd.f32 %v4294, %v4326
      %v4328 = vpop.f32.mrf.mxu0
      %v4329 = vadd.f32 %v4296, %v4328
      %4330 = vmatmul.bf16.gmra.mxu0 %v3982
      %v4331 = vpop.f32.mrf.mxu0
      %v4332 = vadd.f32 %v4299, %v4331
      %v4333 = vpop.f32.mrf.mxu0
      %4334 = vdwg.mxu0
      %4335 = vmatpush.bf16.msra.mxu0 %v4180
      %4336 = vmatpush.bf16.msra.mxu0 %v4179
      %4337 = vmatpush.bf16.msra.mxu0 %v4178
      %4338 = vmatpush.bf16.msra.mxu0 %v4177
      %4339 = vmatpush.bf16.msra.mxu0 %v4176
      %4340 = vmatpush.bf16.msra.mxu0 %v4175
      %4341 = vmatpush.bf16.msra.mxu0 %v4174
      %4342 = vmatpush.bf16.msra.mxu0 %v4173
      %4343 = vmatmul.bf16.gmra.mxu0 %v3963
      %v4344 = vpop.f32.mrf.mxu0
      %v4345 = vadd.f32 %v4312, %v4344
      %v4346 = vpop.f32.mrf.mxu0
      %v4347 = vadd.f32 %v4314, %v4346
      %4348 = vmatmul.bf16.gmra.mxu0 %v3968
      %v4349 = vpop.f32.mrf.mxu0
      %v4350 = vadd.f32 %v4317, %v4349
      %v4351 = vpop.f32.mrf.mxu0
      %v4352 = vadd.f32 %v4319, %v4351
      %4353 = vmatmul.bf16.gmra.mxu0 %v3973
      %v4354 = vpop.f32.mrf.mxu0
      %v4355 = vadd.f32 %v4322, %v4354
      %v4356 = vpop.f32.mrf.mxu0
      %v4357 = vadd.f32 %v4324, %v4356
      %4358 = vmatmul.bf16.gmra.mxu0 %v3978
      %v4359 = vpop.f32.mrf.mxu0
      %v4360 = vadd.f32 %v4327, %v4359
      %v4361 = vpop.f32.mrf.mxu0
      %v4362 = vadd.f32 %v4329, %v4361
      %4363 = vmatmul.bf16.gmra.mxu0 %v3983
      %v4364 = vpop.f32.mrf.mxu0
      %v4365 = vadd.f32 %v4332, %v4364
      %v4366 = vpop.f32.mrf.mxu0
      %4367 = vdwg.mxu0
      %4368 = vmatpush.bf16.msra.mxu0 0
      %4369 = vmatpush.bf16.msra.mxu0 0
      %4370 = vmatpush.bf16.msra.mxu0 0
      %4371 = vmatpush.bf16.msra.mxu0 0
      %4372 = vmatpush.bf16.msra.mxu0 %v4184
      %4373 = vmatpush.bf16.msra.mxu0 %v4183
      %4374 = vmatpush.bf16.msra.mxu0 %v4182
      %4375 = vmatpush.bf16.msra.mxu0 %v4181
      %4376 = vmatmul.bf16.gmra.mxu0 %v4222
      %v4377 = vpop.f32.mrf.mxu0
      %v4378 = vadd.f32 %v4345, %v4377
      %v4379 = vpop.f32.mrf.mxu0
      %v4380 = vadd.f32 %v4347, %v4379
      %4381 = vmatmul.bf16.gmra.mxu0 %v4225
      %v4382 = vpop.f32.mrf.mxu0
      %v4383 = vadd.f32 %v4350, %v4382
      %v4384 = vpop.f32.mrf.mxu0
      %v4385 = vadd.f32 %v4352, %v4384
      %4386 = vmatmul.bf16.gmra.mxu0 %v4228
      %v4387 = vpop.f32.mrf.mxu0
      %v4388 = vadd.f32 %v4355, %v4387
      %v4389 = vpop.f32.mrf.mxu0
      %v4390 = vadd.f32 %v4357, %v4389
      %4391 = vmatmul.bf16.gmra.mxu0 %v4231
      %v4392 = vpop.f32.mrf.mxu0
      %v4393 = vadd.f32 %v4360, %v4392
      %v4394 = vpop.f32.mrf.mxu0
      %v4395 = vadd.f32 %v4362, %v4394
      %4396 = vmatmul.bf16.gmra.mxu0 %v4234
      %v4397 = vpop.f32.mrf.mxu0
      %v4398 = vadd.f32 %v4365, %v4397
      %v4399 = vpop.f32.mrf.mxu0
      %4400 = vdwg.mxu0
      %vm4401 = vcmp.ge.f32.partialorder %v4378, 0.0
      %vm4402 = vcmp.ge.f32.partialorder %v4380, 0.0
      %vm4403 = vcmp.ge.f32.partialorder %v4383, 0.0
      %vm4404 = vcmp.ge.f32.partialorder %v4385, 0.0
      %vm4405 = vcmp.ge.f32.partialorder %v4388, 0.0
      %vm4406 = vcmp.ge.f32.partialorder %v4390, 0.0
      %vm4407 = vcmp.ge.f32.partialorder %v4393, 0.0
      %vm4408 = vcmp.ge.f32.partialorder %v4395, 0.0
      %vm4409 = vcmp.ge.f32.partialorder %v4398, 0.0
      %v4410 = vmul.f32 %v4378, 0.2
      %v4411 = vmul.f32 %v4380, 0.2
      %v4412 = vmul.f32 %v4383, 0.2
      %v4413 = vmul.f32 %v4385, 0.2
      %v4414 = vmul.f32 %v4388, 0.2
      %v4415 = vmul.f32 %v4390, 0.2
      %v4416 = vmul.f32 %v4393, 0.2
      %v4417 = vmul.f32 %v4395, 0.2
      %v4418 = vmul.f32 %v4398, 0.2
      %v4419 = vsel %vm4401, %v4378, %v4410
      %v4420 = vsel %vm4402, %v4380, %v4411
      %v4421 = vsel %vm4403, %v4383, %v4412
      %v4422 = vsel %vm4404, %v4385, %v4413
      %v4423 = vsel %vm4405, %v4388, %v4414
      %v4424 = vsel %vm4406, %v4390, %v4415
      %v4425 = vsel %vm4407, %v4393, %v4416
      %v4426 = vsel %vm4408, %v4395, %v4417
      %v4427 = vsel %vm4409, %v4398, %v4418
      %v4428 = vld [vmem:[%s7] sm:$0xf]
      %v4429 = vpack.c.bf16 %v4420, %v4419
      %v4430 = vpack.c.bf16 %v4422, %v4421
      %v4431 = vpack.c.bf16 %v4424, %v4423
      %v4432 = vpack.c.bf16 %v4426, %v4425
      %v4433 = vpack.c.bf16 %v4427, %v4427
      %vm4434 = vcmask 588800
      %v4436 = vsel %vm4434, %v4428, 0
      %vm4438 = vcmask 1043456
      %v4440 = vsel %vm4438, %v4433, 0
      %4442 = vmatpush.bf16.msra.mxu0 0
      %4443 = vmatpush.bf16.msra.mxu0 0
      %4444 = vmatpush.bf16.msra.mxu0 0
      %4445 = vmatpush.bf16.msra.mxu0 %v4440
      %4446 = vmatpush.bf16.msra.mxu0 %v4432
      %4447 = vmatpush.bf16.msra.mxu0 %v4431
      %4448 = vmatpush.bf16.msra.mxu0 %v4430
      %4449 = vmatpush.bf16.msra.mxu0 %v4429
      %4450 = vmatmul.bf16.gmra.mxu0 %v4436
      %v4451 = vpop.f32.mrf.mxu0
      %v4452 = vadd.f32 0.0, %v4451
      %v4453 = vpop.f32.mrf.mxu0
      %4454 = vdwg.mxu0
      %v4455 = vld [vmem:[%s8] sm:$0xf]
      %v4456 = vld [vmem:[%s8 + $0x4] sm:$0xf]
      %v4457 = vld [vmem:[%s8 + $0x8] sm:$0xf]
      %v4458 = vld [vmem:[%s8 + $0xc] sm:$0xf]
      %v4459 = vld [vmem:[%s8 + $0x10] sm:$0xf]
      %v4460 = vld [vmem:[%s8 + $0x14] sm:$0xf]
      %v4461 = vld [vmem:[%s8 + $0x18] sm:$0xf]
      %v4462 = vld [vmem:[%s8 + $0x1c] sm:$0xf]
      %v4463 = vld [vmem:[%s8 + $0x20] sm:$0xf]
      %v4464 = vpack.c.bf16 %v4452, %v4452
      %v4474 = vunpack.c.l.b16 %v4455
      %v4475 = vunpack.c.l.b16 %v4456
      %v4476 = vunpack.c.l.b16 %v4457
      %v4477 = vunpack.c.l.b16 %v4458
      %v4478 = vunpack.c.l.b16 %v4459
      %v4479 = vunpack.c.l.b16 %v4460
      %v4480 = vunpack.c.l.b16 %v4461
      %v4481 = vunpack.c.l.b16 %v4462
      %v4482 = vunpack.c.l.b16 %v4463
      %v4483 = vpack.c.b16 %v4475, %v4474
      %v4484 = vpack.c.b16 %v4477, %v4476
      %v4485 = vpack.c.b16 %v4479, %v4478
      %v4486 = vpack.c.b16 %v4481, %v4480
      %v4487 = vpack.c.b16 %v4482, %v4482
      %vm4488 = vcmask 64512
      %v4490 = vsel %vm4488, %v4483, 0
      %v4493 = vsel %vm4488, %v4484, 0
      %v4496 = vsel %vm4488, %v4485, 0
      %v4499 = vsel %vm4488, %v4486, 0
      %v4502 = vsel %vm4488, %v4487, 0
      %v4505 = vsel %vm4438, %v4464, 0
      %4507 = vmatpush.bf16.msra.mxu0 0
      %4508 = vmatpush.bf16.msra.mxu0 0
      %4509 = vmatpush.bf16.msra.mxu0 0
      %4510 = vmatpush.bf16.msra.mxu0 0
      %4511 = vmatpush.bf16.msra.mxu0 0
      %4512 = vmatpush.bf16.msra.mxu0 0
      %4513 = vmatpush.bf16.msra.mxu0 0
      %4514 = vmatpush.bf16.msra.mxu0 %v4505
      %4515 = vmatmul.bf16.gmra.mxu0 %v4490
      %v4516 = vpop.f32.mrf.mxu0
      %v4517 = vadd.f32 0.0, %v4516
      %v4518 = vpop.f32.mrf.mxu0
      %v4519 = vadd.f32 0.0, %v4518
      %4520 = vmatmul.bf16.gmra.mxu0 %v4493
      %v4521 = vpop.f32.mrf.mxu0
      %v4522 = vadd.f32 0.0, %v4521
      %v4523 = vpop.f32.mrf.mxu0
      %v4524 = vadd.f32 0.0, %v4523
      %4525 = vmatmul.bf16.gmra.mxu0 %v4496
      %v4526 = vpop.f32.mrf.mxu0
      %v4527 = vadd.f32 0.0, %v4526
      %v4528 = vpop.f32.mrf.mxu0
      %v4529 = vadd.f32 0.0, %v4528
      %4530 = vmatmul.bf16.gmra.mxu0 %v4499
      %v4531 = vpop.f32.mrf.mxu0
      %v4532 = vadd.f32 0.0, %v4531
      %v4533 = vpop.f32.mrf.mxu0
      %v4534 = vadd.f32 0.0, %v4533
      %4535 = vmatmul.bf16.gmra.mxu0 %v4502
      %v4536 = vpop.f32.mrf.mxu0
      %v4537 = vadd.f32 0.0, %v4536
      %v4538 = vpop.f32.mrf.mxu0
      %4539 = vdwg.mxu0
      %v4540 = vpack.c.bf16 %v4517, %v4517
      %v4541 = vpack.c.bf16 %v4519, %v4519
      %v4542 = vpack.c.bf16 %v4522, %v4522
      %v4543 = vpack.c.bf16 %v4524, %v4524
      %v4544 = vpack.c.bf16 %v4527, %v4527
      %v4545 = vpack.c.bf16 %v4529, %v4529
      %v4546 = vpack.c.bf16 %v4532, %v4532
      %v4547 = vpack.c.bf16 %v4534, %v4534
      %v4548 = vpack.c.bf16 %v4537, %v4537
      %vm4549 = vcmask 125952
      %4550 = vst.msk [vmem:[#allocation4] sm:$0xf] %vm4549, %v4540
      %4552 = vrot.lane.b32.xlu0 %v4541, 16
      %v4553 = vpop.permute.xlu0 %4552
      %vm4555 = vcmask 257152
      %4556 = vst.msk [vmem:[#allocation4] sm:$0xf] %vm4555, %v4553
      %4558 = vrot.lane.b32.xlu0 %v4542, 32
      %v4559 = vpop.permute.xlu0 %4558
      %vm4561 = vcmask 388352
      %4562 = vst.msk [vmem:[#allocation4] sm:$0xf] %vm4561, %v4559
      %4564 = vrot.lane.b32.xlu0 %v4543, 48
      %v4565 = vpop.permute.xlu0 %4564
      %vm4567 = vcmask 519552
      %4568 = vst.msk [vmem:[#allocation4] sm:$0xf] %vm4567, %v4565
      %4570 = vrot.lane.b32.xlu0 %v4544, 64
      %v4571 = vpop.permute.xlu0 %4570
      %vm4573 = vcmask 650752
      %4574 = vst.msk [vmem:[#allocation4] sm:$0xf] %vm4573, %v4571
      %4576 = vrot.lane.b32.xlu0 %v4545, 80
      %v4577 = vpop.permute.xlu0 %4576
      %vm4579 = vcmask 781952
      %4580 = vst.msk [vmem:[#allocation4] sm:$0xf] %vm4579, %v4577
      %4582 = vrot.lane.b32.xlu0 %v4546, 96
      %v4583 = vpop.permute.xlu0 %4582
      %vm4585 = vcmask 913152
      %4586 = vst.msk [vmem:[#allocation4] sm:$0xf] %vm4585, %v4583
      %4588 = vrot.lane.b32.xlu0 %v4547, 112
      %v4589 = vpop.permute.xlu0 %4588
      %vm4591 = vcmask 1044352
      %4592 = vst.msk [vmem:[#allocation4] sm:$0xf] %vm4591, %v4589
      %4593 = vst.msk [vmem:[#allocation4 + $0x4] sm:$0xf] %vm4549, %v4548
      %v4594 = vld [vmem:[#allocation4] sm:$0xff]
      %v4595 = vld [vmem:[%s9] sm:$0xf]
      %v4596 = vld [vmem:[%s9 + $0x4] sm:$0xf]
      %v4597 = vld [vmem:[%s9 + $0x8] sm:$0xf]
      %v4598 = vld [vmem:[%s9 + $0xc] sm:$0xf]
      %v4599 = vld [vmem:[%s9 + $0x10] sm:$0xf]
      %v4600 = vld [vmem:[%s9 + $0x14] sm:$0xf]
      %v4601 = vld [vmem:[%s9 + $0x18] sm:$0xf]
      %v4602 = vld [vmem:[%s9 + $0x1c] sm:$0xf]
      %v4603 = vld [vmem:[%s9 + $0x20] sm:$0xf]
      %v4604 = vld [vmem:[%s9 + $0x24] sm:$0xf]
      %v4605 = vld [vmem:[%s9 + $0x28] sm:$0xf]
      %v4606 = vld [vmem:[%s9 + $0x2c] sm:$0xf]
      %v4607 = vld [vmem:[%s9 + $0x30] sm:$0xf]
      %v4608 = vld [vmem:[%s9 + $0x34] sm:$0xf]
      %v4609 = vld [vmem:[%s9 + $0x38] sm:$0xf]
      %v4610 = vld [vmem:[%s9 + $0x3c] sm:$0xf]
      %v4611 = vld [vmem:[%s9 + $0x40] sm:$0xf]
      %v4612 = vld [vmem:[%s9 + $0x44] sm:$0xf]
      %v4613 = vld [vmem:[%s10] sm:$0x1]
      %v4615 = vperm.slane %v4613, 0
      %v4618 = vunpack.c.l.b16 %v4594
      %v4619 = vunpack.c.h.b16 %v4594
      %v4620 = vpack.c.b16 %v4618, %v4618
      %v4621 = vpack.c.b16 %v4619, %v4619
      %v4641 = vunpack.c.l.b16 %v4595
      %v4642 = vunpack.c.l.b16 %v4596
      %v4643 = vunpack.c.l.b16 %v4597
      %v4644 = vunpack.c.l.b16 %v4598
      %v4645 = vunpack.c.l.b16 %v4599
      %v4646 = vunpack.c.l.b16 %v4600
      %v4647 = vunpack.c.l.b16 %v4601
      %v4648 = vunpack.c.l.b16 %v4602
      %v4649 = vunpack.c.l.b16 %v4603
      %v4650 = vunpack.c.l.b16 %v4604
      %v4651 = vunpack.c.l.b16 %v4605
      %v4652 = vunpack.c.l.b16 %v4606
      %v4653 = vunpack.c.l.b16 %v4607
      %v4654 = vunpack.c.l.b16 %v4608
      %v4655 = vunpack.c.l.b16 %v4609
      %v4656 = vunpack.c.l.b16 %v4610
      %v4657 = vunpack.c.l.b16 %v4611
      %v4658 = vunpack.c.l.b16 %v4612
      %v4659 = vpack.c.b16 %v4642, %v4641
      %v4660 = vpack.c.b16 %v4644, %v4643
      %v4661 = vpack.c.b16 %v4646, %v4645
      %v4662 = vpack.c.b16 %v4648, %v4647
      %v4663 = vpack.c.b16 %v4650, %v4649
      %v4664 = vpack.c.b16 %v4652, %v4651
      %v4665 = vpack.c.b16 %v4654, %v4653
      %v4666 = vpack.c.b16 %v4656, %v4655
      %v4667 = vpack.c.b16 %v4658, %v4657
      %vm4677 = vcmask 130048
      %v4679 = vsel %vm4677, %v4621, 0
      %4681 = vmatpush.bf16.msra.mxu0 %v4666
      %4682 = vmatpush.bf16.msra.mxu0 %v4665
      %4683 = vmatpush.bf16.msra.mxu0 %v4664
      %4684 = vmatpush.bf16.msra.mxu0 %v4663
      %4685 = vmatpush.bf16.msra.mxu0 %v4662
      %4686 = vmatpush.bf16.msra.mxu0 %v4661
      %4687 = vmatpush.bf16.msra.mxu0 %v4660
      %4688 = vmatpush.bf16.msra.mxu0 %v4659
      %4689 = vmatmul.bf16.gmra.mxu0 %v4620
      %v4690 = vpop.f32.mrf.mxu0
      %v4691 = vadd.f32 %v4615, %v4690
      %v4692 = vpop.f32.mrf.mxu0
      %4693 = vdwg.mxu0
      %4694 = vmatpush.bf16.msra.mxu0 0
      %4695 = vmatpush.bf16.msra.mxu0 0
      %4696 = vmatpush.bf16.msra.mxu0 0
      %4697 = vmatpush.bf16.msra.mxu0 0
      %4698 = vmatpush.bf16.msra.mxu0 0
      %4699 = vmatpush.bf16.msra.mxu0 0
      %4700 = vmatpush.bf16.msra.mxu0 0
      %4701 = vmatpush.bf16.msra.mxu0 %v4667
      %4702 = vmatmul.bf16.gmra.mxu0 %v4679
      %v4703 = vpop.f32.mrf.mxu0
      %v4704 = vadd.f32 %v4691, %v4703
      %v4705 = vpop.f32.mrf.mxu0
      %4706 = vdwg.mxu0
      %v4707 = vmax.f32 %v4704, 0.0
      %v4708 = vpack.c.bf16 %v4707, %v4707
      %v4709 = vld [vmem:[%s11] sm:$0xf]
      %v4710 = vld [vmem:[%s11 + $0x4] sm:$0xf]
      %v4711 = vld [vmem:[%s12] sm:$0x1]
      %v4713 = vperm.slane %v4711, 0
      %v4717 = vunpack.c.l.b16 %v4709
      %v4718 = vunpack.c.l.b16 %v4710
      %v4719 = vpack.c.b16 %v4718, %v4717
      %v4722 = vsel %vm4677, %v4708, 0
      %4724 = vmatpush.bf16.msra.mxu0 0
      %4725 = vmatpush.bf16.msra.mxu0 0
      %4726 = vmatpush.bf16.msra.mxu0 0
      %4727 = vmatpush.bf16.msra.mxu0 0
      %4728 = vmatpush.bf16.msra.mxu0 0
      %4729 = vmatpush.bf16.msra.mxu0 0
      %4730 = vmatpush.bf16.msra.mxu0 0
      %4731 = vmatpush.bf16.msra.mxu0 %v4719
      %4732 = vmatmul.bf16.gmra.mxu0 %v4722
      %v4733 = vpop.f32.mrf.mxu0
      %v4734 = vadd.f32 %v4713, %v4733
      %v4735 = vpop.f32.mrf.mxu0
      %4736 = vdwg.mxu0
      %v4737 = vadd.f32 %v4452, %v4734
      %v4738 = vmax.f32 %v4737, 0.0
      %s4739 = scalar_lea.vmem %s438, 132
      %v4740 = vld [vmem:[%s4739] sm:$0xf]
      %v4741 = vld [vmem:[%s4739 + $0x4] sm:$0xf]
      %v4742 = vld [vmem:[%s4739 + $0x8] sm:$0xf]
      %v4743 = vld [vmem:[%s4739 + $0xc] sm:$0xf]
      %v4744 = vld [vmem:[%s4739 + $0x10] sm:$0xf]
      %v4745 = vld [vmem:[%s4739 + $0x14] sm:$0xf]
      %v4746 = vld [vmem:[%s4739 + $0x18] sm:$0xf]
      %v4747 = vld [vmem:[%s4739 + $0x1c] sm:$0xf]
      %v4748 = vld [vmem:[%s4739 + $0x20] sm:$0xf]
      %v4749 = vld [vmem:[%s4739 + $0x24] sm:$0xf]
      %v4750 = vld [vmem:[%s4739 + $0x28] sm:$0xf]
      %v4751 = vld [vmem:[%s4739 + $0x2c] sm:$0xf]
      %v4752 = vld [vmem:[%s4739 + $0x30] sm:$0xf]
      %v4753 = vld [vmem:[%s4739 + $0x34] sm:$0xf]
      %v4754 = vld [vmem:[%s4739 + $0x38] sm:$0xf]
      %v4755 = vld [vmem:[%s4739 + $0x3c] sm:$0xf]
      %v4756 = vld [vmem:[%s4739 + $0x40] sm:$0xf]
      %v4757 = vld [vmem:[%s4739 + $0x44] sm:$0xf]
      %v4758 = vld [vmem:[%s4739 + $0x48] sm:$0xf]
      %v4759 = vld [vmem:[%s4739 + $0x4c] sm:$0xf]
      %v4760 = vld [vmem:[%s4739 + $0x50] sm:$0xf]
      %v4761 = vld [vmem:[%s4739 + $0x54] sm:$0xf]
      %v4762 = vld [vmem:[%s4739 + $0x58] sm:$0xf]
      %v4763 = vld [vmem:[%s4739 + $0x5c] sm:$0xf]
      %v4764 = vld [vmem:[%s4739 + $0x60] sm:$0xf]
      %v4765 = vld [vmem:[%s4739 + $0x64] sm:$0xf]
      %v4766 = vld [vmem:[%s4739 + $0x68] sm:$0xf]
      %v4767 = vld [vmem:[%s4739 + $0x6c] sm:$0xf]
      %v4768 = vld [vmem:[%s4739 + $0x70] sm:$0xf]
      %v4769 = vld [vmem:[%s4739 + $0x74] sm:$0xf]
      %v4770 = vld [vmem:[%s4739 + $0x78] sm:$0xf]
      %v4771 = vld [vmem:[%s4739 + $0x7c] sm:$0xf]
      %v4772 = vld [vmem:[%s4739 + $0x80] sm:$0xf]
      %v4773 = vunpack.c.l.bf16 %v4740
      %v4774 = vunpack.c.l.bf16 %v4741
      %v4775 = vunpack.c.l.bf16 %v4742
      %v4776 = vunpack.c.l.bf16 %v4743
      %v4777 = vunpack.c.l.bf16 %v4744
      %v4778 = vunpack.c.l.bf16 %v4745
      %v4779 = vunpack.c.l.bf16 %v4746
      %v4780 = vunpack.c.l.bf16 %v4747
      %v4781 = vunpack.c.l.bf16 %v4748
      %v4782 = vunpack.c.l.bf16 %v4749
      %v4783 = vunpack.c.l.bf16 %v4750
      %v4784 = vunpack.c.l.bf16 %v4751
      %v4785 = vunpack.c.l.bf16 %v4752
      %v4786 = vunpack.c.l.bf16 %v4753
      %v4787 = vunpack.c.l.bf16 %v4754
      %v4788 = vunpack.c.l.bf16 %v4755
      %v4789 = vunpack.c.l.bf16 %v4756
      %v4790 = vunpack.c.l.bf16 %v4757
      %v4791 = vunpack.c.l.bf16 %v4758
      %v4792 = vunpack.c.l.bf16 %v4759
      %v4793 = vunpack.c.l.bf16 %v4760
      %v4794 = vunpack.c.l.bf16 %v4761
      %v4795 = vunpack.c.l.bf16 %v4762
      %v4796 = vunpack.c.l.bf16 %v4763
      %v4797 = vunpack.c.l.bf16 %v4764
      %v4798 = vunpack.c.l.bf16 %v4765
      %v4799 = vunpack.c.l.bf16 %v4766
      %v4800 = vunpack.c.l.bf16 %v4767
      %v4801 = vunpack.c.l.bf16 %v4768
      %v4802 = vunpack.c.l.bf16 %v4769
      %v4803 = vunpack.c.l.bf16 %v4770
      %v4804 = vunpack.c.l.bf16 %v4771
      %v4805 = vunpack.c.l.bf16 %v4772
      %v4806 = vld [vmem:[%s2] sm:$0x1]
      %v4807 = vpack.c.bf16 %v4774, %v4773
      %v4808 = vpack.c.bf16 %v4776, %v4775
      %v4809 = vpack.c.bf16 %v4778, %v4777
      %v4810 = vpack.c.bf16 %v4780, %v4779
      %v4811 = vpack.c.bf16 %v4782, %v4781
      %v4812 = vpack.c.bf16 %v4784, %v4783
      %v4813 = vpack.c.bf16 %v4786, %v4785
      %v4814 = vpack.c.bf16 %v4788, %v4787
      %v4815 = vpack.c.bf16 %v4790, %v4789
      %v4816 = vpack.c.bf16 %v4792, %v4791
      %v4817 = vpack.c.bf16 %v4794, %v4793
      %v4818 = vpack.c.bf16 %v4796, %v4795
      %v4819 = vpack.c.bf16 %v4798, %v4797
      %v4820 = vpack.c.bf16 %v4800, %v4799
      %v4821 = vpack.c.bf16 %v4802, %v4801
      %v4822 = vld [vmem:[%s1] sm:$0xf]
      %v4823 = vld [vmem:[%s1 + $0x4] sm:$0xf]
      %v4824 = vld [vmem:[%s1 + $0x8] sm:$0xf]
      %v4825 = vld [vmem:[%s1 + $0xc] sm:$0xf]
      %v4826 = vld [vmem:[%s1 + $0x10] sm:$0xf]
      %v4827 = vld [vmem:[%s1 + $0x14] sm:$0xf]
      %v4828 = vld [vmem:[%s1 + $0x18] sm:$0xf]
      %v4829 = vld [vmem:[%s1 + $0x1c] sm:$0xf]
      %v4838 = vunpack.c.l.b16 %v4822
      %v4839 = vunpack.c.l.b16 %v4823
      %v4840 = vunpack.c.l.b16 %v4824
      %v4841 = vunpack.c.l.b16 %v4825
      %v4842 = vunpack.c.l.b16 %v4826
      %v4843 = vunpack.c.l.b16 %v4827
      %v4844 = vunpack.c.l.b16 %v4828
      %v4845 = vunpack.c.l.b16 %v4829
      %v4846 = vpack.c.b16 %v4839, %v4838
      %v4847 = vpack.c.b16 %v4841, %v4840
      %v4848 = vpack.c.b16 %v4843, %v4842
      %v4849 = vpack.c.b16 %v4845, %v4844
      %v4855 = vsel %vm559, %v4807, 0
      %v4858 = vsel %vm559, %v4808, 0
      %v4861 = vsel %vm559, %v4809, 0
      %v4864 = vsel %vm559, %v4810, 0
      %v4867 = vsel %vm559, %v4811, 0
      %v4870 = vsel %vm559, %v4812, 0
      %v4873 = vsel %vm559, %v4813, 0
      %v4876 = vsel %vm559, %v4814, 0
      %v4879 = vsel %vm559, %v4815, 0
      %v4882 = vsel %vm559, %v4816, 0
      %v4885 = vsel %vm559, %v4817, 0
      %v4888 = vsel %vm559, %v4818, 0
      %v4891 = vsel %vm559, %v4819, 0
      %v4894 = vsel %vm559, %v4820, 0
      %v4897 = vsel %vm559, %v4821, 0
      %4899 = vmatpush.bf16.msra.mxu0 0
      %4900 = vmatpush.bf16.msra.mxu0 0
      %4901 = vmatpush.bf16.msra.mxu0 0
      %4902 = vmatpush.bf16.msra.mxu0 0
      %4903 = vmatpush.bf16.msra.mxu0 %v4849
      %4904 = vmatpush.bf16.msra.mxu0 %v4848
      %4905 = vmatpush.bf16.msra.mxu0 %v4847
      %4906 = vmatpush.bf16.msra.mxu0 %v4846
      %4907 = vmatmul.bf16.gmra.mxu0 %v4855
      %v4908 = vpop.f32.mrf.mxu0
      %v4909 = vadd.f32 0.0, %v4908
      %v4910 = vpop.f32.mrf.mxu0
      %v4911 = vadd.f32 0.0, %v4910
      %4912 = vmatmul.bf16.gmra.mxu0 %v4858
      %v4913 = vpop.f32.mrf.mxu0
      %v4914 = vadd.f32 0.0, %v4913
      %v4915 = vpop.f32.mrf.mxu0
      %v4916 = vadd.f32 0.0, %v4915
      %4917 = vmatmul.bf16.gmra.mxu0 %v4861
      %v4918 = vpop.f32.mrf.mxu0
      %v4919 = vadd.f32 0.0, %v4918
      %v4920 = vpop.f32.mrf.mxu0
      %v4921 = vadd.f32 0.0, %v4920
      %4922 = vmatmul.bf16.gmra.mxu0 %v4864
      %v4923 = vpop.f32.mrf.mxu0
      %v4924 = vadd.f32 0.0, %v4923
      %v4925 = vpop.f32.mrf.mxu0
      %v4926 = vadd.f32 0.0, %v4925
      %4927 = vmatmul.bf16.gmra.mxu0 %v4867
      %v4928 = vpop.f32.mrf.mxu0
      %v4929 = vadd.f32 0.0, %v4928
      %v4930 = vpop.f32.mrf.mxu0
      %v4931 = vadd.f32 0.0, %v4930
      %4932 = vmatmul.bf16.gmra.mxu0 %v4870
      %v4933 = vpop.f32.mrf.mxu0
      %v4934 = vadd.f32 0.0, %v4933
      %v4935 = vpop.f32.mrf.mxu0
      %v4936 = vadd.f32 0.0, %v4935
      %4937 = vmatmul.bf16.gmra.mxu0 %v4873
      %v4938 = vpop.f32.mrf.mxu0
      %v4939 = vadd.f32 0.0, %v4938
      %v4940 = vpop.f32.mrf.mxu0
      %v4941 = vadd.f32 0.0, %v4940
      %4942 = vmatmul.bf16.gmra.mxu0 %v4876
      %v4943 = vpop.f32.mrf.mxu0
      %v4944 = vadd.f32 0.0, %v4943
      %v4945 = vpop.f32.mrf.mxu0
      %v4946 = vadd.f32 0.0, %v4945
      %4947 = vmatmul.bf16.gmra.mxu0 %v4879
      %v4948 = vpop.f32.mrf.mxu0
      %v4949 = vadd.f32 0.0, %v4948
      %v4950 = vpop.f32.mrf.mxu0
      %v4951 = vadd.f32 0.0, %v4950
      %4952 = vmatmul.bf16.gmra.mxu0 %v4882
      %v4953 = vpop.f32.mrf.mxu0
      %v4954 = vadd.f32 0.0, %v4953
      %v4955 = vpop.f32.mrf.mxu0
      %v4956 = vadd.f32 0.0, %v4955
      %4957 = vmatmul.bf16.gmra.mxu0 %v4885
      %v4958 = vpop.f32.mrf.mxu0
      %v4959 = vadd.f32 0.0, %v4958
      %v4960 = vpop.f32.mrf.mxu0
      %v4961 = vadd.f32 0.0, %v4960
      %4962 = vmatmul.bf16.gmra.mxu0 %v4888
      %v4963 = vpop.f32.mrf.mxu0
      %v4964 = vadd.f32 0.0, %v4963
      %v4965 = vpop.f32.mrf.mxu0
      %v4966 = vadd.f32 0.0, %v4965
      %4967 = vmatmul.bf16.gmra.mxu0 %v4891
      %v4968 = vpop.f32.mrf.mxu0
      %v4969 = vadd.f32 0.0, %v4968
      %v4970 = vpop.f32.mrf.mxu0
      %v4971 = vadd.f32 0.0, %v4970
      %4972 = vmatmul.bf16.gmra.mxu0 %v4894
      %v4973 = vpop.f32.mrf.mxu0
      %v4974 = vadd.f32 0.0, %v4973
      %v4975 = vpop.f32.mrf.mxu0
      %v4976 = vadd.f32 0.0, %v4975
      %4977 = vmatmul.bf16.gmra.mxu0 %v4897
      %v4978 = vpop.f32.mrf.mxu0
      %v4979 = vadd.f32 0.0, %v4978
      %v4980 = vpop.f32.mrf.mxu0
      %4981 = vdwg.mxu0
      %v4983 = vperm.slane %v4806, 0
      %v4985 = vadd.f32 %v4983, %v4909
      %v4986 = vadd.f32 %v4983, %v4911
      %v4987 = vadd.f32 %v4983, %v4914
      %v4988 = vadd.f32 %v4983, %v4916
      %v4989 = vadd.f32 %v4983, %v4919
      %v4990 = vadd.f32 %v4983, %v4921
      %v4991 = vadd.f32 %v4983, %v4924
      %v4992 = vadd.f32 %v4983, %v4926
      %v4993 = vadd.f32 %v4983, %v4929
      %v4994 = vadd.f32 %v4983, %v4931
      %v4995 = vadd.f32 %v4983, %v4934
      %v4996 = vadd.f32 %v4983, %v4936
      %v4997 = vadd.f32 %v4983, %v4939
      %v4998 = vadd.f32 %v4983, %v4941
      %v4999 = vadd.f32 %v4983, %v4944
      %v5000 = vadd.f32 %v4983, %v4946
      %v5001 = vadd.f32 %v4983, %v4949
      %v5002 = vadd.f32 %v4983, %v4951
      %v5003 = vadd.f32 %v4983, %v4954
      %v5004 = vadd.f32 %v4983, %v4956
      %v5005 = vadd.f32 %v4983, %v4959
      %v5006 = vadd.f32 %v4983, %v4961
      %v5007 = vadd.f32 %v4983, %v4964
      %v5008 = vadd.f32 %v4983, %v4966
      %v5009 = vadd.f32 %v4983, %v4969
      %v5010 = vadd.f32 %v4983, %v4971
      %v5011 = vadd.f32 %v4983, %v4974
      %v5012 = vadd.f32 %v4983, %v4976
      %v5013 = vadd.f32 %v4983, %v4979
      %v5014 = vpack.c.bf16 %v4803, %v4803
      %v5015 = vld [vmem:[%s721] sm:$0xf]
      %v5016 = vld [vmem:[%s721 + $0x4] sm:$0xf]
      %v5017 = vld [vmem:[%s721 + $0x8] sm:$0xf]
      %v5018 = vld [vmem:[%s721 + $0xc] sm:$0xf]
      %v5019 = vld [vmem:[%s721 + $0x10] sm:$0xf]
      %v5020 = vld [vmem:[%s721 + $0x14] sm:$0xf]
      %v5021 = vld [vmem:[%s721 + $0x18] sm:$0xf]
      %v5022 = vld [vmem:[%s721 + $0x1c] sm:$0xf]
      %v5023 = vshrl.u32 %v4807, 16
      %v5025 = vshll.u32 %v4807, 16
      %v5027 = vrot.slane %v5025, 1
      %v5028 = vor.u32 %v5023, %v5027
      %v5029 = vshll.u32 %v4808, 16
      %v5031 = vrot.slane %v5029, 1
      %v5032 = vsel %vm730, %v5028, %v5031
      %v5033 = vshrl.u32 %v4808, 16
      %v5035 = vor.u32 %v5033, %v5031
      %v5036 = vshll.u32 %v4809, 16
      %v5038 = vrot.slane %v5036, 1
      %v5039 = vsel %vm730, %v5035, %v5038
      %v5040 = vshrl.u32 %v4809, 16
      %v5042 = vor.u32 %v5040, %v5038
      %v5043 = vshll.u32 %v4810, 16
      %v5045 = vrot.slane %v5043, 1
      %v5046 = vsel %vm730, %v5042, %v5045
      %v5047 = vshrl.u32 %v4810, 16
      %v5049 = vor.u32 %v5047, %v5045
      %v5050 = vshll.u32 %v4811, 16
      %v5052 = vrot.slane %v5050, 1
      %v5053 = vsel %vm730, %v5049, %v5052
      %v5054 = vshrl.u32 %v4811, 16
      %v5056 = vor.u32 %v5054, %v5052
      %v5057 = vshll.u32 %v4812, 16
      %v5059 = vrot.slane %v5057, 1
      %v5060 = vsel %vm730, %v5056, %v5059
      %v5061 = vshrl.u32 %v4812, 16
      %v5063 = vor.u32 %v5061, %v5059
      %v5064 = vshll.u32 %v4813, 16
      %v5066 = vrot.slane %v5064, 1
      %v5067 = vsel %vm730, %v5063, %v5066
      %v5068 = vshrl.u32 %v4813, 16
      %v5070 = vor.u32 %v5068, %v5066
      %v5071 = vshll.u32 %v4814, 16
      %v5073 = vrot.slane %v5071, 1
      %v5074 = vsel %vm730, %v5070, %v5073
      %v5075 = vshrl.u32 %v4814, 16
      %v5077 = vor.u32 %v5075, %v5073
      %v5078 = vshll.u32 %v4815, 16
      %v5080 = vrot.slane %v5078, 1
      %v5081 = vsel %vm730, %v5077, %v5080
      %v5082 = vshrl.u32 %v4815, 16
      %v5084 = vor.u32 %v5082, %v5080
      %v5085 = vshll.u32 %v4816, 16
      %v5087 = vrot.slane %v5085, 1
      %v5088 = vsel %vm730, %v5084, %v5087
      %v5089 = vshrl.u32 %v4816, 16
      %v5091 = vor.u32 %v5089, %v5087
      %v5092 = vshll.u32 %v4817, 16
      %v5094 = vrot.slane %v5092, 1
      %v5095 = vsel %vm730, %v5091, %v5094
      %v5096 = vshrl.u32 %v4817, 16
      %v5098 = vor.u32 %v5096, %v5094
      %v5099 = vshll.u32 %v4818, 16
      %v5101 = vrot.slane %v5099, 1
      %v5102 = vsel %vm730, %v5098, %v5101
      %v5103 = vshrl.u32 %v4818, 16
      %v5105 = vor.u32 %v5103, %v5101
      %v5106 = vshll.u32 %v4819, 16
      %v5108 = vrot.slane %v5106, 1
      %v5109 = vsel %vm730, %v5105, %v5108
      %v5110 = vshrl.u32 %v4819, 16
      %v5112 = vor.u32 %v5110, %v5108
      %v5113 = vshll.u32 %v4820, 16
      %v5115 = vrot.slane %v5113, 1
      %v5116 = vsel %vm730, %v5112, %v5115
      %v5117 = vshrl.u32 %v4820, 16
      %v5119 = vor.u32 %v5117, %v5115
      %v5120 = vshll.u32 %v4821, 16
      %v5122 = vrot.slane %v5120, 1
      %v5123 = vsel %vm730, %v5119, %v5122
      %v5124 = vshrl.u32 %v4821, 16
      %v5126 = vor.u32 %v5124, %v5122
      %v5128 = vshll.u32 %v5014, 16
      %v5130 = vrot.slane %v5128, 1
      %v5131 = vsel %vm730, %v5126, %v5130
      %v5140 = vunpack.c.l.b16 %v5015
      %v5141 = vunpack.c.l.b16 %v5016
      %v5142 = vunpack.c.l.b16 %v5017
      %v5143 = vunpack.c.l.b16 %v5018
      %v5144 = vunpack.c.l.b16 %v5019
      %v5145 = vunpack.c.l.b16 %v5020
      %v5146 = vunpack.c.l.b16 %v5021
      %v5147 = vunpack.c.l.b16 %v5022
      %v5148 = vpack.c.b16 %v5141, %v5140
      %v5149 = vpack.c.b16 %v5143, %v5142
      %v5150 = vpack.c.b16 %v5145, %v5144
      %v5151 = vpack.c.b16 %v5147, %v5146
      %v5157 = vsel %vm559, %v5032, 0
      %v5160 = vsel %vm559, %v5039, 0
      %v5163 = vsel %vm559, %v5046, 0
      %v5166 = vsel %vm559, %v5053, 0
      %v5169 = vsel %vm559, %v5060, 0
      %v5172 = vsel %vm559, %v5067, 0
      %v5175 = vsel %vm559, %v5074, 0
      %v5178 = vsel %vm559, %v5081, 0
      %v5181 = vsel %vm559, %v5088, 0
      %v5184 = vsel %vm559, %v5095, 0
      %v5187 = vsel %vm559, %v5102, 0
      %v5190 = vsel %vm559, %v5109, 0
      %v5193 = vsel %vm559, %v5116, 0
      %v5196 = vsel %vm559, %v5123, 0
      %v5199 = vsel %vm559, %v5131, 0
      %5201 = vmatpush.bf16.msra.mxu0 0
      %5202 = vmatpush.bf16.msra.mxu0 0
      %5203 = vmatpush.bf16.msra.mxu0 0
      %5204 = vmatpush.bf16.msra.mxu0 0
      %5205 = vmatpush.bf16.msra.mxu0 %v5151
      %5206 = vmatpush.bf16.msra.mxu0 %v5150
      %5207 = vmatpush.bf16.msra.mxu0 %v5149
      %5208 = vmatpush.bf16.msra.mxu0 %v5148
      %5209 = vmatmul.bf16.gmra.mxu0 %v5157
      %v5210 = vpop.f32.mrf.mxu0
      %v5211 = vadd.f32 0.0, %v5210
      %v5212 = vpop.f32.mrf.mxu0
      %v5213 = vadd.f32 0.0, %v5212
      %5214 = vmatmul.bf16.gmra.mxu0 %v5160
      %v5215 = vpop.f32.mrf.mxu0
      %v5216 = vadd.f32 0.0, %v5215
      %v5217 = vpop.f32.mrf.mxu0
      %v5218 = vadd.f32 0.0, %v5217
      %5219 = vmatmul.bf16.gmra.mxu0 %v5163
      %v5220 = vpop.f32.mrf.mxu0
      %v5221 = vadd.f32 0.0, %v5220
      %v5222 = vpop.f32.mrf.mxu0
      %v5223 = vadd.f32 0.0, %v5222
      %5224 = vmatmul.bf16.gmra.mxu0 %v5166
      %v5225 = vpop.f32.mrf.mxu0
      %v5226 = vadd.f32 0.0, %v5225
      %v5227 = vpop.f32.mrf.mxu0
      %v5228 = vadd.f32 0.0, %v5227
      %5229 = vmatmul.bf16.gmra.mxu0 %v5169
      %v5230 = vpop.f32.mrf.mxu0
      %v5231 = vadd.f32 0.0, %v5230
      %v5232 = vpop.f32.mrf.mxu0
      %v5233 = vadd.f32 0.0, %v5232
      %5234 = vmatmul.bf16.gmra.mxu0 %v5172
      %v5235 = vpop.f32.mrf.mxu0
      %v5236 = vadd.f32 0.0, %v5235
      %v5237 = vpop.f32.mrf.mxu0
      %v5238 = vadd.f32 0.0, %v5237
      %5239 = vmatmul.bf16.gmra.mxu0 %v5175
      %v5240 = vpop.f32.mrf.mxu0
      %v5241 = vadd.f32 0.0, %v5240
      %v5242 = vpop.f32.mrf.mxu0
      %v5243 = vadd.f32 0.0, %v5242
      %5244 = vmatmul.bf16.gmra.mxu0 %v5178
      %v5245 = vpop.f32.mrf.mxu0
      %v5246 = vadd.f32 0.0, %v5245
      %v5247 = vpop.f32.mrf.mxu0
      %v5248 = vadd.f32 0.0, %v5247
      %5249 = vmatmul.bf16.gmra.mxu0 %v5181
      %v5250 = vpop.f32.mrf.mxu0
      %v5251 = vadd.f32 0.0, %v5250
      %v5252 = vpop.f32.mrf.mxu0
      %v5253 = vadd.f32 0.0, %v5252
      %5254 = vmatmul.bf16.gmra.mxu0 %v5184
      %v5255 = vpop.f32.mrf.mxu0
      %v5256 = vadd.f32 0.0, %v5255
      %v5257 = vpop.f32.mrf.mxu0
      %v5258 = vadd.f32 0.0, %v5257
      %5259 = vmatmul.bf16.gmra.mxu0 %v5187
      %v5260 = vpop.f32.mrf.mxu0
      %v5261 = vadd.f32 0.0, %v5260
      %v5262 = vpop.f32.mrf.mxu0
      %v5263 = vadd.f32 0.0, %v5262
      %5264 = vmatmul.bf16.gmra.mxu0 %v5190
      %v5265 = vpop.f32.mrf.mxu0
      %v5266 = vadd.f32 0.0, %v5265
      %v5267 = vpop.f32.mrf.mxu0
      %v5268 = vadd.f32 0.0, %v5267
      %5269 = vmatmul.bf16.gmra.mxu0 %v5193
      %v5270 = vpop.f32.mrf.mxu0
      %v5271 = vadd.f32 0.0, %v5270
      %v5272 = vpop.f32.mrf.mxu0
      %v5273 = vadd.f32 0.0, %v5272
      %5274 = vmatmul.bf16.gmra.mxu0 %v5196
      %v5275 = vpop.f32.mrf.mxu0
      %v5276 = vadd.f32 0.0, %v5275
      %v5277 = vpop.f32.mrf.mxu0
      %v5278 = vadd.f32 0.0, %v5277
      %5279 = vmatmul.bf16.gmra.mxu0 %v5199
      %v5280 = vpop.f32.mrf.mxu0
      %v5281 = vadd.f32 0.0, %v5280
      %v5282 = vpop.f32.mrf.mxu0
      %5283 = vdwg.mxu0
      %v5284 = vadd.f32 %v4985, %v5211
      %v5285 = vadd.f32 %v4986, %v5213
      %v5286 = vadd.f32 %v4987, %v5216
      %v5287 = vadd.f32 %v4988, %v5218
      %v5288 = vadd.f32 %v4989, %v5221
      %v5289 = vadd.f32 %v4990, %v5223
      %v5290 = vadd.f32 %v4991, %v5226
      %v5291 = vadd.f32 %v4992, %v5228
      %v5292 = vadd.f32 %v4993, %v5231
      %v5293 = vadd.f32 %v4994, %v5233
      %v5294 = vadd.f32 %v4995, %v5236
      %v5295 = vadd.f32 %v4996, %v5238
      %v5296 = vadd.f32 %v4997, %v5241
      %v5297 = vadd.f32 %v4998, %v5243
      %v5298 = vadd.f32 %v4999, %v5246
      %v5299 = vadd.f32 %v5000, %v5248
      %v5300 = vadd.f32 %v5001, %v5251
      %v5301 = vadd.f32 %v5002, %v5253
      %v5302 = vadd.f32 %v5003, %v5256
      %v5303 = vadd.f32 %v5004, %v5258
      %v5304 = vadd.f32 %v5005, %v5261
      %v5305 = vadd.f32 %v5006, %v5263
      %v5306 = vadd.f32 %v5007, %v5266
      %v5307 = vadd.f32 %v5008, %v5268
      %v5308 = vadd.f32 %v5009, %v5271
      %v5309 = vadd.f32 %v5010, %v5273
      %v5310 = vadd.f32 %v5011, %v5276
      %v5311 = vadd.f32 %v5012, %v5278
      %v5312 = vadd.f32 %v5013, %v5281
      %v5313 = vpack.c.bf16 %v4804, %v4803
      %v5314 = vld [vmem:[%s1022] sm:$0xf]
      %v5315 = vld [vmem:[%s1022 + $0x4] sm:$0xf]
      %v5316 = vld [vmem:[%s1022 + $0x8] sm:$0xf]
      %v5317 = vld [vmem:[%s1022 + $0xc] sm:$0xf]
      %v5318 = vld [vmem:[%s1022 + $0x10] sm:$0xf]
      %v5319 = vld [vmem:[%s1022 + $0x14] sm:$0xf]
      %v5320 = vld [vmem:[%s1022 + $0x18] sm:$0xf]
      %v5321 = vld [vmem:[%s1022 + $0x1c] sm:$0xf]
      %v5330 = vunpack.c.l.b16 %v5314
      %v5331 = vunpack.c.l.b16 %v5315
      %v5332 = vunpack.c.l.b16 %v5316
      %v5333 = vunpack.c.l.b16 %v5317
      %v5334 = vunpack.c.l.b16 %v5318
      %v5335 = vunpack.c.l.b16 %v5319
      %v5336 = vunpack.c.l.b16 %v5320
      %v5337 = vunpack.c.l.b16 %v5321
      %v5338 = vpack.c.b16 %v5331, %v5330
      %v5339 = vpack.c.b16 %v5333, %v5332
      %v5340 = vpack.c.b16 %v5335, %v5334
      %v5341 = vpack.c.b16 %v5337, %v5336
      %v5347 = vsel %vm559, %v5313, 0
      %5349 = vmatpush.bf16.msra.mxu0 0
      %5350 = vmatpush.bf16.msra.mxu0 0
      %5351 = vmatpush.bf16.msra.mxu0 0
      %5352 = vmatpush.bf16.msra.mxu0 0
      %5353 = vmatpush.bf16.msra.mxu0 %v5341
      %5354 = vmatpush.bf16.msra.mxu0 %v5340
      %5355 = vmatpush.bf16.msra.mxu0 %v5339
      %5356 = vmatpush.bf16.msra.mxu0 %v5338
      %5357 = vmatmul.bf16.gmra.mxu0 %v4858
      %v5358 = vpop.f32.mrf.mxu0
      %v5359 = vadd.f32 0.0, %v5358
      %v5360 = vpop.f32.mrf.mxu0
      %v5361 = vadd.f32 0.0, %v5360
      %5362 = vmatmul.bf16.gmra.mxu0 %v4861
      %v5363 = vpop.f32.mrf.mxu0
      %v5364 = vadd.f32 0.0, %v5363
      %v5365 = vpop.f32.mrf.mxu0
      %v5366 = vadd.f32 0.0, %v5365
      %5367 = vmatmul.bf16.gmra.mxu0 %v4864
      %v5368 = vpop.f32.mrf.mxu0
      %v5369 = vadd.f32 0.0, %v5368
      %v5370 = vpop.f32.mrf.mxu0
      %v5371 = vadd.f32 0.0, %v5370
      %5372 = vmatmul.bf16.gmra.mxu0 %v4867
      %v5373 = vpop.f32.mrf.mxu0
      %v5374 = vadd.f32 0.0, %v5373
      %v5375 = vpop.f32.mrf.mxu0
      %v5376 = vadd.f32 0.0, %v5375
      %5377 = vmatmul.bf16.gmra.mxu0 %v4870
      %v5378 = vpop.f32.mrf.mxu0
      %v5379 = vadd.f32 0.0, %v5378
      %v5380 = vpop.f32.mrf.mxu0
      %v5381 = vadd.f32 0.0, %v5380
      %5382 = vmatmul.bf16.gmra.mxu0 %v4873
      %v5383 = vpop.f32.mrf.mxu0
      %v5384 = vadd.f32 0.0, %v5383
      %v5385 = vpop.f32.mrf.mxu0
      %v5386 = vadd.f32 0.0, %v5385
      %5387 = vmatmul.bf16.gmra.mxu0 %v4876
      %v5388 = vpop.f32.mrf.mxu0
      %v5389 = vadd.f32 0.0, %v5388
      %v5390 = vpop.f32.mrf.mxu0
      %v5391 = vadd.f32 0.0, %v5390
      %5392 = vmatmul.bf16.gmra.mxu0 %v4879
      %v5393 = vpop.f32.mrf.mxu0
      %v5394 = vadd.f32 0.0, %v5393
      %v5395 = vpop.f32.mrf.mxu0
      %v5396 = vadd.f32 0.0, %v5395
      %5397 = vmatmul.bf16.gmra.mxu0 %v4882
      %v5398 = vpop.f32.mrf.mxu0
      %v5399 = vadd.f32 0.0, %v5398
      %v5400 = vpop.f32.mrf.mxu0
      %v5401 = vadd.f32 0.0, %v5400
      %5402 = vmatmul.bf16.gmra.mxu0 %v4885
      %v5403 = vpop.f32.mrf.mxu0
      %v5404 = vadd.f32 0.0, %v5403
      %v5405 = vpop.f32.mrf.mxu0
      %v5406 = vadd.f32 0.0, %v5405
      %5407 = vmatmul.bf16.gmra.mxu0 %v4888
      %v5408 = vpop.f32.mrf.mxu0
      %v5409 = vadd.f32 0.0, %v5408
      %v5410 = vpop.f32.mrf.mxu0
      %v5411 = vadd.f32 0.0, %v5410
      %5412 = vmatmul.bf16.gmra.mxu0 %v4891
      %v5413 = vpop.f32.mrf.mxu0
      %v5414 = vadd.f32 0.0, %v5413
      %v5415 = vpop.f32.mrf.mxu0
      %v5416 = vadd.f32 0.0, %v5415
      %5417 = vmatmul.bf16.gmra.mxu0 %v4894
      %v5418 = vpop.f32.mrf.mxu0
      %v5419 = vadd.f32 0.0, %v5418
      %v5420 = vpop.f32.mrf.mxu0
      %v5421 = vadd.f32 0.0, %v5420
      %5422 = vmatmul.bf16.gmra.mxu0 %v4897
      %v5423 = vpop.f32.mrf.mxu0
      %v5424 = vadd.f32 0.0, %v5423
      %v5425 = vpop.f32.mrf.mxu0
      %v5426 = vadd.f32 0.0, %v5425
      %5427 = vmatmul.bf16.gmra.mxu0 %v5347
      %v5428 = vpop.f32.mrf.mxu0
      %v5429 = vadd.f32 0.0, %v5428
      %v5430 = vpop.f32.mrf.mxu0
      %5431 = vdwg.mxu0
      %v5432 = vadd.f32 %v5284, %v5359
      %v5433 = vadd.f32 %v5285, %v5361
      %v5434 = vadd.f32 %v5286, %v5364
      %v5435 = vadd.f32 %v5287, %v5366
      %v5436 = vadd.f32 %v5288, %v5369
      %v5437 = vadd.f32 %v5289, %v5371
      %v5438 = vadd.f32 %v5290, %v5374
      %v5439 = vadd.f32 %v5291, %v5376
      %v5440 = vadd.f32 %v5292, %v5379
      %v5441 = vadd.f32 %v5293, %v5381
      %v5442 = vadd.f32 %v5294, %v5384
      %v5443 = vadd.f32 %v5295, %v5386
      %v5444 = vadd.f32 %v5296, %v5389
      %v5445 = vadd.f32 %v5297, %v5391
      %v5446 = vadd.f32 %v5298, %v5394
      %v5447 = vadd.f32 %v5299, %v5396
      %v5448 = vadd.f32 %v5300, %v5399
      %v5449 = vadd.f32 %v5301, %v5401
      %v5450 = vadd.f32 %v5302, %v5404
      %v5451 = vadd.f32 %v5303, %v5406
      %v5452 = vadd.f32 %v5304, %v5409
      %v5453 = vadd.f32 %v5305, %v5411
      %v5454 = vadd.f32 %v5306, %v5414
      %v5455 = vadd.f32 %v5307, %v5416
      %v5456 = vadd.f32 %v5308, %v5419
      %v5457 = vadd.f32 %v5309, %v5421
      %v5458 = vadd.f32 %v5310, %v5424
      %v5459 = vadd.f32 %v5311, %v5426
      %v5460 = vadd.f32 %v5312, %v5429
      %v5461 = vpack.c.bf16 %v4805, %v4805
      %v5462 = vld [vmem:[%s1171] sm:$0xf]
      %v5463 = vld [vmem:[%s1171 + $0x4] sm:$0xf]
      %v5464 = vld [vmem:[%s1171 + $0x8] sm:$0xf]
      %v5465 = vld [vmem:[%s1171 + $0xc] sm:$0xf]
      %v5466 = vld [vmem:[%s1171 + $0x10] sm:$0xf]
      %v5467 = vld [vmem:[%s1171 + $0x14] sm:$0xf]
      %v5468 = vld [vmem:[%s1171 + $0x18] sm:$0xf]
      %v5469 = vld [vmem:[%s1171 + $0x1c] sm:$0xf]
      %v5470 = vshll.u32 %v5313, 16
      %v5472 = vrot.slane %v5470, 1
      %v5473 = vsel %vm730, %v5126, %v5472
      %v5474 = vshrl.u32 %v5313, 16
      %v5476 = vor.u32 %v5474, %v5472
      %v5478 = vshll.u32 %v5461, 16
      %v5480 = vrot.slane %v5478, 1
      %v5481 = vsel %vm730, %v5476, %v5480
      %v5490 = vunpack.c.l.b16 %v5462
      %v5491 = vunpack.c.l.b16 %v5463
      %v5492 = vunpack.c.l.b16 %v5464
      %v5493 = vunpack.c.l.b16 %v5465
      %v5494 = vunpack.c.l.b16 %v5466
      %v5495 = vunpack.c.l.b16 %v5467
      %v5496 = vunpack.c.l.b16 %v5468
      %v5497 = vunpack.c.l.b16 %v5469
      %v5498 = vpack.c.b16 %v5491, %v5490
      %v5499 = vpack.c.b16 %v5493, %v5492
      %v5500 = vpack.c.b16 %v5495, %v5494
      %v5501 = vpack.c.b16 %v5497, %v5496
      %v5507 = vsel %vm559, %v5473, 0
      %v5510 = vsel %vm559, %v5481, 0
      %5512 = vmatpush.bf16.msra.mxu0 0
      %5513 = vmatpush.bf16.msra.mxu0 0
      %5514 = vmatpush.bf16.msra.mxu0 0
      %5515 = vmatpush.bf16.msra.mxu0 0
      %5516 = vmatpush.bf16.msra.mxu0 %v5501
      %5517 = vmatpush.bf16.msra.mxu0 %v5500
      %5518 = vmatpush.bf16.msra.mxu0 %v5499
      %5519 = vmatpush.bf16.msra.mxu0 %v5498
      %5520 = vmatmul.bf16.gmra.mxu0 %v5160
      %v5521 = vpop.f32.mrf.mxu0
      %v5522 = vadd.f32 0.0, %v5521
      %v5523 = vpop.f32.mrf.mxu0
      %v5524 = vadd.f32 0.0, %v5523
      %5525 = vmatmul.bf16.gmra.mxu0 %v5163
      %v5526 = vpop.f32.mrf.mxu0
      %v5527 = vadd.f32 0.0, %v5526
      %v5528 = vpop.f32.mrf.mxu0
      %v5529 = vadd.f32 0.0, %v5528
      %5530 = vmatmul.bf16.gmra.mxu0 %v5166
      %v5531 = vpop.f32.mrf.mxu0
      %v5532 = vadd.f32 0.0, %v5531
      %v5533 = vpop.f32.mrf.mxu0
      %v5534 = vadd.f32 0.0, %v5533
      %5535 = vmatmul.bf16.gmra.mxu0 %v5169
      %v5536 = vpop.f32.mrf.mxu0
      %v5537 = vadd.f32 0.0, %v5536
      %v5538 = vpop.f32.mrf.mxu0
      %v5539 = vadd.f32 0.0, %v5538
      %5540 = vmatmul.bf16.gmra.mxu0 %v5172
      %v5541 = vpop.f32.mrf.mxu0
      %v5542 = vadd.f32 0.0, %v5541
      %v5543 = vpop.f32.mrf.mxu0
      %v5544 = vadd.f32 0.0, %v5543
      %5545 = vmatmul.bf16.gmra.mxu0 %v5175
      %v5546 = vpop.f32.mrf.mxu0
      %v5547 = vadd.f32 0.0, %v5546
      %v5548 = vpop.f32.mrf.mxu0
      %v5549 = vadd.f32 0.0, %v5548
      %5550 = vmatmul.bf16.gmra.mxu0 %v5178
      %v5551 = vpop.f32.mrf.mxu0
      %v5552 = vadd.f32 0.0, %v5551
      %v5553 = vpop.f32.mrf.mxu0
      %v5554 = vadd.f32 0.0, %v5553
      %5555 = vmatmul.bf16.gmra.mxu0 %v5181
      %v5556 = vpop.f32.mrf.mxu0
      %v5557 = vadd.f32 0.0, %v5556
      %v5558 = vpop.f32.mrf.mxu0
      %v5559 = vadd.f32 0.0, %v5558
      %5560 = vmatmul.bf16.gmra.mxu0 %v5184
      %v5561 = vpop.f32.mrf.mxu0
      %v5562 = vadd.f32 0.0, %v5561
      %v5563 = vpop.f32.mrf.mxu0
      %v5564 = vadd.f32 0.0, %v5563
      %5565 = vmatmul.bf16.gmra.mxu0 %v5187
      %v5566 = vpop.f32.mrf.mxu0
      %v5567 = vadd.f32 0.0, %v5566
      %v5568 = vpop.f32.mrf.mxu0
      %v5569 = vadd.f32 0.0, %v5568
      %5570 = vmatmul.bf16.gmra.mxu0 %v5190
      %v5571 = vpop.f32.mrf.mxu0
      %v5572 = vadd.f32 0.0, %v5571
      %v5573 = vpop.f32.mrf.mxu0
      %v5574 = vadd.f32 0.0, %v5573
      %5575 = vmatmul.bf16.gmra.mxu0 %v5193
      %v5576 = vpop.f32.mrf.mxu0
      %v5577 = vadd.f32 0.0, %v5576
      %v5578 = vpop.f32.mrf.mxu0
      %v5579 = vadd.f32 0.0, %v5578
      %5580 = vmatmul.bf16.gmra.mxu0 %v5196
      %v5581 = vpop.f32.mrf.mxu0
      %v5582 = vadd.f32 0.0, %v5581
      %v5583 = vpop.f32.mrf.mxu0
      %v5584 = vadd.f32 0.0, %v5583
      %5585 = vmatmul.bf16.gmra.mxu0 %v5507
      %v5586 = vpop.f32.mrf.mxu0
      %v5587 = vadd.f32 0.0, %v5586
      %v5588 = vpop.f32.mrf.mxu0
      %v5589 = vadd.f32 0.0, %v5588
      %5590 = vmatmul.bf16.gmra.mxu0 %v5510
      %v5591 = vpop.f32.mrf.mxu0
      %v5592 = vadd.f32 0.0, %v5591
      %v5593 = vpop.f32.mrf.mxu0
      %5594 = vdwg.mxu0
      %v5595 = vadd.f32 %v5432, %v5522
      %v5596 = vadd.f32 %v5433, %v5524
      %v5597 = vadd.f32 %v5434, %v5527
      %v5598 = vadd.f32 %v5435, %v5529
      %v5599 = vadd.f32 %v5436, %v5532
      %v5600 = vadd.f32 %v5437, %v5534
      %v5601 = vadd.f32 %v5438, %v5537
      %v5602 = vadd.f32 %v5439, %v5539
      %v5603 = vadd.f32 %v5440, %v5542
      %v5604 = vadd.f32 %v5441, %v5544
      %v5605 = vadd.f32 %v5442, %v5547
      %v5606 = vadd.f32 %v5443, %v5549
      %v5607 = vadd.f32 %v5444, %v5552
      %v5608 = vadd.f32 %v5445, %v5554
      %v5609 = vadd.f32 %v5446, %v5557
      %v5610 = vadd.f32 %v5447, %v5559
      %v5611 = vadd.f32 %v5448, %v5562
      %v5612 = vadd.f32 %v5449, %v5564
      %v5613 = vadd.f32 %v5450, %v5567
      %v5614 = vadd.f32 %v5451, %v5569
      %v5615 = vadd.f32 %v5452, %v5572
      %v5616 = vadd.f32 %v5453, %v5574
      %v5617 = vadd.f32 %v5454, %v5577
      %v5618 = vadd.f32 %v5455, %v5579
      %v5619 = vadd.f32 %v5456, %v5582
      %v5620 = vadd.f32 %v5457, %v5584
      %v5621 = vadd.f32 %v5458, %v5587
      %v5622 = vadd.f32 %v5459, %v5589
      %v5623 = vadd.f32 %v5460, %v5592
      %vm5624 = vcmp.ge.f32.partialorder %v5595, 0.0
      %vm5625 = vcmp.ge.f32.partialorder %v5596, 0.0
      %vm5626 = vcmp.ge.f32.partialorder %v5597, 0.0
      %vm5627 = vcmp.ge.f32.partialorder %v5598, 0.0
      %vm5628 = vcmp.ge.f32.partialorder %v5599, 0.0
      %vm5629 = vcmp.ge.f32.partialorder %v5600, 0.0
      %vm5630 = vcmp.ge.f32.partialorder %v5601, 0.0
      %vm5631 = vcmp.ge.f32.partialorder %v5602, 0.0
      %vm5632 = vcmp.ge.f32.partialorder %v5603, 0.0
      %vm5633 = vcmp.ge.f32.partialorder %v5604, 0.0
      %vm5634 = vcmp.ge.f32.partialorder %v5605, 0.0
      %vm5635 = vcmp.ge.f32.partialorder %v5606, 0.0
      %vm5636 = vcmp.ge.f32.partialorder %v5607, 0.0
      %vm5637 = vcmp.ge.f32.partialorder %v5608, 0.0
      %vm5638 = vcmp.ge.f32.partialorder %v5609, 0.0
      %vm5639 = vcmp.ge.f32.partialorder %v5610, 0.0
      %vm5640 = vcmp.ge.f32.partialorder %v5611, 0.0
      %vm5641 = vcmp.ge.f32.partialorder %v5612, 0.0
      %vm5642 = vcmp.ge.f32.partialorder %v5613, 0.0
      %vm5643 = vcmp.ge.f32.partialorder %v5614, 0.0
      %vm5644 = vcmp.ge.f32.partialorder %v5615, 0.0
      %vm5645 = vcmp.ge.f32.partialorder %v5616, 0.0
      %vm5646 = vcmp.ge.f32.partialorder %v5617, 0.0
      %vm5647 = vcmp.ge.f32.partialorder %v5618, 0.0
      %vm5648 = vcmp.ge.f32.partialorder %v5619, 0.0
      %vm5649 = vcmp.ge.f32.partialorder %v5620, 0.0
      %vm5650 = vcmp.ge.f32.partialorder %v5621, 0.0
      %vm5651 = vcmp.ge.f32.partialorder %v5622, 0.0
      %vm5652 = vcmp.ge.f32.partialorder %v5623, 0.0
      %v5653 = vmul.f32 %v5595, 0.2
      %v5654 = vmul.f32 %v5596, 0.2
      %v5655 = vmul.f32 %v5597, 0.2
      %v5656 = vmul.f32 %v5598, 0.2
      %v5657 = vmul.f32 %v5599, 0.2
      %v5658 = vmul.f32 %v5600, 0.2
      %v5659 = vmul.f32 %v5601, 0.2
      %v5660 = vmul.f32 %v5602, 0.2
      %v5661 = vmul.f32 %v5603, 0.2
      %v5662 = vmul.f32 %v5604, 0.2
      %v5663 = vmul.f32 %v5605, 0.2
      %v5664 = vmul.f32 %v5606, 0.2
      %v5665 = vmul.f32 %v5607, 0.2
      %v5666 = vmul.f32 %v5608, 0.2
      %v5667 = vmul.f32 %v5609, 0.2
      %v5668 = vmul.f32 %v5610, 0.2
      %v5669 = vmul.f32 %v5611, 0.2
      %v5670 = vmul.f32 %v5612, 0.2
      %v5671 = vmul.f32 %v5613, 0.2
      %v5672 = vmul.f32 %v5614, 0.2
      %v5673 = vmul.f32 %v5615, 0.2
      %v5674 = vmul.f32 %v5616, 0.2
      %v5675 = vmul.f32 %v5617, 0.2
      %v5676 = vmul.f32 %v5618, 0.2
      %v5677 = vmul.f32 %v5619, 0.2
      %v5678 = vmul.f32 %v5620, 0.2
      %v5679 = vmul.f32 %v5621, 0.2
      %v5680 = vmul.f32 %v5622, 0.2
      %v5681 = vmul.f32 %v5623, 0.2
      %v5682 = vsel %vm5624, %v5595, %v5653
      %v5683 = vsel %vm5625, %v5596, %v5654
      %v5684 = vsel %vm5626, %v5597, %v5655
      %v5685 = vsel %vm5627, %v5598, %v5656
      %v5686 = vsel %vm5628, %v5599, %v5657
      %v5687 = vsel %vm5629, %v5600, %v5658
      %v5688 = vsel %vm5630, %v5601, %v5659
      %v5689 = vsel %vm5631, %v5602, %v5660
      %v5690 = vsel %vm5632, %v5603, %v5661
      %v5691 = vsel %vm5633, %v5604, %v5662
      %v5692 = vsel %vm5634, %v5605, %v5663
      %v5693 = vsel %vm5635, %v5606, %v5664
      %v5694 = vsel %vm5636, %v5607, %v5665
      %v5695 = vsel %vm5637, %v5608, %v5666
      %v5696 = vsel %vm5638, %v5609, %v5667
      %v5697 = vsel %vm5639, %v5610, %v5668
      %v5698 = vsel %vm5640, %v5611, %v5669
      %v5699 = vsel %vm5641, %v5612, %v5670
      %v5700 = vsel %vm5642, %v5613, %v5671
      %v5701 = vsel %vm5643, %v5614, %v5672
      %v5702 = vsel %vm5644, %v5615, %v5673
      %v5703 = vsel %vm5645, %v5616, %v5674
      %v5704 = vsel %vm5646, %v5617, %v5675
      %v5705 = vsel %vm5647, %v5618, %v5676
      %v5706 = vsel %vm5648, %v5619, %v5677
      %v5707 = vsel %vm5649, %v5620, %v5678
      %v5708 = vsel %vm5650, %v5621, %v5679
      %v5709 = vsel %vm5651, %v5622, %v5680
      %v5710 = vsel %vm5652, %v5623, %v5681
      %v5711 = vpack.c.bf16 %v5682, %v5682
      %v5712 = vpack.c.bf16 %v5683, %v5683
      %v5713 = vpack.c.bf16 %v5684, %v5684
      %v5714 = vpack.c.bf16 %v5685, %v5685
      %v5715 = vpack.c.bf16 %v5686, %v5686
      %v5716 = vpack.c.bf16 %v5687, %v5687
      %v5717 = vpack.c.bf16 %v5688, %v5688
      %v5718 = vpack.c.bf16 %v5689, %v5689
      %v5719 = vpack.c.bf16 %v5690, %v5690
      %v5720 = vpack.c.bf16 %v5691, %v5691
      %v5721 = vpack.c.bf16 %v5692, %v5692
      %v5722 = vpack.c.bf16 %v5693, %v5693
      %v5723 = vpack.c.bf16 %v5694, %v5694
      %v5724 = vpack.c.bf16 %v5695, %v5695
      %v5725 = vpack.c.bf16 %v5696, %v5696
      %v5726 = vpack.c.bf16 %v5697, %v5697
      %v5727 = vpack.c.bf16 %v5698, %v5698
      %v5728 = vpack.c.bf16 %v5699, %v5699
      %v5729 = vpack.c.bf16 %v5700, %v5700
      %v5730 = vpack.c.bf16 %v5701, %v5701
      %v5731 = vpack.c.bf16 %v5702, %v5702
      %v5732 = vpack.c.bf16 %v5703, %v5703
      %5733 = vst.msk [vmem:[#allocation2] sm:$0xf] %vm1443, %v5711
      %5734 = vst.msk [vmem:[#allocation2 + $0x10] sm:$0xf] %vm1443, %v5712
      %5735 = vst.msk [vmem:[#allocation2 + $0x20] sm:$0xf] %vm1443, %v5713
      %5736 = vst.msk [vmem:[#allocation2 + $0x30] sm:$0xf] %vm1443, %v5714
      %5737 = vst.msk [vmem:[#allocation2 + $0x40] sm:$0xf] %vm1443, %v5715
      %5738 = vst.msk [vmem:[#allocation2 + $0x50] sm:$0xf] %vm1443, %v5716
      %5739 = vst.msk [vmem:[#allocation2 + $0x60] sm:$0xf] %vm1443, %v5717
      %5740 = vst.msk [vmem:[#allocation2 + $0x70] sm:$0xf] %vm1443, %v5718
      %5741 = vst.msk [vmem:[#allocation2 + $0x80] sm:$0xf] %vm1443, %v5719
      %5742 = vst.msk [vmem:[#allocation2 + $0x90] sm:$0xf] %vm1443, %v5720
      %5743 = vst.msk [vmem:[#allocation2 + $0xa0] sm:$0xf] %vm1443, %v5721
      %5744 = vst.msk [vmem:[#allocation2 + $0xb0] sm:$0xf] %vm1443, %v5722
      %5745 = vst.msk [vmem:[#allocation2 + $0xc0] sm:$0xf] %vm1443, %v5723
      %5746 = vst.msk [vmem:[#allocation2 + $0xd0] sm:$0xf] %vm1443, %v5724
      %5747 = vst.msk [vmem:[#allocation2 + $0xe0] sm:$0xf] %vm1443, %v5725
      %5748 = vst.msk [vmem:[#allocation2 + $0xf0] sm:$0xf] %vm1443, %v5726
      %5749 = vst.msk [vmem:[#allocation2 + $0x100] sm:$0xf] %vm1443, %v5727
      %5750 = vst.msk [vmem:[#allocation2 + $0x110] sm:$0xf] %vm1443, %v5728
      %5751 = vst.msk [vmem:[#allocation2 + $0x120] sm:$0xf] %vm1443, %v5729
      %5752 = vst.msk [vmem:[#allocation2 + $0x130] sm:$0xf] %vm1443, %v5730
      %5753 = vst.msk [vmem:[#allocation2 + $0x140] sm:$0xf] %vm1443, %v5731
      %5754 = vst.msk [vmem:[#allocation2 + $0x150] sm:$0xf] %vm1443, %v5732
      %v5755 = vpack.c.bf16 %v5704, %v5704
      %v5757 = vshrl.u32 %v5711, 16
      %v5759 = vrot.slane %v5757, 4
      %v5760 = vshll.u32 %v5711, 16
      %v5762 = vrot.slane %v5760, 5
      %v5763 = vor.u32 %v5759, %v5762
      %v5764 = vrot.slane %v5763, 4
      %v5766 = vshll.u32 %v5712, 16
      %v5768 = vrot.slane %v5766, 5
      %v5769 = vsel %vm1469, %v5764, %v5768
      %v5770 = vshrl.u32 %v5712, 16
      %v5772 = vrot.slane %v5770, 4
      %v5773 = vor.u32 %v5772, %v5768
      %v5774 = vrot.slane %v5773, 4
      %v5776 = vshll.u32 %v5713, 16
      %v5778 = vrot.slane %v5776, 5
      %v5779 = vsel %vm1469, %v5774, %v5778
      %v5780 = vshrl.u32 %v5713, 16
      %v5782 = vrot.slane %v5780, 4
      %v5783 = vor.u32 %v5782, %v5778
      %v5784 = vrot.slane %v5783, 4
      %v5786 = vshll.u32 %v5714, 16
      %v5788 = vrot.slane %v5786, 5
      %v5789 = vsel %vm1469, %v5784, %v5788
      %v5790 = vshrl.u32 %v5714, 16
      %v5792 = vrot.slane %v5790, 4
      %v5793 = vor.u32 %v5792, %v5788
      %v5794 = vrot.slane %v5793, 4
      %v5796 = vshll.u32 %v5715, 16
      %v5798 = vrot.slane %v5796, 5
      %v5799 = vsel %vm1469, %v5794, %v5798
      %v5800 = vshrl.u32 %v5715, 16
      %v5802 = vrot.slane %v5800, 4
      %v5803 = vor.u32 %v5802, %v5798
      %v5804 = vrot.slane %v5803, 4
      %v5806 = vshll.u32 %v5716, 16
      %v5808 = vrot.slane %v5806, 5
      %v5809 = vsel %vm1469, %v5804, %v5808
      %v5810 = vshrl.u32 %v5716, 16
      %v5812 = vrot.slane %v5810, 4
      %v5813 = vor.u32 %v5812, %v5808
      %v5814 = vrot.slane %v5813, 4
      %v5816 = vshll.u32 %v5717, 16
      %v5818 = vrot.slane %v5816, 5
      %v5819 = vsel %vm1469, %v5814, %v5818
      %v5820 = vshrl.u32 %v5717, 16
      %v5822 = vrot.slane %v5820, 4
      %v5823 = vor.u32 %v5822, %v5818
      %v5824 = vrot.slane %v5823, 4
      %v5826 = vshll.u32 %v5718, 16
      %v5828 = vrot.slane %v5826, 5
      %v5829 = vsel %vm1469, %v5824, %v5828
      %v5830 = vshrl.u32 %v5718, 16
      %v5832 = vrot.slane %v5830, 4
      %v5833 = vor.u32 %v5832, %v5828
      %v5834 = vrot.slane %v5833, 4
      %v5836 = vshll.u32 %v5719, 16
      %v5838 = vrot.slane %v5836, 5
      %v5839 = vsel %vm1469, %v5834, %v5838
      %v5840 = vshrl.u32 %v5719, 16
      %v5842 = vrot.slane %v5840, 4
      %v5843 = vor.u32 %v5842, %v5838
      %v5844 = vrot.slane %v5843, 4
      %v5846 = vshll.u32 %v5720, 16
      %v5848 = vrot.slane %v5846, 5
      %v5849 = vsel %vm1469, %v5844, %v5848
      %v5850 = vshrl.u32 %v5720, 16
      %v5852 = vrot.slane %v5850, 4
      %v5853 = vor.u32 %v5852, %v5848
      %v5854 = vrot.slane %v5853, 4
      %v5856 = vshll.u32 %v5721, 16
      %v5858 = vrot.slane %v5856, 5
      %v5859 = vsel %vm1469, %v5854, %v5858
      %v5860 = vshrl.u32 %v5721, 16
      %v5862 = vrot.slane %v5860, 4
      %v5863 = vor.u32 %v5862, %v5858
      %v5864 = vrot.slane %v5863, 4
      %v5866 = vshll.u32 %v5722, 16
      %v5868 = vrot.slane %v5866, 5
      %v5869 = vsel %vm1469, %v5864, %v5868
      %v5870 = vshrl.u32 %v5722, 16
      %v5872 = vrot.slane %v5870, 4
      %v5873 = vor.u32 %v5872, %v5868
      %v5874 = vrot.slane %v5873, 4
      %v5876 = vshll.u32 %v5723, 16
      %v5878 = vrot.slane %v5876, 5
      %v5879 = vsel %vm1469, %v5874, %v5878
      %v5880 = vshrl.u32 %v5723, 16
      %v5882 = vrot.slane %v5880, 4
      %v5883 = vor.u32 %v5882, %v5878
      %v5884 = vrot.slane %v5883, 4
      %v5886 = vshll.u32 %v5724, 16
      %v5888 = vrot.slane %v5886, 5
      %v5889 = vsel %vm1469, %v5884, %v5888
      %v5890 = vshrl.u32 %v5724, 16
      %v5892 = vrot.slane %v5890, 4
      %v5893 = vor.u32 %v5892, %v5888
      %v5894 = vrot.slane %v5893, 4
      %v5896 = vshll.u32 %v5725, 16
      %v5898 = vrot.slane %v5896, 5
      %v5899 = vsel %vm1469, %v5894, %v5898
      %v5900 = vshrl.u32 %v5725, 16
      %v5902 = vrot.slane %v5900, 4
      %v5903 = vor.u32 %v5902, %v5898
      %v5904 = vrot.slane %v5903, 4
      %v5906 = vshll.u32 %v5726, 16
      %v5908 = vrot.slane %v5906, 5
      %v5909 = vsel %vm1469, %v5904, %v5908
      %v5910 = vshrl.u32 %v5726, 16
      %v5912 = vrot.slane %v5910, 4
      %v5913 = vor.u32 %v5912, %v5908
      %v5914 = vrot.slane %v5913, 4
      %v5916 = vshll.u32 %v5727, 16
      %v5918 = vrot.slane %v5916, 5
      %v5919 = vsel %vm1469, %v5914, %v5918
      %v5920 = vshrl.u32 %v5727, 16
      %v5922 = vrot.slane %v5920, 4
      %v5923 = vor.u32 %v5922, %v5918
      %v5924 = vrot.slane %v5923, 4
      %v5926 = vshll.u32 %v5728, 16
      %v5928 = vrot.slane %v5926, 5
      %v5929 = vsel %vm1469, %v5924, %v5928
      %v5930 = vshrl.u32 %v5728, 16
      %v5932 = vrot.slane %v5930, 4
      %v5933 = vor.u32 %v5932, %v5928
      %v5934 = vrot.slane %v5933, 4
      %v5936 = vshll.u32 %v5729, 16
      %v5938 = vrot.slane %v5936, 5
      %v5939 = vsel %vm1469, %v5934, %v5938
      %v5940 = vshrl.u32 %v5729, 16
      %v5942 = vrot.slane %v5940, 4
      %v5943 = vor.u32 %v5942, %v5938
      %v5944 = vrot.slane %v5943, 4
      %v5946 = vshll.u32 %v5730, 16
      %v5948 = vrot.slane %v5946, 5
      %v5949 = vsel %vm1469, %v5944, %v5948
      %v5950 = vshrl.u32 %v5730, 16
      %v5952 = vrot.slane %v5950, 4
      %v5953 = vor.u32 %v5952, %v5948
      %v5954 = vrot.slane %v5953, 4
      %v5956 = vshll.u32 %v5731, 16
      %v5958 = vrot.slane %v5956, 5
      %v5959 = vsel %vm1469, %v5954, %v5958
      %v5960 = vshrl.u32 %v5731, 16
      %v5962 = vrot.slane %v5960, 4
      %v5963 = vor.u32 %v5962, %v5958
      %v5964 = vrot.slane %v5963, 4
      %v5966 = vshll.u32 %v5732, 16
      %v5968 = vrot.slane %v5966, 5
      %v5969 = vsel %vm1469, %v5964, %v5968
      %v5970 = vshrl.u32 %v5732, 16
      %v5972 = vrot.slane %v5970, 4
      %v5973 = vor.u32 %v5972, %v5968
      %v5974 = vrot.slane %v5973, 4
      %v5976 = vshll.u32 %v5755, 16
      %v5978 = vrot.slane %v5976, 5
      %v5979 = vsel %vm1469, %v5974, %v5978
      %5980 = vrot.lane.b32.xlu0 %v5769, 32
      %v5981 = vpop.permute.xlu0 %5980
      %5982 = vrot.lane.b32.xlu0 %v5779, 32
      %v5983 = vpop.permute.xlu0 %5982
      %5984 = vrot.lane.b32.xlu0 %v5789, 32
      %v5985 = vpop.permute.xlu0 %5984
      %5986 = vrot.lane.b32.xlu0 %v5799, 32
      %v5987 = vpop.permute.xlu0 %5986
      %5988 = vrot.lane.b32.xlu0 %v5809, 32
      %v5989 = vpop.permute.xlu0 %5988
      %5990 = vrot.lane.b32.xlu0 %v5819, 32
      %v5991 = vpop.permute.xlu0 %5990
      %5992 = vrot.lane.b32.xlu0 %v5829, 32
      %v5993 = vpop.permute.xlu0 %5992
      %5994 = vrot.lane.b32.xlu0 %v5839, 32
      %v5995 = vpop.permute.xlu0 %5994
      %5996 = vrot.lane.b32.xlu0 %v5849, 32
      %v5997 = vpop.permute.xlu0 %5996
      %5998 = vrot.lane.b32.xlu0 %v5859, 32
      %v5999 = vpop.permute.xlu0 %5998
      %6000 = vrot.lane.b32.xlu0 %v5869, 32
      %v6001 = vpop.permute.xlu0 %6000
      %6002 = vrot.lane.b32.xlu0 %v5879, 32
      %v6003 = vpop.permute.xlu0 %6002
      %6004 = vrot.lane.b32.xlu0 %v5889, 32
      %v6005 = vpop.permute.xlu0 %6004
      %6006 = vrot.lane.b32.xlu0 %v5899, 32
      %v6007 = vpop.permute.xlu0 %6006
      %6008 = vrot.lane.b32.xlu0 %v5909, 32
      %v6009 = vpop.permute.xlu0 %6008
      %6010 = vrot.lane.b32.xlu0 %v5919, 32
      %v6011 = vpop.permute.xlu0 %6010
      %6012 = vrot.lane.b32.xlu0 %v5929, 32
      %v6013 = vpop.permute.xlu0 %6012
      %6014 = vrot.lane.b32.xlu0 %v5939, 32
      %v6015 = vpop.permute.xlu0 %6014
      %6016 = vrot.lane.b32.xlu0 %v5949, 32
      %v6017 = vpop.permute.xlu0 %6016
      %6018 = vrot.lane.b32.xlu0 %v5959, 32
      %v6019 = vpop.permute.xlu0 %6018
      %6020 = vrot.lane.b32.xlu0 %v5969, 32
      %v6021 = vpop.permute.xlu0 %6020
      %6022 = vrot.lane.b32.xlu0 %v5979, 32
      %v6023 = vpop.permute.xlu0 %6022
      %6046 = vst.msk [vmem:[#allocation2] sm:$0xf] %vm1760, %v5981
      %6047 = vst.msk [vmem:[#allocation2 + $0x10] sm:$0xf] %vm1760, %v5983
      %6048 = vst.msk [vmem:[#allocation2 + $0x20] sm:$0xf] %vm1760, %v5985
      %6049 = vst.msk [vmem:[#allocation2 + $0x30] sm:$0xf] %vm1760, %v5987
      %6050 = vst.msk [vmem:[#allocation2 + $0x40] sm:$0xf] %vm1760, %v5989
      %6051 = vst.msk [vmem:[#allocation2 + $0x50] sm:$0xf] %vm1760, %v5991
      %6052 = vst.msk [vmem:[#allocation2 + $0x60] sm:$0xf] %vm1760, %v5993
      %6053 = vst.msk [vmem:[#allocation2 + $0x70] sm:$0xf] %vm1760, %v5995
      %6054 = vst.msk [vmem:[#allocation2 + $0x80] sm:$0xf] %vm1760, %v5997
      %6055 = vst.msk [vmem:[#allocation2 + $0x90] sm:$0xf] %vm1760, %v5999
      %6056 = vst.msk [vmem:[#allocation2 + $0xa0] sm:$0xf] %vm1760, %v6001
      %6057 = vst.msk [vmem:[#allocation2 + $0xb0] sm:$0xf] %vm1760, %v6003
      %6058 = vst.msk [vmem:[#allocation2 + $0xc0] sm:$0xf] %vm1760, %v6005
      %6059 = vst.msk [vmem:[#allocation2 + $0xd0] sm:$0xf] %vm1760, %v6007
      %6060 = vst.msk [vmem:[#allocation2 + $0xe0] sm:$0xf] %vm1760, %v6009
      %6061 = vst.msk [vmem:[#allocation2 + $0xf0] sm:$0xf] %vm1760, %v6011
      %6062 = vst.msk [vmem:[#allocation2 + $0x100] sm:$0xf] %vm1760, %v6013
      %6063 = vst.msk [vmem:[#allocation2 + $0x110] sm:$0xf] %vm1760, %v6015
      %6064 = vst.msk [vmem:[#allocation2 + $0x120] sm:$0xf] %vm1760, %v6017
      %6065 = vst.msk [vmem:[#allocation2 + $0x130] sm:$0xf] %vm1760, %v6019
      %6066 = vst.msk [vmem:[#allocation2 + $0x140] sm:$0xf] %vm1760, %v6021
      %6067 = vst.msk [vmem:[#allocation2 + $0x150] sm:$0xf] %vm1760, %v6023
      %v6091 = vrot.slane %v5711, 5
      %v6092 = vrot.slane %v6091, 4
      %v6093 = vrot.slane %v5712, 5
      %v6094 = vsel %vm1808, %v6092, %v6093
      %v6095 = vrot.slane %v6093, 4
      %v6096 = vrot.slane %v5713, 5
      %v6097 = vsel %vm1808, %v6095, %v6096
      %v6098 = vrot.slane %v6096, 4
      %v6099 = vrot.slane %v5714, 5
      %v6100 = vsel %vm1808, %v6098, %v6099
      %v6101 = vrot.slane %v6099, 4
      %v6102 = vrot.slane %v5715, 5
      %v6103 = vsel %vm1808, %v6101, %v6102
      %v6104 = vrot.slane %v6102, 4
      %v6105 = vrot.slane %v5716, 5
      %v6106 = vsel %vm1808, %v6104, %v6105
      %v6107 = vrot.slane %v6105, 4
      %v6108 = vrot.slane %v5717, 5
      %v6109 = vsel %vm1808, %v6107, %v6108
      %v6110 = vrot.slane %v6108, 4
      %v6111 = vrot.slane %v5718, 5
      %v6112 = vsel %vm1808, %v6110, %v6111
      %v6113 = vrot.slane %v6111, 4
      %v6114 = vrot.slane %v5719, 5
      %v6115 = vsel %vm1808, %v6113, %v6114
      %v6116 = vrot.slane %v6114, 4
      %v6117 = vrot.slane %v5720, 5
      %v6118 = vsel %vm1808, %v6116, %v6117
      %v6119 = vrot.slane %v6117, 4
      %v6120 = vrot.slane %v5721, 5
      %v6121 = vsel %vm1808, %v6119, %v6120
      %v6122 = vrot.slane %v6120, 4
      %v6123 = vrot.slane %v5722, 5
      %v6124 = vsel %vm1808, %v6122, %v6123
      %v6125 = vrot.slane %v6123, 4
      %v6126 = vrot.slane %v5723, 5
      %v6127 = vsel %vm1808, %v6125, %v6126
      %v6128 = vrot.slane %v6126, 4
      %v6129 = vrot.slane %v5724, 5
      %v6130 = vsel %vm1808, %v6128, %v6129
      %v6131 = vrot.slane %v6129, 4
      %v6132 = vrot.slane %v5725, 5
      %v6133 = vsel %vm1808, %v6131, %v6132
      %v6134 = vrot.slane %v6132, 4
      %v6135 = vrot.slane %v5726, 5
      %v6136 = vsel %vm1808, %v6134, %v6135
      %v6137 = vrot.slane %v6135, 4
      %v6138 = vrot.slane %v5727, 5
      %v6139 = vsel %vm1808, %v6137, %v6138
      %v6140 = vrot.slane %v6138, 4
      %v6141 = vrot.slane %v5728, 5
      %v6142 = vsel %vm1808, %v6140, %v6141
      %v6143 = vrot.slane %v6141, 4
      %v6144 = vrot.slane %v5729, 5
      %v6145 = vsel %vm1808, %v6143, %v6144
      %v6146 = vrot.slane %v6144, 4
      %v6147 = vrot.slane %v5730, 5
      %v6148 = vsel %vm1808, %v6146, %v6147
      %v6149 = vrot.slane %v6147, 4
      %v6150 = vrot.slane %v5731, 5
      %v6151 = vsel %vm1808, %v6149, %v6150
      %v6152 = vrot.slane %v6150, 4
      %v6153 = vrot.slane %v5732, 5
      %v6154 = vsel %vm1808, %v6152, %v6153
      %v6155 = vrot.slane %v6153, 4
      %v6156 = vrot.slane %v5755, 5
      %v6157 = vsel %vm1808, %v6155, %v6156
      %6158 = vrot.lane.b32.xlu0 %v6094, 64
      %v6159 = vpop.permute.xlu0 %6158
      %6160 = vrot.lane.b32.xlu0 %v6097, 64
      %v6161 = vpop.permute.xlu0 %6160
      %6162 = vrot.lane.b32.xlu0 %v6100, 64
      %v6163 = vpop.permute.xlu0 %6162
      %6164 = vrot.lane.b32.xlu0 %v6103, 64
      %v6165 = vpop.permute.xlu0 %6164
      %6166 = vrot.lane.b32.xlu0 %v6106, 64
      %v6167 = vpop.permute.xlu0 %6166
      %6168 = vrot.lane.b32.xlu0 %v6109, 64
      %v6169 = vpop.permute.xlu0 %6168
      %6170 = vrot.lane.b32.xlu0 %v6112, 64
      %v6171 = vpop.permute.xlu0 %6170
      %6172 = vrot.lane.b32.xlu0 %v6115, 64
      %v6173 = vpop.permute.xlu0 %6172
      %6174 = vrot.lane.b32.xlu0 %v6118, 64
      %v6175 = vpop.permute.xlu0 %6174
      %6176 = vrot.lane.b32.xlu0 %v6121, 64
      %v6177 = vpop.permute.xlu0 %6176
      %6178 = vrot.lane.b32.xlu0 %v6124, 64
      %v6179 = vpop.permute.xlu0 %6178
      %6180 = vrot.lane.b32.xlu0 %v6127, 64
      %v6181 = vpop.permute.xlu0 %6180
      %6182 = vrot.lane.b32.xlu0 %v6130, 64
      %v6183 = vpop.permute.xlu0 %6182
      %6184 = vrot.lane.b32.xlu0 %v6133, 64
      %v6185 = vpop.permute.xlu0 %6184
      %6186 = vrot.lane.b32.xlu0 %v6136, 64
      %v6187 = vpop.permute.xlu0 %6186
      %6188 = vrot.lane.b32.xlu0 %v6139, 64
      %v6189 = vpop.permute.xlu0 %6188
      %6190 = vrot.lane.b32.xlu0 %v6142, 64
      %v6191 = vpop.permute.xlu0 %6190
      %6192 = vrot.lane.b32.xlu0 %v6145, 64
      %v6193 = vpop.permute.xlu0 %6192
      %6194 = vrot.lane.b32.xlu0 %v6148, 64
      %v6195 = vpop.permute.xlu0 %6194
      %6196 = vrot.lane.b32.xlu0 %v6151, 64
      %v6197 = vpop.permute.xlu0 %6196
      %6198 = vrot.lane.b32.xlu0 %v6154, 64
      %v6199 = vpop.permute.xlu0 %6198
      %6200 = vrot.lane.b32.xlu0 %v6157, 64
      %v6201 = vpop.permute.xlu0 %6200
      %6224 = vst.msk [vmem:[#allocation2] sm:$0xf] %vm1942, %v6159
      %6225 = vst.msk [vmem:[#allocation2 + $0x10] sm:$0xf] %vm1942, %v6161
      %6226 = vst.msk [vmem:[#allocation2 + $0x20] sm:$0xf] %vm1942, %v6163
      %6227 = vst.msk [vmem:[#allocation2 + $0x30] sm:$0xf] %vm1942, %v6165
      %6228 = vst.msk [vmem:[#allocation2 + $0x40] sm:$0xf] %vm1942, %v6167
      %6229 = vst.msk [vmem:[#allocation2 + $0x50] sm:$0xf] %vm1942, %v6169
      %6230 = vst.msk [vmem:[#allocation2 + $0x60] sm:$0xf] %vm1942, %v6171
      %6231 = vst.msk [vmem:[#allocation2 + $0x70] sm:$0xf] %vm1942, %v6173
      %6232 = vst.msk [vmem:[#allocation2 + $0x80] sm:$0xf] %vm1942, %v6175
      %6233 = vst.msk [vmem:[#allocation2 + $0x90] sm:$0xf] %vm1942, %v6177
      %6234 = vst.msk [vmem:[#allocation2 + $0xa0] sm:$0xf] %vm1942, %v6179
      %6235 = vst.msk [vmem:[#allocation2 + $0xb0] sm:$0xf] %vm1942, %v6181
      %6236 = vst.msk [vmem:[#allocation2 + $0xc0] sm:$0xf] %vm1942, %v6183
      %6237 = vst.msk [vmem:[#allocation2 + $0xd0] sm:$0xf] %vm1942, %v6185
      %6238 = vst.msk [vmem:[#allocation2 + $0xe0] sm:$0xf] %vm1942, %v6187
      %6239 = vst.msk [vmem:[#allocation2 + $0xf0] sm:$0xf] %vm1942, %v6189
      %6240 = vst.msk [vmem:[#allocation2 + $0x100] sm:$0xf] %vm1942, %v6191
      %6241 = vst.msk [vmem:[#allocation2 + $0x110] sm:$0xf] %vm1942, %v6193
      %6242 = vst.msk [vmem:[#allocation2 + $0x120] sm:$0xf] %vm1942, %v6195
      %6243 = vst.msk [vmem:[#allocation2 + $0x130] sm:$0xf] %vm1942, %v6197
      %6244 = vst.msk [vmem:[#allocation2 + $0x140] sm:$0xf] %vm1942, %v6199
      %6245 = vst.msk [vmem:[#allocation2 + $0x150] sm:$0xf] %vm1942, %v6201
      %v6246 = vrot.slane %v5757, 5
      %v6247 = vrot.slane %v5760, 6
      %v6248 = vor.u32 %v6246, %v6247
      %v6249 = vrot.slane %v6248, 4
      %v6250 = vrot.slane %v5770, 5
      %v6251 = vrot.slane %v5766, 6
      %v6252 = vor.u32 %v6250, %v6251
      %v6253 = vsel %vm1967, %v6249, %v6252
      %v6254 = vrot.slane %v6252, 4
      %v6255 = vrot.slane %v5780, 5
      %v6256 = vrot.slane %v5776, 6
      %v6257 = vor.u32 %v6255, %v6256
      %v6258 = vsel %vm1967, %v6254, %v6257
      %v6259 = vrot.slane %v6257, 4
      %v6260 = vrot.slane %v5790, 5
      %v6261 = vrot.slane %v5786, 6
      %v6262 = vor.u32 %v6260, %v6261
      %v6263 = vsel %vm1967, %v6259, %v6262
      %v6264 = vrot.slane %v6262, 4
      %v6265 = vrot.slane %v5800, 5
      %v6266 = vrot.slane %v5796, 6
      %v6267 = vor.u32 %v6265, %v6266
      %v6268 = vsel %vm1967, %v6264, %v6267
      %v6269 = vrot.slane %v6267, 4
      %v6270 = vrot.slane %v5810, 5
      %v6271 = vrot.slane %v5806, 6
      %v6272 = vor.u32 %v6270, %v6271
      %v6273 = vsel %vm1967, %v6269, %v6272
      %v6274 = vrot.slane %v6272, 4
      %v6275 = vrot.slane %v5820, 5
      %v6276 = vrot.slane %v5816, 6
      %v6277 = vor.u32 %v6275, %v6276
      %v6278 = vsel %vm1967, %v6274, %v6277
      %v6279 = vrot.slane %v6277, 4
      %v6280 = vrot.slane %v5830, 5
      %v6281 = vrot.slane %v5826, 6
      %v6282 = vor.u32 %v6280, %v6281
      %v6283 = vsel %vm1967, %v6279, %v6282
      %v6284 = vrot.slane %v6282, 4
      %v6285 = vrot.slane %v5840, 5
      %v6286 = vrot.slane %v5836, 6
      %v6287 = vor.u32 %v6285, %v6286
      %v6288 = vsel %vm1967, %v6284, %v6287
      %v6289 = vrot.slane %v6287, 4
      %v6290 = vrot.slane %v5850, 5
      %v6291 = vrot.slane %v5846, 6
      %v6292 = vor.u32 %v6290, %v6291
      %v6293 = vsel %vm1967, %v6289, %v6292
      %v6294 = vrot.slane %v6292, 4
      %v6295 = vrot.slane %v5860, 5
      %v6296 = vrot.slane %v5856, 6
      %v6297 = vor.u32 %v6295, %v6296
      %v6298 = vsel %vm1967, %v6294, %v6297
      %v6299 = vrot.slane %v6297, 4
      %v6300 = vrot.slane %v5870, 5
      %v6301 = vrot.slane %v5866, 6
      %v6302 = vor.u32 %v6300, %v6301
      %v6303 = vsel %vm1967, %v6299, %v6302
      %v6304 = vrot.slane %v6302, 4
      %v6305 = vrot.slane %v5880, 5
      %v6306 = vrot.slane %v5876, 6
      %v6307 = vor.u32 %v6305, %v6306
      %v6308 = vsel %vm1967, %v6304, %v6307
      %v6309 = vrot.slane %v6307, 4
      %v6310 = vrot.slane %v5890, 5
      %v6311 = vrot.slane %v5886, 6
      %v6312 = vor.u32 %v6310, %v6311
      %v6313 = vsel %vm1967, %v6309, %v6312
      %v6314 = vrot.slane %v6312, 4
      %v6315 = vrot.slane %v5900, 5
      %v6316 = vrot.slane %v5896, 6
      %v6317 = vor.u32 %v6315, %v6316
      %v6318 = vsel %vm1967, %v6314, %v6317
      %v6319 = vrot.slane %v6317, 4
      %v6320 = vrot.slane %v5910, 5
      %v6321 = vrot.slane %v5906, 6
      %v6322 = vor.u32 %v6320, %v6321
      %v6323 = vsel %vm1967, %v6319, %v6322
      %v6324 = vrot.slane %v6322, 4
      %v6325 = vrot.slane %v5920, 5
      %v6326 = vrot.slane %v5916, 6
      %v6327 = vor.u32 %v6325, %v6326
      %v6328 = vsel %vm1967, %v6324, %v6327
      %v6329 = vrot.slane %v6327, 4
      %v6330 = vrot.slane %v5930, 5
      %v6331 = vrot.slane %v5926, 6
      %v6332 = vor.u32 %v6330, %v6331
      %v6333 = vsel %vm1967, %v6329, %v6332
      %v6334 = vrot.slane %v6332, 4
      %v6335 = vrot.slane %v5940, 5
      %v6336 = vrot.slane %v5936, 6
      %v6337 = vor.u32 %v6335, %v6336
      %v6338 = vsel %vm1967, %v6334, %v6337
      %v6339 = vrot.slane %v6337, 4
      %v6340 = vrot.slane %v5950, 5
      %v6341 = vrot.slane %v5946, 6
      %v6342 = vor.u32 %v6340, %v6341
      %v6343 = vsel %vm1967, %v6339, %v6342
      %v6344 = vrot.slane %v6342, 4
      %v6345 = vrot.slane %v5960, 5
      %v6346 = vrot.slane %v5956, 6
      %v6347 = vor.u32 %v6345, %v6346
      %v6348 = vsel %vm1967, %v6344, %v6347
      %v6349 = vrot.slane %v6347, 4
      %v6350 = vrot.slane %v5970, 5
      %v6351 = vrot.slane %v5966, 6
      %v6352 = vor.u32 %v6350, %v6351
      %v6353 = vsel %vm1967, %v6349, %v6352
      %v6354 = vrot.slane %v6352, 4
      %v6355 = vshrl.u32 %v5755, 16
      %v6357 = vrot.slane %v6355, 5
      %v6358 = vrot.slane %v5976, 6
      %v6359 = vor.u32 %v6357, %v6358
      %v6360 = vsel %vm1967, %v6354, %v6359
      %6361 = vrot.lane.b32.xlu0 %v6253, 96
      %v6362 = vpop.permute.xlu0 %6361
      %6363 = vrot.lane.b32.xlu0 %v6258, 96
      %v6364 = vpop.permute.xlu0 %6363
      %6365 = vrot.lane.b32.xlu0 %v6263, 96
      %v6366 = vpop.permute.xlu0 %6365
      %6367 = vrot.lane.b32.xlu0 %v6268, 96
      %v6368 = vpop.permute.xlu0 %6367
      %6369 = vrot.lane.b32.xlu0 %v6273, 96
      %v6370 = vpop.permute.xlu0 %6369
      %6371 = vrot.lane.b32.xlu0 %v6278, 96
      %v6372 = vpop.permute.xlu0 %6371
      %6373 = vrot.lane.b32.xlu0 %v6283, 96
      %v6374 = vpop.permute.xlu0 %6373
      %6375 = vrot.lane.b32.xlu0 %v6288, 96
      %v6376 = vpop.permute.xlu0 %6375
      %6377 = vrot.lane.b32.xlu0 %v6293, 96
      %v6378 = vpop.permute.xlu0 %6377
      %6379 = vrot.lane.b32.xlu0 %v6298, 96
      %v6380 = vpop.permute.xlu0 %6379
      %6381 = vrot.lane.b32.xlu0 %v6303, 96
      %v6382 = vpop.permute.xlu0 %6381
      %6383 = vrot.lane.b32.xlu0 %v6308, 96
      %v6384 = vpop.permute.xlu0 %6383
      %6385 = vrot.lane.b32.xlu0 %v6313, 96
      %v6386 = vpop.permute.xlu0 %6385
      %6387 = vrot.lane.b32.xlu0 %v6318, 96
      %v6388 = vpop.permute.xlu0 %6387
      %6389 = vrot.lane.b32.xlu0 %v6323, 96
      %v6390 = vpop.permute.xlu0 %6389
      %6391 = vrot.lane.b32.xlu0 %v6328, 96
      %v6392 = vpop.permute.xlu0 %6391
      %6393 = vrot.lane.b32.xlu0 %v6333, 96
      %v6394 = vpop.permute.xlu0 %6393
      %6395 = vrot.lane.b32.xlu0 %v6338, 96
      %v6396 = vpop.permute.xlu0 %6395
      %6397 = vrot.lane.b32.xlu0 %v6343, 96
      %v6398 = vpop.permute.xlu0 %6397
      %6399 = vrot.lane.b32.xlu0 %v6348, 96
      %v6400 = vpop.permute.xlu0 %6399
      %6401 = vrot.lane.b32.xlu0 %v6353, 96
      %v6402 = vpop.permute.xlu0 %6401
      %6403 = vrot.lane.b32.xlu0 %v6360, 96
      %v6404 = vpop.permute.xlu0 %6403
      %6427 = vst.msk [vmem:[#allocation2] sm:$0xf] %vm2149, %v6362
      %6428 = vst.msk [vmem:[#allocation2 + $0x10] sm:$0xf] %vm2149, %v6364
      %6429 = vst.msk [vmem:[#allocation2 + $0x20] sm:$0xf] %vm2149, %v6366
      %6430 = vst.msk [vmem:[#allocation2 + $0x30] sm:$0xf] %vm2149, %v6368
      %6431 = vst.msk [vmem:[#allocation2 + $0x40] sm:$0xf] %vm2149, %v6370
      %6432 = vst.msk [vmem:[#allocation2 + $0x50] sm:$0xf] %vm2149, %v6372
      %6433 = vst.msk [vmem:[#allocation2 + $0x60] sm:$0xf] %vm2149, %v6374
      %6434 = vst.msk [vmem:[#allocation2 + $0x70] sm:$0xf] %vm2149, %v6376
      %6435 = vst.msk [vmem:[#allocation2 + $0x80] sm:$0xf] %vm2149, %v6378
      %6436 = vst.msk [vmem:[#allocation2 + $0x90] sm:$0xf] %vm2149, %v6380
      %6437 = vst.msk [vmem:[#allocation2 + $0xa0] sm:$0xf] %vm2149, %v6382
      %6438 = vst.msk [vmem:[#allocation2 + $0xb0] sm:$0xf] %vm2149, %v6384
      %6439 = vst.msk [vmem:[#allocation2 + $0xc0] sm:$0xf] %vm2149, %v6386
      %6440 = vst.msk [vmem:[#allocation2 + $0xd0] sm:$0xf] %vm2149, %v6388
      %6441 = vst.msk [vmem:[#allocation2 + $0xe0] sm:$0xf] %vm2149, %v6390
      %6442 = vst.msk [vmem:[#allocation2 + $0xf0] sm:$0xf] %vm2149, %v6392
      %6443 = vst.msk [vmem:[#allocation2 + $0x100] sm:$0xf] %vm2149, %v6394
      %6444 = vst.msk [vmem:[#allocation2 + $0x110] sm:$0xf] %vm2149, %v6396
      %6445 = vst.msk [vmem:[#allocation2 + $0x120] sm:$0xf] %vm2149, %v6398
      %6446 = vst.msk [vmem:[#allocation2 + $0x130] sm:$0xf] %vm2149, %v6400
      %6447 = vst.msk [vmem:[#allocation2 + $0x140] sm:$0xf] %vm2149, %v6402
      %6448 = vst.msk [vmem:[#allocation2 + $0x150] sm:$0xf] %vm2149, %v6404
      %v6449 = vpack.c.bf16 %v5705, %v5705
      %6450 = vst.msk [vmem:[#allocation2 + $0x4] sm:$0xf] %vm1443, %v5713
      %6451 = vst.msk [vmem:[#allocation2 + $0x14] sm:$0xf] %vm1443, %v5714
      %6452 = vst.msk [vmem:[#allocation2 + $0x24] sm:$0xf] %vm1443, %v5715
      %6453 = vst.msk [vmem:[#allocation2 + $0x34] sm:$0xf] %vm1443, %v5716
      %6454 = vst.msk [vmem:[#allocation2 + $0x44] sm:$0xf] %vm1443, %v5717
      %6455 = vst.msk [vmem:[#allocation2 + $0x54] sm:$0xf] %vm1443, %v5718
      %6456 = vst.msk [vmem:[#allocation2 + $0x64] sm:$0xf] %vm1443, %v5719
      %6457 = vst.msk [vmem:[#allocation2 + $0x74] sm:$0xf] %vm1443, %v5720
      %6458 = vst.msk [vmem:[#allocation2 + $0x84] sm:$0xf] %vm1443, %v5721
      %6459 = vst.msk [vmem:[#allocation2 + $0x94] sm:$0xf] %vm1443, %v5722
      %6460 = vst.msk [vmem:[#allocation2 + $0xa4] sm:$0xf] %vm1443, %v5723
      %6461 = vst.msk [vmem:[#allocation2 + $0xb4] sm:$0xf] %vm1443, %v5724
      %6462 = vst.msk [vmem:[#allocation2 + $0xc4] sm:$0xf] %vm1443, %v5725
      %6463 = vst.msk [vmem:[#allocation2 + $0xd4] sm:$0xf] %vm1443, %v5726
      %6464 = vst.msk [vmem:[#allocation2 + $0xe4] sm:$0xf] %vm1443, %v5727
      %6465 = vst.msk [vmem:[#allocation2 + $0xf4] sm:$0xf] %vm1443, %v5728
      %6466 = vst.msk [vmem:[#allocation2 + $0x104] sm:$0xf] %vm1443, %v5729
      %6467 = vst.msk [vmem:[#allocation2 + $0x114] sm:$0xf] %vm1443, %v5730
      %6468 = vst.msk [vmem:[#allocation2 + $0x124] sm:$0xf] %vm1443, %v5731
      %6469 = vst.msk [vmem:[#allocation2 + $0x134] sm:$0xf] %vm1443, %v5732
      %6470 = vst.msk [vmem:[#allocation2 + $0x144] sm:$0xf] %vm1443, %v5755
      %6471 = vst.msk [vmem:[#allocation2 + $0x154] sm:$0xf] %vm1443, %v6449
      %v6472 = vpack.c.bf16 %v5706, %v5706
      %v6473 = vrot.slane %v6355, 4
      %v6474 = vor.u32 %v6473, %v5978
      %v6475 = vrot.slane %v6474, 4
      %v6477 = vshll.u32 %v6449, 16
      %v6479 = vrot.slane %v6477, 5
      %v6480 = vsel %vm1469, %v6475, %v6479
      %v6481 = vshrl.u32 %v6449, 16
      %v6483 = vrot.slane %v6481, 4
      %v6484 = vor.u32 %v6483, %v6479
      %v6485 = vrot.slane %v6484, 4
      %v6487 = vshll.u32 %v6472, 16
      %v6489 = vrot.slane %v6487, 5
      %v6490 = vsel %vm1469, %v6485, %v6489
      %6491 = vrot.lane.b32.xlu0 %v6480, 32
      %v6492 = vpop.permute.xlu0 %6491
      %6493 = vrot.lane.b32.xlu0 %v6490, 32
      %v6494 = vpop.permute.xlu0 %6493
      %6497 = vst.msk [vmem:[#allocation2 + $0x4] sm:$0xf] %vm1760, %v5985
      %6498 = vst.msk [vmem:[#allocation2 + $0x14] sm:$0xf] %vm1760, %v5987
      %6499 = vst.msk [vmem:[#allocation2 + $0x24] sm:$0xf] %vm1760, %v5989
      %6500 = vst.msk [vmem:[#allocation2 + $0x34] sm:$0xf] %vm1760, %v5991
      %6501 = vst.msk [vmem:[#allocation2 + $0x44] sm:$0xf] %vm1760, %v5993
      %6502 = vst.msk [vmem:[#allocation2 + $0x54] sm:$0xf] %vm1760, %v5995
      %6503 = vst.msk [vmem:[#allocation2 + $0x64] sm:$0xf] %vm1760, %v5997
      %6504 = vst.msk [vmem:[#allocation2 + $0x74] sm:$0xf] %vm1760, %v5999
      %6505 = vst.msk [vmem:[#allocation2 + $0x84] sm:$0xf] %vm1760, %v6001
      %6506 = vst.msk [vmem:[#allocation2 + $0x94] sm:$0xf] %vm1760, %v6003
      %6507 = vst.msk [vmem:[#allocation2 + $0xa4] sm:$0xf] %vm1760, %v6005
      %6508 = vst.msk [vmem:[#allocation2 + $0xb4] sm:$0xf] %vm1760, %v6007
      %6509 = vst.msk [vmem:[#allocation2 + $0xc4] sm:$0xf] %vm1760, %v6009
      %6510 = vst.msk [vmem:[#allocation2 + $0xd4] sm:$0xf] %vm1760, %v6011
      %6511 = vst.msk [vmem:[#allocation2 + $0xe4] sm:$0xf] %vm1760, %v6013
      %6512 = vst.msk [vmem:[#allocation2 + $0xf4] sm:$0xf] %vm1760, %v6015
      %6513 = vst.msk [vmem:[#allocation2 + $0x104] sm:$0xf] %vm1760, %v6017
      %6514 = vst.msk [vmem:[#allocation2 + $0x114] sm:$0xf] %vm1760, %v6019
      %6515 = vst.msk [vmem:[#allocation2 + $0x124] sm:$0xf] %vm1760, %v6021
      %6516 = vst.msk [vmem:[#allocation2 + $0x134] sm:$0xf] %vm1760, %v6023
      %6517 = vst.msk [vmem:[#allocation2 + $0x144] sm:$0xf] %vm1760, %v6492
      %6518 = vst.msk [vmem:[#allocation2 + $0x154] sm:$0xf] %vm1760, %v6494
      %v6521 = vrot.slane %v6156, 4
      %v6522 = vrot.slane %v6449, 5
      %v6523 = vsel %vm1808, %v6521, %v6522
      %v6524 = vrot.slane %v6522, 4
      %v6525 = vrot.slane %v6472, 5
      %v6526 = vsel %vm1808, %v6524, %v6525
      %6527 = vrot.lane.b32.xlu0 %v6523, 64
      %v6528 = vpop.permute.xlu0 %6527
      %6529 = vrot.lane.b32.xlu0 %v6526, 64
      %v6530 = vpop.permute.xlu0 %6529
      %6533 = vst.msk [vmem:[#allocation2 + $0x4] sm:$0xf] %vm1942, %v6163
      %6534 = vst.msk [vmem:[#allocation2 + $0x14] sm:$0xf] %vm1942, %v6165
      %6535 = vst.msk [vmem:[#allocation2 + $0x24] sm:$0xf] %vm1942, %v6167
      %6536 = vst.msk [vmem:[#allocation2 + $0x34] sm:$0xf] %vm1942, %v6169
      %6537 = vst.msk [vmem:[#allocation2 + $0x44] sm:$0xf] %vm1942, %v6171
      %6538 = vst.msk [vmem:[#allocation2 + $0x54] sm:$0xf] %vm1942, %v6173
      %6539 = vst.msk [vmem:[#allocation2 + $0x64] sm:$0xf] %vm1942, %v6175
      %6540 = vst.msk [vmem:[#allocation2 + $0x74] sm:$0xf] %vm1942, %v6177
      %6541 = vst.msk [vmem:[#allocation2 + $0x84] sm:$0xf] %vm1942, %v6179
      %6542 = vst.msk [vmem:[#allocation2 + $0x94] sm:$0xf] %vm1942, %v6181
      %6543 = vst.msk [vmem:[#allocation2 + $0xa4] sm:$0xf] %vm1942, %v6183
      %6544 = vst.msk [vmem:[#allocation2 + $0xb4] sm:$0xf] %vm1942, %v6185
      %6545 = vst.msk [vmem:[#allocation2 + $0xc4] sm:$0xf] %vm1942, %v6187
      %6546 = vst.msk [vmem:[#allocation2 + $0xd4] sm:$0xf] %vm1942, %v6189
      %6547 = vst.msk [vmem:[#allocation2 + $0xe4] sm:$0xf] %vm1942, %v6191
      %6548 = vst.msk [vmem:[#allocation2 + $0xf4] sm:$0xf] %vm1942, %v6193
      %6549 = vst.msk [vmem:[#allocation2 + $0x104] sm:$0xf] %vm1942, %v6195
      %6550 = vst.msk [vmem:[#allocation2 + $0x114] sm:$0xf] %vm1942, %v6197
      %6551 = vst.msk [vmem:[#allocation2 + $0x124] sm:$0xf] %vm1942, %v6199
      %6552 = vst.msk [vmem:[#allocation2 + $0x134] sm:$0xf] %vm1942, %v6201
      %6553 = vst.msk [vmem:[#allocation2 + $0x144] sm:$0xf] %vm1942, %v6528
      %6554 = vst.msk [vmem:[#allocation2 + $0x154] sm:$0xf] %vm1942, %v6530
      %v6555 = vrot.slane %v6359, 4
      %v6556 = vrot.slane %v6481, 5
      %v6557 = vrot.slane %v6477, 6
      %v6558 = vor.u32 %v6556, %v6557
      %v6559 = vsel %vm1967, %v6555, %v6558
      %v6560 = vrot.slane %v6558, 4
      %v6561 = vshrl.u32 %v6472, 16
      %v6563 = vrot.slane %v6561, 5
      %v6564 = vrot.slane %v6487, 6
      %v6565 = vor.u32 %v6563, %v6564
      %v6566 = vsel %vm1967, %v6560, %v6565
      %6567 = vrot.lane.b32.xlu0 %v6559, 96
      %v6568 = vpop.permute.xlu0 %6567
      %6569 = vrot.lane.b32.xlu0 %v6566, 96
      %v6570 = vpop.permute.xlu0 %6569
      %6573 = vst.msk [vmem:[#allocation2 + $0x4] sm:$0xf] %vm2149, %v6366
      %6574 = vst.msk [vmem:[#allocation2 + $0x14] sm:$0xf] %vm2149, %v6368
      %6575 = vst.msk [vmem:[#allocation2 + $0x24] sm:$0xf] %vm2149, %v6370
      %6576 = vst.msk [vmem:[#allocation2 + $0x34] sm:$0xf] %vm2149, %v6372
      %6577 = vst.msk [vmem:[#allocation2 + $0x44] sm:$0xf] %vm2149, %v6374
      %6578 = vst.msk [vmem:[#allocation2 + $0x54] sm:$0xf] %vm2149, %v6376
      %6579 = vst.msk [vmem:[#allocation2 + $0x64] sm:$0xf] %vm2149, %v6378
      %6580 = vst.msk [vmem:[#allocation2 + $0x74] sm:$0xf] %vm2149, %v6380
      %6581 = vst.msk [vmem:[#allocation2 + $0x84] sm:$0xf] %vm2149, %v6382
      %6582 = vst.msk [vmem:[#allocation2 + $0x94] sm:$0xf] %vm2149, %v6384
      %6583 = vst.msk [vmem:[#allocation2 + $0xa4] sm:$0xf] %vm2149, %v6386
      %6584 = vst.msk [vmem:[#allocation2 + $0xb4] sm:$0xf] %vm2149, %v6388
      %6585 = vst.msk [vmem:[#allocation2 + $0xc4] sm:$0xf] %vm2149, %v6390
      %6586 = vst.msk [vmem:[#allocation2 + $0xd4] sm:$0xf] %vm2149, %v6392
      %6587 = vst.msk [vmem:[#allocation2 + $0xe4] sm:$0xf] %vm2149, %v6394
      %6588 = vst.msk [vmem:[#allocation2 + $0xf4] sm:$0xf] %vm2149, %v6396
      %6589 = vst.msk [vmem:[#allocation2 + $0x104] sm:$0xf] %vm2149, %v6398
      %6590 = vst.msk [vmem:[#allocation2 + $0x114] sm:$0xf] %vm2149, %v6400
      %6591 = vst.msk [vmem:[#allocation2 + $0x124] sm:$0xf] %vm2149, %v6402
      %6592 = vst.msk [vmem:[#allocation2 + $0x134] sm:$0xf] %vm2149, %v6404
      %6593 = vst.msk [vmem:[#allocation2 + $0x144] sm:$0xf] %vm2149, %v6568
      %6594 = vst.msk [vmem:[#allocation2 + $0x154] sm:$0xf] %vm2149, %v6570
      %v6595 = vpack.c.bf16 %v5707, %v5707
      %6596 = vst.msk [vmem:[#allocation2 + $0x8] sm:$0xf] %vm1443, %v5715
      %6597 = vst.msk [vmem:[#allocation2 + $0x18] sm:$0xf] %vm1443, %v5716
      %6598 = vst.msk [vmem:[#allocation2 + $0x28] sm:$0xf] %vm1443, %v5717
      %6599 = vst.msk [vmem:[#allocation2 + $0x38] sm:$0xf] %vm1443, %v5718
      %6600 = vst.msk [vmem:[#allocation2 + $0x48] sm:$0xf] %vm1443, %v5719
      %6601 = vst.msk [vmem:[#allocation2 + $0x58] sm:$0xf] %vm1443, %v5720
      %6602 = vst.msk [vmem:[#allocation2 + $0x68] sm:$0xf] %vm1443, %v5721
      %6603 = vst.msk [vmem:[#allocation2 + $0x78] sm:$0xf] %vm1443, %v5722
      %6604 = vst.msk [vmem:[#allocation2 + $0x88] sm:$0xf] %vm1443, %v5723
      %6605 = vst.msk [vmem:[#allocation2 + $0x98] sm:$0xf] %vm1443, %v5724
      %6606 = vst.msk [vmem:[#allocation2 + $0xa8] sm:$0xf] %vm1443, %v5725
      %6607 = vst.msk [vmem:[#allocation2 + $0xb8] sm:$0xf] %vm1443, %v5726
      %6608 = vst.msk [vmem:[#allocation2 + $0xc8] sm:$0xf] %vm1443, %v5727
      %6609 = vst.msk [vmem:[#allocation2 + $0xd8] sm:$0xf] %vm1443, %v5728
      %6610 = vst.msk [vmem:[#allocation2 + $0xe8] sm:$0xf] %vm1443, %v5729
      %6611 = vst.msk [vmem:[#allocation2 + $0xf8] sm:$0xf] %vm1443, %v5730
      %6612 = vst.msk [vmem:[#allocation2 + $0x108] sm:$0xf] %vm1443, %v5731
      %6613 = vst.msk [vmem:[#allocation2 + $0x118] sm:$0xf] %vm1443, %v5732
      %6614 = vst.msk [vmem:[#allocation2 + $0x128] sm:$0xf] %vm1443, %v5755
      %6615 = vst.msk [vmem:[#allocation2 + $0x138] sm:$0xf] %vm1443, %v6449
      %6616 = vst.msk [vmem:[#allocation2 + $0x148] sm:$0xf] %vm1443, %v6472
      %6617 = vst.msk [vmem:[#allocation2 + $0x158] sm:$0xf] %vm1443, %v6595
      %v6618 = vpack.c.bf16 %v5708, %v5708
      %v6619 = vrot.slane %v6561, 4
      %v6620 = vor.u32 %v6619, %v6489
      %v6621 = vrot.slane %v6620, 4
      %v6623 = vshll.u32 %v6595, 16
      %v6625 = vrot.slane %v6623, 5
      %v6626 = vsel %vm1469, %v6621, %v6625
      %v6627 = vshrl.u32 %v6595, 16
      %v6629 = vrot.slane %v6627, 4
      %v6630 = vor.u32 %v6629, %v6625
      %v6631 = vrot.slane %v6630, 4
      %v6633 = vshll.u32 %v6618, 16
      %v6635 = vrot.slane %v6633, 5
      %v6636 = vsel %vm1469, %v6631, %v6635
      %6637 = vrot.lane.b32.xlu0 %v6626, 32
      %v6638 = vpop.permute.xlu0 %6637
      %6639 = vrot.lane.b32.xlu0 %v6636, 32
      %v6640 = vpop.permute.xlu0 %6639
      %6643 = vst.msk [vmem:[#allocation2 + $0x8] sm:$0xf] %vm1760, %v5989
      %6644 = vst.msk [vmem:[#allocation2 + $0x18] sm:$0xf] %vm1760, %v5991
      %6645 = vst.msk [vmem:[#allocation2 + $0x28] sm:$0xf] %vm1760, %v5993
      %6646 = vst.msk [vmem:[#allocation2 + $0x38] sm:$0xf] %vm1760, %v5995
      %6647 = vst.msk [vmem:[#allocation2 + $0x48] sm:$0xf] %vm1760, %v5997
      %6648 = vst.msk [vmem:[#allocation2 + $0x58] sm:$0xf] %vm1760, %v5999
      %6649 = vst.msk [vmem:[#allocation2 + $0x68] sm:$0xf] %vm1760, %v6001
      %6650 = vst.msk [vmem:[#allocation2 + $0x78] sm:$0xf] %vm1760, %v6003
      %6651 = vst.msk [vmem:[#allocation2 + $0x88] sm:$0xf] %vm1760, %v6005
      %6652 = vst.msk [vmem:[#allocation2 + $0x98] sm:$0xf] %vm1760, %v6007
      %6653 = vst.msk [vmem:[#allocation2 + $0xa8] sm:$0xf] %vm1760, %v6009
      %6654 = vst.msk [vmem:[#allocation2 + $0xb8] sm:$0xf] %vm1760, %v6011
      %6655 = vst.msk [vmem:[#allocation2 + $0xc8] sm:$0xf] %vm1760, %v6013
      %6656 = vst.msk [vmem:[#allocation2 + $0xd8] sm:$0xf] %vm1760, %v6015
      %6657 = vst.msk [vmem:[#allocation2 + $0xe8] sm:$0xf] %vm1760, %v6017
      %6658 = vst.msk [vmem:[#allocation2 + $0xf8] sm:$0xf] %vm1760, %v6019
      %6659 = vst.msk [vmem:[#allocation2 + $0x108] sm:$0xf] %vm1760, %v6021
      %6660 = vst.msk [vmem:[#allocation2 + $0x118] sm:$0xf] %vm1760, %v6023
      %6661 = vst.msk [vmem:[#allocation2 + $0x128] sm:$0xf] %vm1760, %v6492
      %6662 = vst.msk [vmem:[#allocation2 + $0x138] sm:$0xf] %vm1760, %v6494
      %6663 = vst.msk [vmem:[#allocation2 + $0x148] sm:$0xf] %vm1760, %v6638
      %6664 = vst.msk [vmem:[#allocation2 + $0x158] sm:$0xf] %vm1760, %v6640
      %v6667 = vrot.slane %v6525, 4
      %v6668 = vrot.slane %v6595, 5
      %v6669 = vsel %vm1808, %v6667, %v6668
      %v6670 = vrot.slane %v6668, 4
      %v6671 = vrot.slane %v6618, 5
      %v6672 = vsel %vm1808, %v6670, %v6671
      %6673 = vrot.lane.b32.xlu0 %v6669, 64
      %v6674 = vpop.permute.xlu0 %6673
      %6675 = vrot.lane.b32.xlu0 %v6672, 64
      %v6676 = vpop.permute.xlu0 %6675
      %6679 = vst.msk [vmem:[#allocation2 + $0x8] sm:$0xf] %vm1942, %v6167
      %6680 = vst.msk [vmem:[#allocation2 + $0x18] sm:$0xf] %vm1942, %v6169
      %6681 = vst.msk [vmem:[#allocation2 + $0x28] sm:$0xf] %vm1942, %v6171
      %6682 = vst.msk [vmem:[#allocation2 + $0x38] sm:$0xf] %vm1942, %v6173
      %6683 = vst.msk [vmem:[#allocation2 + $0x48] sm:$0xf] %vm1942, %v6175
      %6684 = vst.msk [vmem:[#allocation2 + $0x58] sm:$0xf] %vm1942, %v6177
      %6685 = vst.msk [vmem:[#allocation2 + $0x68] sm:$0xf] %vm1942, %v6179
      %6686 = vst.msk [vmem:[#allocation2 + $0x78] sm:$0xf] %vm1942, %v6181
      %6687 = vst.msk [vmem:[#allocation2 + $0x88] sm:$0xf] %vm1942, %v6183
      %6688 = vst.msk [vmem:[#allocation2 + $0x98] sm:$0xf] %vm1942, %v6185
      %6689 = vst.msk [vmem:[#allocation2 + $0xa8] sm:$0xf] %vm1942, %v6187
      %6690 = vst.msk [vmem:[#allocation2 + $0xb8] sm:$0xf] %vm1942, %v6189
      %6691 = vst.msk [vmem:[#allocation2 + $0xc8] sm:$0xf] %vm1942, %v6191
      %6692 = vst.msk [vmem:[#allocation2 + $0xd8] sm:$0xf] %vm1942, %v6193
      %6693 = vst.msk [vmem:[#allocation2 + $0xe8] sm:$0xf] %vm1942, %v6195
      %6694 = vst.msk [vmem:[#allocation2 + $0xf8] sm:$0xf] %vm1942, %v6197
      %6695 = vst.msk [vmem:[#allocation2 + $0x108] sm:$0xf] %vm1942, %v6199
      %6696 = vst.msk [vmem:[#allocation2 + $0x118] sm:$0xf] %vm1942, %v6201
      %6697 = vst.msk [vmem:[#allocation2 + $0x128] sm:$0xf] %vm1942, %v6528
      %6698 = vst.msk [vmem:[#allocation2 + $0x138] sm:$0xf] %vm1942, %v6530
      %6699 = vst.msk [vmem:[#allocation2 + $0x148] sm:$0xf] %vm1942, %v6674
      %6700 = vst.msk [vmem:[#allocation2 + $0x158] sm:$0xf] %vm1942, %v6676
      %v6701 = vrot.slane %v6565, 4
      %v6702 = vrot.slane %v6627, 5
      %v6703 = vrot.slane %v6623, 6
      %v6704 = vor.u32 %v6702, %v6703
      %v6705 = vsel %vm1967, %v6701, %v6704
      %v6706 = vrot.slane %v6704, 4
      %v6707 = vshrl.u32 %v6618, 16
      %v6709 = vrot.slane %v6707, 5
      %v6710 = vrot.slane %v6633, 6
      %v6711 = vor.u32 %v6709, %v6710
      %v6712 = vsel %vm1967, %v6706, %v6711
      %6713 = vrot.lane.b32.xlu0 %v6705, 96
      %v6714 = vpop.permute.xlu0 %6713
      %6715 = vrot.lane.b32.xlu0 %v6712, 96
      %v6716 = vpop.permute.xlu0 %6715
      %6719 = vst.msk [vmem:[#allocation2 + $0x8] sm:$0xf] %vm2149, %v6370
      %6720 = vst.msk [vmem:[#allocation2 + $0x18] sm:$0xf] %vm2149, %v6372
      %6721 = vst.msk [vmem:[#allocation2 + $0x28] sm:$0xf] %vm2149, %v6374
      %6722 = vst.msk [vmem:[#allocation2 + $0x38] sm:$0xf] %vm2149, %v6376
      %6723 = vst.msk [vmem:[#allocation2 + $0x48] sm:$0xf] %vm2149, %v6378
      %6724 = vst.msk [vmem:[#allocation2 + $0x58] sm:$0xf] %vm2149, %v6380
      %6725 = vst.msk [vmem:[#allocation2 + $0x68] sm:$0xf] %vm2149, %v6382
      %6726 = vst.msk [vmem:[#allocation2 + $0x78] sm:$0xf] %vm2149, %v6384
      %6727 = vst.msk [vmem:[#allocation2 + $0x88] sm:$0xf] %vm2149, %v6386
      %6728 = vst.msk [vmem:[#allocation2 + $0x98] sm:$0xf] %vm2149, %v6388
      %6729 = vst.msk [vmem:[#allocation2 + $0xa8] sm:$0xf] %vm2149, %v6390
      %6730 = vst.msk [vmem:[#allocation2 + $0xb8] sm:$0xf] %vm2149, %v6392
      %6731 = vst.msk [vmem:[#allocation2 + $0xc8] sm:$0xf] %vm2149, %v6394
      %6732 = vst.msk [vmem:[#allocation2 + $0xd8] sm:$0xf] %vm2149, %v6396
      %6733 = vst.msk [vmem:[#allocation2 + $0xe8] sm:$0xf] %vm2149, %v6398
      %6734 = vst.msk [vmem:[#allocation2 + $0xf8] sm:$0xf] %vm2149, %v6400
      %6735 = vst.msk [vmem:[#allocation2 + $0x108] sm:$0xf] %vm2149, %v6402
      %6736 = vst.msk [vmem:[#allocation2 + $0x118] sm:$0xf] %vm2149, %v6404
      %6737 = vst.msk [vmem:[#allocation2 + $0x128] sm:$0xf] %vm2149, %v6568
      %6738 = vst.msk [vmem:[#allocation2 + $0x138] sm:$0xf] %vm2149, %v6570
      %6739 = vst.msk [vmem:[#allocation2 + $0x148] sm:$0xf] %vm2149, %v6714
      %6740 = vst.msk [vmem:[#allocation2 + $0x158] sm:$0xf] %vm2149, %v6716
      %v6741 = vpack.c.bf16 %v5709, %v5709
      %6742 = vst.msk [vmem:[#allocation2 + $0xc] sm:$0xf] %vm1443, %v5717
      %6743 = vst.msk [vmem:[#allocation2 + $0x1c] sm:$0xf] %vm1443, %v5718
      %6744 = vst.msk [vmem:[#allocation2 + $0x2c] sm:$0xf] %vm1443, %v5719
      %6745 = vst.msk [vmem:[#allocation2 + $0x3c] sm:$0xf] %vm1443, %v5720
      %6746 = vst.msk [vmem:[#allocation2 + $0x4c] sm:$0xf] %vm1443, %v5721
      %6747 = vst.msk [vmem:[#allocation2 + $0x5c] sm:$0xf] %vm1443, %v5722
      %6748 = vst.msk [vmem:[#allocation2 + $0x6c] sm:$0xf] %vm1443, %v5723
      %6749 = vst.msk [vmem:[#allocation2 + $0x7c] sm:$0xf] %vm1443, %v5724
      %6750 = vst.msk [vmem:[#allocation2 + $0x8c] sm:$0xf] %vm1443, %v5725
      %6751 = vst.msk [vmem:[#allocation2 + $0x9c] sm:$0xf] %vm1443, %v5726
      %6752 = vst.msk [vmem:[#allocation2 + $0xac] sm:$0xf] %vm1443, %v5727
      %6753 = vst.msk [vmem:[#allocation2 + $0xbc] sm:$0xf] %vm1443, %v5728
      %6754 = vst.msk [vmem:[#allocation2 + $0xcc] sm:$0xf] %vm1443, %v5729
      %6755 = vst.msk [vmem:[#allocation2 + $0xdc] sm:$0xf] %vm1443, %v5730
      %6756 = vst.msk [vmem:[#allocation2 + $0xec] sm:$0xf] %vm1443, %v5731
      %6757 = vst.msk [vmem:[#allocation2 + $0xfc] sm:$0xf] %vm1443, %v5732
      %6758 = vst.msk [vmem:[#allocation2 + $0x10c] sm:$0xf] %vm1443, %v5755
      %6759 = vst.msk [vmem:[#allocation2 + $0x11c] sm:$0xf] %vm1443, %v6449
      %6760 = vst.msk [vmem:[#allocation2 + $0x12c] sm:$0xf] %vm1443, %v6472
      %6761 = vst.msk [vmem:[#allocation2 + $0x13c] sm:$0xf] %vm1443, %v6595
      %6762 = vst.msk [vmem:[#allocation2 + $0x14c] sm:$0xf] %vm1443, %v6618
      %6763 = vst.msk [vmem:[#allocation2 + $0x15c] sm:$0xf] %vm1443, %v6741
      %v6764 = vpack.c.bf16 %v5710, %v5710
      %v6765 = vrot.slane %v6707, 4
      %v6766 = vor.u32 %v6765, %v6635
      %v6767 = vrot.slane %v6766, 4
      %v6769 = vshll.u32 %v6741, 16
      %v6771 = vrot.slane %v6769, 5
      %v6772 = vsel %vm1469, %v6767, %v6771
      %v6773 = vshrl.u32 %v6741, 16
      %v6775 = vrot.slane %v6773, 4
      %v6776 = vor.u32 %v6775, %v6771
      %v6777 = vrot.slane %v6776, 4
      %v6779 = vshll.u32 %v6764, 16
      %v6781 = vrot.slane %v6779, 5
      %v6782 = vsel %vm1469, %v6777, %v6781
      %6783 = vrot.lane.b32.xlu0 %v6772, 32
      %v6784 = vpop.permute.xlu0 %6783
      %6785 = vrot.lane.b32.xlu0 %v6782, 32
      %v6786 = vpop.permute.xlu0 %6785
      %6789 = vst.msk [vmem:[#allocation2 + $0xc] sm:$0xf] %vm1760, %v5993
      %6790 = vst.msk [vmem:[#allocation2 + $0x1c] sm:$0xf] %vm1760, %v5995
      %6791 = vst.msk [vmem:[#allocation2 + $0x2c] sm:$0xf] %vm1760, %v5997
      %6792 = vst.msk [vmem:[#allocation2 + $0x3c] sm:$0xf] %vm1760, %v5999
      %6793 = vst.msk [vmem:[#allocation2 + $0x4c] sm:$0xf] %vm1760, %v6001
      %6794 = vst.msk [vmem:[#allocation2 + $0x5c] sm:$0xf] %vm1760, %v6003
      %6795 = vst.msk [vmem:[#allocation2 + $0x6c] sm:$0xf] %vm1760, %v6005
      %6796 = vst.msk [vmem:[#allocation2 + $0x7c] sm:$0xf] %vm1760, %v6007
      %6797 = vst.msk [vmem:[#allocation2 + $0x8c] sm:$0xf] %vm1760, %v6009
      %6798 = vst.msk [vmem:[#allocation2 + $0x9c] sm:$0xf] %vm1760, %v6011
      %6799 = vst.msk [vmem:[#allocation2 + $0xac] sm:$0xf] %vm1760, %v6013
      %6800 = vst.msk [vmem:[#allocation2 + $0xbc] sm:$0xf] %vm1760, %v6015
      %6801 = vst.msk [vmem:[#allocation2 + $0xcc] sm:$0xf] %vm1760, %v6017
      %6802 = vst.msk [vmem:[#allocation2 + $0xdc] sm:$0xf] %vm1760, %v6019
      %6803 = vst.msk [vmem:[#allocation2 + $0xec] sm:$0xf] %vm1760, %v6021
      %6804 = vst.msk [vmem:[#allocation2 + $0xfc] sm:$0xf] %vm1760, %v6023
      %6805 = vst.msk [vmem:[#allocation2 + $0x10c] sm:$0xf] %vm1760, %v6492
      %6806 = vst.msk [vmem:[#allocation2 + $0x11c] sm:$0xf] %vm1760, %v6494
      %6807 = vst.msk [vmem:[#allocation2 + $0x12c] sm:$0xf] %vm1760, %v6638
      %6808 = vst.msk [vmem:[#allocation2 + $0x13c] sm:$0xf] %vm1760, %v6640
      %6809 = vst.msk [vmem:[#allocation2 + $0x14c] sm:$0xf] %vm1760, %v6784
      %6810 = vst.msk [vmem:[#allocation2 + $0x15c] sm:$0xf] %vm1760, %v6786
      %v6813 = vrot.slane %v6671, 4
      %v6814 = vrot.slane %v6741, 5
      %v6815 = vsel %vm1808, %v6813, %v6814
      %v6816 = vrot.slane %v6814, 4
      %v6817 = vrot.slane %v6764, 5
      %v6818 = vsel %vm1808, %v6816, %v6817
      %6819 = vrot.lane.b32.xlu0 %v6815, 64
      %v6820 = vpop.permute.xlu0 %6819
      %6821 = vrot.lane.b32.xlu0 %v6818, 64
      %v6822 = vpop.permute.xlu0 %6821
      %6825 = vst.msk [vmem:[#allocation2 + $0xc] sm:$0xf] %vm1942, %v6171
      %6826 = vst.msk [vmem:[#allocation2 + $0x1c] sm:$0xf] %vm1942, %v6173
      %6827 = vst.msk [vmem:[#allocation2 + $0x2c] sm:$0xf] %vm1942, %v6175
      %6828 = vst.msk [vmem:[#allocation2 + $0x3c] sm:$0xf] %vm1942, %v6177
      %6829 = vst.msk [vmem:[#allocation2 + $0x4c] sm:$0xf] %vm1942, %v6179
      %6830 = vst.msk [vmem:[#allocation2 + $0x5c] sm:$0xf] %vm1942, %v6181
      %6831 = vst.msk [vmem:[#allocation2 + $0x6c] sm:$0xf] %vm1942, %v6183
      %6832 = vst.msk [vmem:[#allocation2 + $0x7c] sm:$0xf] %vm1942, %v6185
      %6833 = vst.msk [vmem:[#allocation2 + $0x8c] sm:$0xf] %vm1942, %v6187
      %6834 = vst.msk [vmem:[#allocation2 + $0x9c] sm:$0xf] %vm1942, %v6189
      %6835 = vst.msk [vmem:[#allocation2 + $0xac] sm:$0xf] %vm1942, %v6191
      %6836 = vst.msk [vmem:[#allocation2 + $0xbc] sm:$0xf] %vm1942, %v6193
      %6837 = vst.msk [vmem:[#allocation2 + $0xcc] sm:$0xf] %vm1942, %v6195
      %6838 = vst.msk [vmem:[#allocation2 + $0xdc] sm:$0xf] %vm1942, %v6197
      %6839 = vst.msk [vmem:[#allocation2 + $0xec] sm:$0xf] %vm1942, %v6199
      %6840 = vst.msk [vmem:[#allocation2 + $0xfc] sm:$0xf] %vm1942, %v6201
      %6841 = vst.msk [vmem:[#allocation2 + $0x10c] sm:$0xf] %vm1942, %v6528
      %6842 = vst.msk [vmem:[#allocation2 + $0x11c] sm:$0xf] %vm1942, %v6530
      %6843 = vst.msk [vmem:[#allocation2 + $0x12c] sm:$0xf] %vm1942, %v6674
      %6844 = vst.msk [vmem:[#allocation2 + $0x13c] sm:$0xf] %vm1942, %v6676
      %6845 = vst.msk [vmem:[#allocation2 + $0x14c] sm:$0xf] %vm1942, %v6820
      %6846 = vst.msk [vmem:[#allocation2 + $0x15c] sm:$0xf] %vm1942, %v6822
      %v6847 = vrot.slane %v6711, 4
      %v6848 = vrot.slane %v6773, 5
      %v6849 = vrot.slane %v6769, 6
      %v6850 = vor.u32 %v6848, %v6849
      %v6851 = vsel %vm1967, %v6847, %v6850
      %v6852 = vrot.slane %v6850, 4
      %v6853 = vshrl.u32 %v6764, 16
      %v6855 = vrot.slane %v6853, 5
      %v6856 = vrot.slane %v6779, 6
      %v6857 = vor.u32 %v6855, %v6856
      %v6858 = vsel %vm1967, %v6852, %v6857
      %6859 = vrot.lane.b32.xlu0 %v6851, 96
      %v6860 = vpop.permute.xlu0 %6859
      %6861 = vrot.lane.b32.xlu0 %v6858, 96
      %v6862 = vpop.permute.xlu0 %6861
      %6865 = vst.msk [vmem:[#allocation2 + $0xc] sm:$0xf] %vm2149, %v6374
      %6866 = vst.msk [vmem:[#allocation2 + $0x1c] sm:$0xf] %vm2149, %v6376
      %6867 = vst.msk [vmem:[#allocation2 + $0x2c] sm:$0xf] %vm2149, %v6378
      %6868 = vst.msk [vmem:[#allocation2 + $0x3c] sm:$0xf] %vm2149, %v6380
      %6869 = vst.msk [vmem:[#allocation2 + $0x4c] sm:$0xf] %vm2149, %v6382
      %6870 = vst.msk [vmem:[#allocation2 + $0x5c] sm:$0xf] %vm2149, %v6384
      %6871 = vst.msk [vmem:[#allocation2 + $0x6c] sm:$0xf] %vm2149, %v6386
      %6872 = vst.msk [vmem:[#allocation2 + $0x7c] sm:$0xf] %vm2149, %v6388
      %6873 = vst.msk [vmem:[#allocation2 + $0x8c] sm:$0xf] %vm2149, %v6390
      %6874 = vst.msk [vmem:[#allocation2 + $0x9c] sm:$0xf] %vm2149, %v6392
      %6875 = vst.msk [vmem:[#allocation2 + $0xac] sm:$0xf] %vm2149, %v6394
      %6876 = vst.msk [vmem:[#allocation2 + $0xbc] sm:$0xf] %vm2149, %v6396
      %6877 = vst.msk [vmem:[#allocation2 + $0xcc] sm:$0xf] %vm2149, %v6398
      %6878 = vst.msk [vmem:[#allocation2 + $0xdc] sm:$0xf] %vm2149, %v6400
      %6879 = vst.msk [vmem:[#allocation2 + $0xec] sm:$0xf] %vm2149, %v6402
      %6880 = vst.msk [vmem:[#allocation2 + $0xfc] sm:$0xf] %vm2149, %v6404
      %6881 = vst.msk [vmem:[#allocation2 + $0x10c] sm:$0xf] %vm2149, %v6568
      %6882 = vst.msk [vmem:[#allocation2 + $0x11c] sm:$0xf] %vm2149, %v6570
      %6883 = vst.msk [vmem:[#allocation2 + $0x12c] sm:$0xf] %vm2149, %v6714
      %6884 = vst.msk [vmem:[#allocation2 + $0x13c] sm:$0xf] %vm2149, %v6716
      %6885 = vst.msk [vmem:[#allocation2 + $0x14c] sm:$0xf] %vm2149, %v6860
      %6886 = vst.msk [vmem:[#allocation2 + $0x15c] sm:$0xf] %vm2149, %v6862
      %v6887 = vld [vmem:[#allocation2] sm:$0xff]
      %v6888 = vld [vmem:[#allocation2 + $0x8] sm:$0xff]
      %v6889 = vld [vmem:[#allocation2 + $0x10] sm:$0xff]
      %v6890 = vld [vmem:[#allocation2 + $0x18] sm:$0xff]
      %v6891 = vld [vmem:[#allocation2 + $0x20] sm:$0xff]
      %v6892 = vld [vmem:[#allocation2 + $0x28] sm:$0xff]
      %v6893 = vld [vmem:[#allocation2 + $0x30] sm:$0xff]
      %v6894 = vld [vmem:[#allocation2 + $0x38] sm:$0xff]
      %v6895 = vld [vmem:[#allocation2 + $0x40] sm:$0xff]
      %v6896 = vld [vmem:[#allocation2 + $0x48] sm:$0xff]
      %v6897 = vld [vmem:[#allocation2 + $0x50] sm:$0xff]
      %v6898 = vld [vmem:[#allocation2 + $0x58] sm:$0xff]
      %v6899 = vld [vmem:[#allocation2 + $0x60] sm:$0xff]
      %v6900 = vld [vmem:[#allocation2 + $0x68] sm:$0xff]
      %v6901 = vld [vmem:[#allocation2 + $0x70] sm:$0xff]
      %v6902 = vld [vmem:[#allocation2 + $0x78] sm:$0xff]
      %v6903 = vld [vmem:[#allocation2 + $0x80] sm:$0xff]
      %v6904 = vld [vmem:[#allocation2 + $0x88] sm:$0xff]
      %v6905 = vld [vmem:[#allocation2 + $0x90] sm:$0xff]
      %v6906 = vld [vmem:[#allocation2 + $0x98] sm:$0xff]
      %v6907 = vld [vmem:[#allocation2 + $0xa0] sm:$0xff]
      %v6908 = vld [vmem:[#allocation2 + $0xa8] sm:$0xff]
      %v6909 = vld [vmem:[#allocation2 + $0xb0] sm:$0xff]
      %v6910 = vld [vmem:[#allocation2 + $0xb8] sm:$0xff]
      %v6911 = vld [vmem:[#allocation2 + $0xc0] sm:$0xff]
      %v6912 = vld [vmem:[#allocation2 + $0xc8] sm:$0xff]
      %v6913 = vld [vmem:[#allocation2 + $0xd0] sm:$0xff]
      %v6914 = vld [vmem:[#allocation2 + $0xd8] sm:$0xff]
      %v6915 = vld [vmem:[#allocation2 + $0xe0] sm:$0xff]
      %v6916 = vld [vmem:[#allocation2 + $0xe8] sm:$0xff]
      %v6917 = vld [vmem:[#allocation2 + $0xf0] sm:$0xff]
      %v6918 = vld [vmem:[#allocation2 + $0xf8] sm:$0xff]
      %v6919 = vld [vmem:[#allocation2 + $0x100] sm:$0xff]
      %v6920 = vld [vmem:[#allocation2 + $0x108] sm:$0xff]
      %v6921 = vld [vmem:[#allocation2 + $0x110] sm:$0xff]
      %v6922 = vld [vmem:[#allocation2 + $0x118] sm:$0xff]
      %v6923 = vld [vmem:[#allocation2 + $0x120] sm:$0xff]
      %v6924 = vld [vmem:[#allocation2 + $0x128] sm:$0xff]
      %v6925 = vld [vmem:[#allocation2 + $0x130] sm:$0xff]
      %v6926 = vld [vmem:[#allocation2 + $0x138] sm:$0xff]
      %v6927 = vld [vmem:[#allocation2 + $0x140] sm:$0xff]
      %v6928 = vld [vmem:[#allocation2 + $0x148] sm:$0xff]
      %v6929 = vld [vmem:[#allocation2 + $0x150] sm:$0xff]
      %v6930 = vld [vmem:[#allocation2 + $0x158] sm:$0xff]
      %v6931 = vld [vmem:[%s3] sm:$0xf]
      %v6932 = vld [vmem:[%s3 + $0x4] sm:$0xf]
      %v6933 = vld [vmem:[%s3 + $0x8] sm:$0xf]
      %v6934 = vld [vmem:[%s3 + $0xc] sm:$0xf]
      %v6935 = vld [vmem:[%s3 + $0x10] sm:$0xf]
      %v6936 = vld [vmem:[%s3 + $0x14] sm:$0xf]
      %v6937 = vld [vmem:[%s3 + $0x18] sm:$0xf]
      %v6938 = vld [vmem:[%s3 + $0x1c] sm:$0xf]
      %v6939 = vld [vmem:[%s3 + $0x20] sm:$0xf]
      %v6940 = vld [vmem:[%s3 + $0x24] sm:$0xf]
      %v6941 = vld [vmem:[%s3 + $0x28] sm:$0xf]
      %v6942 = vld [vmem:[%s3 + $0x2c] sm:$0xf]
      %v6943 = vld [vmem:[%s3 + $0x30] sm:$0xf]
      %v6944 = vld [vmem:[%s3 + $0x34] sm:$0xf]
      %v6945 = vld [vmem:[%s3 + $0x38] sm:$0xf]
      %v6946 = vld [vmem:[%s3 + $0x3c] sm:$0xf]
      %v6947 = vld [vmem:[%s3 + $0x40] sm:$0xf]
      %v6948 = vld [vmem:[%s3 + $0x44] sm:$0xf]
      %v6949 = vld [vmem:[%s3 + $0x48] sm:$0xf]
      %v6950 = vld [vmem:[%s3 + $0x4c] sm:$0xf]
      %v6951 = vld [vmem:[%s3 + $0x50] sm:$0xf]
      %v6952 = vld [vmem:[%s3 + $0x54] sm:$0xf]
      %v6953 = vld [vmem:[%s3 + $0x58] sm:$0xf]
      %v6954 = vld [vmem:[%s3 + $0x5c] sm:$0xf]
      %v6955 = vld [vmem:[%s3 + $0x60] sm:$0xf]
      %v6956 = vld [vmem:[%s3 + $0x64] sm:$0xf]
      %v6957 = vld [vmem:[%s3 + $0x68] sm:$0xf]
      %v6958 = vld [vmem:[%s3 + $0x6c] sm:$0xf]
      %v6959 = vld [vmem:[%s3 + $0x70] sm:$0xf]
      %v6960 = vld [vmem:[%s3 + $0x74] sm:$0xf]
      %v6961 = vld [vmem:[%s3 + $0x78] sm:$0xf]
      %v6962 = vld [vmem:[%s3 + $0x7c] sm:$0xf]
      %v6963 = vld [vmem:[%s3 + $0x80] sm:$0xf]
      %v6964 = vld [vmem:[%s3 + $0x84] sm:$0xf]
      %v6965 = vld [vmem:[%s3 + $0x88] sm:$0xf]
      %v6966 = vld [vmem:[%s3 + $0x8c] sm:$0xf]
      %v6967 = vld [vmem:[%s3 + $0x90] sm:$0xf]
      %v6968 = vld [vmem:[%s3 + $0x94] sm:$0xf]
      %v6969 = vld [vmem:[%s3 + $0x98] sm:$0xf]
      %v6970 = vld [vmem:[%s3 + $0x9c] sm:$0xf]
      %v6971 = vld [vmem:[%s3 + $0xa0] sm:$0xf]
      %v6972 = vld [vmem:[%s3 + $0xa4] sm:$0xf]
      %v6973 = vld [vmem:[%s3 + $0xa8] sm:$0xf]
      %v6974 = vld [vmem:[%s3 + $0xac] sm:$0xf]
      %v6975 = vld [vmem:[%s3 + $0xb0] sm:$0xf]
      %v6976 = vld [vmem:[%s3 + $0xb4] sm:$0xf]
      %v6977 = vld [vmem:[%s3 + $0xb8] sm:$0xf]
      %v6978 = vld [vmem:[%s3 + $0xbc] sm:$0xf]
      %v6979 = vld [vmem:[%s3 + $0xc0] sm:$0xf]
      %v6980 = vld [vmem:[%s3 + $0xc4] sm:$0xf]
      %v6981 = vld [vmem:[%s3 + $0xc8] sm:$0xf]
      %v6982 = vld [vmem:[%s3 + $0xcc] sm:$0xf]
      %v6983 = vld [vmem:[%s3 + $0xd0] sm:$0xf]
      %v6984 = vld [vmem:[%s3 + $0xd4] sm:$0xf]
      %v6985 = vld [vmem:[%s3 + $0xd8] sm:$0xf]
      %v6986 = vld [vmem:[%s3 + $0xdc] sm:$0xf]
      %v6987 = vld [vmem:[%s3 + $0xe0] sm:$0xf]
      %v6988 = vld [vmem:[%s3 + $0xe4] sm:$0xf]
      %v6989 = vld [vmem:[%s3 + $0xe8] sm:$0xf]
      %v6990 = vld [vmem:[%s3 + $0xec] sm:$0xf]
      %v6991 = vld [vmem:[%s3 + $0xf0] sm:$0xf]
      %v6992 = vld [vmem:[%s3 + $0xf4] sm:$0xf]
      %v6993 = vld [vmem:[%s3 + $0xf8] sm:$0xf]
      %v6994 = vld [vmem:[%s3 + $0xfc] sm:$0xf]
      %v6995 = vld [vmem:[%s4] sm:$0x1]
      %v6997 = vperm.slane %v6995, 0
      %v7043 = vunpack.c.l.b16 %v6887
      %v7044 = vunpack.c.h.b16 %v6887
      %v7045 = vunpack.c.l.b16 %v6888
      %v7046 = vunpack.c.h.b16 %v6888
      %v7047 = vunpack.c.l.b16 %v6889
      %v7048 = vunpack.c.h.b16 %v6889
      %v7049 = vunpack.c.l.b16 %v6890
      %v7050 = vunpack.c.h.b16 %v6890
      %v7051 = vunpack.c.l.b16 %v6891
      %v7052 = vunpack.c.h.b16 %v6891
      %v7053 = vunpack.c.l.b16 %v6892
      %v7054 = vunpack.c.h.b16 %v6892
      %v7055 = vunpack.c.l.b16 %v6893
      %v7056 = vunpack.c.h.b16 %v6893
      %v7057 = vunpack.c.l.b16 %v6894
      %v7058 = vunpack.c.h.b16 %v6894
      %v7059 = vunpack.c.l.b16 %v6895
      %v7060 = vunpack.c.h.b16 %v6895
      %v7061 = vunpack.c.l.b16 %v6896
      %v7062 = vunpack.c.h.b16 %v6896
      %v7063 = vunpack.c.l.b16 %v6897
      %v7064 = vunpack.c.h.b16 %v6897
      %v7065 = vunpack.c.l.b16 %v6898
      %v7066 = vunpack.c.h.b16 %v6898
      %v7067 = vunpack.c.l.b16 %v6899
      %v7068 = vunpack.c.h.b16 %v6899
      %v7069 = vunpack.c.l.b16 %v6900
      %v7070 = vunpack.c.h.b16 %v6900
      %v7071 = vunpack.c.l.b16 %v6901
      %v7072 = vunpack.c.h.b16 %v6901
      %v7073 = vunpack.c.l.b16 %v6902
      %v7074 = vunpack.c.h.b16 %v6902
      %v7075 = vunpack.c.l.b16 %v6903
      %v7076 = vunpack.c.h.b16 %v6903
      %v7077 = vunpack.c.l.b16 %v6904
      %v7078 = vunpack.c.h.b16 %v6904
      %v7079 = vunpack.c.l.b16 %v6905
      %v7080 = vunpack.c.h.b16 %v6905
      %v7081 = vunpack.c.l.b16 %v6906
      %v7082 = vunpack.c.h.b16 %v6906
      %v7083 = vunpack.c.l.b16 %v6907
      %v7084 = vunpack.c.h.b16 %v6907
      %v7085 = vunpack.c.l.b16 %v6908
      %v7086 = vunpack.c.h.b16 %v6908
      %v7087 = vunpack.c.l.b16 %v6909
      %v7088 = vunpack.c.h.b16 %v6909
      %v7089 = vunpack.c.l.b16 %v6910
      %v7090 = vunpack.c.h.b16 %v6910
      %v7091 = vunpack.c.l.b16 %v6911
      %v7092 = vunpack.c.h.b16 %v6911
      %v7093 = vunpack.c.l.b16 %v6912
      %v7094 = vunpack.c.h.b16 %v6912
      %v7095 = vunpack.c.l.b16 %v6913
      %v7096 = vunpack.c.h.b16 %v6913
      %v7097 = vunpack.c.l.b16 %v6914
      %v7098 = vunpack.c.h.b16 %v6914
      %v7099 = vunpack.c.l.b16 %v6915
      %v7100 = vunpack.c.h.b16 %v6915
      %v7101 = vunpack.c.l.b16 %v6916
      %v7102 = vunpack.c.h.b16 %v6916
      %v7103 = vunpack.c.l.b16 %v6917
      %v7104 = vunpack.c.h.b16 %v6917
      %v7105 = vunpack.c.l.b16 %v6918
      %v7106 = vunpack.c.h.b16 %v6918
      %v7107 = vunpack.c.l.b16 %v6919
      %v7108 = vunpack.c.h.b16 %v6919
      %v7109 = vunpack.c.l.b16 %v6920
      %v7110 = vunpack.c.h.b16 %v6920
      %v7111 = vunpack.c.l.b16 %v6921
      %v7112 = vunpack.c.h.b16 %v6921
      %v7113 = vunpack.c.l.b16 %v6922
      %v7114 = vunpack.c.h.b16 %v6922
      %v7115 = vunpack.c.l.b16 %v6923
      %v7116 = vunpack.c.h.b16 %v6923
      %v7117 = vunpack.c.l.b16 %v6924
      %v7118 = vunpack.c.h.b16 %v6924
      %v7119 = vunpack.c.l.b16 %v6925
      %v7120 = vunpack.c.h.b16 %v6925
      %v7121 = vunpack.c.l.b16 %v6926
      %v7122 = vunpack.c.h.b16 %v6926
      %v7123 = vunpack.c.l.b16 %v6927
      %v7124 = vunpack.c.h.b16 %v6927
      %v7125 = vunpack.c.l.b16 %v6928
      %v7126 = vunpack.c.h.b16 %v6928
      %v7127 = vunpack.c.l.b16 %v6929
      %v7128 = vunpack.c.h.b16 %v6929
      %v7129 = vunpack.c.l.b16 %v6930
      %v7130 = vunpack.c.h.b16 %v6930
      %v7131 = vpack.c.b16 %v7047, %v7043
      %v7132 = vpack.c.b16 %v7048, %v7044
      %v7133 = vpack.c.b16 %v7049, %v7045
      %v7134 = vpack.c.b16 %v7050, %v7046
      %v7135 = vpack.c.b16 %v7055, %v7051
      %v7136 = vpack.c.b16 %v7056, %v7052
      %v7137 = vpack.c.b16 %v7057, %v7053
      %v7138 = vpack.c.b16 %v7058, %v7054
      %v7139 = vpack.c.b16 %v7063, %v7059
      %v7140 = vpack.c.b16 %v7064, %v7060
      %v7141 = vpack.c.b16 %v7065, %v7061
      %v7142 = vpack.c.b16 %v7066, %v7062
      %v7143 = vpack.c.b16 %v7071, %v7067
      %v7144 = vpack.c.b16 %v7072, %v7068
      %v7145 = vpack.c.b16 %v7073, %v7069
      %v7146 = vpack.c.b16 %v7074, %v7070
      %v7147 = vpack.c.b16 %v7079, %v7075
      %v7148 = vpack.c.b16 %v7080, %v7076
      %v7149 = vpack.c.b16 %v7081, %v7077
      %v7150 = vpack.c.b16 %v7082, %v7078
      %v7151 = vpack.c.b16 %v7087, %v7083
      %v7152 = vpack.c.b16 %v7088, %v7084
      %v7153 = vpack.c.b16 %v7089, %v7085
      %v7154 = vpack.c.b16 %v7090, %v7086
      %v7155 = vpack.c.b16 %v7095, %v7091
      %v7156 = vpack.c.b16 %v7096, %v7092
      %v7157 = vpack.c.b16 %v7097, %v7093
      %v7158 = vpack.c.b16 %v7098, %v7094
      %v7159 = vpack.c.b16 %v7103, %v7099
      %v7160 = vpack.c.b16 %v7104, %v7100
      %v7161 = vpack.c.b16 %v7105, %v7101
      %v7162 = vpack.c.b16 %v7106, %v7102
      %v7163 = vpack.c.b16 %v7111, %v7107
      %v7164 = vpack.c.b16 %v7112, %v7108
      %v7165 = vpack.c.b16 %v7113, %v7109
      %v7166 = vpack.c.b16 %v7114, %v7110
      %v7167 = vpack.c.b16 %v7119, %v7115
      %v7168 = vpack.c.b16 %v7120, %v7116
      %v7169 = vpack.c.b16 %v7121, %v7117
      %v7170 = vpack.c.b16 %v7122, %v7118
      %v7171 = vpack.c.b16 %v7127, %v7123
      %v7172 = vpack.c.b16 %v7128, %v7124
      %v7173 = vpack.c.b16 %v7129, %v7125
      %v7174 = vpack.c.b16 %v7130, %v7126
      %v7283 = vunpack.c.l.b16 %v6931
      %v7284 = vunpack.c.l.b16 %v6932
      %v7285 = vunpack.c.l.b16 %v6933
      %v7286 = vunpack.c.l.b16 %v6934
      %v7287 = vunpack.c.l.b16 %v6935
      %v7288 = vunpack.c.l.b16 %v6936
      %v7289 = vunpack.c.l.b16 %v6937
      %v7290 = vunpack.c.l.b16 %v6938
      %v7291 = vunpack.c.l.b16 %v6939
      %v7292 = vunpack.c.l.b16 %v6940
      %v7293 = vunpack.c.l.b16 %v6941
      %v7294 = vunpack.c.l.b16 %v6942
      %v7295 = vunpack.c.l.b16 %v6943
      %v7296 = vunpack.c.l.b16 %v6944
      %v7297 = vunpack.c.l.b16 %v6945
      %v7298 = vunpack.c.l.b16 %v6946
      %v7299 = vunpack.c.l.b16 %v6947
      %v7300 = vunpack.c.l.b16 %v6948
      %v7301 = vunpack.c.l.b16 %v6949
      %v7302 = vunpack.c.l.b16 %v6950
      %v7303 = vunpack.c.l.b16 %v6951
      %v7304 = vunpack.c.l.b16 %v6952
      %v7305 = vunpack.c.l.b16 %v6953
      %v7306 = vunpack.c.l.b16 %v6954
      %v7307 = vunpack.c.l.b16 %v6955
      %v7308 = vunpack.c.l.b16 %v6956
      %v7309 = vunpack.c.l.b16 %v6957
      %v7310 = vunpack.c.l.b16 %v6958
      %v7311 = vunpack.c.l.b16 %v6959
      %v7312 = vunpack.c.l.b16 %v6960
      %v7313 = vunpack.c.l.b16 %v6961
      %v7314 = vunpack.c.l.b16 %v6962
      %v7315 = vunpack.c.l.b16 %v6963
      %v7316 = vunpack.c.l.b16 %v6964
      %v7317 = vunpack.c.l.b16 %v6965
      %v7318 = vunpack.c.l.b16 %v6966
      %v7319 = vunpack.c.l.b16 %v6967
      %v7320 = vunpack.c.l.b16 %v6968
      %v7321 = vunpack.c.l.b16 %v6969
      %v7322 = vunpack.c.l.b16 %v6970
      %v7323 = vunpack.c.l.b16 %v6971
      %v7324 = vunpack.c.l.b16 %v6972
      %v7325 = vunpack.c.l.b16 %v6973
      %v7326 = vunpack.c.l.b16 %v6974
      %v7327 = vunpack.c.l.b16 %v6975
      %v7328 = vunpack.c.l.b16 %v6976
      %v7329 = vunpack.c.l.b16 %v6977
      %v7330 = vunpack.c.l.b16 %v6978
      %v7331 = vunpack.c.l.b16 %v6979
      %v7332 = vunpack.c.l.b16 %v6980
      %v7333 = vunpack.c.l.b16 %v6981
      %v7334 = vunpack.c.l.b16 %v6982
      %v7335 = vunpack.c.l.b16 %v6983
      %v7336 = vunpack.c.l.b16 %v6984
      %v7337 = vunpack.c.l.b16 %v6985
      %v7338 = vunpack.c.l.b16 %v6986
      %v7339 = vunpack.c.l.b16 %v6987
      %v7340 = vunpack.c.l.b16 %v6988
      %v7341 = vunpack.c.l.b16 %v6989
      %v7342 = vunpack.c.l.b16 %v6990
      %v7343 = vunpack.c.l.b16 %v6991
      %v7344 = vunpack.c.l.b16 %v6992
      %v7345 = vunpack.c.l.b16 %v6993
      %v7346 = vunpack.c.l.b16 %v6994
      %v7347 = vpack.c.b16 %v7284, %v7283
      %v7348 = vpack.c.b16 %v7286, %v7285
      %v7349 = vpack.c.b16 %v7288, %v7287
      %v7350 = vpack.c.b16 %v7290, %v7289
      %v7351 = vpack.c.b16 %v7292, %v7291
      %v7352 = vpack.c.b16 %v7294, %v7293
      %v7353 = vpack.c.b16 %v7296, %v7295
      %v7354 = vpack.c.b16 %v7298, %v7297
      %v7355 = vpack.c.b16 %v7300, %v7299
      %v7356 = vpack.c.b16 %v7302, %v7301
      %v7357 = vpack.c.b16 %v7304, %v7303
      %v7358 = vpack.c.b16 %v7306, %v7305
      %v7359 = vpack.c.b16 %v7308, %v7307
      %v7360 = vpack.c.b16 %v7310, %v7309
      %v7361 = vpack.c.b16 %v7312, %v7311
      %v7362 = vpack.c.b16 %v7314, %v7313
      %v7363 = vpack.c.b16 %v7316, %v7315
      %v7364 = vpack.c.b16 %v7318, %v7317
      %v7365 = vpack.c.b16 %v7320, %v7319
      %v7366 = vpack.c.b16 %v7322, %v7321
      %v7367 = vpack.c.b16 %v7324, %v7323
      %v7368 = vpack.c.b16 %v7326, %v7325
      %v7369 = vpack.c.b16 %v7328, %v7327
      %v7370 = vpack.c.b16 %v7330, %v7329
      %v7371 = vpack.c.b16 %v7332, %v7331
      %v7372 = vpack.c.b16 %v7334, %v7333
      %v7373 = vpack.c.b16 %v7336, %v7335
      %v7374 = vpack.c.b16 %v7338, %v7337
      %v7375 = vpack.c.b16 %v7340, %v7339
      %v7376 = vpack.c.b16 %v7342, %v7341
      %v7377 = vpack.c.b16 %v7344, %v7343
      %v7378 = vpack.c.b16 %v7346, %v7345
      %7411 = vmatpush.bf16.msra.mxu0 %v7354
      %7412 = vmatpush.bf16.msra.mxu0 %v7353
      %7413 = vmatpush.bf16.msra.mxu0 %v7352
      %7414 = vmatpush.bf16.msra.mxu0 %v7351
      %7415 = vmatpush.bf16.msra.mxu0 %v7350
      %7416 = vmatpush.bf16.msra.mxu0 %v7349
      %7417 = vmatpush.bf16.msra.mxu0 %v7348
      %7418 = vmatpush.bf16.msra.mxu0 %v7347
      %7419 = vmatmul.bf16.gmra.mxu0 %v7131
      %v7420 = vpop.f32.mrf.mxu0
      %v7421 = vadd.f32 %v6997, %v7420
      %v7422 = vpop.f32.mrf.mxu0
      %v7423 = vadd.f32 %v6997, %v7422
      %7424 = vmatmul.bf16.gmra.mxu0 %v7135
      %v7425 = vpop.f32.mrf.mxu0
      %v7426 = vadd.f32 %v6997, %v7425
      %v7427 = vpop.f32.mrf.mxu0
      %v7428 = vadd.f32 %v6997, %v7427
      %7429 = vmatmul.bf16.gmra.mxu0 %v7139
      %v7430 = vpop.f32.mrf.mxu0
      %v7431 = vadd.f32 %v6997, %v7430
      %v7432 = vpop.f32.mrf.mxu0
      %v7433 = vadd.f32 %v6997, %v7432
      %7434 = vmatmul.bf16.gmra.mxu0 %v7143
      %v7435 = vpop.f32.mrf.mxu0
      %v7436 = vadd.f32 %v6997, %v7435
      %v7437 = vpop.f32.mrf.mxu0
      %v7438 = vadd.f32 %v6997, %v7437
      %7439 = vmatmul.bf16.gmra.mxu0 %v7147
      %v7440 = vpop.f32.mrf.mxu0
      %v7441 = vadd.f32 %v6997, %v7440
      %v7442 = vpop.f32.mrf.mxu0
      %v7443 = vadd.f32 %v6997, %v7442
      %7444 = vmatmul.bf16.gmra.mxu0 %v7151
      %v7445 = vpop.f32.mrf.mxu0
      %v7446 = vadd.f32 %v6997, %v7445
      %v7447 = vpop.f32.mrf.mxu0
      %v7448 = vadd.f32 %v6997, %v7447
      %7449 = vmatmul.bf16.gmra.mxu0 %v7155
      %v7450 = vpop.f32.mrf.mxu0
      %v7451 = vadd.f32 %v6997, %v7450
      %v7452 = vpop.f32.mrf.mxu0
      %v7453 = vadd.f32 %v6997, %v7452
      %7454 = vmatmul.bf16.gmra.mxu0 %v7159
      %v7455 = vpop.f32.mrf.mxu0
      %v7456 = vadd.f32 %v6997, %v7455
      %v7457 = vpop.f32.mrf.mxu0
      %v7458 = vadd.f32 %v6997, %v7457
      %7459 = vmatmul.bf16.gmra.mxu0 %v7163
      %v7460 = vpop.f32.mrf.mxu0
      %v7461 = vadd.f32 %v6997, %v7460
      %v7462 = vpop.f32.mrf.mxu0
      %v7463 = vadd.f32 %v6997, %v7462
      %7464 = vmatmul.bf16.gmra.mxu0 %v7167
      %v7465 = vpop.f32.mrf.mxu0
      %v7466 = vpop.f32.mrf.mxu0
      %7467 = vmatmul.bf16.gmra.mxu0 %v7171
      %v7468 = vpop.f32.mrf.mxu0
      %v7469 = vpop.f32.mrf.mxu0
      %7470 = vdwg.mxu0
      %7471 = vmatpush.bf16.msra.mxu0 %v7362
      %7472 = vmatpush.bf16.msra.mxu0 %v7361
      %7473 = vmatpush.bf16.msra.mxu0 %v7360
      %7474 = vmatpush.bf16.msra.mxu0 %v7359
      %7475 = vmatpush.bf16.msra.mxu0 %v7358
      %7476 = vmatpush.bf16.msra.mxu0 %v7357
      %7477 = vmatpush.bf16.msra.mxu0 %v7356
      %7478 = vmatpush.bf16.msra.mxu0 %v7355
      %7479 = vmatmul.bf16.gmra.mxu0 %v7132
      %v7480 = vpop.f32.mrf.mxu0
      %v7481 = vadd.f32 %v7421, %v7480
      %v7482 = vpop.f32.mrf.mxu0
      %v7483 = vadd.f32 %v7423, %v7482
      %7484 = vmatmul.bf16.gmra.mxu0 %v7136
      %v7485 = vpop.f32.mrf.mxu0
      %v7486 = vadd.f32 %v7426, %v7485
      %v7487 = vpop.f32.mrf.mxu0
      %v7488 = vadd.f32 %v7428, %v7487
      %7489 = vmatmul.bf16.gmra.mxu0 %v7140
      %v7490 = vpop.f32.mrf.mxu0
      %v7491 = vadd.f32 %v7431, %v7490
      %v7492 = vpop.f32.mrf.mxu0
      %v7493 = vadd.f32 %v7433, %v7492
      %7494 = vmatmul.bf16.gmra.mxu0 %v7144
      %v7495 = vpop.f32.mrf.mxu0
      %v7496 = vadd.f32 %v7436, %v7495
      %v7497 = vpop.f32.mrf.mxu0
      %v7498 = vadd.f32 %v7438, %v7497
      %7499 = vmatmul.bf16.gmra.mxu0 %v7148
      %v7500 = vpop.f32.mrf.mxu0
      %v7501 = vadd.f32 %v7441, %v7500
      %v7502 = vpop.f32.mrf.mxu0
      %v7503 = vadd.f32 %v7443, %v7502
      %7504 = vmatmul.bf16.gmra.mxu0 %v7152
      %v7505 = vpop.f32.mrf.mxu0
      %v7506 = vadd.f32 %v7446, %v7505
      %v7507 = vpop.f32.mrf.mxu0
      %v7508 = vadd.f32 %v7448, %v7507
      %7509 = vmatmul.bf16.gmra.mxu0 %v7156
      %v7510 = vpop.f32.mrf.mxu0
      %v7511 = vadd.f32 %v7451, %v7510
      %v7512 = vpop.f32.mrf.mxu0
      %v7513 = vadd.f32 %v7453, %v7512
      %7514 = vmatmul.bf16.gmra.mxu0 %v7160
      %v7515 = vpop.f32.mrf.mxu0
      %v7516 = vadd.f32 %v7456, %v7515
      %v7517 = vpop.f32.mrf.mxu0
      %v7518 = vadd.f32 %v7458, %v7517
      %7519 = vmatmul.bf16.gmra.mxu0 %v7164
      %v7520 = vpop.f32.mrf.mxu0
      %v7521 = vadd.f32 %v7461, %v7520
      %v7522 = vpop.f32.mrf.mxu0
      %v7523 = vadd.f32 %v7463, %v7522
      %7524 = vmatmul.bf16.gmra.mxu0 %v7168
      %v7525 = vpop.f32.mrf.mxu0
      %v7526 = vpop.f32.mrf.mxu0
      %7527 = vmatmul.bf16.gmra.mxu0 %v7172
      %v7528 = vpop.f32.mrf.mxu0
      %v7529 = vpop.f32.mrf.mxu0
      %7530 = vdwg.mxu0
      %7531 = vmatpush.bf16.msra.mxu0 %v7370
      %7532 = vmatpush.bf16.msra.mxu0 %v7369
      %7533 = vmatpush.bf16.msra.mxu0 %v7368
      %7534 = vmatpush.bf16.msra.mxu0 %v7367
      %7535 = vmatpush.bf16.msra.mxu0 %v7366
      %7536 = vmatpush.bf16.msra.mxu0 %v7365
      %7537 = vmatpush.bf16.msra.mxu0 %v7364
      %7538 = vmatpush.bf16.msra.mxu0 %v7363
      %7539 = vmatmul.bf16.gmra.mxu0 %v7133
      %v7540 = vpop.f32.mrf.mxu0
      %v7541 = vadd.f32 %v7481, %v7540
      %v7542 = vpop.f32.mrf.mxu0
      %v7543 = vadd.f32 %v7483, %v7542
      %7544 = vmatmul.bf16.gmra.mxu0 %v7137
      %v7545 = vpop.f32.mrf.mxu0
      %v7546 = vadd.f32 %v7486, %v7545
      %v7547 = vpop.f32.mrf.mxu0
      %v7548 = vadd.f32 %v7488, %v7547
      %7549 = vmatmul.bf16.gmra.mxu0 %v7141
      %v7550 = vpop.f32.mrf.mxu0
      %v7551 = vadd.f32 %v7491, %v7550
      %v7552 = vpop.f32.mrf.mxu0
      %v7553 = vadd.f32 %v7493, %v7552
      %7554 = vmatmul.bf16.gmra.mxu0 %v7145
      %v7555 = vpop.f32.mrf.mxu0
      %v7556 = vadd.f32 %v7496, %v7555
      %v7557 = vpop.f32.mrf.mxu0
      %v7558 = vadd.f32 %v7498, %v7557
      %7559 = vmatmul.bf16.gmra.mxu0 %v7149
      %v7560 = vpop.f32.mrf.mxu0
      %v7561 = vadd.f32 %v7501, %v7560
      %v7562 = vpop.f32.mrf.mxu0
      %v7563 = vadd.f32 %v7503, %v7562
      %7564 = vmatmul.bf16.gmra.mxu0 %v7153
      %v7565 = vpop.f32.mrf.mxu0
      %v7566 = vadd.f32 %v7506, %v7565
      %v7567 = vpop.f32.mrf.mxu0
      %v7568 = vadd.f32 %v7508, %v7567
      %7569 = vmatmul.bf16.gmra.mxu0 %v7157
      %v7570 = vpop.f32.mrf.mxu0
      %v7571 = vadd.f32 %v7511, %v7570
      %v7572 = vpop.f32.mrf.mxu0
      %v7573 = vadd.f32 %v7513, %v7572
      %7574 = vmatmul.bf16.gmra.mxu0 %v7161
      %v7575 = vpop.f32.mrf.mxu0
      %v7576 = vadd.f32 %v7516, %v7575
      %v7577 = vpop.f32.mrf.mxu0
      %v7578 = vadd.f32 %v7518, %v7577
      %7579 = vmatmul.bf16.gmra.mxu0 %v7165
      %v7580 = vpop.f32.mrf.mxu0
      %v7581 = vadd.f32 %v7521, %v7580
      %v7582 = vpop.f32.mrf.mxu0
      %v7583 = vadd.f32 %v7523, %v7582
      %7584 = vmatmul.bf16.gmra.mxu0 %v7169
      %v7585 = vpop.f32.mrf.mxu0
      %v7586 = vpop.f32.mrf.mxu0
      %7587 = vmatmul.bf16.gmra.mxu0 %v7173
      %v7588 = vpop.f32.mrf.mxu0
      %v7589 = vpop.f32.mrf.mxu0
      %7590 = vdwg.mxu0
      %7591 = vmatpush.bf16.msra.mxu0 %v7378
      %7592 = vmatpush.bf16.msra.mxu0 %v7377
      %7593 = vmatpush.bf16.msra.mxu0 %v7376
      %7594 = vmatpush.bf16.msra.mxu0 %v7375
      %7595 = vmatpush.bf16.msra.mxu0 %v7374
      %7596 = vmatpush.bf16.msra.mxu0 %v7373
      %7597 = vmatpush.bf16.msra.mxu0 %v7372
      %7598 = vmatpush.bf16.msra.mxu0 %v7371
      %7599 = vmatmul.bf16.gmra.mxu0 %v7134
      %v7600 = vpop.f32.mrf.mxu0
      %v7601 = vadd.f32 %v7541, %v7600
      %v7602 = vpop.f32.mrf.mxu0
      %v7603 = vadd.f32 %v7543, %v7602
      %7604 = vmatmul.bf16.gmra.mxu0 %v7138
      %v7605 = vpop.f32.mrf.mxu0
      %v7606 = vadd.f32 %v7546, %v7605
      %v7607 = vpop.f32.mrf.mxu0
      %v7608 = vadd.f32 %v7548, %v7607
      %7609 = vmatmul.bf16.gmra.mxu0 %v7142
      %v7610 = vpop.f32.mrf.mxu0
      %v7611 = vadd.f32 %v7551, %v7610
      %v7612 = vpop.f32.mrf.mxu0
      %v7613 = vadd.f32 %v7553, %v7612
      %7614 = vmatmul.bf16.gmra.mxu0 %v7146
      %v7615 = vpop.f32.mrf.mxu0
      %v7616 = vadd.f32 %v7556, %v7615
      %v7617 = vpop.f32.mrf.mxu0
      %v7618 = vadd.f32 %v7558, %v7617
      %7619 = vmatmul.bf16.gmra.mxu0 %v7150
      %v7620 = vpop.f32.mrf.mxu0
      %v7621 = vadd.f32 %v7561, %v7620
      %v7622 = vpop.f32.mrf.mxu0
      %v7623 = vadd.f32 %v7563, %v7622
      %7624 = vmatmul.bf16.gmra.mxu0 %v7154
      %v7625 = vpop.f32.mrf.mxu0
      %v7626 = vadd.f32 %v7566, %v7625
      %v7627 = vpop.f32.mrf.mxu0
      %v7628 = vadd.f32 %v7568, %v7627
      %7629 = vmatmul.bf16.gmra.mxu0 %v7158
      %v7630 = vpop.f32.mrf.mxu0
      %v7631 = vadd.f32 %v7571, %v7630
      %v7632 = vpop.f32.mrf.mxu0
      %v7633 = vadd.f32 %v7573, %v7632
      %7634 = vmatmul.bf16.gmra.mxu0 %v7162
      %v7635 = vpop.f32.mrf.mxu0
      %v7636 = vadd.f32 %v7576, %v7635
      %v7637 = vpop.f32.mrf.mxu0
      %v7638 = vadd.f32 %v7578, %v7637
      %7639 = vmatmul.bf16.gmra.mxu0 %v7166
      %v7640 = vpop.f32.mrf.mxu0
      %v7641 = vadd.f32 %v7581, %v7640
      %v7642 = vpop.f32.mrf.mxu0
      %v7643 = vadd.f32 %v7583, %v7642
      %7644 = vmatmul.bf16.gmra.mxu0 %v7170
      %v7645 = vpop.f32.mrf.mxu0
      %v7646 = vpop.f32.mrf.mxu0
      %7647 = vmatmul.bf16.gmra.mxu0 %v7174
      %v7648 = vpop.f32.mrf.mxu0
      %v7649 = vpop.f32.mrf.mxu0
      %7650 = vdwg.mxu0
      %vm7651 = vcmp.ge.f32.partialorder %v7601, 0.0
      %vm7652 = vcmp.ge.f32.partialorder %v7603, 0.0
      %vm7653 = vcmp.ge.f32.partialorder %v7606, 0.0
      %vm7654 = vcmp.ge.f32.partialorder %v7608, 0.0
      %vm7655 = vcmp.ge.f32.partialorder %v7611, 0.0
      %vm7656 = vcmp.ge.f32.partialorder %v7613, 0.0
      %vm7657 = vcmp.ge.f32.partialorder %v7616, 0.0
      %vm7658 = vcmp.ge.f32.partialorder %v7618, 0.0
      %vm7659 = vcmp.ge.f32.partialorder %v7621, 0.0
      %vm7660 = vcmp.ge.f32.partialorder %v7623, 0.0
      %vm7661 = vcmp.ge.f32.partialorder %v7626, 0.0
      %vm7662 = vcmp.ge.f32.partialorder %v7628, 0.0
      %vm7663 = vcmp.ge.f32.partialorder %v7631, 0.0
      %vm7664 = vcmp.ge.f32.partialorder %v7633, 0.0
      %vm7665 = vcmp.ge.f32.partialorder %v7636, 0.0
      %vm7666 = vcmp.ge.f32.partialorder %v7638, 0.0
      %vm7667 = vcmp.ge.f32.partialorder %v7641, 0.0
      %vm7668 = vcmp.ge.f32.partialorder %v7643, 0.0
      %v7669 = vmul.f32 %v7601, 0.2
      %v7670 = vmul.f32 %v7603, 0.2
      %v7671 = vmul.f32 %v7606, 0.2
      %v7672 = vmul.f32 %v7608, 0.2
      %v7673 = vmul.f32 %v7611, 0.2
      %v7674 = vmul.f32 %v7613, 0.2
      %v7675 = vmul.f32 %v7616, 0.2
      %v7676 = vmul.f32 %v7618, 0.2
      %v7677 = vmul.f32 %v7621, 0.2
      %v7678 = vmul.f32 %v7623, 0.2
      %v7679 = vmul.f32 %v7626, 0.2
      %v7680 = vmul.f32 %v7628, 0.2
      %v7681 = vmul.f32 %v7631, 0.2
      %v7682 = vmul.f32 %v7633, 0.2
      %v7683 = vmul.f32 %v7636, 0.2
      %v7684 = vmul.f32 %v7638, 0.2
      %v7685 = vmul.f32 %v7641, 0.2
      %v7686 = vmul.f32 %v7643, 0.2
      %v7687 = vsel %vm7651, %v7601, %v7669
      %v7688 = vsel %vm7652, %v7603, %v7670
      %v7689 = vsel %vm7653, %v7606, %v7671
      %v7690 = vsel %vm7654, %v7608, %v7672
      %v7691 = vsel %vm7655, %v7611, %v7673
      %v7692 = vsel %vm7656, %v7613, %v7674
      %v7693 = vsel %vm7657, %v7616, %v7675
      %v7694 = vsel %vm7658, %v7618, %v7676
      %v7695 = vsel %vm7659, %v7621, %v7677
      %v7696 = vsel %vm7660, %v7623, %v7678
      %v7697 = vsel %vm7661, %v7626, %v7679
      %v7698 = vsel %vm7662, %v7628, %v7680
      %v7699 = vsel %vm7663, %v7631, %v7681
      %v7700 = vsel %vm7664, %v7633, %v7682
      %v7701 = vsel %vm7665, %v7636, %v7683
      %v7702 = vsel %vm7666, %v7638, %v7684
      %v7703 = vsel %vm7667, %v7641, %v7685
      %v7704 = vsel %vm7668, %v7643, %v7686
      %v7705 = vpack.c.bf16 %v7687, %v7687
      %v7706 = vpack.c.bf16 %v7688, %v7688
      %v7707 = vpack.c.bf16 %v7689, %v7689
      %v7708 = vpack.c.bf16 %v7690, %v7690
      %v7709 = vpack.c.bf16 %v7691, %v7691
      %v7710 = vpack.c.bf16 %v7692, %v7692
      %v7711 = vpack.c.bf16 %v7693, %v7693
      %v7712 = vpack.c.bf16 %v7694, %v7694
      %v7713 = vpack.c.bf16 %v7695, %v7695
      %7714 = vst.msk [vmem:[#allocation3] sm:$0xf] %vm3437, %v7705
      %7715 = vst.msk [vmem:[#allocation3 + $0x14] sm:$0xf] %vm3437, %v7706
      %7716 = vst.msk [vmem:[#allocation3 + $0x28] sm:$0xf] %vm3437, %v7707
      %7717 = vst.msk [vmem:[#allocation3 + $0x3c] sm:$0xf] %vm3437, %v7708
      %7718 = vst.msk [vmem:[#allocation3 + $0x50] sm:$0xf] %vm3437, %v7709
      %7719 = vst.msk [vmem:[#allocation3 + $0x64] sm:$0xf] %vm3437, %v7710
      %7720 = vst.msk [vmem:[#allocation3 + $0x78] sm:$0xf] %vm3437, %v7711
      %7721 = vst.msk [vmem:[#allocation3 + $0x8c] sm:$0xf] %vm3437, %v7712
      %7722 = vst.msk [vmem:[#allocation3 + $0xa0] sm:$0xf] %vm3437, %v7713
      %v7723 = vpack.c.bf16 %v7696, %v7696
      %v7734 = vrot.slane %v7705, 5
      %v7735 = vrot.slane %v7734, 4
      %v7736 = vrot.slane %v7706, 5
      %v7737 = vsel %vm1808, %v7735, %v7736
      %v7738 = vrot.slane %v7736, 4
      %v7739 = vrot.slane %v7707, 5
      %v7740 = vsel %vm1808, %v7738, %v7739
      %v7741 = vrot.slane %v7739, 4
      %v7742 = vrot.slane %v7708, 5
      %v7743 = vsel %vm1808, %v7741, %v7742
      %v7744 = vrot.slane %v7742, 4
      %v7745 = vrot.slane %v7709, 5
      %v7746 = vsel %vm1808, %v7744, %v7745
      %v7747 = vrot.slane %v7745, 4
      %v7748 = vrot.slane %v7710, 5
      %v7749 = vsel %vm1808, %v7747, %v7748
      %v7750 = vrot.slane %v7748, 4
      %v7751 = vrot.slane %v7711, 5
      %v7752 = vsel %vm1808, %v7750, %v7751
      %v7753 = vrot.slane %v7751, 4
      %v7754 = vrot.slane %v7712, 5
      %v7755 = vsel %vm1808, %v7753, %v7754
      %v7756 = vrot.slane %v7754, 4
      %v7757 = vrot.slane %v7713, 5
      %v7758 = vsel %vm1808, %v7756, %v7757
      %v7759 = vrot.slane %v7757, 4
      %v7760 = vrot.slane %v7723, 5
      %v7761 = vsel %vm1808, %v7759, %v7760
      %7762 = vrot.lane.b32.xlu0 %v7737, 64
      %v7763 = vpop.permute.xlu0 %7762
      %7764 = vrot.lane.b32.xlu0 %v7740, 64
      %v7765 = vpop.permute.xlu0 %7764
      %7766 = vrot.lane.b32.xlu0 %v7743, 64
      %v7767 = vpop.permute.xlu0 %7766
      %7768 = vrot.lane.b32.xlu0 %v7746, 64
      %v7769 = vpop.permute.xlu0 %7768
      %7770 = vrot.lane.b32.xlu0 %v7749, 64
      %v7771 = vpop.permute.xlu0 %7770
      %7772 = vrot.lane.b32.xlu0 %v7752, 64
      %v7773 = vpop.permute.xlu0 %7772
      %7774 = vrot.lane.b32.xlu0 %v7755, 64
      %v7775 = vpop.permute.xlu0 %7774
      %7776 = vrot.lane.b32.xlu0 %v7758, 64
      %v7777 = vpop.permute.xlu0 %7776
      %7778 = vrot.lane.b32.xlu0 %v7761, 64
      %v7779 = vpop.permute.xlu0 %7778
      %7789 = vst.msk [vmem:[#allocation3] sm:$0xf] %vm3513, %v7763
      %7790 = vst.msk [vmem:[#allocation3 + $0x14] sm:$0xf] %vm3513, %v7765
      %7791 = vst.msk [vmem:[#allocation3 + $0x28] sm:$0xf] %vm3513, %v7767
      %7792 = vst.msk [vmem:[#allocation3 + $0x3c] sm:$0xf] %vm3513, %v7769
      %7793 = vst.msk [vmem:[#allocation3 + $0x50] sm:$0xf] %vm3513, %v7771
      %7794 = vst.msk [vmem:[#allocation3 + $0x64] sm:$0xf] %vm3513, %v7773
      %7795 = vst.msk [vmem:[#allocation3 + $0x78] sm:$0xf] %vm3513, %v7775
      %7796 = vst.msk [vmem:[#allocation3 + $0x8c] sm:$0xf] %vm3513, %v7777
      %7797 = vst.msk [vmem:[#allocation3 + $0xa0] sm:$0xf] %vm3513, %v7779
      %v7798 = vrot.slane %v7705, 6
      %v7799 = vrot.slane %v7798, 4
      %v7800 = vrot.slane %v7706, 6
      %v7801 = vsel %vm3525, %v7799, %v7800
      %v7802 = vrot.slane %v7800, 4
      %v7803 = vrot.slane %v7707, 6
      %v7804 = vsel %vm3525, %v7802, %v7803
      %v7805 = vrot.slane %v7803, 4
      %v7806 = vrot.slane %v7708, 6
      %v7807 = vsel %vm3525, %v7805, %v7806
      %v7808 = vrot.slane %v7806, 4
      %v7809 = vrot.slane %v7709, 6
      %v7810 = vsel %vm3525, %v7808, %v7809
      %v7811 = vrot.slane %v7809, 4
      %v7812 = vrot.slane %v7710, 6
      %v7813 = vsel %vm3525, %v7811, %v7812
      %v7814 = vrot.slane %v7812, 4
      %v7815 = vrot.slane %v7711, 6
      %v7816 = vsel %vm3525, %v7814, %v7815
      %v7817 = vrot.slane %v7815, 4
      %v7818 = vrot.slane %v7712, 6
      %v7819 = vsel %vm3525, %v7817, %v7818
      %v7820 = vrot.slane %v7818, 4
      %v7821 = vrot.slane %v7713, 6
      %v7822 = vsel %vm3525, %v7820, %v7821
      %v7823 = vrot.slane %v7821, 4
      %v7824 = vrot.slane %v7723, 6
      %v7825 = vsel %vm3525, %v7823, %v7824
      %7835 = vst.msk [vmem:[#allocation3 + $0x4] sm:$0xf] %vm3437, %v7801
      %7836 = vst.msk [vmem:[#allocation3 + $0x18] sm:$0xf] %vm3437, %v7804
      %7837 = vst.msk [vmem:[#allocation3 + $0x2c] sm:$0xf] %vm3437, %v7807
      %7838 = vst.msk [vmem:[#allocation3 + $0x40] sm:$0xf] %vm3437, %v7810
      %7839 = vst.msk [vmem:[#allocation3 + $0x54] sm:$0xf] %vm3437, %v7813
      %7840 = vst.msk [vmem:[#allocation3 + $0x68] sm:$0xf] %vm3437, %v7816
      %7841 = vst.msk [vmem:[#allocation3 + $0x7c] sm:$0xf] %vm3437, %v7819
      %7842 = vst.msk [vmem:[#allocation3 + $0x90] sm:$0xf] %vm3437, %v7822
      %7843 = vst.msk [vmem:[#allocation3 + $0xa4] sm:$0xf] %vm3437, %v7825
      %v7844 = vpack.c.bf16 %v7697, %v7697
      %v7845 = vpack.c.bf16 %v7698, %v7698
      %v7846 = vpack.c.bf16 %v7699, %v7699
      %7850 = vrot.lane.b32.xlu0 %v7709, 64
      %v7851 = vpop.permute.xlu0 %7850
      %7852 = vrot.lane.b32.xlu0 %v7710, 64
      %v7853 = vpop.permute.xlu0 %7852
      %7854 = vrot.lane.b32.xlu0 %v7711, 64
      %v7855 = vpop.permute.xlu0 %7854
      %7856 = vrot.lane.b32.xlu0 %v7712, 64
      %v7857 = vpop.permute.xlu0 %7856
      %7858 = vrot.lane.b32.xlu0 %v7713, 64
      %v7859 = vpop.permute.xlu0 %7858
      %7860 = vrot.lane.b32.xlu0 %v7723, 64
      %v7861 = vpop.permute.xlu0 %7860
      %7862 = vrot.lane.b32.xlu0 %v7844, 64
      %v7863 = vpop.permute.xlu0 %7862
      %7864 = vrot.lane.b32.xlu0 %v7845, 64
      %v7865 = vpop.permute.xlu0 %7864
      %7866 = vrot.lane.b32.xlu0 %v7846, 64
      %v7867 = vpop.permute.xlu0 %7866
      %7877 = vst.msk [vmem:[#allocation3 + $0x4] sm:$0xf] %vm3513, %v7851
      %7878 = vst.msk [vmem:[#allocation3 + $0x18] sm:$0xf] %vm3513, %v7853
      %7879 = vst.msk [vmem:[#allocation3 + $0x2c] sm:$0xf] %vm3513, %v7855
      %7880 = vst.msk [vmem:[#allocation3 + $0x40] sm:$0xf] %vm3513, %v7857
      %7881 = vst.msk [vmem:[#allocation3 + $0x54] sm:$0xf] %vm3513, %v7859
      %7882 = vst.msk [vmem:[#allocation3 + $0x68] sm:$0xf] %vm3513, %v7861
      %7883 = vst.msk [vmem:[#allocation3 + $0x7c] sm:$0xf] %vm3513, %v7863
      %7884 = vst.msk [vmem:[#allocation3 + $0x90] sm:$0xf] %vm3513, %v7865
      %7885 = vst.msk [vmem:[#allocation3 + $0xa4] sm:$0xf] %vm3513, %v7867
      %v7886 = vpack.c.bf16 %v7700, %v7700
      %v7888 = vrot.slane %v7760, 4
      %v7889 = vrot.slane %v7844, 5
      %v7890 = vsel %vm1808, %v7888, %v7889
      %v7891 = vrot.slane %v7889, 4
      %v7892 = vrot.slane %v7845, 5
      %v7893 = vsel %vm1808, %v7891, %v7892
      %v7894 = vrot.slane %v7892, 4
      %v7895 = vrot.slane %v7846, 5
      %v7896 = vsel %vm1808, %v7894, %v7895
      %v7897 = vrot.slane %v7895, 4
      %v7898 = vrot.slane %v7886, 5
      %v7899 = vsel %vm1808, %v7897, %v7898
      %7909 = vst.msk [vmem:[#allocation3 + $0x8] sm:$0xf] %vm3437, %v7749
      %7910 = vst.msk [vmem:[#allocation3 + $0x1c] sm:$0xf] %vm3437, %v7752
      %7911 = vst.msk [vmem:[#allocation3 + $0x30] sm:$0xf] %vm3437, %v7755
      %7912 = vst.msk [vmem:[#allocation3 + $0x44] sm:$0xf] %vm3437, %v7758
      %7913 = vst.msk [vmem:[#allocation3 + $0x58] sm:$0xf] %vm3437, %v7761
      %7914 = vst.msk [vmem:[#allocation3 + $0x6c] sm:$0xf] %vm3437, %v7890
      %7915 = vst.msk [vmem:[#allocation3 + $0x80] sm:$0xf] %vm3437, %v7893
      %7916 = vst.msk [vmem:[#allocation3 + $0x94] sm:$0xf] %vm3437, %v7896
      %7917 = vst.msk [vmem:[#allocation3 + $0xa8] sm:$0xf] %vm3437, %v7899
      %v7918 = vrot.slane %v7824, 4
      %v7919 = vrot.slane %v7844, 6
      %v7920 = vsel %vm3525, %v7918, %v7919
      %v7921 = vrot.slane %v7919, 4
      %v7922 = vrot.slane %v7845, 6
      %v7923 = vsel %vm3525, %v7921, %v7922
      %v7924 = vrot.slane %v7922, 4
      %v7925 = vrot.slane %v7846, 6
      %v7926 = vsel %vm3525, %v7924, %v7925
      %v7927 = vrot.slane %v7925, 4
      %v7928 = vrot.slane %v7886, 6
      %v7929 = vsel %vm3525, %v7927, %v7928
      %7930 = vrot.lane.b32.xlu0 %v7813, 64
      %v7931 = vpop.permute.xlu0 %7930
      %7932 = vrot.lane.b32.xlu0 %v7816, 64
      %v7933 = vpop.permute.xlu0 %7932
      %7934 = vrot.lane.b32.xlu0 %v7819, 64
      %v7935 = vpop.permute.xlu0 %7934
      %7936 = vrot.lane.b32.xlu0 %v7822, 64
      %v7937 = vpop.permute.xlu0 %7936
      %7938 = vrot.lane.b32.xlu0 %v7825, 64
      %v7939 = vpop.permute.xlu0 %7938
      %7940 = vrot.lane.b32.xlu0 %v7920, 64
      %v7941 = vpop.permute.xlu0 %7940
      %7942 = vrot.lane.b32.xlu0 %v7923, 64
      %v7943 = vpop.permute.xlu0 %7942
      %7944 = vrot.lane.b32.xlu0 %v7926, 64
      %v7945 = vpop.permute.xlu0 %7944
      %7946 = vrot.lane.b32.xlu0 %v7929, 64
      %v7947 = vpop.permute.xlu0 %7946
      %7957 = vst.msk [vmem:[#allocation3 + $0x8] sm:$0xf] %vm3513, %v7931
      %7958 = vst.msk [vmem:[#allocation3 + $0x1c] sm:$0xf] %vm3513, %v7933
      %7959 = vst.msk [vmem:[#allocation3 + $0x30] sm:$0xf] %vm3513, %v7935
      %7960 = vst.msk [vmem:[#allocation3 + $0x44] sm:$0xf] %vm3513, %v7937
      %7961 = vst.msk [vmem:[#allocation3 + $0x58] sm:$0xf] %vm3513, %v7939
      %7962 = vst.msk [vmem:[#allocation3 + $0x6c] sm:$0xf] %vm3513, %v7941
      %7963 = vst.msk [vmem:[#allocation3 + $0x80] sm:$0xf] %vm3513, %v7943
      %7964 = vst.msk [vmem:[#allocation3 + $0x94] sm:$0xf] %vm3513, %v7945
      %7965 = vst.msk [vmem:[#allocation3 + $0xa8] sm:$0xf] %vm3513, %v7947
      %v7966 = vpack.c.bf16 %v7701, %v7701
      %v7967 = vpack.c.bf16 %v7702, %v7702
      %v7968 = vpack.c.bf16 %v7703, %v7703
      %7969 = vst.msk [vmem:[#allocation3 + $0xc] sm:$0xf] %vm3437, %v7713
      %7970 = vst.msk [vmem:[#allocation3 + $0x20] sm:$0xf] %vm3437, %v7723
      %7971 = vst.msk [vmem:[#allocation3 + $0x34] sm:$0xf] %vm3437, %v7844
      %7972 = vst.msk [vmem:[#allocation3 + $0x48] sm:$0xf] %vm3437, %v7845
      %7973 = vst.msk [vmem:[#allocation3 + $0x5c] sm:$0xf] %vm3437, %v7846
      %7974 = vst.msk [vmem:[#allocation3 + $0x70] sm:$0xf] %vm3437, %v7886
      %7975 = vst.msk [vmem:[#allocation3 + $0x84] sm:$0xf] %vm3437, %v7966
      %7976 = vst.msk [vmem:[#allocation3 + $0x98] sm:$0xf] %vm3437, %v7967
      %7977 = vst.msk [vmem:[#allocation3 + $0xac] sm:$0xf] %vm3437, %v7968
      %v7978 = vpack.c.bf16 %v7704, %v7704
      %v7983 = vrot.slane %v7898, 4
      %v7984 = vrot.slane %v7966, 5
      %v7985 = vsel %vm1808, %v7983, %v7984
      %v7986 = vrot.slane %v7984, 4
      %v7987 = vrot.slane %v7967, 5
      %v7988 = vsel %vm1808, %v7986, %v7987
      %v7989 = vrot.slane %v7987, 4
      %v7990 = vrot.slane %v7968, 5
      %v7991 = vsel %vm1808, %v7989, %v7990
      %v7992 = vrot.slane %v7990, 4
      %v7993 = vrot.slane %v7978, 5
      %v7994 = vsel %vm1808, %v7992, %v7993
      %7995 = vrot.lane.b32.xlu0 %v7890, 64
      %v7996 = vpop.permute.xlu0 %7995
      %7997 = vrot.lane.b32.xlu0 %v7893, 64
      %v7998 = vpop.permute.xlu0 %7997
      %7999 = vrot.lane.b32.xlu0 %v7896, 64
      %v8000 = vpop.permute.xlu0 %7999
      %8001 = vrot.lane.b32.xlu0 %v7899, 64
      %v8002 = vpop.permute.xlu0 %8001
      %8003 = vrot.lane.b32.xlu0 %v7985, 64
      %v8004 = vpop.permute.xlu0 %8003
      %8005 = vrot.lane.b32.xlu0 %v7988, 64
      %v8006 = vpop.permute.xlu0 %8005
      %8007 = vrot.lane.b32.xlu0 %v7991, 64
      %v8008 = vpop.permute.xlu0 %8007
      %8009 = vrot.lane.b32.xlu0 %v7994, 64
      %v8010 = vpop.permute.xlu0 %8009
      %8019 = vst.msk [vmem:[#allocation3 + $0xc] sm:$0xf] %vm3513, %v7779
      %8020 = vst.msk [vmem:[#allocation3 + $0x20] sm:$0xf] %vm3513, %v7996
      %8021 = vst.msk [vmem:[#allocation3 + $0x34] sm:$0xf] %vm3513, %v7998
      %8022 = vst.msk [vmem:[#allocation3 + $0x48] sm:$0xf] %vm3513, %v8000
      %8023 = vst.msk [vmem:[#allocation3 + $0x5c] sm:$0xf] %vm3513, %v8002
      %8024 = vst.msk [vmem:[#allocation3 + $0x70] sm:$0xf] %vm3513, %v8004
      %8025 = vst.msk [vmem:[#allocation3 + $0x84] sm:$0xf] %vm3513, %v8006
      %8026 = vst.msk [vmem:[#allocation3 + $0x98] sm:$0xf] %vm3513, %v8008
      %8027 = vst.msk [vmem:[#allocation3 + $0xac] sm:$0xf] %vm3513, %v8010
      %v8028 = vrot.slane %v7928, 4
      %v8029 = vrot.slane %v7966, 6
      %v8030 = vsel %vm3525, %v8028, %v8029
      %v8031 = vrot.slane %v8029, 4
      %v8032 = vrot.slane %v7967, 6
      %v8033 = vsel %vm3525, %v8031, %v8032
      %v8034 = vrot.slane %v8032, 4
      %v8035 = vrot.slane %v7968, 6
      %v8036 = vsel %vm3525, %v8034, %v8035
      %v8037 = vrot.slane %v8035, 4
      %v8038 = vrot.slane %v7978, 6
      %v8039 = vsel %vm3525, %v8037, %v8038
      %8048 = vst.msk [vmem:[#allocation3 + $0x10] sm:$0xf] %vm3437, %v7825
      %8049 = vst.msk [vmem:[#allocation3 + $0x24] sm:$0xf] %vm3437, %v7920
      %8050 = vst.msk [vmem:[#allocation3 + $0x38] sm:$0xf] %vm3437, %v7923
      %8051 = vst.msk [vmem:[#allocation3 + $0x4c] sm:$0xf] %vm3437, %v7926
      %8052 = vst.msk [vmem:[#allocation3 + $0x60] sm:$0xf] %vm3437, %v7929
      %8053 = vst.msk [vmem:[#allocation3 + $0x74] sm:$0xf] %vm3437, %v8030
      %8054 = vst.msk [vmem:[#allocation3 + $0x88] sm:$0xf] %vm3437, %v8033
      %8055 = vst.msk [vmem:[#allocation3 + $0x9c] sm:$0xf] %vm3437, %v8036
      %8056 = vst.msk [vmem:[#allocation3 + $0xb0] sm:$0xf] %vm3437, %v8039
      %v8057 = vld [vmem:[#allocation3] sm:$0xff]
      %v8058 = vld [vmem:[#allocation3 + $0x8] sm:$0xff]
      %v8059 = vld [vmem:[#allocation3 + $0x10] sm:$0xf]
      %v8060 = vld [vmem:[#allocation3 + $0x14] sm:$0xff]
      %v8061 = vld [vmem:[#allocation3 + $0x1c] sm:$0xff]
      %v8062 = vld [vmem:[#allocation3 + $0x24] sm:$0xf]
      %v8063 = vld [vmem:[#allocation3 + $0x28] sm:$0xff]
      %v8064 = vld [vmem:[#allocation3 + $0x30] sm:$0xff]
      %v8065 = vld [vmem:[#allocation3 + $0x38] sm:$0xf]
      %v8066 = vld [vmem:[#allocation3 + $0x3c] sm:$0xff]
      %v8067 = vld [vmem:[#allocation3 + $0x44] sm:$0xff]
      %v8068 = vld [vmem:[#allocation3 + $0x4c] sm:$0xf]
      %v8069 = vld [vmem:[#allocation3 + $0x50] sm:$0xff]
      %v8070 = vld [vmem:[#allocation3 + $0x58] sm:$0xff]
      %v8071 = vld [vmem:[#allocation3 + $0x60] sm:$0xf]
      %v8072 = vld [vmem:[#allocation3 + $0x64] sm:$0xff]
      %v8073 = vld [vmem:[#allocation3 + $0x6c] sm:$0xff]
      %v8074 = vld [vmem:[#allocation3 + $0x74] sm:$0xf]
      %v8075 = vld [vmem:[#allocation3 + $0x78] sm:$0xff]
      %v8076 = vld [vmem:[#allocation3 + $0x80] sm:$0xff]
      %v8077 = vld [vmem:[#allocation3 + $0x88] sm:$0xf]
      %v8078 = vld [vmem:[#allocation3 + $0x8c] sm:$0xff]
      %v8079 = vld [vmem:[#allocation3 + $0x94] sm:$0xff]
      %v8080 = vld [vmem:[#allocation3 + $0x9c] sm:$0xf]
      %v8081 = vld [vmem:[#allocation3 + $0xa0] sm:$0xff]
      %v8082 = vld [vmem:[#allocation3 + $0xa8] sm:$0xff]
      %v8083 = vld [vmem:[#allocation3 + $0xb0] sm:$0xf]
      %v8084 = vld [vmem:[%s5] sm:$0xf]
      %v8085 = vld [vmem:[%s5 + $0x4] sm:$0xf]
      %v8086 = vld [vmem:[%s5 + $0x8] sm:$0xf]
      %v8087 = vld [vmem:[%s5 + $0xc] sm:$0xf]
      %v8088 = vld [vmem:[%s5 + $0x10] sm:$0xf]
      %v8089 = vld [vmem:[%s5 + $0x14] sm:$0xf]
      %v8090 = vld [vmem:[%s5 + $0x18] sm:$0xf]
      %v8091 = vld [vmem:[%s5 + $0x1c] sm:$0xf]
      %v8092 = vld [vmem:[%s5 + $0x20] sm:$0xf]
      %v8093 = vld [vmem:[%s5 + $0x24] sm:$0xf]
      %v8094 = vld [vmem:[%s5 + $0x28] sm:$0xf]
      %v8095 = vld [vmem:[%s5 + $0x2c] sm:$0xf]
      %v8096 = vld [vmem:[%s5 + $0x30] sm:$0xf]
      %v8097 = vld [vmem:[%s5 + $0x34] sm:$0xf]
      %v8098 = vld [vmem:[%s5 + $0x38] sm:$0xf]
      %v8099 = vld [vmem:[%s5 + $0x3c] sm:$0xf]
      %v8100 = vld [vmem:[%s5 + $0x40] sm:$0xf]
      %v8101 = vld [vmem:[%s5 + $0x44] sm:$0xf]
      %v8102 = vld [vmem:[%s5 + $0x48] sm:$0xf]
      %v8103 = vld [vmem:[%s5 + $0x4c] sm:$0xf]
      %v8104 = vld [vmem:[%s5 + $0x50] sm:$0xf]
      %v8105 = vld [vmem:[%s5 + $0x54] sm:$0xf]
      %v8106 = vld [vmem:[%s5 + $0x58] sm:$0xf]
      %v8107 = vld [vmem:[%s5 + $0x5c] sm:$0xf]
      %v8108 = vld [vmem:[%s5 + $0x60] sm:$0xf]
      %v8109 = vld [vmem:[%s5 + $0x64] sm:$0xf]
      %v8110 = vld [vmem:[%s5 + $0x68] sm:$0xf]
      %v8111 = vld [vmem:[%s5 + $0x6c] sm:$0xf]
      %v8112 = vld [vmem:[%s5 + $0x70] sm:$0xf]
      %v8113 = vld [vmem:[%s5 + $0x74] sm:$0xf]
      %v8114 = vld [vmem:[%s5 + $0x78] sm:$0xf]
      %v8115 = vld [vmem:[%s5 + $0x7c] sm:$0xf]
      %v8116 = vld [vmem:[%s5 + $0x80] sm:$0xf]
      %v8117 = vld [vmem:[%s5 + $0x84] sm:$0xf]
      %v8118 = vld [vmem:[%s5 + $0x88] sm:$0xf]
      %v8119 = vld [vmem:[%s5 + $0x8c] sm:$0xf]
      %v8120 = vld [vmem:[%s5 + $0x90] sm:$0xf]
      %v8121 = vld [vmem:[%s5 + $0x94] sm:$0xf]
      %v8122 = vld [vmem:[%s5 + $0x98] sm:$0xf]
      %v8123 = vld [vmem:[%s5 + $0x9c] sm:$0xf]
      %v8124 = vld [vmem:[%s5 + $0xa0] sm:$0xf]
      %v8125 = vld [vmem:[%s5 + $0xa4] sm:$0xf]
      %v8126 = vld [vmem:[%s5 + $0xa8] sm:$0xf]
      %v8127 = vld [vmem:[%s5 + $0xac] sm:$0xf]
      %v8128 = vld [vmem:[%s5 + $0xb0] sm:$0xf]
      %v8129 = vld [vmem:[%s5 + $0xb4] sm:$0xf]
      %v8130 = vld [vmem:[%s5 + $0xb8] sm:$0xf]
      %v8131 = vld [vmem:[%s5 + $0xbc] sm:$0xf]
      %v8132 = vld [vmem:[%s5 + $0xc0] sm:$0xf]
      %v8133 = vld [vmem:[%s5 + $0xc4] sm:$0xf]
      %v8134 = vld [vmem:[%s5 + $0xc8] sm:$0xf]
      %v8135 = vld [vmem:[%s5 + $0xcc] sm:$0xf]
      %v8136 = vld [vmem:[%s5 + $0xd0] sm:$0xf]
      %v8137 = vld [vmem:[%s5 + $0xd4] sm:$0xf]
      %v8138 = vld [vmem:[%s5 + $0xd8] sm:$0xf]
      %v8139 = vld [vmem:[%s5 + $0xdc] sm:$0xf]
      %v8140 = vld [vmem:[%s5 + $0xe0] sm:$0xf]
      %v8141 = vld [vmem:[%s5 + $0xe4] sm:$0xf]
      %v8142 = vld [vmem:[%s5 + $0xe8] sm:$0xf]
      %v8143 = vld [vmem:[%s5 + $0xec] sm:$0xf]
      %v8144 = vld [vmem:[%s5 + $0xf0] sm:$0xf]
      %v8145 = vld [vmem:[%s5 + $0xf4] sm:$0xf]
      %v8146 = vld [vmem:[%s5 + $0xf8] sm:$0xf]
      %v8147 = vld [vmem:[%s5 + $0xfc] sm:$0xf]
      %v8148 = vld [vmem:[%s5 + $0x100] sm:$0xf]
      %v8149 = vld [vmem:[%s5 + $0x104] sm:$0xf]
      %v8150 = vld [vmem:[%s5 + $0x108] sm:$0xf]
      %v8151 = vld [vmem:[%s5 + $0x10c] sm:$0xf]
      %v8152 = vld [vmem:[%s5 + $0x110] sm:$0xf]
      %v8153 = vld [vmem:[%s5 + $0x114] sm:$0xf]
      %v8154 = vld [vmem:[%s5 + $0x118] sm:$0xf]
      %v8155 = vld [vmem:[%s5 + $0x11c] sm:$0xf]
      %v8156 = vld [vmem:[%s6] sm:$0x1]
      %v8158 = vperm.slane %v8156, 0
      %v8187 = vunpack.c.l.b16 %v8057
      %v8188 = vunpack.c.h.b16 %v8057
      %v8189 = vunpack.c.l.b16 %v8058
      %v8190 = vunpack.c.h.b16 %v8058
      %v8191 = vunpack.c.l.b16 %v8059
      %v8192 = vunpack.c.l.b16 %v8060
      %v8193 = vunpack.c.h.b16 %v8060
      %v8194 = vunpack.c.l.b16 %v8061
      %v8195 = vunpack.c.h.b16 %v8061
      %v8196 = vunpack.c.l.b16 %v8062
      %v8197 = vunpack.c.l.b16 %v8063
      %v8198 = vunpack.c.h.b16 %v8063
      %v8199 = vunpack.c.l.b16 %v8064
      %v8200 = vunpack.c.h.b16 %v8064
      %v8201 = vunpack.c.l.b16 %v8065
      %v8202 = vunpack.c.l.b16 %v8066
      %v8203 = vunpack.c.h.b16 %v8066
      %v8204 = vunpack.c.l.b16 %v8067
      %v8205 = vunpack.c.h.b16 %v8067
      %v8206 = vunpack.c.l.b16 %v8068
      %v8207 = vunpack.c.l.b16 %v8069
      %v8208 = vunpack.c.h.b16 %v8069
      %v8209 = vunpack.c.l.b16 %v8070
      %v8210 = vunpack.c.h.b16 %v8070
      %v8211 = vunpack.c.l.b16 %v8071
      %v8212 = vunpack.c.l.b16 %v8072
      %v8213 = vunpack.c.h.b16 %v8072
      %v8214 = vunpack.c.l.b16 %v8073
      %v8215 = vunpack.c.h.b16 %v8073
      %v8216 = vunpack.c.l.b16 %v8074
      %v8217 = vunpack.c.l.b16 %v8075
      %v8218 = vunpack.c.h.b16 %v8075
      %v8219 = vunpack.c.l.b16 %v8076
      %v8220 = vunpack.c.h.b16 %v8076
      %v8221 = vunpack.c.l.b16 %v8077
      %v8222 = vunpack.c.l.b16 %v8078
      %v8223 = vunpack.c.h.b16 %v8078
      %v8224 = vunpack.c.l.b16 %v8079
      %v8225 = vunpack.c.h.b16 %v8079
      %v8226 = vunpack.c.l.b16 %v8080
      %v8227 = vunpack.c.l.b16 %v8081
      %v8228 = vunpack.c.h.b16 %v8081
      %v8229 = vunpack.c.l.b16 %v8082
      %v8230 = vunpack.c.h.b16 %v8082
      %v8231 = vunpack.c.l.b16 %v8083
      %v8232 = vpack.c.b16 %v8192, %v8187
      %v8233 = vpack.c.b16 %v8193, %v8188
      %v8234 = vpack.c.b16 %v8194, %v8189
      %v8235 = vpack.c.b16 %v8195, %v8190
      %v8236 = vpack.c.b16 %v8196, %v8191
      %v8237 = vpack.c.b16 %v8202, %v8197
      %v8238 = vpack.c.b16 %v8203, %v8198
      %v8239 = vpack.c.b16 %v8204, %v8199
      %v8240 = vpack.c.b16 %v8205, %v8200
      %v8241 = vpack.c.b16 %v8206, %v8201
      %v8242 = vpack.c.b16 %v8212, %v8207
      %v8243 = vpack.c.b16 %v8213, %v8208
      %v8244 = vpack.c.b16 %v8214, %v8209
      %v8245 = vpack.c.b16 %v8215, %v8210
      %v8246 = vpack.c.b16 %v8216, %v8211
      %v8247 = vpack.c.b16 %v8222, %v8217
      %v8248 = vpack.c.b16 %v8223, %v8218
      %v8249 = vpack.c.b16 %v8224, %v8219
      %v8250 = vpack.c.b16 %v8225, %v8220
      %v8251 = vpack.c.b16 %v8226, %v8221
      %v8252 = vpack.c.b16 %v8227, %v8227
      %v8253 = vpack.c.b16 %v8228, %v8228
      %v8254 = vpack.c.b16 %v8229, %v8229
      %v8255 = vpack.c.b16 %v8230, %v8230
      %v8256 = vpack.c.b16 %v8231, %v8231
      %v8349 = vunpack.c.l.b16 %v8084
      %v8350 = vunpack.c.l.b16 %v8085
      %v8351 = vunpack.c.l.b16 %v8086
      %v8352 = vunpack.c.l.b16 %v8087
      %v8353 = vunpack.c.l.b16 %v8088
      %v8354 = vunpack.c.l.b16 %v8089
      %v8355 = vunpack.c.l.b16 %v8090
      %v8356 = vunpack.c.l.b16 %v8091
      %v8357 = vunpack.c.l.b16 %v8092
      %v8358 = vunpack.c.l.b16 %v8093
      %v8359 = vunpack.c.l.b16 %v8094
      %v8360 = vunpack.c.l.b16 %v8095
      %v8361 = vunpack.c.l.b16 %v8096
      %v8362 = vunpack.c.l.b16 %v8097
      %v8363 = vunpack.c.l.b16 %v8098
      %v8364 = vunpack.c.l.b16 %v8099
      %v8365 = vunpack.c.l.b16 %v8100
      %v8366 = vunpack.c.l.b16 %v8101
      %v8367 = vunpack.c.l.b16 %v8102
      %v8368 = vunpack.c.l.b16 %v8103
      %v8369 = vunpack.c.l.b16 %v8104
      %v8370 = vunpack.c.l.b16 %v8105
      %v8371 = vunpack.c.l.b16 %v8106
      %v8372 = vunpack.c.l.b16 %v8107
      %v8373 = vunpack.c.l.b16 %v8108
      %v8374 = vunpack.c.l.b16 %v8109
      %v8375 = vunpack.c.l.b16 %v8110
      %v8376 = vunpack.c.l.b16 %v8111
      %v8377 = vunpack.c.l.b16 %v8112
      %v8378 = vunpack.c.l.b16 %v8113
      %v8379 = vunpack.c.l.b16 %v8114
      %v8380 = vunpack.c.l.b16 %v8115
      %v8381 = vunpack.c.l.b16 %v8116
      %v8382 = vunpack.c.l.b16 %v8117
      %v8383 = vunpack.c.l.b16 %v8118
      %v8384 = vunpack.c.l.b16 %v8119
      %v8385 = vunpack.c.l.b16 %v8120
      %v8386 = vunpack.c.l.b16 %v8121
      %v8387 = vunpack.c.l.b16 %v8122
      %v8388 = vunpack.c.l.b16 %v8123
      %v8389 = vunpack.c.l.b16 %v8124
      %v8390 = vunpack.c.l.b16 %v8125
      %v8391 = vunpack.c.l.b16 %v8126
      %v8392 = vunpack.c.l.b16 %v8127
      %v8393 = vunpack.c.l.b16 %v8128
      %v8394 = vunpack.c.l.b16 %v8129
      %v8395 = vunpack.c.l.b16 %v8130
      %v8396 = vunpack.c.l.b16 %v8131
      %v8397 = vunpack.c.l.b16 %v8132
      %v8398 = vunpack.c.l.b16 %v8133
      %v8399 = vunpack.c.l.b16 %v8134
      %v8400 = vunpack.c.l.b16 %v8135
      %v8401 = vunpack.c.l.b16 %v8136
      %v8402 = vunpack.c.l.b16 %v8137
      %v8403 = vunpack.c.l.b16 %v8138
      %v8404 = vunpack.c.l.b16 %v8139
      %v8405 = vunpack.c.l.b16 %v8140
      %v8406 = vunpack.c.l.b16 %v8141
      %v8407 = vunpack.c.l.b16 %v8142
      %v8408 = vunpack.c.l.b16 %v8143
      %v8409 = vunpack.c.l.b16 %v8144
      %v8410 = vunpack.c.l.b16 %v8145
      %v8411 = vunpack.c.l.b16 %v8146
      %v8412 = vunpack.c.l.b16 %v8147
      %v8413 = vunpack.c.l.b16 %v8148
      %v8414 = vunpack.c.l.b16 %v8149
      %v8415 = vunpack.c.l.b16 %v8150
      %v8416 = vunpack.c.l.b16 %v8151
      %v8417 = vunpack.c.l.b16 %v8152
      %v8418 = vunpack.c.l.b16 %v8153
      %v8419 = vunpack.c.l.b16 %v8154
      %v8420 = vunpack.c.l.b16 %v8155
      %v8421 = vpack.c.b16 %v8350, %v8349
      %v8422 = vpack.c.b16 %v8352, %v8351
      %v8423 = vpack.c.b16 %v8354, %v8353
      %v8424 = vpack.c.b16 %v8356, %v8355
      %v8425 = vpack.c.b16 %v8358, %v8357
      %v8426 = vpack.c.b16 %v8360, %v8359
      %v8427 = vpack.c.b16 %v8362, %v8361
      %v8428 = vpack.c.b16 %v8364, %v8363
      %v8429 = vpack.c.b16 %v8366, %v8365
      %v8430 = vpack.c.b16 %v8368, %v8367
      %v8431 = vpack.c.b16 %v8370, %v8369
      %v8432 = vpack.c.b16 %v8372, %v8371
      %v8433 = vpack.c.b16 %v8374, %v8373
      %v8434 = vpack.c.b16 %v8376, %v8375
      %v8435 = vpack.c.b16 %v8378, %v8377
      %v8436 = vpack.c.b16 %v8380, %v8379
      %v8437 = vpack.c.b16 %v8382, %v8381
      %v8438 = vpack.c.b16 %v8384, %v8383
      %v8439 = vpack.c.b16 %v8386, %v8385
      %v8440 = vpack.c.b16 %v8388, %v8387
      %v8441 = vpack.c.b16 %v8390, %v8389
      %v8442 = vpack.c.b16 %v8392, %v8391
      %v8443 = vpack.c.b16 %v8394, %v8393
      %v8444 = vpack.c.b16 %v8396, %v8395
      %v8445 = vpack.c.b16 %v8398, %v8397
      %v8446 = vpack.c.b16 %v8400, %v8399
      %v8447 = vpack.c.b16 %v8402, %v8401
      %v8448 = vpack.c.b16 %v8404, %v8403
      %v8449 = vpack.c.b16 %v8406, %v8405
      %v8450 = vpack.c.b16 %v8408, %v8407
      %v8451 = vpack.c.b16 %v8410, %v8409
      %v8452 = vpack.c.b16 %v8412, %v8411
      %v8453 = vpack.c.b16 %v8414, %v8413
      %v8454 = vpack.c.b16 %v8416, %v8415
      %v8455 = vpack.c.b16 %v8418, %v8417
      %v8456 = vpack.c.b16 %v8420, %v8419
      %v8494 = vsel %vm559, %v8236, 0
      %v8497 = vsel %vm559, %v8241, 0
      %v8500 = vsel %vm559, %v8246, 0
      %v8503 = vsel %vm559, %v8251, 0
      %v8506 = vsel %vm559, %v8256, 0
      %8508 = vmatpush.bf16.msra.mxu0 %v8428
      %8509 = vmatpush.bf16.msra.mxu0 %v8427
      %8510 = vmatpush.bf16.msra.mxu0 %v8426
      %8511 = vmatpush.bf16.msra.mxu0 %v8425
      %8512 = vmatpush.bf16.msra.mxu0 %v8424
      %8513 = vmatpush.bf16.msra.mxu0 %v8423
      %8514 = vmatpush.bf16.msra.mxu0 %v8422
      %8515 = vmatpush.bf16.msra.mxu0 %v8421
      %8516 = vmatmul.bf16.gmra.mxu0 %v8232
      %v8517 = vpop.f32.mrf.mxu0
      %v8518 = vadd.f32 %v8158, %v8517
      %v8519 = vpop.f32.mrf.mxu0
      %v8520 = vadd.f32 %v8158, %v8519
      %8521 = vmatmul.bf16.gmra.mxu0 %v8237
      %v8522 = vpop.f32.mrf.mxu0
      %v8523 = vadd.f32 %v8158, %v8522
      %v8524 = vpop.f32.mrf.mxu0
      %v8525 = vadd.f32 %v8158, %v8524
      %8526 = vmatmul.bf16.gmra.mxu0 %v8242
      %v8527 = vpop.f32.mrf.mxu0
      %v8528 = vadd.f32 %v8158, %v8527
      %v8529 = vpop.f32.mrf.mxu0
      %v8530 = vadd.f32 %v8158, %v8529
      %8531 = vmatmul.bf16.gmra.mxu0 %v8247
      %v8532 = vpop.f32.mrf.mxu0
      %v8533 = vadd.f32 %v8158, %v8532
      %v8534 = vpop.f32.mrf.mxu0
      %v8535 = vadd.f32 %v8158, %v8534
      %8536 = vmatmul.bf16.gmra.mxu0 %v8252
      %v8537 = vpop.f32.mrf.mxu0
      %v8538 = vadd.f32 %v8158, %v8537
      %v8539 = vpop.f32.mrf.mxu0
      %8540 = vdwg.mxu0
      %8541 = vmatpush.bf16.msra.mxu0 %v8436
      %8542 = vmatpush.bf16.msra.mxu0 %v8435
      %8543 = vmatpush.bf16.msra.mxu0 %v8434
      %8544 = vmatpush.bf16.msra.mxu0 %v8433
      %8545 = vmatpush.bf16.msra.mxu0 %v8432
      %8546 = vmatpush.bf16.msra.mxu0 %v8431
      %8547 = vmatpush.bf16.msra.mxu0 %v8430
      %8548 = vmatpush.bf16.msra.mxu0 %v8429
      %8549 = vmatmul.bf16.gmra.mxu0 %v8233
      %v8550 = vpop.f32.mrf.mxu0
      %v8551 = vadd.f32 %v8518, %v8550
      %v8552 = vpop.f32.mrf.mxu0
      %v8553 = vadd.f32 %v8520, %v8552
      %8554 = vmatmul.bf16.gmra.mxu0 %v8238
      %v8555 = vpop.f32.mrf.mxu0
      %v8556 = vadd.f32 %v8523, %v8555
      %v8557 = vpop.f32.mrf.mxu0
      %v8558 = vadd.f32 %v8525, %v8557
      %8559 = vmatmul.bf16.gmra.mxu0 %v8243
      %v8560 = vpop.f32.mrf.mxu0
      %v8561 = vadd.f32 %v8528, %v8560
      %v8562 = vpop.f32.mrf.mxu0
      %v8563 = vadd.f32 %v8530, %v8562
      %8564 = vmatmul.bf16.gmra.mxu0 %v8248
      %v8565 = vpop.f32.mrf.mxu0
      %v8566 = vadd.f32 %v8533, %v8565
      %v8567 = vpop.f32.mrf.mxu0
      %v8568 = vadd.f32 %v8535, %v8567
      %8569 = vmatmul.bf16.gmra.mxu0 %v8253
      %v8570 = vpop.f32.mrf.mxu0
      %v8571 = vadd.f32 %v8538, %v8570
      %v8572 = vpop.f32.mrf.mxu0
      %8573 = vdwg.mxu0
      %8574 = vmatpush.bf16.msra.mxu0 %v8444
      %8575 = vmatpush.bf16.msra.mxu0 %v8443
      %8576 = vmatpush.bf16.msra.mxu0 %v8442
      %8577 = vmatpush.bf16.msra.mxu0 %v8441
      %8578 = vmatpush.bf16.msra.mxu0 %v8440
      %8579 = vmatpush.bf16.msra.mxu0 %v8439
      %8580 = vmatpush.bf16.msra.mxu0 %v8438
      %8581 = vmatpush.bf16.msra.mxu0 %v8437
      %8582 = vmatmul.bf16.gmra.mxu0 %v8234
      %v8583 = vpop.f32.mrf.mxu0
      %v8584 = vadd.f32 %v8551, %v8583
      %v8585 = vpop.f32.mrf.mxu0
      %v8586 = vadd.f32 %v8553, %v8585
      %8587 = vmatmul.bf16.gmra.mxu0 %v8239
      %v8588 = vpop.f32.mrf.mxu0
      %v8589 = vadd.f32 %v8556, %v8588
      %v8590 = vpop.f32.mrf.mxu0
      %v8591 = vadd.f32 %v8558, %v8590
      %8592 = vmatmul.bf16.gmra.mxu0 %v8244
      %v8593 = vpop.f32.mrf.mxu0
      %v8594 = vadd.f32 %v8561, %v8593
      %v8595 = vpop.f32.mrf.mxu0
      %v8596 = vadd.f32 %v8563, %v8595
      %8597 = vmatmul.bf16.gmra.mxu0 %v8249
      %v8598 = vpop.f32.mrf.mxu0
      %v8599 = vadd.f32 %v8566, %v8598
      %v8600 = vpop.f32.mrf.mxu0
      %v8601 = vadd.f32 %v8568, %v8600
      %8602 = vmatmul.bf16.gmra.mxu0 %v8254
      %v8603 = vpop.f32.mrf.mxu0
      %v8604 = vadd.f32 %v8571, %v8603
      %v8605 = vpop.f32.mrf.mxu0
      %8606 = vdwg.mxu0
      %8607 = vmatpush.bf16.msra.mxu0 %v8452
      %8608 = vmatpush.bf16.msra.mxu0 %v8451
      %8609 = vmatpush.bf16.msra.mxu0 %v8450
      %8610 = vmatpush.bf16.msra.mxu0 %v8449
      %8611 = vmatpush.bf16.msra.mxu0 %v8448
      %8612 = vmatpush.bf16.msra.mxu0 %v8447
      %8613 = vmatpush.bf16.msra.mxu0 %v8446
      %8614 = vmatpush.bf16.msra.mxu0 %v8445
      %8615 = vmatmul.bf16.gmra.mxu0 %v8235
      %v8616 = vpop.f32.mrf.mxu0
      %v8617 = vadd.f32 %v8584, %v8616
      %v8618 = vpop.f32.mrf.mxu0
      %v8619 = vadd.f32 %v8586, %v8618
      %8620 = vmatmul.bf16.gmra.mxu0 %v8240
      %v8621 = vpop.f32.mrf.mxu0
      %v8622 = vadd.f32 %v8589, %v8621
      %v8623 = vpop.f32.mrf.mxu0
      %v8624 = vadd.f32 %v8591, %v8623
      %8625 = vmatmul.bf16.gmra.mxu0 %v8245
      %v8626 = vpop.f32.mrf.mxu0
      %v8627 = vadd.f32 %v8594, %v8626
      %v8628 = vpop.f32.mrf.mxu0
      %v8629 = vadd.f32 %v8596, %v8628
      %8630 = vmatmul.bf16.gmra.mxu0 %v8250
      %v8631 = vpop.f32.mrf.mxu0
      %v8632 = vadd.f32 %v8599, %v8631
      %v8633 = vpop.f32.mrf.mxu0
      %v8634 = vadd.f32 %v8601, %v8633
      %8635 = vmatmul.bf16.gmra.mxu0 %v8255
      %v8636 = vpop.f32.mrf.mxu0
      %v8637 = vadd.f32 %v8604, %v8636
      %v8638 = vpop.f32.mrf.mxu0
      %8639 = vdwg.mxu0
      %8640 = vmatpush.bf16.msra.mxu0 0
      %8641 = vmatpush.bf16.msra.mxu0 0
      %8642 = vmatpush.bf16.msra.mxu0 0
      %8643 = vmatpush.bf16.msra.mxu0 0
      %8644 = vmatpush.bf16.msra.mxu0 %v8456
      %8645 = vmatpush.bf16.msra.mxu0 %v8455
      %8646 = vmatpush.bf16.msra.mxu0 %v8454
      %8647 = vmatpush.bf16.msra.mxu0 %v8453
      %8648 = vmatmul.bf16.gmra.mxu0 %v8494
      %v8649 = vpop.f32.mrf.mxu0
      %v8650 = vadd.f32 %v8617, %v8649
      %v8651 = vpop.f32.mrf.mxu0
      %v8652 = vadd.f32 %v8619, %v8651
      %8653 = vmatmul.bf16.gmra.mxu0 %v8497
      %v8654 = vpop.f32.mrf.mxu0
      %v8655 = vadd.f32 %v8622, %v8654
      %v8656 = vpop.f32.mrf.mxu0
      %v8657 = vadd.f32 %v8624, %v8656
      %8658 = vmatmul.bf16.gmra.mxu0 %v8500
      %v8659 = vpop.f32.mrf.mxu0
      %v8660 = vadd.f32 %v8627, %v8659
      %v8661 = vpop.f32.mrf.mxu0
      %v8662 = vadd.f32 %v8629, %v8661
      %8663 = vmatmul.bf16.gmra.mxu0 %v8503
      %v8664 = vpop.f32.mrf.mxu0
      %v8665 = vadd.f32 %v8632, %v8664
      %v8666 = vpop.f32.mrf.mxu0
      %v8667 = vadd.f32 %v8634, %v8666
      %8668 = vmatmul.bf16.gmra.mxu0 %v8506
      %v8669 = vpop.f32.mrf.mxu0
      %v8670 = vadd.f32 %v8637, %v8669
      %v8671 = vpop.f32.mrf.mxu0
      %8672 = vdwg.mxu0
      %vm8673 = vcmp.ge.f32.partialorder %v8650, 0.0
      %vm8674 = vcmp.ge.f32.partialorder %v8652, 0.0
      %vm8675 = vcmp.ge.f32.partialorder %v8655, 0.0
      %vm8676 = vcmp.ge.f32.partialorder %v8657, 0.0
      %vm8677 = vcmp.ge.f32.partialorder %v8660, 0.0
      %vm8678 = vcmp.ge.f32.partialorder %v8662, 0.0
      %vm8679 = vcmp.ge.f32.partialorder %v8665, 0.0
      %vm8680 = vcmp.ge.f32.partialorder %v8667, 0.0
      %vm8681 = vcmp.ge.f32.partialorder %v8670, 0.0
      %v8682 = vmul.f32 %v8650, 0.2
      %v8683 = vmul.f32 %v8652, 0.2
      %v8684 = vmul.f32 %v8655, 0.2
      %v8685 = vmul.f32 %v8657, 0.2
      %v8686 = vmul.f32 %v8660, 0.2
      %v8687 = vmul.f32 %v8662, 0.2
      %v8688 = vmul.f32 %v8665, 0.2
      %v8689 = vmul.f32 %v8667, 0.2
      %v8690 = vmul.f32 %v8670, 0.2
      %v8691 = vsel %vm8673, %v8650, %v8682
      %v8692 = vsel %vm8674, %v8652, %v8683
      %v8693 = vsel %vm8675, %v8655, %v8684
      %v8694 = vsel %vm8676, %v8657, %v8685
      %v8695 = vsel %vm8677, %v8660, %v8686
      %v8696 = vsel %vm8678, %v8662, %v8687
      %v8697 = vsel %vm8679, %v8665, %v8688
      %v8698 = vsel %vm8680, %v8667, %v8689
      %v8699 = vsel %vm8681, %v8670, %v8690
      %v8700 = vld [vmem:[%s7] sm:$0xf]
      %v8701 = vpack.c.bf16 %v8692, %v8691
      %v8702 = vpack.c.bf16 %v8694, %v8693
      %v8703 = vpack.c.bf16 %v8696, %v8695
      %v8704 = vpack.c.bf16 %v8698, %v8697
      %v8705 = vpack.c.bf16 %v8699, %v8699
      %v8707 = vsel %vm4434, %v8700, 0
      %v8710 = vsel %vm4438, %v8705, 0
      %8712 = vmatpush.bf16.msra.mxu0 0
      %8713 = vmatpush.bf16.msra.mxu0 0
      %8714 = vmatpush.bf16.msra.mxu0 0
      %8715 = vmatpush.bf16.msra.mxu0 %v8710
      %8716 = vmatpush.bf16.msra.mxu0 %v8704
      %8717 = vmatpush.bf16.msra.mxu0 %v8703
      %8718 = vmatpush.bf16.msra.mxu0 %v8702
      %8719 = vmatpush.bf16.msra.mxu0 %v8701
      %8720 = vmatmul.bf16.gmra.mxu0 %v8707
      %v8721 = vpop.f32.mrf.mxu0
      %v8722 = vadd.f32 0.0, %v8721
      %v8723 = vpop.f32.mrf.mxu0
      %8724 = vdwg.mxu0
      %v8725 = vld [vmem:[%s8] sm:$0xf]
      %v8726 = vld [vmem:[%s8 + $0x4] sm:$0xf]
      %v8727 = vld [vmem:[%s8 + $0x8] sm:$0xf]
      %v8728 = vld [vmem:[%s8 + $0xc] sm:$0xf]
      %v8729 = vld [vmem:[%s8 + $0x10] sm:$0xf]
      %v8730 = vld [vmem:[%s8 + $0x14] sm:$0xf]
      %v8731 = vld [vmem:[%s8 + $0x18] sm:$0xf]
      %v8732 = vld [vmem:[%s8 + $0x1c] sm:$0xf]
      %v8733 = vld [vmem:[%s8 + $0x20] sm:$0xf]
      %v8734 = vpack.c.bf16 %v8722, %v8722
      %v8744 = vunpack.c.l.b16 %v8725
      %v8745 = vunpack.c.l.b16 %v8726
      %v8746 = vunpack.c.l.b16 %v8727
      %v8747 = vunpack.c.l.b16 %v8728
      %v8748 = vunpack.c.l.b16 %v8729
      %v8749 = vunpack.c.l.b16 %v8730
      %v8750 = vunpack.c.l.b16 %v8731
      %v8751 = vunpack.c.l.b16 %v8732
      %v8752 = vunpack.c.l.b16 %v8733
      %v8753 = vpack.c.b16 %v8745, %v8744
      %v8754 = vpack.c.b16 %v8747, %v8746
      %v8755 = vpack.c.b16 %v8749, %v8748
      %v8756 = vpack.c.b16 %v8751, %v8750
      %v8757 = vpack.c.b16 %v8752, %v8752
      %v8759 = vsel %vm4488, %v8753, 0
      %v8762 = vsel %vm4488, %v8754, 0
      %v8765 = vsel %vm4488, %v8755, 0
      %v8768 = vsel %vm4488, %v8756, 0
      %v8771 = vsel %vm4488, %v8757, 0
      %v8774 = vsel %vm4438, %v8734, 0
      %8776 = vmatpush.bf16.msra.mxu0 0
      %8777 = vmatpush.bf16.msra.mxu0 0
      %8778 = vmatpush.bf16.msra.mxu0 0
      %8779 = vmatpush.bf16.msra.mxu0 0
      %8780 = vmatpush.bf16.msra.mxu0 0
      %8781 = vmatpush.bf16.msra.mxu0 0
      %8782 = vmatpush.bf16.msra.mxu0 0
      %8783 = vmatpush.bf16.msra.mxu0 %v8774
      %8784 = vmatmul.bf16.gmra.mxu0 %v8759
      %v8785 = vpop.f32.mrf.mxu0
      %v8786 = vadd.f32 0.0, %v8785
      %v8787 = vpop.f32.mrf.mxu0
      %v8788 = vadd.f32 0.0, %v8787
      %8789 = vmatmul.bf16.gmra.mxu0 %v8762
      %v8790 = vpop.f32.mrf.mxu0
      %v8791 = vadd.f32 0.0, %v8790
      %v8792 = vpop.f32.mrf.mxu0
      %v8793 = vadd.f32 0.0, %v8792
      %8794 = vmatmul.bf16.gmra.mxu0 %v8765
      %v8795 = vpop.f32.mrf.mxu0
      %v8796 = vadd.f32 0.0, %v8795
      %v8797 = vpop.f32.mrf.mxu0
      %v8798 = vadd.f32 0.0, %v8797
      %8799 = vmatmul.bf16.gmra.mxu0 %v8768
      %v8800 = vpop.f32.mrf.mxu0
      %v8801 = vadd.f32 0.0, %v8800
      %v8802 = vpop.f32.mrf.mxu0
      %v8803 = vadd.f32 0.0, %v8802
      %8804 = vmatmul.bf16.gmra.mxu0 %v8771
      %v8805 = vpop.f32.mrf.mxu0
      %v8806 = vadd.f32 0.0, %v8805
      %v8807 = vpop.f32.mrf.mxu0
      %8808 = vdwg.mxu0
      %v8809 = vpack.c.bf16 %v8786, %v8786
      %v8810 = vpack.c.bf16 %v8788, %v8788
      %v8811 = vpack.c.bf16 %v8791, %v8791
      %v8812 = vpack.c.bf16 %v8793, %v8793
      %v8813 = vpack.c.bf16 %v8796, %v8796
      %v8814 = vpack.c.bf16 %v8798, %v8798
      %v8815 = vpack.c.bf16 %v8801, %v8801
      %v8816 = vpack.c.bf16 %v8803, %v8803
      %v8817 = vpack.c.bf16 %v8806, %v8806
      %8818 = vst.msk [vmem:[#allocation4] sm:$0xf] %vm4549, %v8809
      %8820 = vrot.lane.b32.xlu0 %v8810, 16
      %v8821 = vpop.permute.xlu0 %8820
      %8823 = vst.msk [vmem:[#allocation4] sm:$0xf] %vm4555, %v8821
      %8825 = vrot.lane.b32.xlu0 %v8811, 32
      %v8826 = vpop.permute.xlu0 %8825
      %8828 = vst.msk [vmem:[#allocation4] sm:$0xf] %vm4561, %v8826
      %8830 = vrot.lane.b32.xlu0 %v8812, 48
      %v8831 = vpop.permute.xlu0 %8830
      %8833 = vst.msk [vmem:[#allocation4] sm:$0xf] %vm4567, %v8831
      %8835 = vrot.lane.b32.xlu0 %v8813, 64
      %v8836 = vpop.permute.xlu0 %8835
      %8838 = vst.msk [vmem:[#allocation4] sm:$0xf] %vm4573, %v8836
      %8840 = vrot.lane.b32.xlu0 %v8814, 80
      %v8841 = vpop.permute.xlu0 %8840
      %8843 = vst.msk [vmem:[#allocation4] sm:$0xf] %vm4579, %v8841
      %8845 = vrot.lane.b32.xlu0 %v8815, 96
      %v8846 = vpop.permute.xlu0 %8845
      %8848 = vst.msk [vmem:[#allocation4] sm:$0xf] %vm4585, %v8846
      %8850 = vrot.lane.b32.xlu0 %v8816, 112
      %v8851 = vpop.permute.xlu0 %8850
      %8853 = vst.msk [vmem:[#allocation4] sm:$0xf] %vm4591, %v8851
      %8854 = vst.msk [vmem:[#allocation4 + $0x4] sm:$0xf] %vm4549, %v8817
      %v8855 = vld [vmem:[#allocation4] sm:$0xff]
      %v8856 = vld [vmem:[%s9] sm:$0xf]
      %v8857 = vld [vmem:[%s9 + $0x4] sm:$0xf]
      %v8858 = vld [vmem:[%s9 + $0x8] sm:$0xf]
      %v8859 = vld [vmem:[%s9 + $0xc] sm:$0xf]
      %v8860 = vld [vmem:[%s9 + $0x10] sm:$0xf]
      %v8861 = vld [vmem:[%s9 + $0x14] sm:$0xf]
      %v8862 = vld [vmem:[%s9 + $0x18] sm:$0xf]
      %v8863 = vld [vmem:[%s9 + $0x1c] sm:$0xf]
      %v8864 = vld [vmem:[%s9 + $0x20] sm:$0xf]
      %v8865 = vld [vmem:[%s9 + $0x24] sm:$0xf]
      %v8866 = vld [vmem:[%s9 + $0x28] sm:$0xf]
      %v8867 = vld [vmem:[%s9 + $0x2c] sm:$0xf]
      %v8868 = vld [vmem:[%s9 + $0x30] sm:$0xf]
      %v8869 = vld [vmem:[%s9 + $0x34] sm:$0xf]
      %v8870 = vld [vmem:[%s9 + $0x38] sm:$0xf]
      %v8871 = vld [vmem:[%s9 + $0x3c] sm:$0xf]
      %v8872 = vld [vmem:[%s9 + $0x40] sm:$0xf]
      %v8873 = vld [vmem:[%s9 + $0x44] sm:$0xf]
      %v8874 = vld [vmem:[%s10] sm:$0x1]
      %v8876 = vperm.slane %v8874, 0
      %v8879 = vunpack.c.l.b16 %v8855
      %v8880 = vunpack.c.h.b16 %v8855
      %v8881 = vpack.c.b16 %v8879, %v8879
      %v8882 = vpack.c.b16 %v8880, %v8880
      %v8902 = vunpack.c.l.b16 %v8856
      %v8903 = vunpack.c.l.b16 %v8857
      %v8904 = vunpack.c.l.b16 %v8858
      %v8905 = vunpack.c.l.b16 %v8859
      %v8906 = vunpack.c.l.b16 %v8860
      %v8907 = vunpack.c.l.b16 %v8861
      %v8908 = vunpack.c.l.b16 %v8862
      %v8909 = vunpack.c.l.b16 %v8863
      %v8910 = vunpack.c.l.b16 %v8864
      %v8911 = vunpack.c.l.b16 %v8865
      %v8912 = vunpack.c.l.b16 %v8866
      %v8913 = vunpack.c.l.b16 %v8867
      %v8914 = vunpack.c.l.b16 %v8868
      %v8915 = vunpack.c.l.b16 %v8869
      %v8916 = vunpack.c.l.b16 %v8870
      %v8917 = vunpack.c.l.b16 %v8871
      %v8918 = vunpack.c.l.b16 %v8872
      %v8919 = vunpack.c.l.b16 %v8873
      %v8920 = vpack.c.b16 %v8903, %v8902
      %v8921 = vpack.c.b16 %v8905, %v8904
      %v8922 = vpack.c.b16 %v8907, %v8906
      %v8923 = vpack.c.b16 %v8909, %v8908
      %v8924 = vpack.c.b16 %v8911, %v8910
      %v8925 = vpack.c.b16 %v8913, %v8912
      %v8926 = vpack.c.b16 %v8915, %v8914
      %v8927 = vpack.c.b16 %v8917, %v8916
      %v8928 = vpack.c.b16 %v8919, %v8918
      %v8939 = vsel %vm4677, %v8882, 0
      %8941 = vmatpush.bf16.msra.mxu0 %v8927
      %8942 = vmatpush.bf16.msra.mxu0 %v8926
      %8943 = vmatpush.bf16.msra.mxu0 %v8925
      %8944 = vmatpush.bf16.msra.mxu0 %v8924
      %8945 = vmatpush.bf16.msra.mxu0 %v8923
      %8946 = vmatpush.bf16.msra.mxu0 %v8922
      %8947 = vmatpush.bf16.msra.mxu0 %v8921
      %8948 = vmatpush.bf16.msra.mxu0 %v8920
      %8949 = vmatmul.bf16.gmra.mxu0 %v8881
      %v8950 = vpop.f32.mrf.mxu0
      %v8951 = vadd.f32 %v8876, %v8950
      %v8952 = vpop.f32.mrf.mxu0
      %8953 = vdwg.mxu0
      %8954 = vmatpush.bf16.msra.mxu0 0
      %8955 = vmatpush.bf16.msra.mxu0 0
      %8956 = vmatpush.bf16.msra.mxu0 0
      %8957 = vmatpush.bf16.msra.mxu0 0
      %8958 = vmatpush.bf16.msra.mxu0 0
      %8959 = vmatpush.bf16.msra.mxu0 0
      %8960 = vmatpush.bf16.msra.mxu0 0
      %8961 = vmatpush.bf16.msra.mxu0 %v8928
      %8962 = vmatmul.bf16.gmra.mxu0 %v8939
      %v8963 = vpop.f32.mrf.mxu0
      %v8964 = vadd.f32 %v8951, %v8963
      %v8965 = vpop.f32.mrf.mxu0
      %8966 = vdwg.mxu0
      %v8967 = vmax.f32 %v8964, 0.0
      %v8968 = vpack.c.bf16 %v8967, %v8967
      %v8969 = vld [vmem:[%s11] sm:$0xf]
      %v8970 = vld [vmem:[%s11 + $0x4] sm:$0xf]
      %v8971 = vld [vmem:[%s12] sm:$0x1]
      %v8973 = vperm.slane %v8971, 0
      %v8977 = vunpack.c.l.b16 %v8969
      %v8978 = vunpack.c.l.b16 %v8970
      %v8979 = vpack.c.b16 %v8978, %v8977
      %v8982 = vsel %vm4677, %v8968, 0
      %8984 = vmatpush.bf16.msra.mxu0 0
      %8985 = vmatpush.bf16.msra.mxu0 0
      %8986 = vmatpush.bf16.msra.mxu0 0
      %8987 = vmatpush.bf16.msra.mxu0 0
      %8988 = vmatpush.bf16.msra.mxu0 0
      %8989 = vmatpush.bf16.msra.mxu0 0
      %8990 = vmatpush.bf16.msra.mxu0 0
      %8991 = vmatpush.bf16.msra.mxu0 %v8979
      %8992 = vmatmul.bf16.gmra.mxu0 %v8982
      %v8993 = vpop.f32.mrf.mxu0
      %v8994 = vadd.f32 %v8973, %v8993
      %v8995 = vpop.f32.mrf.mxu0
      %8996 = vdwg.mxu0
      %v8997 = vadd.f32 %v8722, %v8994
      %v8998 = vmax.f32 %v8997, 0.0
      %9000 = vrot.lane.b32.xlu0 %v8998, 16
      %v9001 = vpop.permute.xlu0 %9000
      %v9003 = vsel %vm4677, %v4738, %v9001
      %vm9004 = vcmask 261120
      %9005 = vst.msk [vmem:[%s443] sm:$0xff] %vm9004, %v9003
      %p9006 = scmp.lt.s32.totalorder %s24, 1
      %s9007 = scalar_select %p9006, %s24, 1
      %s9008 = smul.addr %s9007, 8
      %s9009 = scalar_lea.vmem %s13, %s9008
      // Predicated region
      $region73: #{encoder_forward.1} parent=71 // pred_check
        %p9010 = pneg %p320
      $region74: #{encoder_forward.1} parent=71 // pred_check_branch
        %9012 = sbr.rel (%p9010) target = $region76
      $region75: #{encoder_forward.1} parent=71 // pred_region
        _
      $region76: #{encoder_forward.1} parent=71 // pred_fallthru
        _
    $region72: #{encoder_forward.1} parent=5 // pred_fallthru
      _
    %p9013 = scmp.le.s32.totalorder 2, %s19
    // Predicated region
    $region77: #{encoder_forward.1} parent=5 // pred_check
      %p9014 = pneg %p9013
    $region78: #{encoder_forward.1} parent=5 // pred_check_branch
      %9016 = sbr.rel (%p9014) target = $region80
    $region79: #{encoder_forward.1} parent=5 // pred_region
      %s9017 = ssub.s32 %s19, 2
      // Predicated region
      $region81: #{encoder_forward.1} parent=79 // pred_check
        %p9018 = pneg %p326
      $region82: #{encoder_forward.1} parent=79 // pred_check_branch
        %9020 = sbr.rel (%p9018) target = $region84
      $region83: #{encoder_forward.1} parent=79 // pred_region
        %p9021 = scmp.lt.s32.totalorder %s25, 1
        %s9022 = scalar_select %p9021, %s25, 1
        %s9023 = smul.addr %s9022, 8
        %s9024 = scalar_lea.vmem %s13, %s9023
      $region84: #{encoder_forward.1} parent=79 // pred_fallthru
        _
    $region80: #{encoder_forward.1} parent=5 // pred_fallthru
      _
  $region6: #{encoder_forward.1} parent=0 // loop_footer
    %s23 = sadd.s32 1, %s19
  $region7: #{encoder_forward.1} parent=0 // loop_footer_branch
    %18 = sbr.rel target = $region3
  $region8: #{encoder_forward.1} parent=0 // loop_exit
    _

</llo_original>
